<compile_context>
chip_gen: v7x
topology: tpu7x:2x2x1
jax: 0.10.0
libtpu: 0.0.40
codegen_flags: <defaults>
</compile_context>

<pallas_src>
import functools

import numpy as np
import jax
import jax.numpy as jnp
from jax import lax
from jax.experimental import pallas as pl
from jax.experimental.pallas import tpu as pltpu

CONV_OUT = 12   # start_conv out_channels == LSTM input_size
HIDDEN = 48     # LSTM hidden_size
GATES = 4 * HIDDEN
LIN1_OUT = 24
OUT_DIM = 12
HEAD_ROWS = HIDDEN + 1 + LIN1_OUT + 1   # [l1w ; l1b ; l2w(pad) ; l2b(pad)] = 74 rows


def _cdiv(a, b):
    return -(-a // b)


def _round_up(x, m):
    return _cdiv(x, m) * m


def mlp_model_kernel(x_ref, rec_w_ref, rec_v_ref, head_ref, out_ref, xa_ref,
                     *, seq_len, n_chains):
    """One M-tile of the full forward pass (rows on sublanes, features on lanes).

    rec_w_ref : (144, 192)  rows   0: 48 = whh1  (layer-1 recurrent weights)
                            rows  48: 96 = whh2  (layer-2 recurrent weights)
                            rows  96:144 = wih2  (layer-2 input weights)
    rec_v_ref : (3, 192)    row 0 = A = conv_w @ wih1        (hoisted conv+proj)
                            row 1 = C = conv_b @ wih1 + b1
                            row 2 = b2
    head_ref  : (74, 24)    rows 0:48 = l1w, row 48 = l1b,
                            rows 49:73 = l2w (cols 0:12), row 73 = l2b (cols 0:12)
    xa_ref    : (T, m, 192) VMEM scratch holding the precomputed input injection.
    Gate columns are pre-reordered to [i, f, o, g] so the three sigmoid gates
    form one contiguous (m, 144) slice and tanh covers the last 48 lanes.
    """
    m = x_ref.shape[0]
    mh = m // n_chains

    whh1 = rec_w_ref[0 * HIDDEN:1 * HIDDEN, :]          # (48, 192)
    whh2 = rec_w_ref[1 * HIDDEN:2 * HIDDEN, :]          # (48, 192)
    wih2 = rec_w_ref[2 * HIDDEN:3 * HIDDEN, :]          # (48, 192)
    a_vec = rec_v_ref[0:1, :]                           # (1, 192)
    c_vec = rec_v_ref[1:2, :]                           # (1, 192)
    b2 = rec_v_ref[2:3, :]                              # (1, 192)

    # --- Hoisted input injection for the whole tile (off the serial path) ---
    #   xa[t] = x[:, t] * A + C   with A = conv_w@wih1, C = conv_b@wih1 + b1
    x_all = x_ref[...]                                  # (m, T)
    for t in range(seq_len):
        xa_ref[t] = x_all[:, t:t + 1] * a_vec + c_vec   # (m, 192)

    # Hoisted broadcast: avoid re-emitting broadcast_in_dim every iteration.
    b2_b = jnp.broadcast_to(b2, (mh, GATES))

    def gate_act(gates, c):
        # gate order [i, f, o, g]: one wide sigmoid over 3*H lanes, one tanh over H.
        sig = jax.nn.sigmoid(gates[:, :3 * HIDDEN])
        i = sig[:, 0 * HIDDEN:1 * HIDDEN]
        f = sig[:, 1 * HIDDEN:2 * HIDDEN]
        o = sig[:, 2 * HIDDEN:3 * HIDDEN]
        g = jnp.tanh(gates[:, 3 * HIDDEN:])
        c_new = f * c + i * g
        h_new = o * jnp.tanh(c_new)
        return h_new, c_new

    def step(t, carry):
        inj_full = xa_ref[t]                            # (m, 192), leading-dim index
        new_carry = []
        for idx in range(n_chains):
            h1, c1, h2, c2 = carry[idx]
            lo = idx * mh
            inj = inj_full[lo:lo + mh, :]
            # Both recurrent matmuls depend only on the (t-1) state, so the
            # whh2 contribution sits off the layer-1 critical path.
            r1 = jnp.dot(h1, whh1, preferred_element_type=jnp.float32)
            r2 = jnp.dot(h2, whh2, preferred_element_type=jnp.float32)
            h1, c1 = gate_act(inj + r1, c1)
            g2 = r2 + jnp.dot(h1, wih2, preferred_element_type=jnp.float32) + b2_b
            h2, c2 = gate_act(g2, c2)
            new_carry.append((h1, c1, h2, c2))
        return tuple(new_carry)

    zeros = jnp.zeros((mh, HIDDEN), jnp.float32)
    carry = tuple((zeros, zeros, zeros, zeros) for _ in range(n_chains))
    if seq_len <= 16 and m <= 256:
        # Small tiles / short sequences: static unroll keeps LLO visibility.
        for t in range(seq_len):
            carry = step(t, carry)
    else:
        # Large tiles: real loop bounds vreg live ranges (avoids spills onto
        # the busy vld/vst slots) while unroll=2 keeps some scheduling slack.
        carry = lax.fori_loop(0, seq_len, step, carry, unroll=2)

    # --- MLP head, per chain (no h2 re-concat needed) ---
    l1w = head_ref[0:HIDDEN, :]                                   # (48, 24)
    l1b = head_ref[HIDDEN:HIDDEN + 1, :]                          # (1, 24)
    l2w = head_ref[HIDDEN + 1:HIDDEN + 1 + LIN1_OUT, 0:OUT_DIM]   # (24, 12)
    l2b = head_ref[HIDDEN + 1 + LIN1_OUT:HEAD_ROWS, 0:OUT_DIM]    # (1, 12)
    for idx in range(n_chains):
        h2 = carry[idx][2]
        lo = idx * mh
        z = jnp.dot(h2, l1w, preferred_element_type=jnp.float32) + l1b
        z = jnp.maximum(z, 0.0)                                   # ReLU
        z = jnp.dot(z, l2w, preferred_element_type=jnp.float32) + l2b
        out_ref[lo:lo + mh, :] = z.astype(out_ref.dtype)


def prepare_params(p):
    """Host-side weight prep from PyTorch-layout params:
       gate reorder [i,f,g,o] -> [i,f,o,g], conv + layer-1 input-projection
       hoist (A/C), recurrent-weight slab, and a packed MLP-head slab."""

    def reorder(w):  # (..., 4H) PyTorch gate order i,f,g,o -> i,f,o,g
        i, f, g, o = jnp.split(w, 4, axis=-1)
        return jnp.concatenate([i, f, o, g], axis=-1)

    wih1 = reorder(p["wih1_t"])                 # (12, 192)
    whh1 = reorder(p["whh1_t"])                 # (48, 192)
    b1 = reorder(p["bias1"])                    # (1, 192)
    wih2 = reorder(p["wih2_t"])                 # (48, 192)
    whh2 = reorder(p["whh2_t"])                 # (48, 192)
    b2 = reorder(p["bias2"])                    # (1, 192)

    # Hoist 1x1-conv + layer-1 input projection out of the time loop:
    #   (x_t * cw + cb) @ wih1 == x_t * (cw @ wih1) + (cb @ wih1)
    a_vec = p["conv_w"] @ wih1                  # (1, 192)
    c_vec = p["conv_b"] @ wih1 + b1             # (1, 192)

    rec_w = jnp.concatenate([whh1, whh2, wih2], axis=0)      # (144, 192)
    rec_v = jnp.concatenate([a_vec, c_vec, b2], axis=0)      # (3, 192)

    head = jnp.zeros((HEAD_ROWS, LIN1_OUT), jnp.float32)     # (74, 24)
    head = head.at[0:HIDDEN, :].set(p["l1w_t"])
    head = head.at[HIDDEN, :].set(p["l1b"][0])
    head = head.at[HIDDEN + 1:HIDDEN + 1 + LIN1_OUT, 0:OUT_DIM].set(p["l2w_t"])
    head = head.at[HIDDEN + 1 + LIN1_OUT, 0:OUT_DIM].set(p["l2b"][0])

    return {"rec_w": rec_w, "rec_v": rec_v, "head": head}


def _choose_tile_m(M, max_tile=1024):
    """>=2 grid steps (so v7x's two TensorCores both get work on the 'parallel'
    axis), tiles ~cdiv(M, k) so padding waste stays small, rounded to 16 rows
    so the two interleaved sub-chains stay sublane-aligned."""
    n_tiles = max(2, _cdiv(M, max_tile))
    tile = _round_up(_cdiv(M, n_tiles), 16)
    return int(max(16, min(tile, max_tile)))


def mlp_model_forward(x, prep, *, tile_m=None):
    """x: (B, N, T) float32  ->  prediction (B*N, 12)   (== .reshape(-1, 12))."""
    B, N, T = x.shape
    M = B * N
    xf = x.reshape(M, T).astype(jnp.float32)

    if tile_m is None:
        tile_m = _choose_tile_m(M)
    tile_m = _round_up(min(tile_m, _round_up(M, 16)), 16)
    m_pad = _round_up(M, tile_m)
    if m_pad != M:
        xf = jnp.pad(xf, ((0, m_pad - M), (0, 0)))

    n_chains = 2 if (tile_m % 16 == 0 and tile_m >= 16) else 1
    kernel = functools.partial(mlp_model_kernel, seq_len=T, n_chains=n_chains)

    def const2(i):
        return (0, 0)   # weights stay resident across the grid

    # VMEM budget: xa scratch (lane-padded), double-buffered x/out tiles,
    # state/gate intermediates + headroom. Kept under v7x's 64 MiB.
    vmem_bytes = 4 * (T * tile_m * 2 * GATES
                      + 2 * tile_m * T
                      + 2 * tile_m * 128
                      + 12 * tile_m * GATES)
    vmem_limit = int(min(48 << 20, max(32 << 20, 2 * vmem_bytes)))

    out = pl.pallas_call(
        kernel,
        out_shape=jax.ShapeDtypeStruct((m_pad, OUT_DIM), jnp.float32),
        grid_spec=pltpu.PrefetchScalarGridSpec(
            num_scalar_prefetch=0,
            grid=(m_pad // tile_m,),
            in_specs=[
                pl.BlockSpec((tile_m, T), lambda i: (i, 0)),
                pl.BlockSpec(prep["rec_w"].shape, const2),
                pl.BlockSpec(prep["rec_v"].shape, const2),
                pl.BlockSpec(prep["head"].shape, const2),
            ],
            out_specs=pl.BlockSpec((tile_m, OUT_DIM), lambda i: (i, 0)),
            scratch_shapes=[pltpu.VMEM((T, tile_m, GATES), jnp.float32)],
        ),
        compiler_params=pltpu.CompilerParams(
            dimension_semantics=("parallel",),
            vmem_limit_bytes=vmem_limit),
    )(xf, prep["rec_w"], prep["rec_v"], prep["head"])
    return out[:M]


def reference_forward(x, params):
    """Pure-JAX reference (PyTorch layout / gate order), for correctness checks."""
    B, N, T = x.shape
    M = B * N
    xf = x.reshape(M, T).astype(jnp.float32)

    def lstm_cell(x_t, h, c, wih, whh, b):
        gates = x_t @ wih + h @ whh + b
        i = jax.nn.sigmoid(gates[:, 0 * HIDDEN:1 * HIDDEN])
        f = jax.nn.sigmoid(gates[:, 1 * HIDDEN:2 * HIDDEN])
        g = jnp.tanh(gates[:, 2 * HIDDEN:3 * HIDDEN])
        o = jax.nn.sigmoid(gates[:, 3 * HIDDEN:4 * HIDDEN])
        c_new = f * c + i * g
        return o * jnp.tanh(c_new), c_new

    h1 = c1 = h2 = c2 = jnp.zeros((M, HIDDEN), jnp.float32)
    for t in range(T):
        x_t = xf[:, t:t + 1] * params["conv_w"] + params["conv_b"]
        h1, c1 = lstm_cell(x_t, h1, c1, params["wih1_t"], params["whh1_t"], params["bias1"])
        h2, c2 = lstm_cell(h1, h2, c2, params["wih2_t"], params["whh2_t"], params["bias2"])
    z = jnp.maximum(h2 @ params["l1w_t"] + params["l1b"], 0.0)
    return z @ params["l2w_t"] + params["l2b"]


def init_params(key):
    """Deterministic synthetic parameters, PyTorch-default-style uniform init."""
    ks = list(jax.random.split(key, 16))

    def u(k, shape, fan_in):
        bound = 1.0 / np.sqrt(fan_in)
        return jax.random.uniform(k, shape, jnp.float32, -bound, bound)

    p = {}
    # start_conv: Conv2d(1, 12, kernel_size=(1,1)) -> weight (12,1,1,1), bias (12,)
    p["conv_w"] = u(ks[0], (1, CONV_OUT), 1)          # transposed: (C_in=1, C_out=12)
    p["conv_b"] = u(ks[1], (1, CONV_OUT), 1)

    # LSTM layer 1: weight_ih (192,12), weight_hh (192,48), biases (192,)
    p["wih1_t"] = u(ks[2], (CONV_OUT, GATES), HIDDEN)
    p["whh1_t"] = u(ks[3], (HIDDEN, GATES), HIDDEN)
    p["bias1"] = u(ks[4], (1, GATES), HIDDEN) + u(ks[5], (1, GATES), HIDDEN)

    # LSTM layer 2: weight_ih (192,48), weight_hh (192,48), biases (192,)
    p["wih2_t"] = u(ks[6], (HIDDEN, GATES), HIDDEN)
    p["whh2_t"] = u(ks[7], (HIDDEN, GATES), HIDDEN)
    p["bias2"] = u(ks[8], (1, GATES), HIDDEN) + u(ks[9], (1, GATES), HIDDEN)

    # end_linear1: Linear(48, 24);  end_linear2: Linear(24, 12)
    p["l1w_t"] = u(ks[10], (HIDDEN, LIN1_OUT), HIDDEN)
    p["l1b"] = u(ks[11], (1, LIN1_OUT), HIDDEN)
    p["l2w_t"] = u(ks[12], (LIN1_OUT, OUT_DIM), LIN1_OUT)
    p["l2b"] = u(ks[13], (1, OUT_DIM), LIN1_OUT)
    return p


if __name__ == "__main__":
    key = jax.random.PRNGKey(0)
    kx, kp, kx2 = jax.random.split(key, 3)
    params = init_params(kp)
    prep = prepare_params(params)

    # Test 1: small shapes consistent with the module: B=2 graphs, N=4 nodes,
    # T=12 history steps (args.gcn['in_channel'] == 12). Exercises the
    # static-unroll path.
    B, N, T = 2, 4, 12
    x = jax.random.normal(kx, (B, N, T), jnp.float32)
    out = jax.block_until_ready(mlp_model_forward(x, prep))
    ref = jax.block_until_ready(reference_forward(x, params))
    assert out.shape == (B * N, OUT_DIM)
    np.testing.assert_allclose(np.asarray(out), np.asarray(ref), rtol=1e-4, atol=1e-4)

    # Test 2: larger batch exercising the fori_loop path, two sub-chains,
    # row padding, and a multi-step (megacore-shardable) grid.
    B2, N2 = 2, 300
    x2 = jax.random.normal(kx2, (B2, N2, T), jnp.float32)
    out2 = jax.block_until_ready(mlp_model_forward(x2, prep))
    ref2 = jax.block_until_ready(reference_forward(x2, params))
    assert out2.shape == (B2 * N2, OUT_DIM)
    np.testing.assert_allclose(np.asarray(out2), np.asarray(ref2), rtol=1e-4, atol=1e-4)

    # TODO(synk): original forward() references undefined self.encoder /
    # self.regression_layer; implemented the canonical conv->LSTM->MLP path
    # implied by __init__ instead.
    print("KERNEL_OK")
</pallas_src>

<mosaic_0001>
module attributes {stable_mosaic.version = 11 : i64} {
  func.func @mlp_model_kernel(%arg0: i32, %arg1: memref<16x12xf32, #tpu.memory_space<vmem>>, %arg2: memref<144x192xf32, #tpu.memory_space<vmem>>, %arg3: memref<3x192xf32, #tpu.memory_space<vmem>>, %arg4: memref<74x24xf32, #tpu.memory_space<vmem>>, %arg5: memref<16x12xf32, #tpu.memory_space<vmem>>, %arg6: memref<12x16x192xf32, #tpu.memory_space<vmem>>) attributes {dimension_semantics = [#tpu.dimension_semantics<parallel>], iteration_bounds = array<i64: 1>, scalar_prefetch = 0 : i64, scratch_operands = 1 : i64, tpu.core_type = #tpu.core_type<tc>, window_params = [{transform_indices = @transform_0, window_bounds = array<i64: 16, 12>}, {pipeline_mode = #tpu.pipeline_mode<synchronous>, transform_indices = @transform_1, window_bounds = array<i64: 144, 192>}, {pipeline_mode = #tpu.pipeline_mode<synchronous>, transform_indices = @transform_2, window_bounds = array<i64: 3, 192>}, {pipeline_mode = #tpu.pipeline_mode<synchronous>, transform_indices = @transform_3, window_bounds = array<i64: 74, 24>}, {transform_indices = @transform_4, window_bounds = array<i64: 16, 12>}]} {
    %c0 = arith.constant 0 : index
    %c0_0 = arith.constant 0 : index
    %0 = vector.load %arg2[%c0, %c0_0] : memref<144x192xf32, #tpu.memory_space<vmem>>, vector<48x192xf32>
    %c48 = arith.constant 48 : index
    %c0_1 = arith.constant 0 : index
    %1 = vector.load %arg2[%c48, %c0_1] : memref<144x192xf32, #tpu.memory_space<vmem>>, vector<48x192xf32>
    %c96 = arith.constant 96 : index
    %c0_2 = arith.constant 0 : index
    %2 = vector.load %arg2[%c96, %c0_2] : memref<144x192xf32, #tpu.memory_space<vmem>>, vector<48x192xf32>
    %c0_3 = arith.constant 0 : index
    %c0_4 = arith.constant 0 : index
    %3 = vector.load %arg3[%c0_3, %c0_4] : memref<3x192xf32, #tpu.memory_space<vmem>>, vector<1x192xf32>
    %c1 = arith.constant 1 : index
    %c0_5 = arith.constant 0 : index
    %4 = vector.load %arg3[%c1, %c0_5] : memref<3x192xf32, #tpu.memory_space<vmem>>, vector<1x192xf32>
    %c2 = arith.constant 2 : index
    %c0_6 = arith.constant 0 : index
    %5 = vector.load %arg3[%c2, %c0_6] : memref<3x192xf32, #tpu.memory_space<vmem>>, vector<1x192xf32>
    %c0_7 = arith.constant 0 : index
    %c0_8 = arith.constant 0 : index
    %6 = vector.load %arg1[%c0_7, %c0_8] : memref<16x12xf32, #tpu.memory_space<vmem>>, vector<16x12xf32>
    %7 = vector.extract_strided_slice %6 {offsets = [0, 0], sizes = [16, 1], strides = [1, 1]} : vector<16x12xf32> to vector<16x1xf32>
    %8 = vector.broadcast %7 : vector<16x1xf32> to vector<16x192xf32>
    %9 = vector.broadcast %3 : vector<1x192xf32> to vector<16x192xf32>
    %10 = arith.mulf %8, %9 : vector<16x192xf32>
    %11 = vector.broadcast %4 : vector<1x192xf32> to vector<16x192xf32>
    %12 = arith.addf %10, %11 : vector<16x192xf32>
    %c0_9 = arith.constant 0 : index
    %c0_10 = arith.constant 0 : index
    %c0_11 = arith.constant 0 : index
    %13 = vector.load %arg6[%c0_9, %c0_10, %c0_11] : memref<12x16x192xf32, #tpu.memory_space<vmem>>, vector<1x16x192xf32>
    %14 = vector.shape_cast %13 : vector<1x16x192xf32> to vector<16x192xf32>
    %15 = vector.shape_cast %12 : vector<16x192xf32> to vector<1x16x192xf32>
    tpu.vector_store %arg6[%c0_9, %c0_10, %c0_11], %15 {strides = array<i32>} : memref<12x16x192xf32, #tpu.memory_space<vmem>>, vector<1x16x192xf32>,
    %16 = vector.extract_strided_slice %6 {offsets = [0, 1], sizes = [16, 1], strides = [1, 1]} : vector<16x12xf32> to vector<16x1xf32>
    %17 = vector.broadcast %16 : vector<16x1xf32> to vector<16x192xf32>
    %18 = vector.broadcast %3 : vector<1x192xf32> to vector<16x192xf32>
    %19 = arith.mulf %17, %18 : vector<16x192xf32>
    %20 = vector.broadcast %4 : vector<1x192xf32> to vector<16x192xf32>
    %21 = arith.addf %19, %20 : vector<16x192xf32>
    %c1_12 = arith.constant 1 : index
    %c0_13 = arith.constant 0 : index
    %c0_14 = arith.constant 0 : index
    %22 = vector.load %arg6[%c1_12, %c0_13, %c0_14] : memref<12x16x192xf32, #tpu.memory_space<vmem>>, vector<1x16x192xf32>
    %23 = vector.shape_cast %22 : vector<1x16x192xf32> to vector<16x192xf32>
    %24 = vector.shape_cast %21 : vector<16x192xf32> to vector<1x16x192xf32>
    tpu.vector_store %arg6[%c1_12, %c0_13, %c0_14], %24 {strides = array<i32>} : memref<12x16x192xf32, #tpu.memory_space<vmem>>, vector<1x16x192xf32>,
    %25 = vector.extract_strided_slice %6 {offsets = [0, 2], sizes = [16, 1], strides = [1, 1]} : vector<16x12xf32> to vector<16x1xf32>
    %26 = vector.broadcast %25 : vector<16x1xf32> to vector<16x192xf32>
    %27 = vector.broadcast %3 : vector<1x192xf32> to vector<16x192xf32>
    %28 = arith.mulf %26, %27 : vector<16x192xf32>
    %29 = vector.broadcast %4 : vector<1x192xf32> to vector<16x192xf32>
    %30 = arith.addf %28, %29 : vector<16x192xf32>
    %c2_15 = arith.constant 2 : index
    %c0_16 = arith.constant 0 : index
    %c0_17 = arith.constant 0 : index
    %31 = vector.load %arg6[%c2_15, %c0_16, %c0_17] : memref<12x16x192xf32, #tpu.memory_space<vmem>>, vector<1x16x192xf32>
    %32 = vector.shape_cast %31 : vector<1x16x192xf32> to vector<16x192xf32>
    %33 = vector.shape_cast %30 : vector<16x192xf32> to vector<1x16x192xf32>
    tpu.vector_store %arg6[%c2_15, %c0_16, %c0_17], %33 {strides = array<i32>} : memref<12x16x192xf32, #tpu.memory_space<vmem>>, vector<1x16x192xf32>,
    %34 = vector.extract_strided_slice %6 {offsets = [0, 3], sizes = [16, 1], strides = [1, 1]} : vector<16x12xf32> to vector<16x1xf32>
    %35 = vector.broadcast %34 : vector<16x1xf32> to vector<16x192xf32>
    %36 = vector.broadcast %3 : vector<1x192xf32> to vector<16x192xf32>
    %37 = arith.mulf %35, %36 : vector<16x192xf32>
    %38 = vector.broadcast %4 : vector<1x192xf32> to vector<16x192xf32>
    %39 = arith.addf %37, %38 : vector<16x192xf32>
    %c3 = arith.constant 3 : index
    %c0_18 = arith.constant 0 : index
    %c0_19 = arith.constant 0 : index
    %40 = vector.load %arg6[%c3, %c0_18, %c0_19] : memref<12x16x192xf32, #tpu.memory_space<vmem>>, vector<1x16x192xf32>
    %41 = vector.shape_cast %40 : vector<1x16x192xf32> to vector<16x192xf32>
    %42 = vector.shape_cast %39 : vector<16x192xf32> to vector<1x16x192xf32>
    tpu.vector_store %arg6[%c3, %c0_18, %c0_19], %42 {strides = array<i32>} : memref<12x16x192xf32, #tpu.memory_space<vmem>>, vector<1x16x192xf32>,
    %43 = vector.extract_strided_slice %6 {offsets = [0, 4], sizes = [16, 1], strides = [1, 1]} : vector<16x12xf32> to vector<16x1xf32>
    %44 = vector.broadcast %43 : vector<16x1xf32> to vector<16x192xf32>
    %45 = vector.broadcast %3 : vector<1x192xf32> to vector<16x192xf32>
    %46 = arith.mulf %44, %45 : vector<16x192xf32>
    %47 = vector.broadcast %4 : vector<1x192xf32> to vector<16x192xf32>
    %48 = arith.addf %46, %47 : vector<16x192xf32>
    %c4 = arith.constant 4 : index
    %c0_20 = arith.constant 0 : index
    %c0_21 = arith.constant 0 : index
    %49 = vector.load %arg6[%c4, %c0_20, %c0_21] : memref<12x16x192xf32, #tpu.memory_space<vmem>>, vector<1x16x192xf32>
    %50 = vector.shape_cast %49 : vector<1x16x192xf32> to vector<16x192xf32>
    %51 = vector.shape_cast %48 : vector<16x192xf32> to vector<1x16x192xf32>
    tpu.vector_store %arg6[%c4, %c0_20, %c0_21], %51 {strides = array<i32>} : memref<12x16x192xf32, #tpu.memory_space<vmem>>, vector<1x16x192xf32>,
    %52 = vector.extract_strided_slice %6 {offsets = [0, 5], sizes = [16, 1], strides = [1, 1]} : vector<16x12xf32> to vector<16x1xf32>
    %53 = vector.broadcast %52 : vector<16x1xf32> to vector<16x192xf32>
    %54 = vector.broadcast %3 : vector<1x192xf32> to vector<16x192xf32>
    %55 = arith.mulf %53, %54 : vector<16x192xf32>
    %56 = vector.broadcast %4 : vector<1x192xf32> to vector<16x192xf32>
    %57 = arith.addf %55, %56 : vector<16x192xf32>
    %c5 = arith.constant 5 : index
    %c0_22 = arith.constant 0 : index
    %c0_23 = arith.constant 0 : index
    %58 = vector.load %arg6[%c5, %c0_22, %c0_23] : memref<12x16x192xf32, #tpu.memory_space<vmem>>, vector<1x16x192xf32>
    %59 = vector.shape_cast %58 : vector<1x16x192xf32> to vector<16x192xf32>
    %60 = vector.shape_cast %57 : vector<16x192xf32> to vector<1x16x192xf32>
    tpu.vector_store %arg6[%c5, %c0_22, %c0_23], %60 {strides = array<i32>} : memref<12x16x192xf32, #tpu.memory_space<vmem>>, vector<1x16x192xf32>,
    %61 = vector.extract_strided_slice %6 {offsets = [0, 6], sizes = [16, 1], strides = [1, 1]} : vector<16x12xf32> to vector<16x1xf32>
    %62 = vector.broadcast %61 : vector<16x1xf32> to vector<16x192xf32>
    %63 = vector.broadcast %3 : vector<1x192xf32> to vector<16x192xf32>
    %64 = arith.mulf %62, %63 : vector<16x192xf32>
    %65 = vector.broadcast %4 : vector<1x192xf32> to vector<16x192xf32>
    %66 = arith.addf %64, %65 : vector<16x192xf32>
    %c6 = arith.constant 6 : index
    %c0_24 = arith.constant 0 : index
    %c0_25 = arith.constant 0 : index
    %67 = vector.load %arg6[%c6, %c0_24, %c0_25] : memref<12x16x192xf32, #tpu.memory_space<vmem>>, vector<1x16x192xf32>
    %68 = vector.shape_cast %67 : vector<1x16x192xf32> to vector<16x192xf32>
    %69 = vector.shape_cast %66 : vector<16x192xf32> to vector<1x16x192xf32>
    tpu.vector_store %arg6[%c6, %c0_24, %c0_25], %69 {strides = array<i32>} : memref<12x16x192xf32, #tpu.memory_space<vmem>>, vector<1x16x192xf32>,
    %70 = vector.extract_strided_slice %6 {offsets = [0, 7], sizes = [16, 1], strides = [1, 1]} : vector<16x12xf32> to vector<16x1xf32>
    %71 = vector.broadcast %70 : vector<16x1xf32> to vector<16x192xf32>
    %72 = vector.broadcast %3 : vector<1x192xf32> to vector<16x192xf32>
    %73 = arith.mulf %71, %72 : vector<16x192xf32>
    %74 = vector.broadcast %4 : vector<1x192xf32> to vector<16x192xf32>
    %75 = arith.addf %73, %74 : vector<16x192xf32>
    %c7 = arith.constant 7 : index
    %c0_26 = arith.constant 0 : index
    %c0_27 = arith.constant 0 : index
    %76 = vector.load %arg6[%c7, %c0_26, %c0_27] : memref<12x16x192xf32, #tpu.memory_space<vmem>>, vector<1x16x192xf32>
    %77 = vector.shape_cast %76 : vector<1x16x192xf32> to vector<16x192xf32>
    %78 = vector.shape_cast %75 : vector<16x192xf32> to vector<1x16x192xf32>
    tpu.vector_store %arg6[%c7, %c0_26, %c0_27], %78 {strides = array<i32>} : memref<12x16x192xf32, #tpu.memory_space<vmem>>, vector<1x16x192xf32>,
    %79 = vector.extract_strided_slice %6 {offsets = [0, 8], sizes = [16, 1], strides = [1, 1]} : vector<16x12xf32> to vector<16x1xf32>
    %80 = vector.broadcast %79 : vector<16x1xf32> to vector<16x192xf32>
    %81 = vector.broadcast %3 : vector<1x192xf32> to vector<16x192xf32>
    %82 = arith.mulf %80, %81 : vector<16x192xf32>
    %83 = vector.broadcast %4 : vector<1x192xf32> to vector<16x192xf32>
    %84 = arith.addf %82, %83 : vector<16x192xf32>
    %c8 = arith.constant 8 : index
    %c0_28 = arith.constant 0 : index
    %c0_29 = arith.constant 0 : index
    %85 = vector.load %arg6[%c8, %c0_28, %c0_29] : memref<12x16x192xf32, #tpu.memory_space<vmem>>, vector<1x16x192xf32>
    %86 = vector.shape_cast %85 : vector<1x16x192xf32> to vector<16x192xf32>
    %87 = vector.shape_cast %84 : vector<16x192xf32> to vector<1x16x192xf32>
    tpu.vector_store %arg6[%c8, %c0_28, %c0_29], %87 {strides = array<i32>} : memref<12x16x192xf32, #tpu.memory_space<vmem>>, vector<1x16x192xf32>,
    %88 = vector.extract_strided_slice %6 {offsets = [0, 9], sizes = [16, 1], strides = [1, 1]} : vector<16x12xf32> to vector<16x1xf32>
    %89 = vector.broadcast %88 : vector<16x1xf32> to vector<16x192xf32>
    %90 = vector.broadcast %3 : vector<1x192xf32> to vector<16x192xf32>
    %91 = arith.mulf %89, %90 : vector<16x192xf32>
    %92 = vector.broadcast %4 : vector<1x192xf32> to vector<16x192xf32>
    %93 = arith.addf %91, %92 : vector<16x192xf32>
    %c9 = arith.constant 9 : index
    %c0_30 = arith.constant 0 : index
    %c0_31 = arith.constant 0 : index
    %94 = vector.load %arg6[%c9, %c0_30, %c0_31] : memref<12x16x192xf32, #tpu.memory_space<vmem>>, vector<1x16x192xf32>
    %95 = vector.shape_cast %94 : vector<1x16x192xf32> to vector<16x192xf32>
    %96 = vector.shape_cast %93 : vector<16x192xf32> to vector<1x16x192xf32>
    tpu.vector_store %arg6[%c9, %c0_30, %c0_31], %96 {strides = array<i32>} : memref<12x16x192xf32, #tpu.memory_space<vmem>>, vector<1x16x192xf32>,
    %97 = vector.extract_strided_slice %6 {offsets = [0, 10], sizes = [16, 1], strides = [1, 1]} : vector<16x12xf32> to vector<16x1xf32>
    %98 = vector.broadcast %97 : vector<16x1xf32> to vector<16x192xf32>
    %99 = vector.broadcast %3 : vector<1x192xf32> to vector<16x192xf32>
    %100 = arith.mulf %98, %99 : vector<16x192xf32>
    %101 = vector.broadcast %4 : vector<1x192xf32> to vector<16x192xf32>
    %102 = arith.addf %100, %101 : vector<16x192xf32>
    %c10 = arith.constant 10 : index
    %c0_32 = arith.constant 0 : index
    %c0_33 = arith.constant 0 : index
    %103 = vector.load %arg6[%c10, %c0_32, %c0_33] : memref<12x16x192xf32, #tpu.memory_space<vmem>>, vector<1x16x192xf32>
    %104 = vector.shape_cast %103 : vector<1x16x192xf32> to vector<16x192xf32>
    %105 = vector.shape_cast %102 : vector<16x192xf32> to vector<1x16x192xf32>
    tpu.vector_store %arg6[%c10, %c0_32, %c0_33], %105 {strides = array<i32>} : memref<12x16x192xf32, #tpu.memory_space<vmem>>, vector<1x16x192xf32>,
    %106 = vector.extract_strided_slice %6 {offsets = [0, 11], sizes = [16, 1], strides = [1, 1]} : vector<16x12xf32> to vector<16x1xf32>
    %107 = vector.broadcast %106 : vector<16x1xf32> to vector<16x192xf32>
    %108 = vector.broadcast %3 : vector<1x192xf32> to vector<16x192xf32>
    %109 = arith.mulf %107, %108 : vector<16x192xf32>
    %110 = vector.broadcast %4 : vector<1x192xf32> to vector<16x192xf32>
    %111 = arith.addf %109, %110 : vector<16x192xf32>
    %c11 = arith.constant 11 : index
    %c0_34 = arith.constant 0 : index
    %c0_35 = arith.constant 0 : index
    %112 = vector.load %arg6[%c11, %c0_34, %c0_35] : memref<12x16x192xf32, #tpu.memory_space<vmem>>, vector<1x16x192xf32>
    %113 = vector.shape_cast %112 : vector<1x16x192xf32> to vector<16x192xf32>
    %114 = vector.shape_cast %111 : vector<16x192xf32> to vector<1x16x192xf32>
    tpu.vector_store %arg6[%c11, %c0_34, %c0_35], %114 {strides = array<i32>} : memref<12x16x192xf32, #tpu.memory_space<vmem>>, vector<1x16x192xf32>,
    %115 = vector.shape_cast %5 : vector<1x192xf32> to vector<1x192xf32>
    %116 = vector.broadcast %115 : vector<1x192xf32> to vector<8x192xf32>
    %cst = arith.constant 0.000000e+00 : f32
    %117 = vector.broadcast %cst : f32 to vector<8x48xf32>
    %c0_36 = arith.constant 0 : index
    %c0_37 = arith.constant 0 : index
    %c0_38 = arith.constant 0 : index
    %118 = vector.load %arg6[%c0_36, %c0_37, %c0_38] : memref<12x16x192xf32, #tpu.memory_space<vmem>>, vector<1x16x192xf32>
    %119 = vector.shape_cast %118 : vector<1x16x192xf32> to vector<16x192xf32>
    %120 = vector.extract_strided_slice %119 {offsets = [0, 0], sizes = [8, 192], strides = [1, 1]} : vector<16x192xf32> to vector<8x192xf32>
    %cst_39 = arith.constant dense<0.000000e+00> : vector<8x192xf32>
    %121 = tpu.matmul %117, %0, %cst_39 {dimension_numbers = #tpu.dot_dimension_numbers<[1], [0], [0], [1], [0, 0, 1, 1], [], []>} : vector<8x48xf32>, vector<48x192xf32>, vector<8x192xf32> -> vector<8x192xf32>
    %cst_40 = arith.constant dense<0.000000e+00> : vector<8x192xf32>
    %122 = tpu.matmul %117, %1, %cst_40 {dimension_numbers = #tpu.dot_dimension_numbers<[1], [0], [0], [1], [0, 0, 1, 1], [], []>} : vector<8x48xf32>, vector<48x192xf32>, vector<8x192xf32> -> vector<8x192xf32>
    %123 = arith.addf %120, %121 : vector<8x192xf32>
    %124 = vector.extract_strided_slice %123 {offsets = [0, 0], sizes = [8, 144], strides = [1, 1]} : vector<8x192xf32> to vector<8x144xf32>
    %125 = arith.negf %124 : vector<8x144xf32>
    %126 = math.exp %125 : vector<8x144xf32>
    %cst_41 = arith.constant 1.000000e+00 : f32
    %127 = vector.broadcast %cst_41 : f32 to vector<8x144xf32>
    %128 = arith.addf %127, %126 : vector<8x144xf32>
    %129 = arith.divf %127, %128 : vector<8x144xf32>
    %130 = vector.extract_strided_slice %129 {offsets = [0, 0], sizes = [8, 48], strides = [1, 1]} : vector<8x144xf32> to vector<8x48xf32>
    %131 = vector.extract_strided_slice %129 {offsets = [0, 48], sizes = [8, 48], strides = [1, 1]} : vector<8x144xf32> to vector<8x48xf32>
    %132 = vector.extract_strided_slice %129 {offsets = [0, 96], sizes = [8, 48], strides = [1, 1]} : vector<8x144xf32> to vector<8x48xf32>
    %133 = vector.extract_strided_slice %123 {offsets = [0, 144], sizes = [8, 48], strides = [1, 1]} : vector<8x192xf32> to vector<8x48xf32>
    %134 = math.tanh %133 : vector<8x48xf32>
    %135 = arith.mulf %131, %117 : vector<8x48xf32>
    %136 = arith.mulf %130, %134 : vector<8x48xf32>
    %137 = arith.addf %135, %136 : vector<8x48xf32>
    %138 = math.tanh %137 : vector<8x48xf32>
    %139 = arith.mulf %132, %138 : vector<8x48xf32>
    %cst_42 = arith.constant dense<0.000000e+00> : vector<8x192xf32>
    %140 = tpu.matmul %139, %2, %cst_42 {dimension_numbers = #tpu.dot_dimension_numbers<[1], [0], [0], [1], [0, 0, 1, 1], [], []>} : vector<8x48xf32>, vector<48x192xf32>, vector<8x192xf32> -> vector<8x192xf32>
    %141 = arith.addf %122, %140 : vector<8x192xf32>
    %142 = arith.addf %141, %116 : vector<8x192xf32>
    %143 = vector.extract_strided_slice %142 {offsets = [0, 0], sizes = [8, 144], strides = [1, 1]} : vector<8x192xf32> to vector<8x144xf32>
    %144 = arith.negf %143 : vector<8x144xf32>
    %145 = math.exp %144 : vector<8x144xf32>
    %cst_43 = arith.constant 1.000000e+00 : f32
    %146 = vector.broadcast %cst_43 : f32 to vector<8x144xf32>
    %147 = arith.addf %146, %145 : vector<8x144xf32>
    %148 = arith.divf %146, %147 : vector<8x144xf32>
    %149 = vector.extract_strided_slice %148 {offsets = [0, 0], sizes = [8, 48], strides = [1, 1]} : vector<8x144xf32> to vector<8x48xf32>
    %150 = vector.extract_strided_slice %148 {offsets = [0, 48], sizes = [8, 48], strides = [1, 1]} : vector<8x144xf32> to vector<8x48xf32>
    %151 = vector.extract_strided_slice %148 {offsets = [0, 96], sizes = [8, 48], strides = [1, 1]} : vector<8x144xf32> to vector<8x48xf32>
    %152 = vector.extract_strided_slice %142 {offsets = [0, 144], sizes = [8, 48], strides = [1, 1]} : vector<8x192xf32> to vector<8x48xf32>
    %153 = math.tanh %152 : vector<8x48xf32>
    %154 = arith.mulf %150, %117 : vector<8x48xf32>
    %155 = arith.mulf %149, %153 : vector<8x48xf32>
    %156 = arith.addf %154, %155 : vector<8x48xf32>
    %157 = math.tanh %156 : vector<8x48xf32>
    %158 = arith.mulf %151, %157 : vector<8x48xf32>
    %159 = vector.extract_strided_slice %119 {offsets = [8, 0], sizes = [8, 192], strides = [1, 1]} : vector<16x192xf32> to vector<8x192xf32>
    %cst_44 = arith.constant dense<0.000000e+00> : vector<8x192xf32>
    %160 = tpu.matmul %117, %0, %cst_44 {dimension_numbers = #tpu.dot_dimension_numbers<[1], [0], [0], [1], [0, 0, 1, 1], [], []>} : vector<8x48xf32>, vector<48x192xf32>, vector<8x192xf32> -> vector<8x192xf32>
    %cst_45 = arith.constant dense<0.000000e+00> : vector<8x192xf32>
    %161 = tpu.matmul %117, %1, %cst_45 {dimension_numbers = #tpu.dot_dimension_numbers<[1], [0], [0], [1], [0, 0, 1, 1], [], []>} : vector<8x48xf32>, vector<48x192xf32>, vector<8x192xf32> -> vector<8x192xf32>
    %162 = arith.addf %159, %160 : vector<8x192xf32>
    %163 = vector.extract_strided_slice %162 {offsets = [0, 0], sizes = [8, 144], strides = [1, 1]} : vector<8x192xf32> to vector<8x144xf32>
    %164 = arith.negf %163 : vector<8x144xf32>
    %165 = math.exp %164 : vector<8x144xf32>
    %cst_46 = arith.constant 1.000000e+00 : f32
    %166 = vector.broadcast %cst_46 : f32 to vector<8x144xf32>
    %167 = arith.addf %166, %165 : vector<8x144xf32>
    %168 = arith.divf %166, %167 : vector<8x144xf32>
    %169 = vector.extract_strided_slice %168 {offsets = [0, 0], sizes = [8, 48], strides = [1, 1]} : vector<8x144xf32> to vector<8x48xf32>
    %170 = vector.extract_strided_slice %168 {offsets = [0, 48], sizes = [8, 48], strides = [1, 1]} : vector<8x144xf32> to vector<8x48xf32>
    %171 = vector.extract_strided_slice %168 {offsets = [0, 96], sizes = [8, 48], strides = [1, 1]} : vector<8x144xf32> to vector<8x48xf32>
    %172 = vector.extract_strided_slice %162 {offsets = [0, 144], sizes = [8, 48], strides = [1, 1]} : vector<8x192xf32> to vector<8x48xf32>
    %173 = math.tanh %172 : vector<8x48xf32>
    %174 = arith.mulf %170, %117 : vector<8x48xf32>
    %175 = arith.mulf %169, %173 : vector<8x48xf32>
    %176 = arith.addf %174, %175 : vector<8x48xf32>
    %177 = math.tanh %176 : vector<8x48xf32>
    %178 = arith.mulf %171, %177 : vector<8x48xf32>
    %cst_47 = arith.constant dense<0.000000e+00> : vector<8x192xf32>
    %179 = tpu.matmul %178, %2, %cst_47 {dimension_numbers = #tpu.dot_dimension_numbers<[1], [0], [0], [1], [0, 0, 1, 1], [], []>} : vector<8x48xf32>, vector<48x192xf32>, vector<8x192xf32> -> vector<8x192xf32>
    %180 = arith.addf %161, %179 : vector<8x192xf32>
    %181 = arith.addf %180, %116 : vector<8x192xf32>
    %182 = vector.extract_strided_slice %181 {offsets = [0, 0], sizes = [8, 144], strides = [1, 1]} : vector<8x192xf32> to vector<8x144xf32>
    %183 = arith.negf %182 : vector<8x144xf32>
    %184 = math.exp %183 : vector<8x144xf32>
    %cst_48 = arith.constant 1.000000e+00 : f32
    %185 = vector.broadcast %cst_48 : f32 to vector<8x144xf32>
    %186 = arith.addf %185, %184 : vector<8x144xf32>
    %187 = arith.divf %185, %186 : vector<8x144xf32>
    %188 = vector.extract_strided_slice %187 {offsets = [0, 0], sizes = [8, 48], strides = [1, 1]} : vector<8x144xf32> to vector<8x48xf32>
    %189 = vector.extract_strided_slice %187 {offsets = [0, 48], sizes = [8, 48], strides = [1, 1]} : vector<8x144xf32> to vector<8x48xf32>
    %190 = vector.extract_strided_slice %187 {offsets = [0, 96], sizes = [8, 48], strides = [1, 1]} : vector<8x144xf32> to vector<8x48xf32>
    %191 = vector.extract_strided_slice %181 {offsets = [0, 144], sizes = [8, 48], strides = [1, 1]} : vector<8x192xf32> to vector<8x48xf32>
    %192 = math.tanh %191 : vector<8x48xf32>
    %193 = arith.mulf %189, %117 : vector<8x48xf32>
    %194 = arith.mulf %188, %192 : vector<8x48xf32>
    %195 = arith.addf %193, %194 : vector<8x48xf32>
    %196 = math.tanh %195 : vector<8x48xf32>
    %197 = arith.mulf %190, %196 : vector<8x48xf32>
    %c1_49 = arith.constant 1 : index
    %c0_50 = arith.constant 0 : index
    %c0_51 = arith.constant 0 : index
    %198 = vector.load %arg6[%c1_49, %c0_50, %c0_51] : memref<12x16x192xf32, #tpu.memory_space<vmem>>, vector<1x16x192xf32>
    %199 = vector.shape_cast %198 : vector<1x16x192xf32> to vector<16x192xf32>
    %200 = vector.extract_strided_slice %199 {offsets = [0, 0], sizes = [8, 192], strides = [1, 1]} : vector<16x192xf32> to vector<8x192xf32>
    %cst_52 = arith.constant dense<0.000000e+00> : vector<8x192xf32>
    %201 = tpu.matmul %139, %0, %cst_52 {dimension_numbers = #tpu.dot_dimension_numbers<[1], [0], [0], [1], [0, 0, 1, 1], [], []>} : vector<8x48xf32>, vector<48x192xf32>, vector<8x192xf32> -> vector<8x192xf32>
    %cst_53 = arith.constant dense<0.000000e+00> : vector<8x192xf32>
    %202 = tpu.matmul %158, %1, %cst_53 {dimension_numbers = #tpu.dot_dimension_numbers<[1], [0], [0], [1], [0, 0, 1, 1], [], []>} : vector<8x48xf32>, vector<48x192xf32>, vector<8x192xf32> -> vector<8x192xf32>
    %203 = arith.addf %200, %201 : vector<8x192xf32>
    %204 = vector.extract_strided_slice %203 {offsets = [0, 0], sizes = [8, 144], strides = [1, 1]} : vector<8x192xf32> to vector<8x144xf32>
    %205 = arith.negf %204 : vector<8x144xf32>
    %206 = math.exp %205 : vector<8x144xf32>
    %cst_54 = arith.constant 1.000000e+00 : f32
    %207 = vector.broadcast %cst_54 : f32 to vector<8x144xf32>
    %208 = arith.addf %207, %206 : vector<8x144xf32>
    %209 = arith.divf %207, %208 : vector<8x144xf32>
    %210 = vector.extract_strided_slice %209 {offsets = [0, 0], sizes = [8, 48], strides = [1, 1]} : vector<8x144xf32> to vector<8x48xf32>
    %211 = vector.extract_strided_slice %209 {offsets = [0, 48], sizes = [8, 48], strides = [1, 1]} : vector<8x144xf32> to vector<8x48xf32>
    %212 = vector.extract_strided_slice %209 {offsets = [0, 96], sizes = [8, 48], strides = [1, 1]} : vector<8x144xf32> to vector<8x48xf32>
    %213 = vector.extract_strided_slice %203 {offsets = [0, 144], sizes = [8, 48], strides = [1, 1]} : vector<8x192xf32> to vector<8x48xf32>
    %214 = math.tanh %213 : vector<8x48xf32>
    %215 = arith.mulf %211, %137 : vector<8x48xf32>
    %216 = arith.mulf %210, %214 : vector<8x48xf32>
    %217 = arith.addf %215, %216 : vector<8x48xf32>
    %218 = math.tanh %217 : vector<8x48xf32>
    %219 = arith.mulf %212, %218 : vector<8x48xf32>
    %cst_55 = arith.constant dense<0.000000e+00> : vector<8x192xf32>
    %220 = tpu.matmul %219, %2, %cst_55 {dimension_numbers = #tpu.dot_dimension_numbers<[1], [0], [0], [1], [0, 0, 1, 1], [], []>} : vector<8x48xf32>, vector<48x192xf32>, vector<8x192xf32> -> vector<8x192xf32>
    %221 = arith.addf %202, %220 : vector<8x192xf32>
    %222 = arith.addf %221, %116 : vector<8x192xf32>
    %223 = vector.extract_strided_slice %222 {offsets = [0, 0], sizes = [8, 144], strides = [1, 1]} : vector<8x192xf32> to vector<8x144xf32>
    %224 = arith.negf %223 : vector<8x144xf32>
    %225 = math.exp %224 : vector<8x144xf32>
    %cst_56 = arith.constant 1.000000e+00 : f32
    %226 = vector.broadcast %cst_56 : f32 to vector<8x144xf32>
    %227 = arith.addf %226, %225 : vector<8x144xf32>
    %228 = arith.divf %226, %227 : vector<8x144xf32>
    %229 = vector.extract_strided_slice %228 {offsets = [0, 0], sizes = [8, 48], strides = [1, 1]} : vector<8x144xf32> to vector<8x48xf32>
    %230 = vector.extract_strided_slice %228 {offsets = [0, 48], sizes = [8, 48], strides = [1, 1]} : vector<8x144xf32> to vector<8x48xf32>
    %231 = vector.extract_strided_slice %228 {offsets = [0, 96], sizes = [8, 48], strides = [1, 1]} : vector<8x144xf32> to vector<8x48xf32>
    %232 = vector.extract_strided_slice %222 {offsets = [0, 144], sizes = [8, 48], strides = [1, 1]} : vector<8x192xf32> to vector<8x48xf32>
    %233 = math.tanh %232 : vector<8x48xf32>
    %234 = arith.mulf %230, %156 : vector<8x48xf32>
    %235 = arith.mulf %229, %233 : vector<8x48xf32>
    %236 = arith.addf %234, %235 : vector<8x48xf32>
    %237 = math.tanh %236 : vector<8x48xf32>
    %238 = arith.mulf %231, %237 : vector<8x48xf32>
    %239 = vector.extract_strided_slice %199 {offsets = [8, 0], sizes = [8, 192], strides = [1, 1]} : vector<16x192xf32> to vector<8x192xf32>
    %cst_57 = arith.constant dense<0.000000e+00> : vector<8x192xf32>
    %240 = tpu.matmul %178, %0, %cst_57 {dimension_numbers = #tpu.dot_dimension_numbers<[1], [0], [0], [1], [0, 0, 1, 1], [], []>} : vector<8x48xf32>, vector<48x192xf32>, vector<8x192xf32> -> vector<8x192xf32>
    %cst_58 = arith.constant dense<0.000000e+00> : vector<8x192xf32>
    %241 = tpu.matmul %197, %1, %cst_58 {dimension_numbers = #tpu.dot_dimension_numbers<[1], [0], [0], [1], [0, 0, 1, 1], [], []>} : vector<8x48xf32>, vector<48x192xf32>, vector<8x192xf32> -> vector<8x192xf32>
    %242 = arith.addf %239, %240 : vector<8x192xf32>
    %243 = vector.extract_strided_slice %242 {offsets = [0, 0], sizes = [8, 144], strides = [1, 1]} : vector<8x192xf32> to vector<8x144xf32>
    %244 = arith.negf %243 : vector<8x144xf32>
    %245 = math.exp %244 : vector<8x144xf32>
    %cst_59 = arith.constant 1.000000e+00 : f32
    %246 = vector.broadcast %cst_59 : f32 to vector<8x144xf32>
    %247 = arith.addf %246, %245 : vector<8x144xf32>
    %248 = arith.divf %246, %247 : vector<8x144xf32>
    %249 = vector.extract_strided_slice %248 {offsets = [0, 0], sizes = [8, 48], strides = [1, 1]} : vector<8x144xf32> to vector<8x48xf32>
    %250 = vector.extract_strided_slice %248 {offsets = [0, 48], sizes = [8, 48], strides = [1, 1]} : vector<8x144xf32> to vector<8x48xf32>
    %251 = vector.extract_strided_slice %248 {offsets = [0, 96], sizes = [8, 48], strides = [1, 1]} : vector<8x144xf32> to vector<8x48xf32>
    %252 = vector.extract_strided_slice %242 {offsets = [0, 144], sizes = [8, 48], strides = [1, 1]} : vector<8x192xf32> to vector<8x48xf32>
    %253 = math.tanh %252 : vector<8x48xf32>
    %254 = arith.mulf %250, %176 : vector<8x48xf32>
    %255 = arith.mulf %249, %253 : vector<8x48xf32>
    %256 = arith.addf %254, %255 : vector<8x48xf32>
    %257 = math.tanh %256 : vector<8x48xf32>
    %258 = arith.mulf %251, %257 : vector<8x48xf32>
    %cst_60 = arith.constant dense<0.000000e+00> : vector<8x192xf32>
    %259 = tpu.matmul %258, %2, %cst_60 {dimension_numbers = #tpu.dot_dimension_numbers<[1], [0], [0], [1], [0, 0, 1, 1], [], []>} : vector<8x48xf32>, vector<48x192xf32>, vector<8x192xf32> -> vector<8x192xf32>
    %260 = arith.addf %241, %259 : vector<8x192xf32>
    %261 = arith.addf %260, %116 : vector<8x192xf32>
    %262 = vector.extract_strided_slice %261 {offsets = [0, 0], sizes = [8, 144], strides = [1, 1]} : vector<8x192xf32> to vector<8x144xf32>
    %263 = arith.negf %262 : vector<8x144xf32>
    %264 = math.exp %263 : vector<8x144xf32>
    %cst_61 = arith.constant 1.000000e+00 : f32
    %265 = vector.broadcast %cst_61 : f32 to vector<8x144xf32>
    %266 = arith.addf %265, %264 : vector<8x144xf32>
    %267 = arith.divf %265, %266 : vector<8x144xf32>
    %268 = vector.extract_strided_slice %267 {offsets = [0, 0], sizes = [8, 48], strides = [1, 1]} : vector<8x144xf32> to vector<8x48xf32>
    %269 = vector.extract_strided_slice %267 {offsets = [0, 48], sizes = [8, 48], strides = [1, 1]} : vector<8x144xf32> to vector<8x48xf32>
    %270 = vector.extract_strided_slice %267 {offsets = [0, 96], sizes = [8, 48], strides = [1, 1]} : vector<8x144xf32> to vector<8x48xf32>
    %271 = vector.extract_strided_slice %261 {offsets = [0, 144], sizes = [8, 48], strides = [1, 1]} : vector<8x192xf32> to vector<8x48xf32>
    %272 = math.tanh %271 : vector<8x48xf32>
    %273 = arith.mulf %269, %195 : vector<8x48xf32>
    %274 = arith.mulf %268, %272 : vector<8x48xf32>
    %275 = arith.addf %273, %274 : vector<8x48xf32>
    %276 = math.tanh %275 : vector<8x48xf32>
    %277 = arith.mulf %270, %276 : vector<8x48xf32>
    %c2_62 = arith.constant 2 : index
    %c0_63 = arith.constant 0 : index
    %c0_64 = arith.constant 0 : index
    %278 = vector.load %arg6[%c2_62, %c0_63, %c0_64] : memref<12x16x192xf32, #tpu.memory_space<vmem>>, vector<1x16x192xf32>
    %279 = vector.shape_cast %278 : vector<1x16x192xf32> to vector<16x192xf32>
    %280 = vector.extract_strided_slice %279 {offsets = [0, 0], sizes = [8, 192], strides = [1, 1]} : vector<16x192xf32> to vector<8x192xf32>
    %cst_65 = arith.constant dense<0.000000e+00> : vector<8x192xf32>
    %281 = tpu.matmul %219, %0, %cst_65 {dimension_numbers = #tpu.dot_dimension_numbers<[1], [0], [0], [1], [0, 0, 1, 1], [], []>} : vector<8x48xf32>, vector<48x192xf32>, vector<8x192xf32> -> vector<8x192xf32>
    %cst_66 = arith.constant dense<0.000000e+00> : vector<8x192xf32>
    %282 = tpu.matmul %238, %1, %cst_66 {dimension_numbers = #tpu.dot_dimension_numbers<[1], [0], [0], [1], [0, 0, 1, 1], [], []>} : vector<8x48xf32>, vector<48x192xf32>, vector<8x192xf32> -> vector<8x192xf32>
    %283 = arith.addf %280, %281 : vector<8x192xf32>
    %284 = vector.extract_strided_slice %283 {offsets = [0, 0], sizes = [8, 144], strides = [1, 1]} : vector<8x192xf32> to vector<8x144xf32>
    %285 = arith.negf %284 : vector<8x144xf32>
    %286 = math.exp %285 : vector<8x144xf32>
    %cst_67 = arith.constant 1.000000e+00 : f32
    %287 = vector.broadcast %cst_67 : f32 to vector<8x144xf32>
    %288 = arith.addf %287, %286 : vector<8x144xf32>
    %289 = arith.divf %287, %288 : vector<8x144xf32>
    %290 = vector.extract_strided_slice %289 {offsets = [0, 0], sizes = [8, 48], strides = [1, 1]} : vector<8x144xf32> to vector<8x48xf32>
    %291 = vector.extract_strided_slice %289 {offsets = [0, 48], sizes = [8, 48], strides = [1, 1]} : vector<8x144xf32> to vector<8x48xf32>
    %292 = vector.extract_strided_slice %289 {offsets = [0, 96], sizes = [8, 48], strides = [1, 1]} : vector<8x144xf32> to vector<8x48xf32>
    %293 = vector.extract_strided_slice %283 {offsets = [0, 144], sizes = [8, 48], strides = [1, 1]} : vector<8x192xf32> to vector<8x48xf32>
    %294 = math.tanh %293 : vector<8x48xf32>
    %295 = arith.mulf %291, %217 : vector<8x48xf32>
    %296 = arith.mulf %290, %294 : vector<8x48xf32>
    %297 = arith.addf %295, %296 : vector<8x48xf32>
    %298 = math.tanh %297 : vector<8x48xf32>
    %299 = arith.mulf %292, %298 : vector<8x48xf32>
    %cst_68 = arith.constant dense<0.000000e+00> : vector<8x192xf32>
    %300 = tpu.matmul %299, %2, %cst_68 {dimension_numbers = #tpu.dot_dimension_numbers<[1], [0], [0], [1], [0, 0, 1, 1], [], []>} : vector<8x48xf32>, vector<48x192xf32>, vector<8x192xf32> -> vector<8x192xf32>
    %301 = arith.addf %282, %300 : vector<8x192xf32>
    %302 = arith.addf %301, %116 : vector<8x192xf32>
    %303 = vector.extract_strided_slice %302 {offsets = [0, 0], sizes = [8, 144], strides = [1, 1]} : vector<8x192xf32> to vector<8x144xf32>
    %304 = arith.negf %303 : vector<8x144xf32>
    %305 = math.exp %304 : vector<8x144xf32>
    %cst_69 = arith.constant 1.000000e+00 : f32
    %306 = vector.broadcast %cst_69 : f32 to vector<8x144xf32>
    %307 = arith.addf %306, %305 : vector<8x144xf32>
    %308 = arith.divf %306, %307 : vector<8x144xf32>
    %309 = vector.extract_strided_slice %308 {offsets = [0, 0], sizes = [8, 48], strides = [1, 1]} : vector<8x144xf32> to vector<8x48xf32>
    %310 = vector.extract_strided_slice %308 {offsets = [0, 48], sizes = [8, 48], strides = [1, 1]} : vector<8x144xf32> to vector<8x48xf32>
    %311 = vector.extract_strided_slice %308 {offsets = [0, 96], sizes = [8, 48], strides = [1, 1]} : vector<8x144xf32> to vector<8x48xf32>
    %312 = vector.extract_strided_slice %302 {offsets = [0, 144], sizes = [8, 48], strides = [1, 1]} : vector<8x192xf32> to vector<8x48xf32>
    %313 = math.tanh %312 : vector<8x48xf32>
    %314 = arith.mulf %310, %236 : vector<8x48xf32>
    %315 = arith.mulf %309, %313 : vector<8x48xf32>
    %316 = arith.addf %314, %315 : vector<8x48xf32>
    %317 = math.tanh %316 : vector<8x48xf32>
    %318 = arith.mulf %311, %317 : vector<8x48xf32>
    %319 = vector.extract_strided_slice %279 {offsets = [8, 0], sizes = [8, 192], strides = [1, 1]} : vector<16x192xf32> to vector<8x192xf32>
    %cst_70 = arith.constant dense<0.000000e+00> : vector<8x192xf32>
    %320 = tpu.matmul %258, %0, %cst_70 {dimension_numbers = #tpu.dot_dimension_numbers<[1], [0], [0], [1], [0, 0, 1, 1], [], []>} : vector<8x48xf32>, vector<48x192xf32>, vector<8x192xf32> -> vector<8x192xf32>
    %cst_71 = arith.constant dense<0.000000e+00> : vector<8x192xf32>
    %321 = tpu.matmul %277, %1, %cst_71 {dimension_numbers = #tpu.dot_dimension_numbers<[1], [0], [0], [1], [0, 0, 1, 1], [], []>} : vector<8x48xf32>, vector<48x192xf32>, vector<8x192xf32> -> vector<8x192xf32>
    %322 = arith.addf %319, %320 : vector<8x192xf32>
    %323 = vector.extract_strided_slice %322 {offsets = [0, 0], sizes = [8, 144], strides = [1, 1]} : vector<8x192xf32> to vector<8x144xf32>
    %324 = arith.negf %323 : vector<8x144xf32>
    %325 = math.exp %324 : vector<8x144xf32>
    %cst_72 = arith.constant 1.000000e+00 : f32
    %326 = vector.broadcast %cst_72 : f32 to vector<8x144xf32>
    %327 = arith.addf %326, %325 : vector<8x144xf32>
    %328 = arith.divf %326, %327 : vector<8x144xf32>
    %329 = vector.extract_strided_slice %328 {offsets = [0, 0], sizes = [8, 48], strides = [1, 1]} : vector<8x144xf32> to vector<8x48xf32>
    %330 = vector.extract_strided_slice %328 {offsets = [0, 48], sizes = [8, 48], strides = [1, 1]} : vector<8x144xf32> to vector<8x48xf32>
    %331 = vector.extract_strided_slice %328 {offsets = [0, 96], sizes = [8, 48], strides = [1, 1]} : vector<8x144xf32> to vector<8x48xf32>
    %332 = vector.extract_strided_slice %322 {offsets = [0, 144], sizes = [8, 48], strides = [1, 1]} : vector<8x192xf32> to vector<8x48xf32>
    %333 = math.tanh %332 : vector<8x48xf32>
    %334 = arith.mulf %330, %256 : vector<8x48xf32>
    %335 = arith.mulf %329, %333 : vector<8x48xf32>
    %336 = arith.addf %334, %335 : vector<8x48xf32>
    %337 = math.tanh %336 : vector<8x48xf32>
    %338 = arith.mulf %331, %337 : vector<8x48xf32>
    %cst_73 = arith.constant dense<0.000000e+00> : vector<8x192xf32>
    %339 = tpu.matmul %338, %2, %cst_73 {dimension_numbers = #tpu.dot_dimension_numbers<[1], [0], [0], [1], [0, 0, 1, 1], [], []>} : vector<8x48xf32>, vector<48x192xf32>, vector<8x192xf32> -> vector<8x192xf32>
    %340 = arith.addf %321, %339 : vector<8x192xf32>
    %341 = arith.addf %340, %116 : vector<8x192xf32>
    %342 = vector.extract_strided_slice %341 {offsets = [0, 0], sizes = [8, 144], strides = [1, 1]} : vector<8x192xf32> to vector<8x144xf32>
    %343 = arith.negf %342 : vector<8x144xf32>
    %344 = math.exp %343 : vector<8x144xf32>
    %cst_74 = arith.constant 1.000000e+00 : f32
    %345 = vector.broadcast %cst_74 : f32 to vector<8x144xf32>
    %346 = arith.addf %345, %344 : vector<8x144xf32>
    %347 = arith.divf %345, %346 : vector<8x144xf32>
    %348 = vector.extract_strided_slice %347 {offsets = [0, 0], sizes = [8, 48], strides = [1, 1]} : vector<8x144xf32> to vector<8x48xf32>
    %349 = vector.extract_strided_slice %347 {offsets = [0, 48], sizes = [8, 48], strides = [1, 1]} : vector<8x144xf32> to vector<8x48xf32>
    %350 = vector.extract_strided_slice %347 {offsets = [0, 96], sizes = [8, 48], strides = [1, 1]} : vector<8x144xf32> to vector<8x48xf32>
    %351 = vector.extract_strided_slice %341 {offsets = [0, 144], sizes = [8, 48], strides = [1, 1]} : vector<8x192xf32> to vector<8x48xf32>
    %352 = math.tanh %351 : vector<8x48xf32>
    %353 = arith.mulf %349, %275 : vector<8x48xf32>
    %354 = arith.mulf %348, %352 : vector<8x48xf32>
    %355 = arith.addf %353, %354 : vector<8x48xf32>
    %356 = math.tanh %355 : vector<8x48xf32>
    %357 = arith.mulf %350, %356 : vector<8x48xf32>
    %c3_75 = arith.constant 3 : index
    %c0_76 = arith.constant 0 : index
    %c0_77 = arith.constant 0 : index
    %358 = vector.load %arg6[%c3_75, %c0_76, %c0_77] : memref<12x16x192xf32, #tpu.memory_space<vmem>>, vector<1x16x192xf32>
    %359 = vector.shape_cast %358 : vector<1x16x192xf32> to vector<16x192xf32>
    %360 = vector.extract_strided_slice %359 {offsets = [0, 0], sizes = [8, 192], strides = [1, 1]} : vector<16x192xf32> to vector<8x192xf32>
    %cst_78 = arith.constant dense<0.000000e+00> : vector<8x192xf32>
    %361 = tpu.matmul %299, %0, %cst_78 {dimension_numbers = #tpu.dot_dimension_numbers<[1], [0], [0], [1], [0, 0, 1, 1], [], []>} : vector<8x48xf32>, vector<48x192xf32>, vector<8x192xf32> -> vector<8x192xf32>
    %cst_79 = arith.constant dense<0.000000e+00> : vector<8x192xf32>
    %362 = tpu.matmul %318, %1, %cst_79 {dimension_numbers = #tpu.dot_dimension_numbers<[1], [0], [0], [1], [0, 0, 1, 1], [], []>} : vector<8x48xf32>, vector<48x192xf32>, vector<8x192xf32> -> vector<8x192xf32>
    %363 = arith.addf %360, %361 : vector<8x192xf32>
    %364 = vector.extract_strided_slice %363 {offsets = [0, 0], sizes = [8, 144], strides = [1, 1]} : vector<8x192xf32> to vector<8x144xf32>
    %365 = arith.negf %364 : vector<8x144xf32>
    %366 = math.exp %365 : vector<8x144xf32>
    %cst_80 = arith.constant 1.000000e+00 : f32
    %367 = vector.broadcast %cst_80 : f32 to vector<8x144xf32>
    %368 = arith.addf %367, %366 : vector<8x144xf32>
    %369 = arith.divf %367, %368 : vector<8x144xf32>
    %370 = vector.extract_strided_slice %369 {offsets = [0, 0], sizes = [8, 48], strides = [1, 1]} : vector<8x144xf32> to vector<8x48xf32>
    %371 = vector.extract_strided_slice %369 {offsets = [0, 48], sizes = [8, 48], strides = [1, 1]} : vector<8x144xf32> to vector<8x48xf32>
    %372 = vector.extract_strided_slice %369 {offsets = [0, 96], sizes = [8, 48], strides = [1, 1]} : vector<8x144xf32> to vector<8x48xf32>
    %373 = vector.extract_strided_slice %363 {offsets = [0, 144], sizes = [8, 48], strides = [1, 1]} : vector<8x192xf32> to vector<8x48xf32>
    %374 = math.tanh %373 : vector<8x48xf32>
    %375 = arith.mulf %371, %297 : vector<8x48xf32>
    %376 = arith.mulf %370, %374 : vector<8x48xf32>
    %377 = arith.addf %375, %376 : vector<8x48xf32>
    %378 = math.tanh %377 : vector<8x48xf32>
    %379 = arith.mulf %372, %378 : vector<8x48xf32>
    %cst_81 = arith.constant dense<0.000000e+00> : vector<8x192xf32>
    %380 = tpu.matmul %379, %2, %cst_81 {dimension_numbers = #tpu.dot_dimension_numbers<[1], [0], [0], [1], [0, 0, 1, 1], [], []>} : vector<8x48xf32>, vector<48x192xf32>, vector<8x192xf32> -> vector<8x192xf32>
    %381 = arith.addf %362, %380 : vector<8x192xf32>
    %382 = arith.addf %381, %116 : vector<8x192xf32>
    %383 = vector.extract_strided_slice %382 {offsets = [0, 0], sizes = [8, 144], strides = [1, 1]} : vector<8x192xf32> to vector<8x144xf32>
    %384 = arith.negf %383 : vector<8x144xf32>
    %385 = math.exp %384 : vector<8x144xf32>
    %cst_82 = arith.constant 1.000000e+00 : f32
    %386 = vector.broadcast %cst_82 : f32 to vector<8x144xf32>
    %387 = arith.addf %386, %385 : vector<8x144xf32>
    %388 = arith.divf %386, %387 : vector<8x144xf32>
    %389 = vector.extract_strided_slice %388 {offsets = [0, 0], sizes = [8, 48], strides = [1, 1]} : vector<8x144xf32> to vector<8x48xf32>
    %390 = vector.extract_strided_slice %388 {offsets = [0, 48], sizes = [8, 48], strides = [1, 1]} : vector<8x144xf32> to vector<8x48xf32>
    %391 = vector.extract_strided_slice %388 {offsets = [0, 96], sizes = [8, 48], strides = [1, 1]} : vector<8x144xf32> to vector<8x48xf32>
    %392 = vector.extract_strided_slice %382 {offsets = [0, 144], sizes = [8, 48], strides = [1, 1]} : vector<8x192xf32> to vector<8x48xf32>
    %393 = math.tanh %392 : vector<8x48xf32>
    %394 = arith.mulf %390, %316 : vector<8x48xf32>
    %395 = arith.mulf %389, %393 : vector<8x48xf32>
    %396 = arith.addf %394, %395 : vector<8x48xf32>
    %397 = math.tanh %396 : vector<8x48xf32>
    %398 = arith.mulf %391, %397 : vector<8x48xf32>
    %399 = vector.extract_strided_slice %359 {offsets = [8, 0], sizes = [8, 192], strides = [1, 1]} : vector<16x192xf32> to vector<8x192xf32>
    %cst_83 = arith.constant dense<0.000000e+00> : vector<8x192xf32>
    %400 = tpu.matmul %338, %0, %cst_83 {dimension_numbers = #tpu.dot_dimension_numbers<[1], [0], [0], [1], [0, 0, 1, 1], [], []>} : vector<8x48xf32>, vector<48x192xf32>, vector<8x192xf32> -> vector<8x192xf32>
    %cst_84 = arith.constant dense<0.000000e+00> : vector<8x192xf32>
    %401 = tpu.matmul %357, %1, %cst_84 {dimension_numbers = #tpu.dot_dimension_numbers<[1], [0], [0], [1], [0, 0, 1, 1], [], []>} : vector<8x48xf32>, vector<48x192xf32>, vector<8x192xf32> -> vector<8x192xf32>
    %402 = arith.addf %399, %400 : vector<8x192xf32>
    %403 = vector.extract_strided_slice %402 {offsets = [0, 0], sizes = [8, 144], strides = [1, 1]} : vector<8x192xf32> to vector<8x144xf32>
    %404 = arith.negf %403 : vector<8x144xf32>
    %405 = math.exp %404 : vector<8x144xf32>
    %cst_85 = arith.constant 1.000000e+00 : f32
    %406 = vector.broadcast %cst_85 : f32 to vector<8x144xf32>
    %407 = arith.addf %406, %405 : vector<8x144xf32>
    %408 = arith.divf %406, %407 : vector<8x144xf32>
    %409 = vector.extract_strided_slice %408 {offsets = [0, 0], sizes = [8, 48], strides = [1, 1]} : vector<8x144xf32> to vector<8x48xf32>
    %410 = vector.extract_strided_slice %408 {offsets = [0, 48], sizes = [8, 48], strides = [1, 1]} : vector<8x144xf32> to vector<8x48xf32>
    %411 = vector.extract_strided_slice %408 {offsets = [0, 96], sizes = [8, 48], strides = [1, 1]} : vector<8x144xf32> to vector<8x48xf32>
    %412 = vector.extract_strided_slice %402 {offsets = [0, 144], sizes = [8, 48], strides = [1, 1]} : vector<8x192xf32> to vector<8x48xf32>
    %413 = math.tanh %412 : vector<8x48xf32>
    %414 = arith.mulf %410, %336 : vector<8x48xf32>
    %415 = arith.mulf %409, %413 : vector<8x48xf32>
    %416 = arith.addf %414, %415 : vector<8x48xf32>
    %417 = math.tanh %416 : vector<8x48xf32>
    %418 = arith.mulf %411, %417 : vector<8x48xf32>
    %cst_86 = arith.constant dense<0.000000e+00> : vector<8x192xf32>
    %419 = tpu.matmul %418, %2, %cst_86 {dimension_numbers = #tpu.dot_dimension_numbers<[1], [0], [0], [1], [0, 0, 1, 1], [], []>} : vector<8x48xf32>, vector<48x192xf32>, vector<8x192xf32> -> vector<8x192xf32>
    %420 = arith.addf %401, %419 : vector<8x192xf32>
    %421 = arith.addf %420, %116 : vector<8x192xf32>
    %422 = vector.extract_strided_slice %421 {offsets = [0, 0], sizes = [8, 144], strides = [1, 1]} : vector<8x192xf32> to vector<8x144xf32>
    %423 = arith.negf %422 : vector<8x144xf32>
    %424 = math.exp %423 : vector<8x144xf32>
    %cst_87 = arith.constant 1.000000e+00 : f32
    %425 = vector.broadcast %cst_87 : f32 to vector<8x144xf32>
    %426 = arith.addf %425, %424 : vector<8x144xf32>
    %427 = arith.divf %425, %426 : vector<8x144xf32>
    %428 = vector.extract_strided_slice %427 {offsets = [0, 0], sizes = [8, 48], strides = [1, 1]} : vector<8x144xf32> to vector<8x48xf32>
    %429 = vector.extract_strided_slice %427 {offsets = [0, 48], sizes = [8, 48], strides = [1, 1]} : vector<8x144xf32> to vector<8x48xf32>
    %430 = vector.extract_strided_slice %427 {offsets = [0, 96], sizes = [8, 48], strides = [1, 1]} : vector<8x144xf32> to vector<8x48xf32>
    %431 = vector.extract_strided_slice %421 {offsets = [0, 144], sizes = [8, 48], strides = [1, 1]} : vector<8x192xf32> to vector<8x48xf32>
    %432 = math.tanh %431 : vector<8x48xf32>
    %433 = arith.mulf %429, %355 : vector<8x48xf32>
    %434 = arith.mulf %428, %432 : vector<8x48xf32>
    %435 = arith.addf %433, %434 : vector<8x48xf32>
    %436 = math.tanh %435 : vector<8x48xf32>
    %437 = arith.mulf %430, %436 : vector<8x48xf32>
    %c4_88 = arith.constant 4 : index
    %c0_89 = arith.constant 0 : index
    %c0_90 = arith.constant 0 : index
    %438 = vector.load %arg6[%c4_88, %c0_89, %c0_90] : memref<12x16x192xf32, #tpu.memory_space<vmem>>, vector<1x16x192xf32>
    %439 = vector.shape_cast %438 : vector<1x16x192xf32> to vector<16x192xf32>
    %440 = vector.extract_strided_slice %439 {offsets = [0, 0], sizes = [8, 192], strides = [1, 1]} : vector<16x192xf32> to vector<8x192xf32>
    %cst_91 = arith.constant dense<0.000000e+00> : vector<8x192xf32>
    %441 = tpu.matmul %379, %0, %cst_91 {dimension_numbers = #tpu.dot_dimension_numbers<[1], [0], [0], [1], [0, 0, 1, 1], [], []>} : vector<8x48xf32>, vector<48x192xf32>, vector<8x192xf32> -> vector<8x192xf32>
    %cst_92 = arith.constant dense<0.000000e+00> : vector<8x192xf32>
    %442 = tpu.matmul %398, %1, %cst_92 {dimension_numbers = #tpu.dot_dimension_numbers<[1], [0], [0], [1], [0, 0, 1, 1], [], []>} : vector<8x48xf32>, vector<48x192xf32>, vector<8x192xf32> -> vector<8x192xf32>
    %443 = arith.addf %440, %441 : vector<8x192xf32>
    %444 = vector.extract_strided_slice %443 {offsets = [0, 0], sizes = [8, 144], strides = [1, 1]} : vector<8x192xf32> to vector<8x144xf32>
    %445 = arith.negf %444 : vector<8x144xf32>
    %446 = math.exp %445 : vector<8x144xf32>
    %cst_93 = arith.constant 1.000000e+00 : f32
    %447 = vector.broadcast %cst_93 : f32 to vector<8x144xf32>
    %448 = arith.addf %447, %446 : vector<8x144xf32>
    %449 = arith.divf %447, %448 : vector<8x144xf32>
    %450 = vector.extract_strided_slice %449 {offsets = [0, 0], sizes = [8, 48], strides = [1, 1]} : vector<8x144xf32> to vector<8x48xf32>
    %451 = vector.extract_strided_slice %449 {offsets = [0, 48], sizes = [8, 48], strides = [1, 1]} : vector<8x144xf32> to vector<8x48xf32>
    %452 = vector.extract_strided_slice %449 {offsets = [0, 96], sizes = [8, 48], strides = [1, 1]} : vector<8x144xf32> to vector<8x48xf32>
    %453 = vector.extract_strided_slice %443 {offsets = [0, 144], sizes = [8, 48], strides = [1, 1]} : vector<8x192xf32> to vector<8x48xf32>
    %454 = math.tanh %453 : vector<8x48xf32>
    %455 = arith.mulf %451, %377 : vector<8x48xf32>
    %456 = arith.mulf %450, %454 : vector<8x48xf32>
    %457 = arith.addf %455, %456 : vector<8x48xf32>
    %458 = math.tanh %457 : vector<8x48xf32>
    %459 = arith.mulf %452, %458 : vector<8x48xf32>
    %cst_94 = arith.constant dense<0.000000e+00> : vector<8x192xf32>
    %460 = tpu.matmul %459, %2, %cst_94 {dimension_numbers = #tpu.dot_dimension_numbers<[1], [0], [0], [1], [0, 0, 1, 1], [], []>} : vector<8x48xf32>, vector<48x192xf32>, vector<8x192xf32> -> vector<8x192xf32>
    %461 = arith.addf %442, %460 : vector<8x192xf32>
    %462 = arith.addf %461, %116 : vector<8x192xf32>
    %463 = vector.extract_strided_slice %462 {offsets = [0, 0], sizes = [8, 144], strides = [1, 1]} : vector<8x192xf32> to vector<8x144xf32>
    %464 = arith.negf %463 : vector<8x144xf32>
    %465 = math.exp %464 : vector<8x144xf32>
    %cst_95 = arith.constant 1.000000e+00 : f32
    %466 = vector.broadcast %cst_95 : f32 to vector<8x144xf32>
    %467 = arith.addf %466, %465 : vector<8x144xf32>
    %468 = arith.divf %466, %467 : vector<8x144xf32>
    %469 = vector.extract_strided_slice %468 {offsets = [0, 0], sizes = [8, 48], strides = [1, 1]} : vector<8x144xf32> to vector<8x48xf32>
    %470 = vector.extract_strided_slice %468 {offsets = [0, 48], sizes = [8, 48], strides = [1, 1]} : vector<8x144xf32> to vector<8x48xf32>
    %471 = vector.extract_strided_slice %468 {offsets = [0, 96], sizes = [8, 48], strides = [1, 1]} : vector<8x144xf32> to vector<8x48xf32>
    %472 = vector.extract_strided_slice %462 {offsets = [0, 144], sizes = [8, 48], strides = [1, 1]} : vector<8x192xf32> to vector<8x48xf32>
    %473 = math.tanh %472 : vector<8x48xf32>
    %474 = arith.mulf %470, %396 : vector<8x48xf32>
    %475 = arith.mulf %469, %473 : vector<8x48xf32>
    %476 = arith.addf %474, %475 : vector<8x48xf32>
    %477 = math.tanh %476 : vector<8x48xf32>
    %478 = arith.mulf %471, %477 : vector<8x48xf32>
    %479 = vector.extract_strided_slice %439 {offsets = [8, 0], sizes = [8, 192], strides = [1, 1]} : vector<16x192xf32> to vector<8x192xf32>
    %cst_96 = arith.constant dense<0.000000e+00> : vector<8x192xf32>
    %480 = tpu.matmul %418, %0, %cst_96 {dimension_numbers = #tpu.dot_dimension_numbers<[1], [0], [0], [1], [0, 0, 1, 1], [], []>} : vector<8x48xf32>, vector<48x192xf32>, vector<8x192xf32> -> vector<8x192xf32>
    %cst_97 = arith.constant dense<0.000000e+00> : vector<8x192xf32>
    %481 = tpu.matmul %437, %1, %cst_97 {dimension_numbers = #tpu.dot_dimension_numbers<[1], [0], [0], [1], [0, 0, 1, 1], [], []>} : vector<8x48xf32>, vector<48x192xf32>, vector<8x192xf32> -> vector<8x192xf32>
    %482 = arith.addf %479, %480 : vector<8x192xf32>
    %483 = vector.extract_strided_slice %482 {offsets = [0, 0], sizes = [8, 144], strides = [1, 1]} : vector<8x192xf32> to vector<8x144xf32>
    %484 = arith.negf %483 : vector<8x144xf32>
    %485 = math.exp %484 : vector<8x144xf32>
    %cst_98 = arith.constant 1.000000e+00 : f32
    %486 = vector.broadcast %cst_98 : f32 to vector<8x144xf32>
    %487 = arith.addf %486, %485 : vector<8x144xf32>
    %488 = arith.divf %486, %487 : vector<8x144xf32>
    %489 = vector.extract_strided_slice %488 {offsets = [0, 0], sizes = [8, 48], strides = [1, 1]} : vector<8x144xf32> to vector<8x48xf32>
    %490 = vector.extract_strided_slice %488 {offsets = [0, 48], sizes = [8, 48], strides = [1, 1]} : vector<8x144xf32> to vector<8x48xf32>
    %491 = vector.extract_strided_slice %488 {offsets = [0, 96], sizes = [8, 48], strides = [1, 1]} : vector<8x144xf32> to vector<8x48xf32>
    %492 = vector.extract_strided_slice %482 {offsets = [0, 144], sizes = [8, 48], strides = [1, 1]} : vector<8x192xf32> to vector<8x48xf32>
    %493 = math.tanh %492 : vector<8x48xf32>
    %494 = arith.mulf %490, %416 : vector<8x48xf32>
    %495 = arith.mulf %489, %493 : vector<8x48xf32>
    %496 = arith.addf %494, %495 : vector<8x48xf32>
    %497 = math.tanh %496 : vector<8x48xf32>
    %498 = arith.mulf %491, %497 : vector<8x48xf32>
    %cst_99 = arith.constant dense<0.000000e+00> : vector<8x192xf32>
    %499 = tpu.matmul %498, %2, %cst_99 {dimension_numbers = #tpu.dot_dimension_numbers<[1], [0], [0], [1], [0, 0, 1, 1], [], []>} : vector<8x48xf32>, vector<48x192xf32>, vector<8x192xf32> -> vector<8x192xf32>
    %500 = arith.addf %481, %499 : vector<8x192xf32>
    %501 = arith.addf %500, %116 : vector<8x192xf32>
    %502 = vector.extract_strided_slice %501 {offsets = [0, 0], sizes = [8, 144], strides = [1, 1]} : vector<8x192xf32> to vector<8x144xf32>
    %503 = arith.negf %502 : vector<8x144xf32>
    %504 = math.exp %503 : vector<8x144xf32>
    %cst_100 = arith.constant 1.000000e+00 : f32
    %505 = vector.broadcast %cst_100 : f32 to vector<8x144xf32>
    %506 = arith.addf %505, %504 : vector<8x144xf32>
    %507 = arith.divf %505, %506 : vector<8x144xf32>
    %508 = vector.extract_strided_slice %507 {offsets = [0, 0], sizes = [8, 48], strides = [1, 1]} : vector<8x144xf32> to vector<8x48xf32>
    %509 = vector.extract_strided_slice %507 {offsets = [0, 48], sizes = [8, 48], strides = [1, 1]} : vector<8x144xf32> to vector<8x48xf32>
    %510 = vector.extract_strided_slice %507 {offsets = [0, 96], sizes = [8, 48], strides = [1, 1]} : vector<8x144xf32> to vector<8x48xf32>
    %511 = vector.extract_strided_slice %501 {offsets = [0, 144], sizes = [8, 48], strides = [1, 1]} : vector<8x192xf32> to vector<8x48xf32>
    %512 = math.tanh %511 : vector<8x48xf32>
    %513 = arith.mulf %509, %435 : vector<8x48xf32>
    %514 = arith.mulf %508, %512 : vector<8x48xf32>
    %515 = arith.addf %513, %514 : vector<8x48xf32>
    %516 = math.tanh %515 : vector<8x48xf32>
    %517 = arith.mulf %510, %516 : vector<8x48xf32>
    %c5_101 = arith.constant 5 : index
    %c0_102 = arith.constant 0 : index
    %c0_103 = arith.constant 0 : index
    %518 = vector.load %arg6[%c5_101, %c0_102, %c0_103] : memref<12x16x192xf32, #tpu.memory_space<vmem>>, vector<1x16x192xf32>
    %519 = vector.shape_cast %518 : vector<1x16x192xf32> to vector<16x192xf32>
    %520 = vector.extract_strided_slice %519 {offsets = [0, 0], sizes = [8, 192], strides = [1, 1]} : vector<16x192xf32> to vector<8x192xf32>
    %cst_104 = arith.constant dense<0.000000e+00> : vector<8x192xf32>
    %521 = tpu.matmul %459, %0, %cst_104 {dimension_numbers = #tpu.dot_dimension_numbers<[1], [0], [0], [1], [0, 0, 1, 1], [], []>} : vector<8x48xf32>, vector<48x192xf32>, vector<8x192xf32> -> vector<8x192xf32>
    %cst_105 = arith.constant dense<0.000000e+00> : vector<8x192xf32>
    %522 = tpu.matmul %478, %1, %cst_105 {dimension_numbers = #tpu.dot_dimension_numbers<[1], [0], [0], [1], [0, 0, 1, 1], [], []>} : vector<8x48xf32>, vector<48x192xf32>, vector<8x192xf32> -> vector<8x192xf32>
    %523 = arith.addf %520, %521 : vector<8x192xf32>
    %524 = vector.extract_strided_slice %523 {offsets = [0, 0], sizes = [8, 144], strides = [1, 1]} : vector<8x192xf32> to vector<8x144xf32>
    %525 = arith.negf %524 : vector<8x144xf32>
    %526 = math.exp %525 : vector<8x144xf32>
    %cst_106 = arith.constant 1.000000e+00 : f32
    %527 = vector.broadcast %cst_106 : f32 to vector<8x144xf32>
    %528 = arith.addf %527, %526 : vector<8x144xf32>
    %529 = arith.divf %527, %528 : vector<8x144xf32>
    %530 = vector.extract_strided_slice %529 {offsets = [0, 0], sizes = [8, 48], strides = [1, 1]} : vector<8x144xf32> to vector<8x48xf32>
    %531 = vector.extract_strided_slice %529 {offsets = [0, 48], sizes = [8, 48], strides = [1, 1]} : vector<8x144xf32> to vector<8x48xf32>
    %532 = vector.extract_strided_slice %529 {offsets = [0, 96], sizes = [8, 48], strides = [1, 1]} : vector<8x144xf32> to vector<8x48xf32>
    %533 = vector.extract_strided_slice %523 {offsets = [0, 144], sizes = [8, 48], strides = [1, 1]} : vector<8x192xf32> to vector<8x48xf32>
    %534 = math.tanh %533 : vector<8x48xf32>
    %535 = arith.mulf %531, %457 : vector<8x48xf32>
    %536 = arith.mulf %530, %534 : vector<8x48xf32>
    %537 = arith.addf %535, %536 : vector<8x48xf32>
    %538 = math.tanh %537 : vector<8x48xf32>
    %539 = arith.mulf %532, %538 : vector<8x48xf32>
    %cst_107 = arith.constant dense<0.000000e+00> : vector<8x192xf32>
    %540 = tpu.matmul %539, %2, %cst_107 {dimension_numbers = #tpu.dot_dimension_numbers<[1], [0], [0], [1], [0, 0, 1, 1], [], []>} : vector<8x48xf32>, vector<48x192xf32>, vector<8x192xf32> -> vector<8x192xf32>
    %541 = arith.addf %522, %540 : vector<8x192xf32>
    %542 = arith.addf %541, %116 : vector<8x192xf32>
    %543 = vector.extract_strided_slice %542 {offsets = [0, 0], sizes = [8, 144], strides = [1, 1]} : vector<8x192xf32> to vector<8x144xf32>
    %544 = arith.negf %543 : vector<8x144xf32>
    %545 = math.exp %544 : vector<8x144xf32>
    %cst_108 = arith.constant 1.000000e+00 : f32
    %546 = vector.broadcast %cst_108 : f32 to vector<8x144xf32>
    %547 = arith.addf %546, %545 : vector<8x144xf32>
    %548 = arith.divf %546, %547 : vector<8x144xf32>
    %549 = vector.extract_strided_slice %548 {offsets = [0, 0], sizes = [8, 48], strides = [1, 1]} : vector<8x144xf32> to vector<8x48xf32>
    %550 = vector.extract_strided_slice %548 {offsets = [0, 48], sizes = [8, 48], strides = [1, 1]} : vector<8x144xf32> to vector<8x48xf32>
    %551 = vector.extract_strided_slice %548 {offsets = [0, 96], sizes = [8, 48], strides = [1, 1]} : vector<8x144xf32> to vector<8x48xf32>
    %552 = vector.extract_strided_slice %542 {offsets = [0, 144], sizes = [8, 48], strides = [1, 1]} : vector<8x192xf32> to vector<8x48xf32>
    %553 = math.tanh %552 : vector<8x48xf32>
    %554 = arith.mulf %550, %476 : vector<8x48xf32>
    %555 = arith.mulf %549, %553 : vector<8x48xf32>
    %556 = arith.addf %554, %555 : vector<8x48xf32>
    %557 = math.tanh %556 : vector<8x48xf32>
    %558 = arith.mulf %551, %557 : vector<8x48xf32>
    %559 = vector.extract_strided_slice %519 {offsets = [8, 0], sizes = [8, 192], strides = [1, 1]} : vector<16x192xf32> to vector<8x192xf32>
    %cst_109 = arith.constant dense<0.000000e+00> : vector<8x192xf32>
    %560 = tpu.matmul %498, %0, %cst_109 {dimension_numbers = #tpu.dot_dimension_numbers<[1], [0], [0], [1], [0, 0, 1, 1], [], []>} : vector<8x48xf32>, vector<48x192xf32>, vector<8x192xf32> -> vector<8x192xf32>
    %cst_110 = arith.constant dense<0.000000e+00> : vector<8x192xf32>
    %561 = tpu.matmul %517, %1, %cst_110 {dimension_numbers = #tpu.dot_dimension_numbers<[1], [0], [0], [1], [0, 0, 1, 1], [], []>} : vector<8x48xf32>, vector<48x192xf32>, vector<8x192xf32> -> vector<8x192xf32>
    %562 = arith.addf %559, %560 : vector<8x192xf32>
    %563 = vector.extract_strided_slice %562 {offsets = [0, 0], sizes = [8, 144], strides = [1, 1]} : vector<8x192xf32> to vector<8x144xf32>
    %564 = arith.negf %563 : vector<8x144xf32>
    %565 = math.exp %564 : vector<8x144xf32>
    %cst_111 = arith.constant 1.000000e+00 : f32
    %566 = vector.broadcast %cst_111 : f32 to vector<8x144xf32>
    %567 = arith.addf %566, %565 : vector<8x144xf32>
    %568 = arith.divf %566, %567 : vector<8x144xf32>
    %569 = vector.extract_strided_slice %568 {offsets = [0, 0], sizes = [8, 48], strides = [1, 1]} : vector<8x144xf32> to vector<8x48xf32>
    %570 = vector.extract_strided_slice %568 {offsets = [0, 48], sizes = [8, 48], strides = [1, 1]} : vector<8x144xf32> to vector<8x48xf32>
    %571 = vector.extract_strided_slice %568 {offsets = [0, 96], sizes = [8, 48], strides = [1, 1]} : vector<8x144xf32> to vector<8x48xf32>
    %572 = vector.extract_strided_slice %562 {offsets = [0, 144], sizes = [8, 48], strides = [1, 1]} : vector<8x192xf32> to vector<8x48xf32>
    %573 = math.tanh %572 : vector<8x48xf32>
    %574 = arith.mulf %570, %496 : vector<8x48xf32>
    %575 = arith.mulf %569, %573 : vector<8x48xf32>
    %576 = arith.addf %574, %575 : vector<8x48xf32>
    %577 = math.tanh %576 : vector<8x48xf32>
    %578 = arith.mulf %571, %577 : vector<8x48xf32>
    %cst_112 = arith.constant dense<0.000000e+00> : vector<8x192xf32>
    %579 = tpu.matmul %578, %2, %cst_112 {dimension_numbers = #tpu.dot_dimension_numbers<[1], [0], [0], [1], [0, 0, 1, 1], [], []>} : vector<8x48xf32>, vector<48x192xf32>, vector<8x192xf32> -> vector<8x192xf32>
    %580 = arith.addf %561, %579 : vector<8x192xf32>
    %581 = arith.addf %580, %116 : vector<8x192xf32>
    %582 = vector.extract_strided_slice %581 {offsets = [0, 0], sizes = [8, 144], strides = [1, 1]} : vector<8x192xf32> to vector<8x144xf32>
    %583 = arith.negf %582 : vector<8x144xf32>
    %584 = math.exp %583 : vector<8x144xf32>
    %cst_113 = arith.constant 1.000000e+00 : f32
    %585 = vector.broadcast %cst_113 : f32 to vector<8x144xf32>
    %586 = arith.addf %585, %584 : vector<8x144xf32>
    %587 = arith.divf %585, %586 : vector<8x144xf32>
    %588 = vector.extract_strided_slice %587 {offsets = [0, 0], sizes = [8, 48], strides = [1, 1]} : vector<8x144xf32> to vector<8x48xf32>
    %589 = vector.extract_strided_slice %587 {offsets = [0, 48], sizes = [8, 48], strides = [1, 1]} : vector<8x144xf32> to vector<8x48xf32>
    %590 = vector.extract_strided_slice %587 {offsets = [0, 96], sizes = [8, 48], strides = [1, 1]} : vector<8x144xf32> to vector<8x48xf32>
    %591 = vector.extract_strided_slice %581 {offsets = [0, 144], sizes = [8, 48], strides = [1, 1]} : vector<8x192xf32> to vector<8x48xf32>
    %592 = math.tanh %591 : vector<8x48xf32>
    %593 = arith.mulf %589, %515 : vector<8x48xf32>
    %594 = arith.mulf %588, %592 : vector<8x48xf32>
    %595 = arith.addf %593, %594 : vector<8x48xf32>
    %596 = math.tanh %595 : vector<8x48xf32>
    %597 = arith.mulf %590, %596 : vector<8x48xf32>
    %c6_114 = arith.constant 6 : index
    %c0_115 = arith.constant 0 : index
    %c0_116 = arith.constant 0 : index
    %598 = vector.load %arg6[%c6_114, %c0_115, %c0_116] : memref<12x16x192xf32, #tpu.memory_space<vmem>>, vector<1x16x192xf32>
    %599 = vector.shape_cast %598 : vector<1x16x192xf32> to vector<16x192xf32>
    %600 = vector.extract_strided_slice %599 {offsets = [0, 0], sizes = [8, 192], strides = [1, 1]} : vector<16x192xf32> to vector<8x192xf32>
    %cst_117 = arith.constant dense<0.000000e+00> : vector<8x192xf32>
    %601 = tpu.matmul %539, %0, %cst_117 {dimension_numbers = #tpu.dot_dimension_numbers<[1], [0], [0], [1], [0, 0, 1, 1], [], []>} : vector<8x48xf32>, vector<48x192xf32>, vector<8x192xf32> -> vector<8x192xf32>
    %cst_118 = arith.constant dense<0.000000e+00> : vector<8x192xf32>
    %602 = tpu.matmul %558, %1, %cst_118 {dimension_numbers = #tpu.dot_dimension_numbers<[1], [0], [0], [1], [0, 0, 1, 1], [], []>} : vector<8x48xf32>, vector<48x192xf32>, vector<8x192xf32> -> vector<8x192xf32>
    %603 = arith.addf %600, %601 : vector<8x192xf32>
    %604 = vector.extract_strided_slice %603 {offsets = [0, 0], sizes = [8, 144], strides = [1, 1]} : vector<8x192xf32> to vector<8x144xf32>
    %605 = arith.negf %604 : vector<8x144xf32>
    %606 = math.exp %605 : vector<8x144xf32>
    %cst_119 = arith.constant 1.000000e+00 : f32
    %607 = vector.broadcast %cst_119 : f32 to vector<8x144xf32>
    %608 = arith.addf %607, %606 : vector<8x144xf32>
    %609 = arith.divf %607, %608 : vector<8x144xf32>
    %610 = vector.extract_strided_slice %609 {offsets = [0, 0], sizes = [8, 48], strides = [1, 1]} : vector<8x144xf32> to vector<8x48xf32>
    %611 = vector.extract_strided_slice %609 {offsets = [0, 48], sizes = [8, 48], strides = [1, 1]} : vector<8x144xf32> to vector<8x48xf32>
    %612 = vector.extract_strided_slice %609 {offsets = [0, 96], sizes = [8, 48], strides = [1, 1]} : vector<8x144xf32> to vector<8x48xf32>
    %613 = vector.extract_strided_slice %603 {offsets = [0, 144], sizes = [8, 48], strides = [1, 1]} : vector<8x192xf32> to vector<8x48xf32>
    %614 = math.tanh %613 : vector<8x48xf32>
    %615 = arith.mulf %611, %537 : vector<8x48xf32>
    %616 = arith.mulf %610, %614 : vector<8x48xf32>
    %617 = arith.addf %615, %616 : vector<8x48xf32>
    %618 = math.tanh %617 : vector<8x48xf32>
    %619 = arith.mulf %612, %618 : vector<8x48xf32>
    %cst_120 = arith.constant dense<0.000000e+00> : vector<8x192xf32>
    %620 = tpu.matmul %619, %2, %cst_120 {dimension_numbers = #tpu.dot_dimension_numbers<[1], [0], [0], [1], [0, 0, 1, 1], [], []>} : vector<8x48xf32>, vector<48x192xf32>, vector<8x192xf32> -> vector<8x192xf32>
    %621 = arith.addf %602, %620 : vector<8x192xf32>
    %622 = arith.addf %621, %116 : vector<8x192xf32>
    %623 = vector.extract_strided_slice %622 {offsets = [0, 0], sizes = [8, 144], strides = [1, 1]} : vector<8x192xf32> to vector<8x144xf32>
    %624 = arith.negf %623 : vector<8x144xf32>
    %625 = math.exp %624 : vector<8x144xf32>
    %cst_121 = arith.constant 1.000000e+00 : f32
    %626 = vector.broadcast %cst_121 : f32 to vector<8x144xf32>
    %627 = arith.addf %626, %625 : vector<8x144xf32>
    %628 = arith.divf %626, %627 : vector<8x144xf32>
    %629 = vector.extract_strided_slice %628 {offsets = [0, 0], sizes = [8, 48], strides = [1, 1]} : vector<8x144xf32> to vector<8x48xf32>
    %630 = vector.extract_strided_slice %628 {offsets = [0, 48], sizes = [8, 48], strides = [1, 1]} : vector<8x144xf32> to vector<8x48xf32>
    %631 = vector.extract_strided_slice %628 {offsets = [0, 96], sizes = [8, 48], strides = [1, 1]} : vector<8x144xf32> to vector<8x48xf32>
    %632 = vector.extract_strided_slice %622 {offsets = [0, 144], sizes = [8, 48], strides = [1, 1]} : vector<8x192xf32> to vector<8x48xf32>
    %633 = math.tanh %632 : vector<8x48xf32>
    %634 = arith.mulf %630, %556 : vector<8x48xf32>
    %635 = arith.mulf %629, %633 : vector<8x48xf32>
    %636 = arith.addf %634, %635 : vector<8x48xf32>
    %637 = math.tanh %636 : vector<8x48xf32>
    %638 = arith.mulf %631, %637 : vector<8x48xf32>
    %639 = vector.extract_strided_slice %599 {offsets = [8, 0], sizes = [8, 192], strides = [1, 1]} : vector<16x192xf32> to vector<8x192xf32>
    %cst_122 = arith.constant dense<0.000000e+00> : vector<8x192xf32>
    %640 = tpu.matmul %578, %0, %cst_122 {dimension_numbers = #tpu.dot_dimension_numbers<[1], [0], [0], [1], [0, 0, 1, 1], [], []>} : vector<8x48xf32>, vector<48x192xf32>, vector<8x192xf32> -> vector<8x192xf32>
    %cst_123 = arith.constant dense<0.000000e+00> : vector<8x192xf32>
    %641 = tpu.matmul %597, %1, %cst_123 {dimension_numbers = #tpu.dot_dimension_numbers<[1], [0], [0], [1], [0, 0, 1, 1], [], []>} : vector<8x48xf32>, vector<48x192xf32>, vector<8x192xf32> -> vector<8x192xf32>
    %642 = arith.addf %639, %640 : vector<8x192xf32>
    %643 = vector.extract_strided_slice %642 {offsets = [0, 0], sizes = [8, 144], strides = [1, 1]} : vector<8x192xf32> to vector<8x144xf32>
    %644 = arith.negf %643 : vector<8x144xf32>
    %645 = math.exp %644 : vector<8x144xf32>
    %cst_124 = arith.constant 1.000000e+00 : f32
    %646 = vector.broadcast %cst_124 : f32 to vector<8x144xf32>
    %647 = arith.addf %646, %645 : vector<8x144xf32>
    %648 = arith.divf %646, %647 : vector<8x144xf32>
    %649 = vector.extract_strided_slice %648 {offsets = [0, 0], sizes = [8, 48], strides = [1, 1]} : vector<8x144xf32> to vector<8x48xf32>
    %650 = vector.extract_strided_slice %648 {offsets = [0, 48], sizes = [8, 48], strides = [1, 1]} : vector<8x144xf32> to vector<8x48xf32>
    %651 = vector.extract_strided_slice %648 {offsets = [0, 96], sizes = [8, 48], strides = [1, 1]} : vector<8x144xf32> to vector<8x48xf32>
    %652 = vector.extract_strided_slice %642 {offsets = [0, 144], sizes = [8, 48], strides = [1, 1]} : vector<8x192xf32> to vector<8x48xf32>
    %653 = math.tanh %652 : vector<8x48xf32>
    %654 = arith.mulf %650, %576 : vector<8x48xf32>
    %655 = arith.mulf %649, %653 : vector<8x48xf32>
    %656 = arith.addf %654, %655 : vector<8x48xf32>
    %657 = math.tanh %656 : vector<8x48xf32>
    %658 = arith.mulf %651, %657 : vector<8x48xf32>
    %cst_125 = arith.constant dense<0.000000e+00> : vector<8x192xf32>
    %659 = tpu.matmul %658, %2, %cst_125 {dimension_numbers = #tpu.dot_dimension_numbers<[1], [0], [0], [1], [0, 0, 1, 1], [], []>} : vector<8x48xf32>, vector<48x192xf32>, vector<8x192xf32> -> vector<8x192xf32>
    %660 = arith.addf %641, %659 : vector<8x192xf32>
    %661 = arith.addf %660, %116 : vector<8x192xf32>
    %662 = vector.extract_strided_slice %661 {offsets = [0, 0], sizes = [8, 144], strides = [1, 1]} : vector<8x192xf32> to vector<8x144xf32>
    %663 = arith.negf %662 : vector<8x144xf32>
    %664 = math.exp %663 : vector<8x144xf32>
    %cst_126 = arith.constant 1.000000e+00 : f32
    %665 = vector.broadcast %cst_126 : f32 to vector<8x144xf32>
    %666 = arith.addf %665, %664 : vector<8x144xf32>
    %667 = arith.divf %665, %666 : vector<8x144xf32>
    %668 = vector.extract_strided_slice %667 {offsets = [0, 0], sizes = [8, 48], strides = [1, 1]} : vector<8x144xf32> to vector<8x48xf32>
    %669 = vector.extract_strided_slice %667 {offsets = [0, 48], sizes = [8, 48], strides = [1, 1]} : vector<8x144xf32> to vector<8x48xf32>
    %670 = vector.extract_strided_slice %667 {offsets = [0, 96], sizes = [8, 48], strides = [1, 1]} : vector<8x144xf32> to vector<8x48xf32>
    %671 = vector.extract_strided_slice %661 {offsets = [0, 144], sizes = [8, 48], strides = [1, 1]} : vector<8x192xf32> to vector<8x48xf32>
    %672 = math.tanh %671 : vector<8x48xf32>
    %673 = arith.mulf %669, %595 : vector<8x48xf32>
    %674 = arith.mulf %668, %672 : vector<8x48xf32>
    %675 = arith.addf %673, %674 : vector<8x48xf32>
    %676 = math.tanh %675 : vector<8x48xf32>
    %677 = arith.mulf %670, %676 : vector<8x48xf32>
    %c7_127 = arith.constant 7 : index
    %c0_128 = arith.constant 0 : index
    %c0_129 = arith.constant 0 : index
    %678 = vector.load %arg6[%c7_127, %c0_128, %c0_129] : memref<12x16x192xf32, #tpu.memory_space<vmem>>, vector<1x16x192xf32>
    %679 = vector.shape_cast %678 : vector<1x16x192xf32> to vector<16x192xf32>
    %680 = vector.extract_strided_slice %679 {offsets = [0, 0], sizes = [8, 192], strides = [1, 1]} : vector<16x192xf32> to vector<8x192xf32>
    %cst_130 = arith.constant dense<0.000000e+00> : vector<8x192xf32>
    %681 = tpu.matmul %619, %0, %cst_130 {dimension_numbers = #tpu.dot_dimension_numbers<[1], [0], [0], [1], [0, 0, 1, 1], [], []>} : vector<8x48xf32>, vector<48x192xf32>, vector<8x192xf32> -> vector<8x192xf32>
    %cst_131 = arith.constant dense<0.000000e+00> : vector<8x192xf32>
    %682 = tpu.matmul %638, %1, %cst_131 {dimension_numbers = #tpu.dot_dimension_numbers<[1], [0], [0], [1], [0, 0, 1, 1], [], []>} : vector<8x48xf32>, vector<48x192xf32>, vector<8x192xf32> -> vector<8x192xf32>
    %683 = arith.addf %680, %681 : vector<8x192xf32>
    %684 = vector.extract_strided_slice %683 {offsets = [0, 0], sizes = [8, 144], strides = [1, 1]} : vector<8x192xf32> to vector<8x144xf32>
    %685 = arith.negf %684 : vector<8x144xf32>
    %686 = math.exp %685 : vector<8x144xf32>
    %cst_132 = arith.constant 1.000000e+00 : f32
    %687 = vector.broadcast %cst_132 : f32 to vector<8x144xf32>
    %688 = arith.addf %687, %686 : vector<8x144xf32>
    %689 = arith.divf %687, %688 : vector<8x144xf32>
    %690 = vector.extract_strided_slice %689 {offsets = [0, 0], sizes = [8, 48], strides = [1, 1]} : vector<8x144xf32> to vector<8x48xf32>
    %691 = vector.extract_strided_slice %689 {offsets = [0, 48], sizes = [8, 48], strides = [1, 1]} : vector<8x144xf32> to vector<8x48xf32>
    %692 = vector.extract_strided_slice %689 {offsets = [0, 96], sizes = [8, 48], strides = [1, 1]} : vector<8x144xf32> to vector<8x48xf32>
    %693 = vector.extract_strided_slice %683 {offsets = [0, 144], sizes = [8, 48], strides = [1, 1]} : vector<8x192xf32> to vector<8x48xf32>
    %694 = math.tanh %693 : vector<8x48xf32>
    %695 = arith.mulf %691, %617 : vector<8x48xf32>
    %696 = arith.mulf %690, %694 : vector<8x48xf32>
    %697 = arith.addf %695, %696 : vector<8x48xf32>
    %698 = math.tanh %697 : vector<8x48xf32>
    %699 = arith.mulf %692, %698 : vector<8x48xf32>
    %cst_133 = arith.constant dense<0.000000e+00> : vector<8x192xf32>
    %700 = tpu.matmul %699, %2, %cst_133 {dimension_numbers = #tpu.dot_dimension_numbers<[1], [0], [0], [1], [0, 0, 1, 1], [], []>} : vector<8x48xf32>, vector<48x192xf32>, vector<8x192xf32> -> vector<8x192xf32>
    %701 = arith.addf %682, %700 : vector<8x192xf32>
    %702 = arith.addf %701, %116 : vector<8x192xf32>
    %703 = vector.extract_strided_slice %702 {offsets = [0, 0], sizes = [8, 144], strides = [1, 1]} : vector<8x192xf32> to vector<8x144xf32>
    %704 = arith.negf %703 : vector<8x144xf32>
    %705 = math.exp %704 : vector<8x144xf32>
    %cst_134 = arith.constant 1.000000e+00 : f32
    %706 = vector.broadcast %cst_134 : f32 to vector<8x144xf32>
    %707 = arith.addf %706, %705 : vector<8x144xf32>
    %708 = arith.divf %706, %707 : vector<8x144xf32>
    %709 = vector.extract_strided_slice %708 {offsets = [0, 0], sizes = [8, 48], strides = [1, 1]} : vector<8x144xf32> to vector<8x48xf32>
    %710 = vector.extract_strided_slice %708 {offsets = [0, 48], sizes = [8, 48], strides = [1, 1]} : vector<8x144xf32> to vector<8x48xf32>
    %711 = vector.extract_strided_slice %708 {offsets = [0, 96], sizes = [8, 48], strides = [1, 1]} : vector<8x144xf32> to vector<8x48xf32>
    %712 = vector.extract_strided_slice %702 {offsets = [0, 144], sizes = [8, 48], strides = [1, 1]} : vector<8x192xf32> to vector<8x48xf32>
    %713 = math.tanh %712 : vector<8x48xf32>
    %714 = arith.mulf %710, %636 : vector<8x48xf32>
    %715 = arith.mulf %709, %713 : vector<8x48xf32>
    %716 = arith.addf %714, %715 : vector<8x48xf32>
    %717 = math.tanh %716 : vector<8x48xf32>
    %718 = arith.mulf %711, %717 : vector<8x48xf32>
    %719 = vector.extract_strided_slice %679 {offsets = [8, 0], sizes = [8, 192], strides = [1, 1]} : vector<16x192xf32> to vector<8x192xf32>
    %cst_135 = arith.constant dense<0.000000e+00> : vector<8x192xf32>
    %720 = tpu.matmul %658, %0, %cst_135 {dimension_numbers = #tpu.dot_dimension_numbers<[1], [0], [0], [1], [0, 0, 1, 1], [], []>} : vector<8x48xf32>, vector<48x192xf32>, vector<8x192xf32> -> vector<8x192xf32>
    %cst_136 = arith.constant dense<0.000000e+00> : vector<8x192xf32>
    %721 = tpu.matmul %677, %1, %cst_136 {dimension_numbers = #tpu.dot_dimension_numbers<[1], [0], [0], [1], [0, 0, 1, 1], [], []>} : vector<8x48xf32>, vector<48x192xf32>, vector<8x192xf32> -> vector<8x192xf32>
    %722 = arith.addf %719, %720 : vector<8x192xf32>
    %723 = vector.extract_strided_slice %722 {offsets = [0, 0], sizes = [8, 144], strides = [1, 1]} : vector<8x192xf32> to vector<8x144xf32>
    %724 = arith.negf %723 : vector<8x144xf32>
    %725 = math.exp %724 : vector<8x144xf32>
    %cst_137 = arith.constant 1.000000e+00 : f32
    %726 = vector.broadcast %cst_137 : f32 to vector<8x144xf32>
    %727 = arith.addf %726, %725 : vector<8x144xf32>
    %728 = arith.divf %726, %727 : vector<8x144xf32>
    %729 = vector.extract_strided_slice %728 {offsets = [0, 0], sizes = [8, 48], strides = [1, 1]} : vector<8x144xf32> to vector<8x48xf32>
    %730 = vector.extract_strided_slice %728 {offsets = [0, 48], sizes = [8, 48], strides = [1, 1]} : vector<8x144xf32> to vector<8x48xf32>
    %731 = vector.extract_strided_slice %728 {offsets = [0, 96], sizes = [8, 48], strides = [1, 1]} : vector<8x144xf32> to vector<8x48xf32>
    %732 = vector.extract_strided_slice %722 {offsets = [0, 144], sizes = [8, 48], strides = [1, 1]} : vector<8x192xf32> to vector<8x48xf32>
    %733 = math.tanh %732 : vector<8x48xf32>
    %734 = arith.mulf %730, %656 : vector<8x48xf32>
    %735 = arith.mulf %729, %733 : vector<8x48xf32>
    %736 = arith.addf %734, %735 : vector<8x48xf32>
    %737 = math.tanh %736 : vector<8x48xf32>
    %738 = arith.mulf %731, %737 : vector<8x48xf32>
    %cst_138 = arith.constant dense<0.000000e+00> : vector<8x192xf32>
    %739 = tpu.matmul %738, %2, %cst_138 {dimension_numbers = #tpu.dot_dimension_numbers<[1], [0], [0], [1], [0, 0, 1, 1], [], []>} : vector<8x48xf32>, vector<48x192xf32>, vector<8x192xf32> -> vector<8x192xf32>
    %740 = arith.addf %721, %739 : vector<8x192xf32>
    %741 = arith.addf %740, %116 : vector<8x192xf32>
    %742 = vector.extract_strided_slice %741 {offsets = [0, 0], sizes = [8, 144], strides = [1, 1]} : vector<8x192xf32> to vector<8x144xf32>
    %743 = arith.negf %742 : vector<8x144xf32>
    %744 = math.exp %743 : vector<8x144xf32>
    %cst_139 = arith.constant 1.000000e+00 : f32
    %745 = vector.broadcast %cst_139 : f32 to vector<8x144xf32>
    %746 = arith.addf %745, %744 : vector<8x144xf32>
    %747 = arith.divf %745, %746 : vector<8x144xf32>
    %748 = vector.extract_strided_slice %747 {offsets = [0, 0], sizes = [8, 48], strides = [1, 1]} : vector<8x144xf32> to vector<8x48xf32>
    %749 = vector.extract_strided_slice %747 {offsets = [0, 48], sizes = [8, 48], strides = [1, 1]} : vector<8x144xf32> to vector<8x48xf32>
    %750 = vector.extract_strided_slice %747 {offsets = [0, 96], sizes = [8, 48], strides = [1, 1]} : vector<8x144xf32> to vector<8x48xf32>
    %751 = vector.extract_strided_slice %741 {offsets = [0, 144], sizes = [8, 48], strides = [1, 1]} : vector<8x192xf32> to vector<8x48xf32>
    %752 = math.tanh %751 : vector<8x48xf32>
    %753 = arith.mulf %749, %675 : vector<8x48xf32>
    %754 = arith.mulf %748, %752 : vector<8x48xf32>
    %755 = arith.addf %753, %754 : vector<8x48xf32>
    %756 = math.tanh %755 : vector<8x48xf32>
    %757 = arith.mulf %750, %756 : vector<8x48xf32>
    %c8_140 = arith.constant 8 : index
    %c0_141 = arith.constant 0 : index
    %c0_142 = arith.constant 0 : index
    %758 = vector.load %arg6[%c8_140, %c0_141, %c0_142] : memref<12x16x192xf32, #tpu.memory_space<vmem>>, vector<1x16x192xf32>
    %759 = vector.shape_cast %758 : vector<1x16x192xf32> to vector<16x192xf32>
    %760 = vector.extract_strided_slice %759 {offsets = [0, 0], sizes = [8, 192], strides = [1, 1]} : vector<16x192xf32> to vector<8x192xf32>
    %cst_143 = arith.constant dense<0.000000e+00> : vector<8x192xf32>
    %761 = tpu.matmul %699, %0, %cst_143 {dimension_numbers = #tpu.dot_dimension_numbers<[1], [0], [0], [1], [0, 0, 1, 1], [], []>} : vector<8x48xf32>, vector<48x192xf32>, vector<8x192xf32> -> vector<8x192xf32>
    %cst_144 = arith.constant dense<0.000000e+00> : vector<8x192xf32>
    %762 = tpu.matmul %718, %1, %cst_144 {dimension_numbers = #tpu.dot_dimension_numbers<[1], [0], [0], [1], [0, 0, 1, 1], [], []>} : vector<8x48xf32>, vector<48x192xf32>, vector<8x192xf32> -> vector<8x192xf32>
    %763 = arith.addf %760, %761 : vector<8x192xf32>
    %764 = vector.extract_strided_slice %763 {offsets = [0, 0], sizes = [8, 144], strides = [1, 1]} : vector<8x192xf32> to vector<8x144xf32>
    %765 = arith.negf %764 : vector<8x144xf32>
    %766 = math.exp %765 : vector<8x144xf32>
    %cst_145 = arith.constant 1.000000e+00 : f32
    %767 = vector.broadcast %cst_145 : f32 to vector<8x144xf32>
    %768 = arith.addf %767, %766 : vector<8x144xf32>
    %769 = arith.divf %767, %768 : vector<8x144xf32>
    %770 = vector.extract_strided_slice %769 {offsets = [0, 0], sizes = [8, 48], strides = [1, 1]} : vector<8x144xf32> to vector<8x48xf32>
    %771 = vector.extract_strided_slice %769 {offsets = [0, 48], sizes = [8, 48], strides = [1, 1]} : vector<8x144xf32> to vector<8x48xf32>
    %772 = vector.extract_strided_slice %769 {offsets = [0, 96], sizes = [8, 48], strides = [1, 1]} : vector<8x144xf32> to vector<8x48xf32>
    %773 = vector.extract_strided_slice %763 {offsets = [0, 144], sizes = [8, 48], strides = [1, 1]} : vector<8x192xf32> to vector<8x48xf32>
    %774 = math.tanh %773 : vector<8x48xf32>
    %775 = arith.mulf %771, %697 : vector<8x48xf32>
    %776 = arith.mulf %770, %774 : vector<8x48xf32>
    %777 = arith.addf %775, %776 : vector<8x48xf32>
    %778 = math.tanh %777 : vector<8x48xf32>
    %779 = arith.mulf %772, %778 : vector<8x48xf32>
    %cst_146 = arith.constant dense<0.000000e+00> : vector<8x192xf32>
    %780 = tpu.matmul %779, %2, %cst_146 {dimension_numbers = #tpu.dot_dimension_numbers<[1], [0], [0], [1], [0, 0, 1, 1], [], []>} : vector<8x48xf32>, vector<48x192xf32>, vector<8x192xf32> -> vector<8x192xf32>
    %781 = arith.addf %762, %780 : vector<8x192xf32>
    %782 = arith.addf %781, %116 : vector<8x192xf32>
    %783 = vector.extract_strided_slice %782 {offsets = [0, 0], sizes = [8, 144], strides = [1, 1]} : vector<8x192xf32> to vector<8x144xf32>
    %784 = arith.negf %783 : vector<8x144xf32>
    %785 = math.exp %784 : vector<8x144xf32>
    %cst_147 = arith.constant 1.000000e+00 : f32
    %786 = vector.broadcast %cst_147 : f32 to vector<8x144xf32>
    %787 = arith.addf %786, %785 : vector<8x144xf32>
    %788 = arith.divf %786, %787 : vector<8x144xf32>
    %789 = vector.extract_strided_slice %788 {offsets = [0, 0], sizes = [8, 48], strides = [1, 1]} : vector<8x144xf32> to vector<8x48xf32>
    %790 = vector.extract_strided_slice %788 {offsets = [0, 48], sizes = [8, 48], strides = [1, 1]} : vector<8x144xf32> to vector<8x48xf32>
    %791 = vector.extract_strided_slice %788 {offsets = [0, 96], sizes = [8, 48], strides = [1, 1]} : vector<8x144xf32> to vector<8x48xf32>
    %792 = vector.extract_strided_slice %782 {offsets = [0, 144], sizes = [8, 48], strides = [1, 1]} : vector<8x192xf32> to vector<8x48xf32>
    %793 = math.tanh %792 : vector<8x48xf32>
    %794 = arith.mulf %790, %716 : vector<8x48xf32>
    %795 = arith.mulf %789, %793 : vector<8x48xf32>
    %796 = arith.addf %794, %795 : vector<8x48xf32>
    %797 = math.tanh %796 : vector<8x48xf32>
    %798 = arith.mulf %791, %797 : vector<8x48xf32>
    %799 = vector.extract_strided_slice %759 {offsets = [8, 0], sizes = [8, 192], strides = [1, 1]} : vector<16x192xf32> to vector<8x192xf32>
    %cst_148 = arith.constant dense<0.000000e+00> : vector<8x192xf32>
    %800 = tpu.matmul %738, %0, %cst_148 {dimension_numbers = #tpu.dot_dimension_numbers<[1], [0], [0], [1], [0, 0, 1, 1], [], []>} : vector<8x48xf32>, vector<48x192xf32>, vector<8x192xf32> -> vector<8x192xf32>
    %cst_149 = arith.constant dense<0.000000e+00> : vector<8x192xf32>
    %801 = tpu.matmul %757, %1, %cst_149 {dimension_numbers = #tpu.dot_dimension_numbers<[1], [0], [0], [1], [0, 0, 1, 1], [], []>} : vector<8x48xf32>, vector<48x192xf32>, vector<8x192xf32> -> vector<8x192xf32>
    %802 = arith.addf %799, %800 : vector<8x192xf32>
    %803 = vector.extract_strided_slice %802 {offsets = [0, 0], sizes = [8, 144], strides = [1, 1]} : vector<8x192xf32> to vector<8x144xf32>
    %804 = arith.negf %803 : vector<8x144xf32>
    %805 = math.exp %804 : vector<8x144xf32>
    %cst_150 = arith.constant 1.000000e+00 : f32
    %806 = vector.broadcast %cst_150 : f32 to vector<8x144xf32>
    %807 = arith.addf %806, %805 : vector<8x144xf32>
    %808 = arith.divf %806, %807 : vector<8x144xf32>
    %809 = vector.extract_strided_slice %808 {offsets = [0, 0], sizes = [8, 48], strides = [1, 1]} : vector<8x144xf32> to vector<8x48xf32>
    %810 = vector.extract_strided_slice %808 {offsets = [0, 48], sizes = [8, 48], strides = [1, 1]} : vector<8x144xf32> to vector<8x48xf32>
    %811 = vector.extract_strided_slice %808 {offsets = [0, 96], sizes = [8, 48], strides = [1, 1]} : vector<8x144xf32> to vector<8x48xf32>
    %812 = vector.extract_strided_slice %802 {offsets = [0, 144], sizes = [8, 48], strides = [1, 1]} : vector<8x192xf32> to vector<8x48xf32>
    %813 = math.tanh %812 : vector<8x48xf32>
    %814 = arith.mulf %810, %736 : vector<8x48xf32>
    %815 = arith.mulf %809, %813 : vector<8x48xf32>
    %816 = arith.addf %814, %815 : vector<8x48xf32>
    %817 = math.tanh %816 : vector<8x48xf32>
    %818 = arith.mulf %811, %817 : vector<8x48xf32>
    %cst_151 = arith.constant dense<0.000000e+00> : vector<8x192xf32>
    %819 = tpu.matmul %818, %2, %cst_151 {dimension_numbers = #tpu.dot_dimension_numbers<[1], [0], [0], [1], [0, 0, 1, 1], [], []>} : vector<8x48xf32>, vector<48x192xf32>, vector<8x192xf32> -> vector<8x192xf32>
    %820 = arith.addf %801, %819 : vector<8x192xf32>
    %821 = arith.addf %820, %116 : vector<8x192xf32>
    %822 = vector.extract_strided_slice %821 {offsets = [0, 0], sizes = [8, 144], strides = [1, 1]} : vector<8x192xf32> to vector<8x144xf32>
    %823 = arith.negf %822 : vector<8x144xf32>
    %824 = math.exp %823 : vector<8x144xf32>
    %cst_152 = arith.constant 1.000000e+00 : f32
    %825 = vector.broadcast %cst_152 : f32 to vector<8x144xf32>
    %826 = arith.addf %825, %824 : vector<8x144xf32>
    %827 = arith.divf %825, %826 : vector<8x144xf32>
    %828 = vector.extract_strided_slice %827 {offsets = [0, 0], sizes = [8, 48], strides = [1, 1]} : vector<8x144xf32> to vector<8x48xf32>
    %829 = vector.extract_strided_slice %827 {offsets = [0, 48], sizes = [8, 48], strides = [1, 1]} : vector<8x144xf32> to vector<8x48xf32>
    %830 = vector.extract_strided_slice %827 {offsets = [0, 96], sizes = [8, 48], strides = [1, 1]} : vector<8x144xf32> to vector<8x48xf32>
    %831 = vector.extract_strided_slice %821 {offsets = [0, 144], sizes = [8, 48], strides = [1, 1]} : vector<8x192xf32> to vector<8x48xf32>
    %832 = math.tanh %831 : vector<8x48xf32>
    %833 = arith.mulf %829, %755 : vector<8x48xf32>
    %834 = arith.mulf %828, %832 : vector<8x48xf32>
    %835 = arith.addf %833, %834 : vector<8x48xf32>
    %836 = math.tanh %835 : vector<8x48xf32>
    %837 = arith.mulf %830, %836 : vector<8x48xf32>
    %c9_153 = arith.constant 9 : index
    %c0_154 = arith.constant 0 : index
    %c0_155 = arith.constant 0 : index
    %838 = vector.load %arg6[%c9_153, %c0_154, %c0_155] : memref<12x16x192xf32, #tpu.memory_space<vmem>>, vector<1x16x192xf32>
    %839 = vector.shape_cast %838 : vector<1x16x192xf32> to vector<16x192xf32>
    %840 = vector.extract_strided_slice %839 {offsets = [0, 0], sizes = [8, 192], strides = [1, 1]} : vector<16x192xf32> to vector<8x192xf32>
    %cst_156 = arith.constant dense<0.000000e+00> : vector<8x192xf32>
    %841 = tpu.matmul %779, %0, %cst_156 {dimension_numbers = #tpu.dot_dimension_numbers<[1], [0], [0], [1], [0, 0, 1, 1], [], []>} : vector<8x48xf32>, vector<48x192xf32>, vector<8x192xf32> -> vector<8x192xf32>
    %cst_157 = arith.constant dense<0.000000e+00> : vector<8x192xf32>
    %842 = tpu.matmul %798, %1, %cst_157 {dimension_numbers = #tpu.dot_dimension_numbers<[1], [0], [0], [1], [0, 0, 1, 1], [], []>} : vector<8x48xf32>, vector<48x192xf32>, vector<8x192xf32> -> vector<8x192xf32>
    %843 = arith.addf %840, %841 : vector<8x192xf32>
    %844 = vector.extract_strided_slice %843 {offsets = [0, 0], sizes = [8, 144], strides = [1, 1]} : vector<8x192xf32> to vector<8x144xf32>
    %845 = arith.negf %844 : vector<8x144xf32>
    %846 = math.exp %845 : vector<8x144xf32>
    %cst_158 = arith.constant 1.000000e+00 : f32
    %847 = vector.broadcast %cst_158 : f32 to vector<8x144xf32>
    %848 = arith.addf %847, %846 : vector<8x144xf32>
    %849 = arith.divf %847, %848 : vector<8x144xf32>
    %850 = vector.extract_strided_slice %849 {offsets = [0, 0], sizes = [8, 48], strides = [1, 1]} : vector<8x144xf32> to vector<8x48xf32>
    %851 = vector.extract_strided_slice %849 {offsets = [0, 48], sizes = [8, 48], strides = [1, 1]} : vector<8x144xf32> to vector<8x48xf32>
    %852 = vector.extract_strided_slice %849 {offsets = [0, 96], sizes = [8, 48], strides = [1, 1]} : vector<8x144xf32> to vector<8x48xf32>
    %853 = vector.extract_strided_slice %843 {offsets = [0, 144], sizes = [8, 48], strides = [1, 1]} : vector<8x192xf32> to vector<8x48xf32>
    %854 = math.tanh %853 : vector<8x48xf32>
    %855 = arith.mulf %851, %777 : vector<8x48xf32>
    %856 = arith.mulf %850, %854 : vector<8x48xf32>
    %857 = arith.addf %855, %856 : vector<8x48xf32>
    %858 = math.tanh %857 : vector<8x48xf32>
    %859 = arith.mulf %852, %858 : vector<8x48xf32>
    %cst_159 = arith.constant dense<0.000000e+00> : vector<8x192xf32>
    %860 = tpu.matmul %859, %2, %cst_159 {dimension_numbers = #tpu.dot_dimension_numbers<[1], [0], [0], [1], [0, 0, 1, 1], [], []>} : vector<8x48xf32>, vector<48x192xf32>, vector<8x192xf32> -> vector<8x192xf32>
    %861 = arith.addf %842, %860 : vector<8x192xf32>
    %862 = arith.addf %861, %116 : vector<8x192xf32>
    %863 = vector.extract_strided_slice %862 {offsets = [0, 0], sizes = [8, 144], strides = [1, 1]} : vector<8x192xf32> to vector<8x144xf32>
    %864 = arith.negf %863 : vector<8x144xf32>
    %865 = math.exp %864 : vector<8x144xf32>
    %cst_160 = arith.constant 1.000000e+00 : f32
    %866 = vector.broadcast %cst_160 : f32 to vector<8x144xf32>
    %867 = arith.addf %866, %865 : vector<8x144xf32>
    %868 = arith.divf %866, %867 : vector<8x144xf32>
    %869 = vector.extract_strided_slice %868 {offsets = [0, 0], sizes = [8, 48], strides = [1, 1]} : vector<8x144xf32> to vector<8x48xf32>
    %870 = vector.extract_strided_slice %868 {offsets = [0, 48], sizes = [8, 48], strides = [1, 1]} : vector<8x144xf32> to vector<8x48xf32>
    %871 = vector.extract_strided_slice %868 {offsets = [0, 96], sizes = [8, 48], strides = [1, 1]} : vector<8x144xf32> to vector<8x48xf32>
    %872 = vector.extract_strided_slice %862 {offsets = [0, 144], sizes = [8, 48], strides = [1, 1]} : vector<8x192xf32> to vector<8x48xf32>
    %873 = math.tanh %872 : vector<8x48xf32>
    %874 = arith.mulf %870, %796 : vector<8x48xf32>
    %875 = arith.mulf %869, %873 : vector<8x48xf32>
    %876 = arith.addf %874, %875 : vector<8x48xf32>
    %877 = math.tanh %876 : vector<8x48xf32>
    %878 = arith.mulf %871, %877 : vector<8x48xf32>
    %879 = vector.extract_strided_slice %839 {offsets = [8, 0], sizes = [8, 192], strides = [1, 1]} : vector<16x192xf32> to vector<8x192xf32>
    %cst_161 = arith.constant dense<0.000000e+00> : vector<8x192xf32>
    %880 = tpu.matmul %818, %0, %cst_161 {dimension_numbers = #tpu.dot_dimension_numbers<[1], [0], [0], [1], [0, 0, 1, 1], [], []>} : vector<8x48xf32>, vector<48x192xf32>, vector<8x192xf32> -> vector<8x192xf32>
    %cst_162 = arith.constant dense<0.000000e+00> : vector<8x192xf32>
    %881 = tpu.matmul %837, %1, %cst_162 {dimension_numbers = #tpu.dot_dimension_numbers<[1], [0], [0], [1], [0, 0, 1, 1], [], []>} : vector<8x48xf32>, vector<48x192xf32>, vector<8x192xf32> -> vector<8x192xf32>
    %882 = arith.addf %879, %880 : vector<8x192xf32>
    %883 = vector.extract_strided_slice %882 {offsets = [0, 0], sizes = [8, 144], strides = [1, 1]} : vector<8x192xf32> to vector<8x144xf32>
    %884 = arith.negf %883 : vector<8x144xf32>
    %885 = math.exp %884 : vector<8x144xf32>
    %cst_163 = arith.constant 1.000000e+00 : f32
    %886 = vector.broadcast %cst_163 : f32 to vector<8x144xf32>
    %887 = arith.addf %886, %885 : vector<8x144xf32>
    %888 = arith.divf %886, %887 : vector<8x144xf32>
    %889 = vector.extract_strided_slice %888 {offsets = [0, 0], sizes = [8, 48], strides = [1, 1]} : vector<8x144xf32> to vector<8x48xf32>
    %890 = vector.extract_strided_slice %888 {offsets = [0, 48], sizes = [8, 48], strides = [1, 1]} : vector<8x144xf32> to vector<8x48xf32>
    %891 = vector.extract_strided_slice %888 {offsets = [0, 96], sizes = [8, 48], strides = [1, 1]} : vector<8x144xf32> to vector<8x48xf32>
    %892 = vector.extract_strided_slice %882 {offsets = [0, 144], sizes = [8, 48], strides = [1, 1]} : vector<8x192xf32> to vector<8x48xf32>
    %893 = math.tanh %892 : vector<8x48xf32>
    %894 = arith.mulf %890, %816 : vector<8x48xf32>
    %895 = arith.mulf %889, %893 : vector<8x48xf32>
    %896 = arith.addf %894, %895 : vector<8x48xf32>
    %897 = math.tanh %896 : vector<8x48xf32>
    %898 = arith.mulf %891, %897 : vector<8x48xf32>
    %cst_164 = arith.constant dense<0.000000e+00> : vector<8x192xf32>
    %899 = tpu.matmul %898, %2, %cst_164 {dimension_numbers = #tpu.dot_dimension_numbers<[1], [0], [0], [1], [0, 0, 1, 1], [], []>} : vector<8x48xf32>, vector<48x192xf32>, vector<8x192xf32> -> vector<8x192xf32>
    %900 = arith.addf %881, %899 : vector<8x192xf32>
    %901 = arith.addf %900, %116 : vector<8x192xf32>
    %902 = vector.extract_strided_slice %901 {offsets = [0, 0], sizes = [8, 144], strides = [1, 1]} : vector<8x192xf32> to vector<8x144xf32>
    %903 = arith.negf %902 : vector<8x144xf32>
    %904 = math.exp %903 : vector<8x144xf32>
    %cst_165 = arith.constant 1.000000e+00 : f32
    %905 = vector.broadcast %cst_165 : f32 to vector<8x144xf32>
    %906 = arith.addf %905, %904 : vector<8x144xf32>
    %907 = arith.divf %905, %906 : vector<8x144xf32>
    %908 = vector.extract_strided_slice %907 {offsets = [0, 0], sizes = [8, 48], strides = [1, 1]} : vector<8x144xf32> to vector<8x48xf32>
    %909 = vector.extract_strided_slice %907 {offsets = [0, 48], sizes = [8, 48], strides = [1, 1]} : vector<8x144xf32> to vector<8x48xf32>
    %910 = vector.extract_strided_slice %907 {offsets = [0, 96], sizes = [8, 48], strides = [1, 1]} : vector<8x144xf32> to vector<8x48xf32>
    %911 = vector.extract_strided_slice %901 {offsets = [0, 144], sizes = [8, 48], strides = [1, 1]} : vector<8x192xf32> to vector<8x48xf32>
    %912 = math.tanh %911 : vector<8x48xf32>
    %913 = arith.mulf %909, %835 : vector<8x48xf32>
    %914 = arith.mulf %908, %912 : vector<8x48xf32>
    %915 = arith.addf %913, %914 : vector<8x48xf32>
    %916 = math.tanh %915 : vector<8x48xf32>
    %917 = arith.mulf %910, %916 : vector<8x48xf32>
    %c10_166 = arith.constant 10 : index
    %c0_167 = arith.constant 0 : index
    %c0_168 = arith.constant 0 : index
    %918 = vector.load %arg6[%c10_166, %c0_167, %c0_168] : memref<12x16x192xf32, #tpu.memory_space<vmem>>, vector<1x16x192xf32>
    %919 = vector.shape_cast %918 : vector<1x16x192xf32> to vector<16x192xf32>
    %920 = vector.extract_strided_slice %919 {offsets = [0, 0], sizes = [8, 192], strides = [1, 1]} : vector<16x192xf32> to vector<8x192xf32>
    %cst_169 = arith.constant dense<0.000000e+00> : vector<8x192xf32>
    %921 = tpu.matmul %859, %0, %cst_169 {dimension_numbers = #tpu.dot_dimension_numbers<[1], [0], [0], [1], [0, 0, 1, 1], [], []>} : vector<8x48xf32>, vector<48x192xf32>, vector<8x192xf32> -> vector<8x192xf32>
    %cst_170 = arith.constant dense<0.000000e+00> : vector<8x192xf32>
    %922 = tpu.matmul %878, %1, %cst_170 {dimension_numbers = #tpu.dot_dimension_numbers<[1], [0], [0], [1], [0, 0, 1, 1], [], []>} : vector<8x48xf32>, vector<48x192xf32>, vector<8x192xf32> -> vector<8x192xf32>
    %923 = arith.addf %920, %921 : vector<8x192xf32>
    %924 = vector.extract_strided_slice %923 {offsets = [0, 0], sizes = [8, 144], strides = [1, 1]} : vector<8x192xf32> to vector<8x144xf32>
    %925 = arith.negf %924 : vector<8x144xf32>
    %926 = math.exp %925 : vector<8x144xf32>
    %cst_171 = arith.constant 1.000000e+00 : f32
    %927 = vector.broadcast %cst_171 : f32 to vector<8x144xf32>
    %928 = arith.addf %927, %926 : vector<8x144xf32>
    %929 = arith.divf %927, %928 : vector<8x144xf32>
    %930 = vector.extract_strided_slice %929 {offsets = [0, 0], sizes = [8, 48], strides = [1, 1]} : vector<8x144xf32> to vector<8x48xf32>
    %931 = vector.extract_strided_slice %929 {offsets = [0, 48], sizes = [8, 48], strides = [1, 1]} : vector<8x144xf32> to vector<8x48xf32>
    %932 = vector.extract_strided_slice %929 {offsets = [0, 96], sizes = [8, 48], strides = [1, 1]} : vector<8x144xf32> to vector<8x48xf32>
    %933 = vector.extract_strided_slice %923 {offsets = [0, 144], sizes = [8, 48], strides = [1, 1]} : vector<8x192xf32> to vector<8x48xf32>
    %934 = math.tanh %933 : vector<8x48xf32>
    %935 = arith.mulf %931, %857 : vector<8x48xf32>
    %936 = arith.mulf %930, %934 : vector<8x48xf32>
    %937 = arith.addf %935, %936 : vector<8x48xf32>
    %938 = math.tanh %937 : vector<8x48xf32>
    %939 = arith.mulf %932, %938 : vector<8x48xf32>
    %cst_172 = arith.constant dense<0.000000e+00> : vector<8x192xf32>
    %940 = tpu.matmul %939, %2, %cst_172 {dimension_numbers = #tpu.dot_dimension_numbers<[1], [0], [0], [1], [0, 0, 1, 1], [], []>} : vector<8x48xf32>, vector<48x192xf32>, vector<8x192xf32> -> vector<8x192xf32>
    %941 = arith.addf %922, %940 : vector<8x192xf32>
    %942 = arith.addf %941, %116 : vector<8x192xf32>
    %943 = vector.extract_strided_slice %942 {offsets = [0, 0], sizes = [8, 144], strides = [1, 1]} : vector<8x192xf32> to vector<8x144xf32>
    %944 = arith.negf %943 : vector<8x144xf32>
    %945 = math.exp %944 : vector<8x144xf32>
    %cst_173 = arith.constant 1.000000e+00 : f32
    %946 = vector.broadcast %cst_173 : f32 to vector<8x144xf32>
    %947 = arith.addf %946, %945 : vector<8x144xf32>
    %948 = arith.divf %946, %947 : vector<8x144xf32>
    %949 = vector.extract_strided_slice %948 {offsets = [0, 0], sizes = [8, 48], strides = [1, 1]} : vector<8x144xf32> to vector<8x48xf32>
    %950 = vector.extract_strided_slice %948 {offsets = [0, 48], sizes = [8, 48], strides = [1, 1]} : vector<8x144xf32> to vector<8x48xf32>
    %951 = vector.extract_strided_slice %948 {offsets = [0, 96], sizes = [8, 48], strides = [1, 1]} : vector<8x144xf32> to vector<8x48xf32>
    %952 = vector.extract_strided_slice %942 {offsets = [0, 144], sizes = [8, 48], strides = [1, 1]} : vector<8x192xf32> to vector<8x48xf32>
    %953 = math.tanh %952 : vector<8x48xf32>
    %954 = arith.mulf %950, %876 : vector<8x48xf32>
    %955 = arith.mulf %949, %953 : vector<8x48xf32>
    %956 = arith.addf %954, %955 : vector<8x48xf32>
    %957 = math.tanh %956 : vector<8x48xf32>
    %958 = arith.mulf %951, %957 : vector<8x48xf32>
    %959 = vector.extract_strided_slice %919 {offsets = [8, 0], sizes = [8, 192], strides = [1, 1]} : vector<16x192xf32> to vector<8x192xf32>
    %cst_174 = arith.constant dense<0.000000e+00> : vector<8x192xf32>
    %960 = tpu.matmul %898, %0, %cst_174 {dimension_numbers = #tpu.dot_dimension_numbers<[1], [0], [0], [1], [0, 0, 1, 1], [], []>} : vector<8x48xf32>, vector<48x192xf32>, vector<8x192xf32> -> vector<8x192xf32>
    %cst_175 = arith.constant dense<0.000000e+00> : vector<8x192xf32>
    %961 = tpu.matmul %917, %1, %cst_175 {dimension_numbers = #tpu.dot_dimension_numbers<[1], [0], [0], [1], [0, 0, 1, 1], [], []>} : vector<8x48xf32>, vector<48x192xf32>, vector<8x192xf32> -> vector<8x192xf32>
    %962 = arith.addf %959, %960 : vector<8x192xf32>
    %963 = vector.extract_strided_slice %962 {offsets = [0, 0], sizes = [8, 144], strides = [1, 1]} : vector<8x192xf32> to vector<8x144xf32>
    %964 = arith.negf %963 : vector<8x144xf32>
    %965 = math.exp %964 : vector<8x144xf32>
    %cst_176 = arith.constant 1.000000e+00 : f32
    %966 = vector.broadcast %cst_176 : f32 to vector<8x144xf32>
    %967 = arith.addf %966, %965 : vector<8x144xf32>
    %968 = arith.divf %966, %967 : vector<8x144xf32>
    %969 = vector.extract_strided_slice %968 {offsets = [0, 0], sizes = [8, 48], strides = [1, 1]} : vector<8x144xf32> to vector<8x48xf32>
    %970 = vector.extract_strided_slice %968 {offsets = [0, 48], sizes = [8, 48], strides = [1, 1]} : vector<8x144xf32> to vector<8x48xf32>
    %971 = vector.extract_strided_slice %968 {offsets = [0, 96], sizes = [8, 48], strides = [1, 1]} : vector<8x144xf32> to vector<8x48xf32>
    %972 = vector.extract_strided_slice %962 {offsets = [0, 144], sizes = [8, 48], strides = [1, 1]} : vector<8x192xf32> to vector<8x48xf32>
    %973 = math.tanh %972 : vector<8x48xf32>
    %974 = arith.mulf %970, %896 : vector<8x48xf32>
    %975 = arith.mulf %969, %973 : vector<8x48xf32>
    %976 = arith.addf %974, %975 : vector<8x48xf32>
    %977 = math.tanh %976 : vector<8x48xf32>
    %978 = arith.mulf %971, %977 : vector<8x48xf32>
    %cst_177 = arith.constant dense<0.000000e+00> : vector<8x192xf32>
    %979 = tpu.matmul %978, %2, %cst_177 {dimension_numbers = #tpu.dot_dimension_numbers<[1], [0], [0], [1], [0, 0, 1, 1], [], []>} : vector<8x48xf32>, vector<48x192xf32>, vector<8x192xf32> -> vector<8x192xf32>
    %980 = arith.addf %961, %979 : vector<8x192xf32>
    %981 = arith.addf %980, %116 : vector<8x192xf32>
    %982 = vector.extract_strided_slice %981 {offsets = [0, 0], sizes = [8, 144], strides = [1, 1]} : vector<8x192xf32> to vector<8x144xf32>
    %983 = arith.negf %982 : vector<8x144xf32>
    %984 = math.exp %983 : vector<8x144xf32>
    %cst_178 = arith.constant 1.000000e+00 : f32
    %985 = vector.broadcast %cst_178 : f32 to vector<8x144xf32>
    %986 = arith.addf %985, %984 : vector<8x144xf32>
    %987 = arith.divf %985, %986 : vector<8x144xf32>
    %988 = vector.extract_strided_slice %987 {offsets = [0, 0], sizes = [8, 48], strides = [1, 1]} : vector<8x144xf32> to vector<8x48xf32>
    %989 = vector.extract_strided_slice %987 {offsets = [0, 48], sizes = [8, 48], strides = [1, 1]} : vector<8x144xf32> to vector<8x48xf32>
    %990 = vector.extract_strided_slice %987 {offsets = [0, 96], sizes = [8, 48], strides = [1, 1]} : vector<8x144xf32> to vector<8x48xf32>
    %991 = vector.extract_strided_slice %981 {offsets = [0, 144], sizes = [8, 48], strides = [1, 1]} : vector<8x192xf32> to vector<8x48xf32>
    %992 = math.tanh %991 : vector<8x48xf32>
    %993 = arith.mulf %989, %915 : vector<8x48xf32>
    %994 = arith.mulf %988, %992 : vector<8x48xf32>
    %995 = arith.addf %993, %994 : vector<8x48xf32>
    %996 = math.tanh %995 : vector<8x48xf32>
    %997 = arith.mulf %990, %996 : vector<8x48xf32>
    %c11_179 = arith.constant 11 : index
    %c0_180 = arith.constant 0 : index
    %c0_181 = arith.constant 0 : index
    %998 = vector.load %arg6[%c11_179, %c0_180, %c0_181] : memref<12x16x192xf32, #tpu.memory_space<vmem>>, vector<1x16x192xf32>
    %999 = vector.shape_cast %998 : vector<1x16x192xf32> to vector<16x192xf32>
    %1000 = vector.extract_strided_slice %999 {offsets = [0, 0], sizes = [8, 192], strides = [1, 1]} : vector<16x192xf32> to vector<8x192xf32>
    %cst_182 = arith.constant dense<0.000000e+00> : vector<8x192xf32>
    %1001 = tpu.matmul %939, %0, %cst_182 {dimension_numbers = #tpu.dot_dimension_numbers<[1], [0], [0], [1], [0, 0, 1, 1], [], []>} : vector<8x48xf32>, vector<48x192xf32>, vector<8x192xf32> -> vector<8x192xf32>
    %cst_183 = arith.constant dense<0.000000e+00> : vector<8x192xf32>
    %1002 = tpu.matmul %958, %1, %cst_183 {dimension_numbers = #tpu.dot_dimension_numbers<[1], [0], [0], [1], [0, 0, 1, 1], [], []>} : vector<8x48xf32>, vector<48x192xf32>, vector<8x192xf32> -> vector<8x192xf32>
    %1003 = arith.addf %1000, %1001 : vector<8x192xf32>
    %1004 = vector.extract_strided_slice %1003 {offsets = [0, 0], sizes = [8, 144], strides = [1, 1]} : vector<8x192xf32> to vector<8x144xf32>
    %1005 = arith.negf %1004 : vector<8x144xf32>
    %1006 = math.exp %1005 : vector<8x144xf32>
    %cst_184 = arith.constant 1.000000e+00 : f32
    %1007 = vector.broadcast %cst_184 : f32 to vector<8x144xf32>
    %1008 = arith.addf %1007, %1006 : vector<8x144xf32>
    %1009 = arith.divf %1007, %1008 : vector<8x144xf32>
    %1010 = vector.extract_strided_slice %1009 {offsets = [0, 0], sizes = [8, 48], strides = [1, 1]} : vector<8x144xf32> to vector<8x48xf32>
    %1011 = vector.extract_strided_slice %1009 {offsets = [0, 48], sizes = [8, 48], strides = [1, 1]} : vector<8x144xf32> to vector<8x48xf32>
    %1012 = vector.extract_strided_slice %1009 {offsets = [0, 96], sizes = [8, 48], strides = [1, 1]} : vector<8x144xf32> to vector<8x48xf32>
    %1013 = vector.extract_strided_slice %1003 {offsets = [0, 144], sizes = [8, 48], strides = [1, 1]} : vector<8x192xf32> to vector<8x48xf32>
    %1014 = math.tanh %1013 : vector<8x48xf32>
    %1015 = arith.mulf %1011, %937 : vector<8x48xf32>
    %1016 = arith.mulf %1010, %1014 : vector<8x48xf32>
    %1017 = arith.addf %1015, %1016 : vector<8x48xf32>
    %1018 = math.tanh %1017 : vector<8x48xf32>
    %1019 = arith.mulf %1012, %1018 : vector<8x48xf32>
    %cst_185 = arith.constant dense<0.000000e+00> : vector<8x192xf32>
    %1020 = tpu.matmul %1019, %2, %cst_185 {dimension_numbers = #tpu.dot_dimension_numbers<[1], [0], [0], [1], [0, 0, 1, 1], [], []>} : vector<8x48xf32>, vector<48x192xf32>, vector<8x192xf32> -> vector<8x192xf32>
    %1021 = arith.addf %1002, %1020 : vector<8x192xf32>
    %1022 = arith.addf %1021, %116 : vector<8x192xf32>
    %1023 = vector.extract_strided_slice %1022 {offsets = [0, 0], sizes = [8, 144], strides = [1, 1]} : vector<8x192xf32> to vector<8x144xf32>
    %1024 = arith.negf %1023 : vector<8x144xf32>
    %1025 = math.exp %1024 : vector<8x144xf32>
    %cst_186 = arith.constant 1.000000e+00 : f32
    %1026 = vector.broadcast %cst_186 : f32 to vector<8x144xf32>
    %1027 = arith.addf %1026, %1025 : vector<8x144xf32>
    %1028 = arith.divf %1026, %1027 : vector<8x144xf32>
    %1029 = vector.extract_strided_slice %1028 {offsets = [0, 0], sizes = [8, 48], strides = [1, 1]} : vector<8x144xf32> to vector<8x48xf32>
    %1030 = vector.extract_strided_slice %1028 {offsets = [0, 48], sizes = [8, 48], strides = [1, 1]} : vector<8x144xf32> to vector<8x48xf32>
    %1031 = vector.extract_strided_slice %1028 {offsets = [0, 96], sizes = [8, 48], strides = [1, 1]} : vector<8x144xf32> to vector<8x48xf32>
    %1032 = vector.extract_strided_slice %1022 {offsets = [0, 144], sizes = [8, 48], strides = [1, 1]} : vector<8x192xf32> to vector<8x48xf32>
    %1033 = math.tanh %1032 : vector<8x48xf32>
    %1034 = arith.mulf %1030, %956 : vector<8x48xf32>
    %1035 = arith.mulf %1029, %1033 : vector<8x48xf32>
    %1036 = arith.addf %1034, %1035 : vector<8x48xf32>
    %1037 = math.tanh %1036 : vector<8x48xf32>
    %1038 = arith.mulf %1031, %1037 : vector<8x48xf32>
    %1039 = vector.extract_strided_slice %999 {offsets = [8, 0], sizes = [8, 192], strides = [1, 1]} : vector<16x192xf32> to vector<8x192xf32>
    %cst_187 = arith.constant dense<0.000000e+00> : vector<8x192xf32>
    %1040 = tpu.matmul %978, %0, %cst_187 {dimension_numbers = #tpu.dot_dimension_numbers<[1], [0], [0], [1], [0, 0, 1, 1], [], []>} : vector<8x48xf32>, vector<48x192xf32>, vector<8x192xf32> -> vector<8x192xf32>
    %cst_188 = arith.constant dense<0.000000e+00> : vector<8x192xf32>
    %1041 = tpu.matmul %997, %1, %cst_188 {dimension_numbers = #tpu.dot_dimension_numbers<[1], [0], [0], [1], [0, 0, 1, 1], [], []>} : vector<8x48xf32>, vector<48x192xf32>, vector<8x192xf32> -> vector<8x192xf32>
    %1042 = arith.addf %1039, %1040 : vector<8x192xf32>
    %1043 = vector.extract_strided_slice %1042 {offsets = [0, 0], sizes = [8, 144], strides = [1, 1]} : vector<8x192xf32> to vector<8x144xf32>
    %1044 = arith.negf %1043 : vector<8x144xf32>
    %1045 = math.exp %1044 : vector<8x144xf32>
    %cst_189 = arith.constant 1.000000e+00 : f32
    %1046 = vector.broadcast %cst_189 : f32 to vector<8x144xf32>
    %1047 = arith.addf %1046, %1045 : vector<8x144xf32>
    %1048 = arith.divf %1046, %1047 : vector<8x144xf32>
    %1049 = vector.extract_strided_slice %1048 {offsets = [0, 0], sizes = [8, 48], strides = [1, 1]} : vector<8x144xf32> to vector<8x48xf32>
    %1050 = vector.extract_strided_slice %1048 {offsets = [0, 48], sizes = [8, 48], strides = [1, 1]} : vector<8x144xf32> to vector<8x48xf32>
    %1051 = vector.extract_strided_slice %1048 {offsets = [0, 96], sizes = [8, 48], strides = [1, 1]} : vector<8x144xf32> to vector<8x48xf32>
    %1052 = vector.extract_strided_slice %1042 {offsets = [0, 144], sizes = [8, 48], strides = [1, 1]} : vector<8x192xf32> to vector<8x48xf32>
    %1053 = math.tanh %1052 : vector<8x48xf32>
    %1054 = arith.mulf %1050, %976 : vector<8x48xf32>
    %1055 = arith.mulf %1049, %1053 : vector<8x48xf32>
    %1056 = arith.addf %1054, %1055 : vector<8x48xf32>
    %1057 = math.tanh %1056 : vector<8x48xf32>
    %1058 = arith.mulf %1051, %1057 : vector<8x48xf32>
    %cst_190 = arith.constant dense<0.000000e+00> : vector<8x192xf32>
    %1059 = tpu.matmul %1058, %2, %cst_190 {dimension_numbers = #tpu.dot_dimension_numbers<[1], [0], [0], [1], [0, 0, 1, 1], [], []>} : vector<8x48xf32>, vector<48x192xf32>, vector<8x192xf32> -> vector<8x192xf32>
    %1060 = arith.addf %1041, %1059 : vector<8x192xf32>
    %1061 = arith.addf %1060, %116 : vector<8x192xf32>
    %1062 = vector.extract_strided_slice %1061 {offsets = [0, 0], sizes = [8, 144], strides = [1, 1]} : vector<8x192xf32> to vector<8x144xf32>
    %1063 = arith.negf %1062 : vector<8x144xf32>
    %1064 = math.exp %1063 : vector<8x144xf32>
    %cst_191 = arith.constant 1.000000e+00 : f32
    %1065 = vector.broadcast %cst_191 : f32 to vector<8x144xf32>
    %1066 = arith.addf %1065, %1064 : vector<8x144xf32>
    %1067 = arith.divf %1065, %1066 : vector<8x144xf32>
    %1068 = vector.extract_strided_slice %1067 {offsets = [0, 0], sizes = [8, 48], strides = [1, 1]} : vector<8x144xf32> to vector<8x48xf32>
    %1069 = vector.extract_strided_slice %1067 {offsets = [0, 48], sizes = [8, 48], strides = [1, 1]} : vector<8x144xf32> to vector<8x48xf32>
    %1070 = vector.extract_strided_slice %1067 {offsets = [0, 96], sizes = [8, 48], strides = [1, 1]} : vector<8x144xf32> to vector<8x48xf32>
    %1071 = vector.extract_strided_slice %1061 {offsets = [0, 144], sizes = [8, 48], strides = [1, 1]} : vector<8x192xf32> to vector<8x48xf32>
    %1072 = math.tanh %1071 : vector<8x48xf32>
    %1073 = arith.mulf %1069, %995 : vector<8x48xf32>
    %1074 = arith.mulf %1068, %1072 : vector<8x48xf32>
    %1075 = arith.addf %1073, %1074 : vector<8x48xf32>
    %1076 = math.tanh %1075 : vector<8x48xf32>
    %1077 = arith.mulf %1070, %1076 : vector<8x48xf32>
    %c0_192 = arith.constant 0 : index
    %c0_193 = arith.constant 0 : index
    %1078 = vector.load %arg4[%c0_192, %c0_193] : memref<74x24xf32, #tpu.memory_space<vmem>>, vector<48x24xf32>
    %c48_194 = arith.constant 48 : index
    %c0_195 = arith.constant 0 : index
    %1079 = vector.load %arg4[%c48_194, %c0_195] : memref<74x24xf32, #tpu.memory_space<vmem>>, vector<1x24xf32>
    %c49 = arith.constant 49 : index
    %c0_196 = arith.constant 0 : index
    %1080 = vector.load %arg4[%c49, %c0_196] : memref<74x24xf32, #tpu.memory_space<vmem>>, vector<24x12xf32>
    %c73 = arith.constant 73 : index
    %c0_197 = arith.constant 0 : index
    %1081 = vector.load %arg4[%c73, %c0_197] : memref<74x24xf32, #tpu.memory_space<vmem>>, vector<1x12xf32>
    %cst_198 = arith.constant dense<0.000000e+00> : vector<8x24xf32>
    %1082 = tpu.matmul %1038, %1078, %cst_198 {dimension_numbers = #tpu.dot_dimension_numbers<[1], [0], [0], [1], [0, 0, 1, 1], [], []>} : vector<8x48xf32>, vector<48x24xf32>, vector<8x24xf32> -> vector<8x24xf32>
    %1083 = vector.broadcast %1079 : vector<1x24xf32> to vector<8x24xf32>
    %1084 = arith.addf %1082, %1083 : vector<8x24xf32>
    %cst_199 = arith.constant 0.000000e+00 : f32
    %1085 = vector.broadcast %cst_199 : f32 to vector<8x24xf32>
    %1086 = arith.maximumf %1084, %1085 : vector<8x24xf32>
    %cst_200 = arith.constant dense<0.000000e+00> : vector<8x12xf32>
    %1087 = tpu.matmul %1086, %1080, %cst_200 {dimension_numbers = #tpu.dot_dimension_numbers<[1], [0], [0], [1], [0, 0, 1, 1], [], []>} : vector<8x24xf32>, vector<24x12xf32>, vector<8x12xf32> -> vector<8x12xf32>
    %1088 = vector.broadcast %1081 : vector<1x12xf32> to vector<8x12xf32>
    %1089 = arith.addf %1087, %1088 : vector<8x12xf32>
    %c0_201 = arith.constant 0 : index
    %c0_202 = arith.constant 0 : index
    %1090 = vector.load %arg5[%c0_201, %c0_202] : memref<16x12xf32, #tpu.memory_space<vmem>>, vector<8x12xf32>
    tpu.vector_store %arg5[%c0_201, %c0_202], %1089 {strides = array<i32>} : memref<16x12xf32, #tpu.memory_space<vmem>>, vector<8x12xf32>,
    %cst_203 = arith.constant dense<0.000000e+00> : vector<8x24xf32>
    %1091 = tpu.matmul %1077, %1078, %cst_203 {dimension_numbers = #tpu.dot_dimension_numbers<[1], [0], [0], [1], [0, 0, 1, 1], [], []>} : vector<8x48xf32>, vector<48x24xf32>, vector<8x24xf32> -> vector<8x24xf32>
    %1092 = vector.broadcast %1079 : vector<1x24xf32> to vector<8x24xf32>
    %1093 = arith.addf %1091, %1092 : vector<8x24xf32>
    %cst_204 = arith.constant 0.000000e+00 : f32
    %1094 = vector.broadcast %cst_204 : f32 to vector<8x24xf32>
    %1095 = arith.maximumf %1093, %1094 : vector<8x24xf32>
    %cst_205 = arith.constant dense<0.000000e+00> : vector<8x12xf32>
    %1096 = tpu.matmul %1095, %1080, %cst_205 {dimension_numbers = #tpu.dot_dimension_numbers<[1], [0], [0], [1], [0, 0, 1, 1], [], []>} : vector<8x24xf32>, vector<24x12xf32>, vector<8x12xf32> -> vector<8x12xf32>
    %1097 = vector.broadcast %1081 : vector<1x12xf32> to vector<8x12xf32>
    %1098 = arith.addf %1096, %1097 : vector<8x12xf32>
    %c8_206 = arith.constant 8 : index
    %c0_207 = arith.constant 0 : index
    %1099 = vector.load %arg5[%c8_206, %c0_207] : memref<16x12xf32, #tpu.memory_space<vmem>>, vector<8x12xf32>
    tpu.vector_store %arg5[%c8_206, %c0_207], %1098 {strides = array<i32>} : memref<16x12xf32, #tpu.memory_space<vmem>>, vector<8x12xf32>,
    return
  }
  func.func @transform_0(%arg0: i32) -> (i32, i32) {
    %c0_i32 = arith.constant 0 : i32
    %c0_i32_0 = arith.constant 0 : i32
    return %arg0, %c0_i32 : i32, i32
  }
  func.func @transform_1(%arg0: i32) -> (i32, i32) {
    %c0_i32 = arith.constant 0 : i32
    %c0_i32_0 = arith.constant 0 : i32
    %c0_i32_1 = arith.constant 0 : i32
    return %c0_i32, %c0_i32_0 : i32, i32
  }
  func.func @transform_2(%arg0: i32) -> (i32, i32) {
    %c0_i32 = arith.constant 0 : i32
    %c0_i32_0 = arith.constant 0 : i32
    %c0_i32_1 = arith.constant 0 : i32
    return %c0_i32, %c0_i32_0 : i32, i32
  }
  func.func @transform_3(%arg0: i32) -> (i32, i32) {
    %c0_i32 = arith.constant 0 : i32
    %c0_i32_0 = arith.constant 0 : i32
    %c0_i32_1 = arith.constant 0 : i32
    return %c0_i32, %c0_i32_0 : i32, i32
  }
  func.func @transform_4(%arg0: i32) -> (i32, i32) {
    %c0_i32 = arith.constant 0 : i32
    %c0_i32_0 = arith.constant 0 : i32
    return %arg0, %c0_i32 : i32, i32
  }
}

</mosaic_0001>

<llo_original>
// kernel: tpu_custom_call.1
$region0: #{tpu_custom_call.1}
  #allocation0 [shape = 'u32[]', space=smem, size = 0x4, offset = 0x4, fixed_abs, tag = 'smem constant byte address 0x4 - core index']
  #allocation1 [shape = 'u32[144,128]{1,0:T(1,128)}', space=vmem, size = 0x12000, scoped, tag = 'internal scratch']
  #allocation2 [shape = 'f32[12,16,192]{2,1,0:T(8,128)}', space=vmem, size = 0x30000, scoped, tag = 'scratch operand']
  %s0 = inlined_call_operand.vmem [shape: f32[16,12], index: 0, kind: input, shape index: {}]
  %s1 = inlined_call_operand.hbm [shape: f32[144,192], index: 1, kind: input, shape index: {}]
  %s2 = inlined_call_operand.vmem [shape: f32[3,192], index: 2, kind: input, shape index: {}]
  %s3 = inlined_call_operand.vmem [shape: f32[74,24], index: 3, kind: input, shape index: {}]
  %s4 = inlined_call_operand.hbm [shape: f32[16,12], index: 4, kind: output, shape index: {}]
  %s5 = sld [smem:[#allocation0]]
  $region30: #{tpu_custom_call.1} parent=0
    _
  %s7 = ssub.s32 1, %s5
  %s8 = scalar_select 0, %s7, %s5
  $region1: #{tpu_custom_call.1} parent=0
    #allocation3 [shape = 'u8[147456]{0}', space=vmem, size = 0x24000, scoped, tag = 'input window, operand 1, single buffered']
    #allocation4 [shape = 's32[1]{0}', space=sflag, size = 0x4, scoped, tag = 'scoped memory for tpu_custom_call.1']
    #allocation5 [shape = 's32[1]{0}', space=sflag, size = 0x4, scoped, tag = 'scoped memory for tpu_custom_call.1']
    #allocation6 [shape = 'u8[8192]{0}', space=vmem, size = 0x2000, scoped, tag = 'output window, operand 0, single buffered']
    %9 = vsyncpa [#allocation4], 0
    %10 = vsyncpa [#allocation5], 0
    // Predicated region
    $region2: #{tpu_custom_call.1} parent=1 // pred_check
      _
    $region3: #{tpu_custom_call.1} parent=1 // pred_check_branch
      %12 = sbr.rel (0) target = $region5
    $region4: #{tpu_custom_call.1} parent=1 // pred_region
      _
    $region5: #{tpu_custom_call.1} parent=1 // pred_fallthru
      _
    // Predicated region
    $region6: #{tpu_custom_call.1} parent=1 // pred_check
      _
    $region7: #{tpu_custom_call.1} parent=1 // pred_check_branch
      %14 = sbr.rel (0) target = $region9
    $region8: #{tpu_custom_call.1} parent=1 // pred_region
      %s16 = ssub.s32 4608, 4608
      %17 = vsyncadd [#allocation4], %s16
      %s18 = sshll.u32 [#allocation3], 4
      %s19 = int_to_ptr.vmem [resolvable:$true] %s18
      %24 = dma.hbm_to_vmem [thread:$0]  %s1, 4608, %s19, [#allocation4], 256, 256, 16
    $region9: #{tpu_custom_call.1} parent=1 // pred_fallthru
      _
    // Predicated region
    $region10: #{tpu_custom_call.1} parent=1 // pred_check
      _
    $region11: #{tpu_custom_call.1} parent=1 // pred_check_branch
      %26 = sbr.rel (0) target = $region13
    $region12: #{tpu_custom_call.1} parent=1 // pred_region
      _
    $region13: #{tpu_custom_call.1} parent=1 // pred_fallthru
      _
    // Predicated region
    $region14: #{tpu_custom_call.1} parent=1 // pred_check
      _
    $region15: #{tpu_custom_call.1} parent=1 // pred_check_branch
      %28 = sbr.rel (0) target = $region17
    $region16: #{tpu_custom_call.1} parent=1 // pred_region
      _
    $region17: #{tpu_custom_call.1} parent=1 // pred_fallthru
      _
    // Predicated region
    $region18: #{tpu_custom_call.1} parent=1 // pred_check
      _
    $region19: #{tpu_custom_call.1} parent=1 // pred_check_branch
      %30 = sbr.rel (0) target = $region21
    $region20: #{tpu_custom_call.1} parent=1 // pred_region
      %31 = dma.done [#allocation4], 4608
    $region21: #{tpu_custom_call.1} parent=1 // pred_fallthru
      _
    %v32 = vld [vmem:[#allocation3] sm:$0xff]
    %v33 = vld [vmem:[#allocation3 + $0x8] sm:$0xff]
    %v34 = vld [vmem:[#allocation3 + $0x10] sm:$0xff]
    %v35 = vld [vmem:[#allocation3 + $0x18] sm:$0xff]
    %v36 = vld [vmem:[#allocation3 + $0x20] sm:$0xff]
    %v37 = vld [vmem:[#allocation3 + $0x28] sm:$0xff]
    %v38 = vld [vmem:[#allocation3 + $0x30] sm:$0xff]
    %v39 = vld [vmem:[#allocation3 + $0x38] sm:$0xff]
    %v40 = vld [vmem:[#allocation3 + $0x40] sm:$0xff]
    %v41 = vld [vmem:[#allocation3 + $0x48] sm:$0xff]
    %v42 = vld [vmem:[#allocation3 + $0x50] sm:$0xff]
    %v43 = vld [vmem:[#allocation3 + $0x58] sm:$0xff]
    %v44 = vld [vmem:[#allocation3 + $0x60] sm:$0xff]
    %v45 = vld [vmem:[#allocation3 + $0x68] sm:$0xff]
    %v46 = vld [vmem:[#allocation3 + $0x70] sm:$0xff]
    %v47 = vld [vmem:[#allocation3 + $0x78] sm:$0xff]
    %v48 = vld [vmem:[#allocation3 + $0x80] sm:$0xff]
    %v49 = vld [vmem:[#allocation3 + $0x88] sm:$0xff]
    %v50 = vld [vmem:[#allocation3 + $0x90] sm:$0xff]
    %v51 = vld [vmem:[#allocation3 + $0x98] sm:$0xff]
    %v52 = vld [vmem:[#allocation3 + $0xa0] sm:$0xff]
    %v53 = vld [vmem:[#allocation3 + $0xa8] sm:$0xff]
    %v54 = vld [vmem:[#allocation3 + $0xb0] sm:$0xff]
    %v55 = vld [vmem:[#allocation3 + $0xb8] sm:$0xff]
    %v56 = vld [vmem:[#allocation3 + $0xc0] sm:$0xff]
    %v57 = vld [vmem:[#allocation3 + $0xc8] sm:$0xff]
    %v58 = vld [vmem:[#allocation3 + $0xd0] sm:$0xff]
    %v59 = vld [vmem:[#allocation3 + $0xd8] sm:$0xff]
    %v60 = vld [vmem:[#allocation3 + $0xe0] sm:$0xff]
    %v61 = vld [vmem:[#allocation3 + $0xe8] sm:$0xff]
    %v62 = vld [vmem:[#allocation3 + $0xf0] sm:$0xff]
    %v63 = vld [vmem:[#allocation3 + $0xf8] sm:$0xff]
    %v64 = vld [vmem:[#allocation3 + $0x100] sm:$0xff]
    %v65 = vld [vmem:[#allocation3 + $0x108] sm:$0xff]
    %v66 = vld [vmem:[#allocation3 + $0x110] sm:$0xff]
    %v67 = vld [vmem:[#allocation3 + $0x118] sm:$0xff]
    %v68 = vld [vmem:[%s2] ss:$4 sm:$0x3]
    %s69 = scalar_lea.vmem %s2, 1
    %v70 = vld [vmem:[%s69] ss:$4 sm:$0x3]
    %s71 = scalar_lea.vmem %s2, 2
    %v72 = vld [vmem:[%s71] ss:$4 sm:$0x3]
    %v73 = vld [vmem:[%s0] sm:$0xff]
    %v74 = vld [vmem:[%s0 + $0x8] sm:$0xff]
    %76 = vset.pattern.permute.xlu0 0
    %77 = vperm.xlu0 %76, %v73
    %v78 = vpop.permute.xlu0 %77
    %81 = vset.pattern.permute.xlu0 0
    %82 = vperm.xlu0 %81, %v74
    %v83 = vpop.permute.xlu0 %82
    %v86 = vlaneseq
    %v87 = vshrl.u32 %v86, 7
    %v88 = vsub.s32 0, %v87
    %v89 = vrot.slane %v68, %v88
    %v90 = vlaneseq
    %v91 = vshrl.u32 %v90, 7
    %v92 = vsub.s32 1, %v91
    %v93 = vrot.slane %v68, %v92
    %v96 = vmul.f32 %v78, %v89
    %v97 = vmul.f32 %v78, %v93
    %v98 = vmul.f32 %v83, %v89
    %v99 = vmul.f32 %v83, %v93
    %v101 = vlaneseq
    %v102 = vshrl.u32 %v101, 7
    %v103 = vsub.s32 0, %v102
    %v104 = vrot.slane %v70, %v103
    %v105 = vlaneseq
    %v106 = vshrl.u32 %v105, 7
    %v107 = vsub.s32 1, %v106
    %v108 = vrot.slane %v70, %v107
    %v111 = vadd.f32 %v96, %v104
    %v112 = vadd.f32 %v97, %v108
    %v113 = vadd.f32 %v98, %v104
    %v114 = vadd.f32 %v99, %v108
    %115 = vst [vmem:[#allocation2] sm:$0xff] %v111
    %vm116 = vcmask 523264
    %117 = vst.msk [vmem:[#allocation2 + $0x8] sm:$0xff] %vm116, %v112
    %118 = vst [vmem:[#allocation2 + $0x10] sm:$0xff] %v113
    %119 = vst.msk [vmem:[#allocation2 + $0x18] sm:$0xff] %vm116, %v114
    %120 = vset.pattern.permute.xlu0 1
    %121 = vperm.xlu0 %120, %v73
    %v122 = vpop.permute.xlu0 %121
    %124 = vset.pattern.permute.xlu0 1
    %125 = vperm.xlu0 %124, %v74
    %v126 = vpop.permute.xlu0 %125
    %v128 = vmul.f32 %v122, %v89
    %v129 = vmul.f32 %v122, %v93
    %v130 = vmul.f32 %v126, %v89
    %v131 = vmul.f32 %v126, %v93
    %v132 = vadd.f32 %v128, %v104
    %v133 = vadd.f32 %v129, %v108
    %v134 = vadd.f32 %v130, %v104
    %v135 = vadd.f32 %v131, %v108
    %s136 = scalar_lea.vmem [#allocation2], 32
    %137 = vst [vmem:[%s136] sm:$0xff] %v132
    %138 = vst.msk [vmem:[%s136 + $0x8] sm:$0xff] %vm116, %v133
    %139 = vst [vmem:[%s136 + $0x10] sm:$0xff] %v134
    %140 = vst.msk [vmem:[%s136 + $0x18] sm:$0xff] %vm116, %v135
    %141 = vset.pattern.permute.xlu0 2
    %142 = vperm.xlu0 %141, %v73
    %v143 = vpop.permute.xlu0 %142
    %145 = vset.pattern.permute.xlu0 2
    %146 = vperm.xlu0 %145, %v74
    %v147 = vpop.permute.xlu0 %146
    %v149 = vmul.f32 %v143, %v89
    %v150 = vmul.f32 %v143, %v93
    %v151 = vmul.f32 %v147, %v89
    %v152 = vmul.f32 %v147, %v93
    %v153 = vadd.f32 %v149, %v104
    %v154 = vadd.f32 %v150, %v108
    %v155 = vadd.f32 %v151, %v104
    %v156 = vadd.f32 %v152, %v108
    %s157 = scalar_lea.vmem [#allocation2], 64
    %158 = vst [vmem:[%s157] sm:$0xff] %v153
    %159 = vst.msk [vmem:[%s157 + $0x8] sm:$0xff] %vm116, %v154
    %160 = vst [vmem:[%s157 + $0x10] sm:$0xff] %v155
    %161 = vst.msk [vmem:[%s157 + $0x18] sm:$0xff] %vm116, %v156
    %162 = vset.pattern.permute.xlu0 3
    %163 = vperm.xlu0 %162, %v73
    %v164 = vpop.permute.xlu0 %163
    %166 = vset.pattern.permute.xlu0 3
    %167 = vperm.xlu0 %166, %v74
    %v168 = vpop.permute.xlu0 %167
    %v170 = vmul.f32 %v164, %v89
    %v171 = vmul.f32 %v164, %v93
    %v172 = vmul.f32 %v168, %v89
    %v173 = vmul.f32 %v168, %v93
    %v174 = vadd.f32 %v170, %v104
    %v175 = vadd.f32 %v171, %v108
    %v176 = vadd.f32 %v172, %v104
    %v177 = vadd.f32 %v173, %v108
    %s178 = scalar_lea.vmem [#allocation2], 96
    %179 = vst [vmem:[%s178] sm:$0xff] %v174
    %180 = vst.msk [vmem:[%s178 + $0x8] sm:$0xff] %vm116, %v175
    %181 = vst [vmem:[%s178 + $0x10] sm:$0xff] %v176
    %182 = vst.msk [vmem:[%s178 + $0x18] sm:$0xff] %vm116, %v177
    %183 = vset.pattern.permute.xlu0 4
    %184 = vperm.xlu0 %183, %v73
    %v185 = vpop.permute.xlu0 %184
    %187 = vset.pattern.permute.xlu0 4
    %188 = vperm.xlu0 %187, %v74
    %v189 = vpop.permute.xlu0 %188
    %v191 = vmul.f32 %v185, %v89
    %v192 = vmul.f32 %v185, %v93
    %v193 = vmul.f32 %v189, %v89
    %v194 = vmul.f32 %v189, %v93
    %v195 = vadd.f32 %v191, %v104
    %v196 = vadd.f32 %v192, %v108
    %v197 = vadd.f32 %v193, %v104
    %v198 = vadd.f32 %v194, %v108
    %s199 = scalar_lea.vmem [#allocation2], 128
    %200 = vst [vmem:[%s199] sm:$0xff] %v195
    %201 = vst.msk [vmem:[%s199 + $0x8] sm:$0xff] %vm116, %v196
    %202 = vst [vmem:[%s199 + $0x10] sm:$0xff] %v197
    %203 = vst.msk [vmem:[%s199 + $0x18] sm:$0xff] %vm116, %v198
    %204 = vset.pattern.permute.xlu0 5
    %205 = vperm.xlu0 %204, %v73
    %v206 = vpop.permute.xlu0 %205
    %208 = vset.pattern.permute.xlu0 5
    %209 = vperm.xlu0 %208, %v74
    %v210 = vpop.permute.xlu0 %209
    %v212 = vmul.f32 %v206, %v89
    %v213 = vmul.f32 %v206, %v93
    %v214 = vmul.f32 %v210, %v89
    %v215 = vmul.f32 %v210, %v93
    %v216 = vadd.f32 %v212, %v104
    %v217 = vadd.f32 %v213, %v108
    %v218 = vadd.f32 %v214, %v104
    %v219 = vadd.f32 %v215, %v108
    %s220 = scalar_lea.vmem [#allocation2], 160
    %221 = vst [vmem:[%s220] sm:$0xff] %v216
    %222 = vst.msk [vmem:[%s220 + $0x8] sm:$0xff] %vm116, %v217
    %223 = vst [vmem:[%s220 + $0x10] sm:$0xff] %v218
    %224 = vst.msk [vmem:[%s220 + $0x18] sm:$0xff] %vm116, %v219
    %225 = vset.pattern.permute.xlu0 6
    %226 = vperm.xlu0 %225, %v73
    %v227 = vpop.permute.xlu0 %226
    %229 = vset.pattern.permute.xlu0 6
    %230 = vperm.xlu0 %229, %v74
    %v231 = vpop.permute.xlu0 %230
    %v233 = vmul.f32 %v227, %v89
    %v234 = vmul.f32 %v227, %v93
    %v235 = vmul.f32 %v231, %v89
    %v236 = vmul.f32 %v231, %v93
    %v237 = vadd.f32 %v233, %v104
    %v238 = vadd.f32 %v234, %v108
    %v239 = vadd.f32 %v235, %v104
    %v240 = vadd.f32 %v236, %v108
    %s241 = scalar_lea.vmem [#allocation2], 192
    %242 = vst [vmem:[%s241] sm:$0xff] %v237
    %243 = vst.msk [vmem:[%s241 + $0x8] sm:$0xff] %vm116, %v238
    %244 = vst [vmem:[%s241 + $0x10] sm:$0xff] %v239
    %245 = vst.msk [vmem:[%s241 + $0x18] sm:$0xff] %vm116, %v240
    %246 = vset.pattern.permute.xlu0 7
    %247 = vperm.xlu0 %246, %v73
    %v248 = vpop.permute.xlu0 %247
    %250 = vset.pattern.permute.xlu0 7
    %251 = vperm.xlu0 %250, %v74
    %v252 = vpop.permute.xlu0 %251
    %v254 = vmul.f32 %v248, %v89
    %v255 = vmul.f32 %v248, %v93
    %v256 = vmul.f32 %v252, %v89
    %v257 = vmul.f32 %v252, %v93
    %v258 = vadd.f32 %v254, %v104
    %v259 = vadd.f32 %v255, %v108
    %v260 = vadd.f32 %v256, %v104
    %v261 = vadd.f32 %v257, %v108
    %s262 = scalar_lea.vmem [#allocation2], 224
    %263 = vst [vmem:[%s262] sm:$0xff] %v258
    %264 = vst.msk [vmem:[%s262 + $0x8] sm:$0xff] %vm116, %v259
    %265 = vst [vmem:[%s262 + $0x10] sm:$0xff] %v260
    %266 = vst.msk [vmem:[%s262 + $0x18] sm:$0xff] %vm116, %v261
    %267 = vset.pattern.permute.xlu0 8
    %268 = vperm.xlu0 %267, %v73
    %v269 = vpop.permute.xlu0 %268
    %271 = vset.pattern.permute.xlu0 8
    %272 = vperm.xlu0 %271, %v74
    %v273 = vpop.permute.xlu0 %272
    %v275 = vmul.f32 %v269, %v89
    %v276 = vmul.f32 %v269, %v93
    %v277 = vmul.f32 %v273, %v89
    %v278 = vmul.f32 %v273, %v93
    %v279 = vadd.f32 %v275, %v104
    %v280 = vadd.f32 %v276, %v108
    %v281 = vadd.f32 %v277, %v104
    %v282 = vadd.f32 %v278, %v108
    %s283 = scalar_lea.vmem [#allocation2], 256
    %284 = vst [vmem:[%s283] sm:$0xff] %v279
    %285 = vst.msk [vmem:[%s283 + $0x8] sm:$0xff] %vm116, %v280
    %286 = vst [vmem:[%s283 + $0x10] sm:$0xff] %v281
    %287 = vst.msk [vmem:[%s283 + $0x18] sm:$0xff] %vm116, %v282
    %288 = vset.pattern.permute.xlu0 9
    %289 = vperm.xlu0 %288, %v73
    %v290 = vpop.permute.xlu0 %289
    %292 = vset.pattern.permute.xlu0 9
    %293 = vperm.xlu0 %292, %v74
    %v294 = vpop.permute.xlu0 %293
    %v296 = vmul.f32 %v290, %v89
    %v297 = vmul.f32 %v290, %v93
    %v298 = vmul.f32 %v294, %v89
    %v299 = vmul.f32 %v294, %v93
    %v300 = vadd.f32 %v296, %v104
    %v301 = vadd.f32 %v297, %v108
    %v302 = vadd.f32 %v298, %v104
    %v303 = vadd.f32 %v299, %v108
    %s304 = scalar_lea.vmem [#allocation2], 288
    %305 = vst [vmem:[%s304] sm:$0xff] %v300
    %306 = vst.msk [vmem:[%s304 + $0x8] sm:$0xff] %vm116, %v301
    %307 = vst [vmem:[%s304 + $0x10] sm:$0xff] %v302
    %308 = vst.msk [vmem:[%s304 + $0x18] sm:$0xff] %vm116, %v303
    %309 = vset.pattern.permute.xlu0 10
    %310 = vperm.xlu0 %309, %v73
    %v311 = vpop.permute.xlu0 %310
    %313 = vset.pattern.permute.xlu0 10
    %314 = vperm.xlu0 %313, %v74
    %v315 = vpop.permute.xlu0 %314
    %v317 = vmul.f32 %v311, %v89
    %v318 = vmul.f32 %v311, %v93
    %v319 = vmul.f32 %v315, %v89
    %v320 = vmul.f32 %v315, %v93
    %v321 = vadd.f32 %v317, %v104
    %v322 = vadd.f32 %v318, %v108
    %v323 = vadd.f32 %v319, %v104
    %v324 = vadd.f32 %v320, %v108
    %s325 = scalar_lea.vmem [#allocation2], 320
    %326 = vst [vmem:[%s325] sm:$0xff] %v321
    %327 = vst.msk [vmem:[%s325 + $0x8] sm:$0xff] %vm116, %v322
    %328 = vst [vmem:[%s325 + $0x10] sm:$0xff] %v323
    %329 = vst.msk [vmem:[%s325 + $0x18] sm:$0xff] %vm116, %v324
    %330 = vset.pattern.permute.xlu0 11
    %331 = vperm.xlu0 %330, %v73
    %v332 = vpop.permute.xlu0 %331
    %334 = vset.pattern.permute.xlu0 11
    %335 = vperm.xlu0 %334, %v74
    %v336 = vpop.permute.xlu0 %335
    %v338 = vmul.f32 %v332, %v89
    %v339 = vmul.f32 %v332, %v93
    %v340 = vmul.f32 %v336, %v89
    %v341 = vmul.f32 %v336, %v93
    %v342 = vadd.f32 %v338, %v104
    %v343 = vadd.f32 %v339, %v108
    %v344 = vadd.f32 %v340, %v104
    %v345 = vadd.f32 %v341, %v108
    %s346 = scalar_lea.vmem [#allocation2], 352
    %347 = vst [vmem:[%s346] sm:$0xff] %v342
    %348 = vst.msk [vmem:[%s346 + $0x8] sm:$0xff] %vm116, %v343
    %349 = vst [vmem:[%s346 + $0x10] sm:$0xff] %v344
    %350 = vst.msk [vmem:[%s346 + $0x18] sm:$0xff] %vm116, %v345
    %v352 = vlaneseq
    %v353 = vshrl.u32 %v352, 7
    %v354 = vsub.s32 0, %v353
    %v355 = vrot.slane %v72, %v354
    %v356 = vlaneseq
    %v357 = vshrl.u32 %v356, 7
    %v358 = vsub.s32 1, %v357
    %v359 = vrot.slane %v72, %v358
    %v362 = vld [vmem:[#allocation2] sm:$0xff]
    %v363 = vld [vmem:[#allocation2 + $0x8] sm:$0xff]
    %v364 = vld [vmem:[#allocation2 + $0x10] sm:$0xff]
    %v365 = vld [vmem:[#allocation2 + $0x18] sm:$0xff]
    %vm366 = vcmask 392192
    %v368 = vsel %vm366, 0.0, 0
    %370 = vmatprep.subr.mxu0 %v33
    %371 = vmatpush1.msra.mxu0 %v32
    %372 = vmatprep.subr.mxu0 %v35
    %373 = vmatpush1.msra.mxu0 %v34
    %374 = vmatprep.subr.mxu0 %v37
    %375 = vmatpush1.msra.mxu0 %v36
    %376 = vmatprep.subr.mxu0 %v39
    %377 = vmatpush1.msra.mxu0 %v38
    %378 = vmatprep.subr.mxu0 %v41
    %379 = vmatpush1.msra.mxu0 %v40
    %380 = vmatprep.subr.mxu0 %v43
    %381 = vmatpush1.msra.mxu0 %v42
    %382 = vmatprep.subr.mxu0 0.0
    %383 = vmatpush1.msra.mxu0 0.0
    %384 = vmatprep.subr.mxu0 0.0
    %385 = vmatpush1.msra.mxu0 0.0
    %386 = vmatprep.subr.mxu0 0.0
    %387 = vmatpush1.msra.mxu0 0.0
    %388 = vmatprep.subr.mxu0 0.0
    %389 = vmatpush1.msra.mxu0 0.0
    %390 = vmatprep.subr.mxu0 0.0
    %391 = vmatpush1.msra.mxu0 0.0
    %392 = vmatprep.subr.mxu0 0.0
    %393 = vmatpush1.msra.mxu0 0.0
    %394 = vmatprep.subr.mxu0 0.0
    %395 = vmatpush1.msra.mxu0 0.0
    %396 = vmatprep.subr.mxu0 0.0
    %397 = vmatpush1.msra.mxu0 0.0
    %398 = vmatprep.subr.mxu0 0.0
    %399 = vmatpush1.msra.mxu0 0.0
    %400 = vmatprep.subr.mxu0 0.0
    %401 = vmatpush1.msra.mxu0 0.0
    %402 = vmatprep.subr.mxu0 0.0
    %403 = vmatpush1.msra.mxu0 0.0
    %404 = vmatprep.subr.mxu0 0.0
    %405 = vmatpush1.msra.mxu0 0.0
    %406 = vmatprep.subr.mxu0 0.0
    %407 = vmatpush1.msra.mxu0 0.0
    %408 = vmatprep.subr.mxu0 0.0
    %409 = vmatpush1.msra.mxu0 0.0
    %410 = vmatprep.subr.mxu0 0.0
    %411 = vmatpush1.msra.mxu0 0.0
    %412 = vmatprep.subr.mxu0 0.0
    %413 = vmatpush1.msra.mxu0 0.0
    %414 = vmatprep.subr.mxu0 0.0
    %415 = vmatpush1.msra.mxu0 0.0
    %416 = vmatprep.subr.mxu0 0.0
    %417 = vmatpush1.msra.mxu0 0.0
    %418 = vmatprep.subr.mxu0 0.0
    %419 = vmatpush1.msra.mxu0 0.0
    %420 = vmatprep.subr.mxu0 0.0
    %421 = vmatpush1.msra.mxu0 0.0
    %422 = vmatprep.subr.mxu0 0.0
    %423 = vmatpush1.msra.mxu0 0.0
    %424 = vmatprep.subr.mxu0 0.0
    %425 = vmatpush1.msra.mxu0 0.0
    %426 = vmatprep.subr.mxu0 0.0
    %427 = vmatpush1.msra.mxu0 0.0
    %428 = vmatprep.subr.mxu0 0.0
    %429 = vmatpush1.msra.mxu0 0.0
    %430 = vmatprep.subr.mxu0 0.0
    %431 = vmatpush1.msra.mxu0 0.0
    %432 = vmatprep.subr.mxu0 0.0
    %433 = vmatpush1.msra.mxu0 0.0
    %434 = vmatprep.mubr.f32.mxu0 0.0
    %435 = vmatmul.mubr.f32.gmra.mrb[0].mxu0 %v368
    %v436 = vpop.f32.mrb[0].mxu0
    %v437 = vadd.f32 0.0, %v436
    %v438 = vpop.f32.mrb[0].mxu0
    %v439 = vadd.f32 0.0, %v438
    %440 = vdwg.mxu0
    %v441 = vadd.f32 %v362, %v437
    %v442 = vadd.f32 %v363, %v439
    %v443 = vxor.u32 %v441, 2147483648
    %v444 = vxor.u32 %v442, 2147483648
    %v445 = vmul.f32 %v443, 1.442695
    %v446 = vpow.pop %v445
    %v447 = vmul.f32 %v444, 1.442695
    %v448 = vpow.pop %v447
    %v449 = vadd.f32 %v446, 1.0
    %v450 = vadd.f32 %v448, 1.0
    %v451 = vrcp.pop %v449
    %v452 = vmul.f32 1.0, %v451
    %v453 = vrcp.pop %v450
    %v454 = vmul.f32 1.0, %v453
    %v455 = vtanh.pop %v442
    %v456 = vmul.f32 %v452, 0.0
    %458 = vrot.lane.b32.xlu0 %v455, 112
    %v459 = vpop.permute.xlu0 %458
    %v461 = vmul.f32 %v452, %v459
    %463 = vrot.lane.b32.xlu0 %v461, 48
    %v464 = vpop.permute.xlu0 %463
    %v466 = vadd.f32 %v456, %v464
    %v467 = vtanh.pop %v466
    %469 = vrot.lane.b32.xlu0 %v467, 48
    %v470 = vpop.permute.xlu0 %469
    %v472 = vmul.f32 %v452, %v470
    %v473 = vmul.f32 %v454, %v470
    %476 = vrot.lane.b32.xlu0 %v472, 32
    %v477 = vpop.permute.xlu0 %476
    %478 = vrot.lane.b32.xlu0 %v473, 32
    %v479 = vpop.permute.xlu0 %478
    %vm480 = vcmask 261120
    %v481 = vsel %vm480, %v477, %v479
    %v482 = vsel %vm366, %v481, 0
    %484 = vmatprep.subr.mxu0 %v57
    %485 = vmatpush1.msra.mxu0 %v56
    %486 = vmatprep.subr.mxu0 %v59
    %487 = vmatpush1.msra.mxu0 %v58
    %488 = vmatprep.subr.mxu0 %v61
    %489 = vmatpush1.msra.mxu0 %v60
    %490 = vmatprep.subr.mxu0 %v63
    %491 = vmatpush1.msra.mxu0 %v62
    %492 = vmatprep.subr.mxu0 %v65
    %493 = vmatpush1.msra.mxu0 %v64
    %494 = vmatprep.subr.mxu0 %v67
    %495 = vmatpush1.msra.mxu0 %v66
    %496 = vmatprep.subr.mxu0 0.0
    %497 = vmatpush1.msra.mxu0 0.0
    %498 = vmatprep.subr.mxu0 0.0
    %499 = vmatpush1.msra.mxu0 0.0
    %500 = vmatprep.subr.mxu0 0.0
    %501 = vmatpush1.msra.mxu0 0.0
    %502 = vmatprep.subr.mxu0 0.0
    %503 = vmatpush1.msra.mxu0 0.0
    %504 = vmatprep.subr.mxu0 0.0
    %505 = vmatpush1.msra.mxu0 0.0
    %506 = vmatprep.subr.mxu0 0.0
    %507 = vmatpush1.msra.mxu0 0.0
    %508 = vmatprep.subr.mxu0 0.0
    %509 = vmatpush1.msra.mxu0 0.0
    %510 = vmatprep.subr.mxu0 0.0
    %511 = vmatpush1.msra.mxu0 0.0
    %512 = vmatprep.subr.mxu0 0.0
    %513 = vmatpush1.msra.mxu0 0.0
    %514 = vmatprep.subr.mxu0 0.0
    %515 = vmatpush1.msra.mxu0 0.0
    %516 = vmatprep.subr.mxu0 0.0
    %517 = vmatpush1.msra.mxu0 0.0
    %518 = vmatprep.subr.mxu0 0.0
    %519 = vmatpush1.msra.mxu0 0.0
    %520 = vmatprep.subr.mxu0 0.0
    %521 = vmatpush1.msra.mxu0 0.0
    %522 = vmatprep.subr.mxu0 0.0
    %523 = vmatpush1.msra.mxu0 0.0
    %524 = vmatprep.subr.mxu0 0.0
    %525 = vmatpush1.msra.mxu0 0.0
    %526 = vmatprep.subr.mxu0 0.0
    %527 = vmatpush1.msra.mxu0 0.0
    %528 = vmatprep.subr.mxu0 0.0
    %529 = vmatpush1.msra.mxu0 0.0
    %530 = vmatprep.subr.mxu0 0.0
    %531 = vmatpush1.msra.mxu0 0.0
    %532 = vmatprep.subr.mxu0 0.0
    %533 = vmatpush1.msra.mxu0 0.0
    %534 = vmatprep.subr.mxu0 0.0
    %535 = vmatpush1.msra.mxu0 0.0
    %536 = vmatprep.subr.mxu0 0.0
    %537 = vmatpush1.msra.mxu0 0.0
    %538 = vmatprep.subr.mxu0 0.0
    %539 = vmatpush1.msra.mxu0 0.0
    %540 = vmatprep.subr.mxu0 0.0
    %541 = vmatpush1.msra.mxu0 0.0
    %542 = vmatprep.subr.mxu0 0.0
    %543 = vmatpush1.msra.mxu0 0.0
    %544 = vmatprep.subr.mxu0 0.0
    %545 = vmatpush1.msra.mxu0 0.0
    %546 = vmatprep.subr.mxu0 0.0
    %547 = vmatpush1.msra.mxu0 0.0
    %548 = vmatprep.mubr.f32.mxu0 0.0
    %549 = vmatmul.mubr.f32.gmra.mrb[0].mxu0 %v482
    %v550 = vpop.f32.mrb[0].mxu0
    %v551 = vadd.f32 0.0, %v550
    %v552 = vpop.f32.mrb[0].mxu0
    %v553 = vadd.f32 0.0, %v552
    %554 = vdwg.mxu0
    %555 = vmatprep.subr.mxu0 %v45
    %556 = vmatpush1.msra.mxu0 %v44
    %557 = vmatprep.subr.mxu0 %v47
    %558 = vmatpush1.msra.mxu0 %v46
    %559 = vmatprep.subr.mxu0 %v49
    %560 = vmatpush1.msra.mxu0 %v48
    %561 = vmatprep.subr.mxu0 %v51
    %562 = vmatpush1.msra.mxu0 %v50
    %563 = vmatprep.subr.mxu0 %v53
    %564 = vmatpush1.msra.mxu0 %v52
    %565 = vmatprep.subr.mxu0 %v55
    %566 = vmatpush1.msra.mxu0 %v54
    %567 = vmatprep.subr.mxu0 0.0
    %568 = vmatpush1.msra.mxu0 0.0
    %569 = vmatprep.subr.mxu0 0.0
    %570 = vmatpush1.msra.mxu0 0.0
    %571 = vmatprep.subr.mxu0 0.0
    %572 = vmatpush1.msra.mxu0 0.0
    %573 = vmatprep.subr.mxu0 0.0
    %574 = vmatpush1.msra.mxu0 0.0
    %575 = vmatprep.subr.mxu0 0.0
    %576 = vmatpush1.msra.mxu0 0.0
    %577 = vmatprep.subr.mxu0 0.0
    %578 = vmatpush1.msra.mxu0 0.0
    %579 = vmatprep.subr.mxu0 0.0
    %580 = vmatpush1.msra.mxu0 0.0
    %581 = vmatprep.subr.mxu0 0.0
    %582 = vmatpush1.msra.mxu0 0.0
    %583 = vmatprep.subr.mxu0 0.0
    %584 = vmatpush1.msra.mxu0 0.0
    %585 = vmatprep.subr.mxu0 0.0
    %586 = vmatpush1.msra.mxu0 0.0
    %587 = vmatprep.subr.mxu0 0.0
    %588 = vmatpush1.msra.mxu0 0.0
    %589 = vmatprep.subr.mxu0 0.0
    %590 = vmatpush1.msra.mxu0 0.0
    %591 = vmatprep.subr.mxu0 0.0
    %592 = vmatpush1.msra.mxu0 0.0
    %593 = vmatprep.subr.mxu0 0.0
    %594 = vmatpush1.msra.mxu0 0.0
    %595 = vmatprep.subr.mxu0 0.0
    %596 = vmatpush1.msra.mxu0 0.0
    %597 = vmatprep.subr.mxu0 0.0
    %598 = vmatpush1.msra.mxu0 0.0
    %599 = vmatprep.subr.mxu0 0.0
    %600 = vmatpush1.msra.mxu0 0.0
    %601 = vmatprep.subr.mxu0 0.0
    %602 = vmatpush1.msra.mxu0 0.0
    %603 = vmatprep.subr.mxu0 0.0
    %604 = vmatpush1.msra.mxu0 0.0
    %605 = vmatprep.subr.mxu0 0.0
    %606 = vmatpush1.msra.mxu0 0.0
    %607 = vmatprep.subr.mxu0 0.0
    %608 = vmatpush1.msra.mxu0 0.0
    %609 = vmatprep.subr.mxu0 0.0
    %610 = vmatpush1.msra.mxu0 0.0
    %611 = vmatprep.subr.mxu0 0.0
    %612 = vmatpush1.msra.mxu0 0.0
    %613 = vmatprep.subr.mxu0 0.0
    %614 = vmatpush1.msra.mxu0 0.0
    %615 = vmatprep.subr.mxu0 0.0
    %616 = vmatpush1.msra.mxu0 0.0
    %617 = vmatprep.subr.mxu0 0.0
    %618 = vmatpush1.msra.mxu0 0.0
    %619 = vmatprep.mubr.f32.mxu0 0.0
    %620 = vmatmul.mubr.f32.gmra.mrb[0].mxu0 %v368
    %v621 = vpop.f32.mrb[0].mxu0
    %v622 = vadd.f32 %v551, %v621
    %v623 = vpop.f32.mrb[0].mxu0
    %v624 = vadd.f32 %v553, %v623
    %625 = vdwg.mxu0
    %v626 = vadd.f32 %v622, %v355
    %v627 = vadd.f32 %v624, %v359
    %v628 = vxor.u32 %v626, 2147483648
    %v629 = vxor.u32 %v627, 2147483648
    %v630 = vmul.f32 %v628, 1.442695
    %v631 = vpow.pop %v630
    %v632 = vmul.f32 %v629, 1.442695
    %v633 = vpow.pop %v632
    %v634 = vadd.f32 %v631, 1.0
    %v635 = vadd.f32 %v633, 1.0
    %v636 = vrcp.pop %v634
    %v637 = vmul.f32 1.0, %v636
    %v638 = vrcp.pop %v635
    %v639 = vmul.f32 1.0, %v638
    %v640 = vtanh.pop %v627
    %v641 = vmul.f32 %v637, 0.0
    %643 = vrot.lane.b32.xlu0 %v640, 112
    %v644 = vpop.permute.xlu0 %643
    %v646 = vmul.f32 %v637, %v644
    %648 = vrot.lane.b32.xlu0 %v646, 48
    %v649 = vpop.permute.xlu0 %648
    %v651 = vadd.f32 %v641, %v649
    %v652 = vtanh.pop %v651
    %654 = vrot.lane.b32.xlu0 %v652, 48
    %v655 = vpop.permute.xlu0 %654
    %v657 = vmul.f32 %v637, %v655
    %v658 = vmul.f32 %v639, %v655
    %v659 = vadd.f32 %v364, %v437
    %v660 = vadd.f32 %v365, %v439
    %v661 = vxor.u32 %v659, 2147483648
    %v662 = vxor.u32 %v660, 2147483648
    %v663 = vmul.f32 %v661, 1.442695
    %v664 = vpow.pop %v663
    %v665 = vmul.f32 %v662, 1.442695
    %v666 = vpow.pop %v665
    %v667 = vadd.f32 %v664, 1.0
    %v668 = vadd.f32 %v666, 1.0
    %v669 = vrcp.pop %v667
    %v670 = vmul.f32 1.0, %v669
    %v671 = vrcp.pop %v668
    %v672 = vmul.f32 1.0, %v671
    %v673 = vtanh.pop %v660
    %v674 = vmul.f32 %v670, 0.0
    %676 = vrot.lane.b32.xlu0 %v673, 112
    %v677 = vpop.permute.xlu0 %676
    %v679 = vmul.f32 %v670, %v677
    %681 = vrot.lane.b32.xlu0 %v679, 48
    %v682 = vpop.permute.xlu0 %681
    %v684 = vadd.f32 %v674, %v682
    %v685 = vtanh.pop %v684
    %687 = vrot.lane.b32.xlu0 %v685, 48
    %v688 = vpop.permute.xlu0 %687
    %v690 = vmul.f32 %v670, %v688
    %v691 = vmul.f32 %v672, %v688
    %694 = vrot.lane.b32.xlu0 %v690, 32
    %v695 = vpop.permute.xlu0 %694
    %696 = vrot.lane.b32.xlu0 %v691, 32
    %v697 = vpop.permute.xlu0 %696
    %v698 = vsel %vm480, %v695, %v697
    %v699 = vsel %vm366, %v698, 0
    %701 = vmatprep.subr.mxu0 %v57
    %702 = vmatpush1.msra.mxu0 %v56
    %703 = vmatprep.subr.mxu0 %v59
    %704 = vmatpush1.msra.mxu0 %v58
    %705 = vmatprep.subr.mxu0 %v61
    %706 = vmatpush1.msra.mxu0 %v60
    %707 = vmatprep.subr.mxu0 %v63
    %708 = vmatpush1.msra.mxu0 %v62
    %709 = vmatprep.subr.mxu0 %v65
    %710 = vmatpush1.msra.mxu0 %v64
    %711 = vmatprep.subr.mxu0 %v67
    %712 = vmatpush1.msra.mxu0 %v66
    %713 = vmatprep.subr.mxu0 0.0
    %714 = vmatpush1.msra.mxu0 0.0
    %715 = vmatprep.subr.mxu0 0.0
    %716 = vmatpush1.msra.mxu0 0.0
    %717 = vmatprep.subr.mxu0 0.0
    %718 = vmatpush1.msra.mxu0 0.0
    %719 = vmatprep.subr.mxu0 0.0
    %720 = vmatpush1.msra.mxu0 0.0
    %721 = vmatprep.subr.mxu0 0.0
    %722 = vmatpush1.msra.mxu0 0.0
    %723 = vmatprep.subr.mxu0 0.0
    %724 = vmatpush1.msra.mxu0 0.0
    %725 = vmatprep.subr.mxu0 0.0
    %726 = vmatpush1.msra.mxu0 0.0
    %727 = vmatprep.subr.mxu0 0.0
    %728 = vmatpush1.msra.mxu0 0.0
    %729 = vmatprep.subr.mxu0 0.0
    %730 = vmatpush1.msra.mxu0 0.0
    %731 = vmatprep.subr.mxu0 0.0
    %732 = vmatpush1.msra.mxu0 0.0
    %733 = vmatprep.subr.mxu0 0.0
    %734 = vmatpush1.msra.mxu0 0.0
    %735 = vmatprep.subr.mxu0 0.0
    %736 = vmatpush1.msra.mxu0 0.0
    %737 = vmatprep.subr.mxu0 0.0
    %738 = vmatpush1.msra.mxu0 0.0
    %739 = vmatprep.subr.mxu0 0.0
    %740 = vmatpush1.msra.mxu0 0.0
    %741 = vmatprep.subr.mxu0 0.0
    %742 = vmatpush1.msra.mxu0 0.0
    %743 = vmatprep.subr.mxu0 0.0
    %744 = vmatpush1.msra.mxu0 0.0
    %745 = vmatprep.subr.mxu0 0.0
    %746 = vmatpush1.msra.mxu0 0.0
    %747 = vmatprep.subr.mxu0 0.0
    %748 = vmatpush1.msra.mxu0 0.0
    %749 = vmatprep.subr.mxu0 0.0
    %750 = vmatpush1.msra.mxu0 0.0
    %751 = vmatprep.subr.mxu0 0.0
    %752 = vmatpush1.msra.mxu0 0.0
    %753 = vmatprep.subr.mxu0 0.0
    %754 = vmatpush1.msra.mxu0 0.0
    %755 = vmatprep.subr.mxu0 0.0
    %756 = vmatpush1.msra.mxu0 0.0
    %757 = vmatprep.subr.mxu0 0.0
    %758 = vmatpush1.msra.mxu0 0.0
    %759 = vmatprep.subr.mxu0 0.0
    %760 = vmatpush1.msra.mxu0 0.0
    %761 = vmatprep.subr.mxu0 0.0
    %762 = vmatpush1.msra.mxu0 0.0
    %763 = vmatprep.subr.mxu0 0.0
    %764 = vmatpush1.msra.mxu0 0.0
    %765 = vmatprep.mubr.f32.mxu0 0.0
    %766 = vmatmul.mubr.f32.gmra.mrb[0].mxu0 %v699
    %v767 = vpop.f32.mrb[0].mxu0
    %v768 = vadd.f32 0.0, %v767
    %v769 = vpop.f32.mrb[0].mxu0
    %v770 = vadd.f32 0.0, %v769
    %771 = vdwg.mxu0
    %772 = vmatprep.subr.mxu0 %v45
    %773 = vmatpush1.msra.mxu0 %v44
    %774 = vmatprep.subr.mxu0 %v47
    %775 = vmatpush1.msra.mxu0 %v46
    %776 = vmatprep.subr.mxu0 %v49
    %777 = vmatpush1.msra.mxu0 %v48
    %778 = vmatprep.subr.mxu0 %v51
    %779 = vmatpush1.msra.mxu0 %v50
    %780 = vmatprep.subr.mxu0 %v53
    %781 = vmatpush1.msra.mxu0 %v52
    %782 = vmatprep.subr.mxu0 %v55
    %783 = vmatpush1.msra.mxu0 %v54
    %784 = vmatprep.subr.mxu0 0.0
    %785 = vmatpush1.msra.mxu0 0.0
    %786 = vmatprep.subr.mxu0 0.0
    %787 = vmatpush1.msra.mxu0 0.0
    %788 = vmatprep.subr.mxu0 0.0
    %789 = vmatpush1.msra.mxu0 0.0
    %790 = vmatprep.subr.mxu0 0.0
    %791 = vmatpush1.msra.mxu0 0.0
    %792 = vmatprep.subr.mxu0 0.0
    %793 = vmatpush1.msra.mxu0 0.0
    %794 = vmatprep.subr.mxu0 0.0
    %795 = vmatpush1.msra.mxu0 0.0
    %796 = vmatprep.subr.mxu0 0.0
    %797 = vmatpush1.msra.mxu0 0.0
    %798 = vmatprep.subr.mxu0 0.0
    %799 = vmatpush1.msra.mxu0 0.0
    %800 = vmatprep.subr.mxu0 0.0
    %801 = vmatpush1.msra.mxu0 0.0
    %802 = vmatprep.subr.mxu0 0.0
    %803 = vmatpush1.msra.mxu0 0.0
    %804 = vmatprep.subr.mxu0 0.0
    %805 = vmatpush1.msra.mxu0 0.0
    %806 = vmatprep.subr.mxu0 0.0
    %807 = vmatpush1.msra.mxu0 0.0
    %808 = vmatprep.subr.mxu0 0.0
    %809 = vmatpush1.msra.mxu0 0.0
    %810 = vmatprep.subr.mxu0 0.0
    %811 = vmatpush1.msra.mxu0 0.0
    %812 = vmatprep.subr.mxu0 0.0
    %813 = vmatpush1.msra.mxu0 0.0
    %814 = vmatprep.subr.mxu0 0.0
    %815 = vmatpush1.msra.mxu0 0.0
    %816 = vmatprep.subr.mxu0 0.0
    %817 = vmatpush1.msra.mxu0 0.0
    %818 = vmatprep.subr.mxu0 0.0
    %819 = vmatpush1.msra.mxu0 0.0
    %820 = vmatprep.subr.mxu0 0.0
    %821 = vmatpush1.msra.mxu0 0.0
    %822 = vmatprep.subr.mxu0 0.0
    %823 = vmatpush1.msra.mxu0 0.0
    %824 = vmatprep.subr.mxu0 0.0
    %825 = vmatpush1.msra.mxu0 0.0
    %826 = vmatprep.subr.mxu0 0.0
    %827 = vmatpush1.msra.mxu0 0.0
    %828 = vmatprep.subr.mxu0 0.0
    %829 = vmatpush1.msra.mxu0 0.0
    %830 = vmatprep.subr.mxu0 0.0
    %831 = vmatpush1.msra.mxu0 0.0
    %832 = vmatprep.subr.mxu0 0.0
    %833 = vmatpush1.msra.mxu0 0.0
    %834 = vmatprep.subr.mxu0 0.0
    %835 = vmatpush1.msra.mxu0 0.0
    %836 = vmatprep.mubr.f32.mxu0 0.0
    %837 = vmatmul.mubr.f32.gmra.mrb[0].mxu0 %v368
    %v838 = vpop.f32.mrb[0].mxu0
    %v839 = vadd.f32 %v768, %v838
    %v840 = vpop.f32.mrb[0].mxu0
    %v841 = vadd.f32 %v770, %v840
    %842 = vdwg.mxu0
    %v843 = vadd.f32 %v839, %v355
    %v844 = vadd.f32 %v841, %v359
    %v845 = vxor.u32 %v843, 2147483648
    %v846 = vxor.u32 %v844, 2147483648
    %v847 = vmul.f32 %v845, 1.442695
    %v848 = vpow.pop %v847
    %v849 = vmul.f32 %v846, 1.442695
    %v850 = vpow.pop %v849
    %v851 = vadd.f32 %v848, 1.0
    %v852 = vadd.f32 %v850, 1.0
    %v853 = vrcp.pop %v851
    %v854 = vmul.f32 1.0, %v853
    %v855 = vrcp.pop %v852
    %v856 = vmul.f32 1.0, %v855
    %v857 = vtanh.pop %v844
    %v858 = vmul.f32 %v854, 0.0
    %860 = vrot.lane.b32.xlu0 %v857, 112
    %v861 = vpop.permute.xlu0 %860
    %v863 = vmul.f32 %v854, %v861
    %865 = vrot.lane.b32.xlu0 %v863, 48
    %v866 = vpop.permute.xlu0 %865
    %v868 = vadd.f32 %v858, %v866
    %v869 = vtanh.pop %v868
    %871 = vrot.lane.b32.xlu0 %v869, 48
    %v872 = vpop.permute.xlu0 %871
    %v874 = vmul.f32 %v854, %v872
    %v875 = vmul.f32 %v856, %v872
    %v876 = vld [vmem:[%s136] sm:$0xff]
    %v877 = vld [vmem:[%s136 + $0x8] sm:$0xff]
    %v878 = vld [vmem:[%s136 + $0x10] sm:$0xff]
    %v879 = vld [vmem:[%s136 + $0x18] sm:$0xff]
    %880 = vmatprep.subr.mxu0 %v33
    %881 = vmatpush1.msra.mxu0 %v32
    %882 = vmatprep.subr.mxu0 %v35
    %883 = vmatpush1.msra.mxu0 %v34
    %884 = vmatprep.subr.mxu0 %v37
    %885 = vmatpush1.msra.mxu0 %v36
    %886 = vmatprep.subr.mxu0 %v39
    %887 = vmatpush1.msra.mxu0 %v38
    %888 = vmatprep.subr.mxu0 %v41
    %889 = vmatpush1.msra.mxu0 %v40
    %890 = vmatprep.subr.mxu0 %v43
    %891 = vmatpush1.msra.mxu0 %v42
    %892 = vmatprep.subr.mxu0 0.0
    %893 = vmatpush1.msra.mxu0 0.0
    %894 = vmatprep.subr.mxu0 0.0
    %895 = vmatpush1.msra.mxu0 0.0
    %896 = vmatprep.subr.mxu0 0.0
    %897 = vmatpush1.msra.mxu0 0.0
    %898 = vmatprep.subr.mxu0 0.0
    %899 = vmatpush1.msra.mxu0 0.0
    %900 = vmatprep.subr.mxu0 0.0
    %901 = vmatpush1.msra.mxu0 0.0
    %902 = vmatprep.subr.mxu0 0.0
    %903 = vmatpush1.msra.mxu0 0.0
    %904 = vmatprep.subr.mxu0 0.0
    %905 = vmatpush1.msra.mxu0 0.0
    %906 = vmatprep.subr.mxu0 0.0
    %907 = vmatpush1.msra.mxu0 0.0
    %908 = vmatprep.subr.mxu0 0.0
    %909 = vmatpush1.msra.mxu0 0.0
    %910 = vmatprep.subr.mxu0 0.0
    %911 = vmatpush1.msra.mxu0 0.0
    %912 = vmatprep.subr.mxu0 0.0
    %913 = vmatpush1.msra.mxu0 0.0
    %914 = vmatprep.subr.mxu0 0.0
    %915 = vmatpush1.msra.mxu0 0.0
    %916 = vmatprep.subr.mxu0 0.0
    %917 = vmatpush1.msra.mxu0 0.0
    %918 = vmatprep.subr.mxu0 0.0
    %919 = vmatpush1.msra.mxu0 0.0
    %920 = vmatprep.subr.mxu0 0.0
    %921 = vmatpush1.msra.mxu0 0.0
    %922 = vmatprep.subr.mxu0 0.0
    %923 = vmatpush1.msra.mxu0 0.0
    %924 = vmatprep.subr.mxu0 0.0
    %925 = vmatpush1.msra.mxu0 0.0
    %926 = vmatprep.subr.mxu0 0.0
    %927 = vmatpush1.msra.mxu0 0.0
    %928 = vmatprep.subr.mxu0 0.0
    %929 = vmatpush1.msra.mxu0 0.0
    %930 = vmatprep.subr.mxu0 0.0
    %931 = vmatpush1.msra.mxu0 0.0
    %932 = vmatprep.subr.mxu0 0.0
    %933 = vmatpush1.msra.mxu0 0.0
    %934 = vmatprep.subr.mxu0 0.0
    %935 = vmatpush1.msra.mxu0 0.0
    %936 = vmatprep.subr.mxu0 0.0
    %937 = vmatpush1.msra.mxu0 0.0
    %938 = vmatprep.subr.mxu0 0.0
    %939 = vmatpush1.msra.mxu0 0.0
    %940 = vmatprep.subr.mxu0 0.0
    %941 = vmatpush1.msra.mxu0 0.0
    %942 = vmatprep.subr.mxu0 0.0
    %943 = vmatpush1.msra.mxu0 0.0
    %944 = vmatprep.mubr.f32.mxu0 0.0
    %945 = vmatmul.mubr.f32.gmra.mrb[0].mxu0 %v482
    %v946 = vpop.f32.mrb[0].mxu0
    %v947 = vadd.f32 0.0, %v946
    %v948 = vpop.f32.mrb[0].mxu0
    %v949 = vadd.f32 0.0, %v948
    %950 = vdwg.mxu0
    %v951 = vadd.f32 %v876, %v947
    %v952 = vadd.f32 %v877, %v949
    %v953 = vxor.u32 %v951, 2147483648
    %v954 = vxor.u32 %v952, 2147483648
    %v955 = vmul.f32 %v953, 1.442695
    %v956 = vpow.pop %v955
    %v957 = vmul.f32 %v954, 1.442695
    %v958 = vpow.pop %v957
    %v959 = vadd.f32 %v956, 1.0
    %v960 = vadd.f32 %v958, 1.0
    %v961 = vrcp.pop %v959
    %v962 = vmul.f32 1.0, %v961
    %v963 = vrcp.pop %v960
    %v964 = vmul.f32 1.0, %v963
    %v965 = vtanh.pop %v952
    %v966 = vmul.f32 %v962, %v466
    %968 = vrot.lane.b32.xlu0 %v965, 112
    %v969 = vpop.permute.xlu0 %968
    %v971 = vmul.f32 %v962, %v969
    %973 = vrot.lane.b32.xlu0 %v971, 48
    %v974 = vpop.permute.xlu0 %973
    %v976 = vadd.f32 %v966, %v974
    %v977 = vtanh.pop %v976
    %979 = vrot.lane.b32.xlu0 %v977, 48
    %v980 = vpop.permute.xlu0 %979
    %v982 = vmul.f32 %v962, %v980
    %v983 = vmul.f32 %v964, %v980
    %986 = vrot.lane.b32.xlu0 %v982, 32
    %v987 = vpop.permute.xlu0 %986
    %988 = vrot.lane.b32.xlu0 %v983, 32
    %v989 = vpop.permute.xlu0 %988
    %v990 = vsel %vm480, %v987, %v989
    %v991 = vsel %vm366, %v990, 0
    %993 = vmatprep.subr.mxu0 %v57
    %994 = vmatpush1.msra.mxu0 %v56
    %995 = vmatprep.subr.mxu0 %v59
    %996 = vmatpush1.msra.mxu0 %v58
    %997 = vmatprep.subr.mxu0 %v61
    %998 = vmatpush1.msra.mxu0 %v60
    %999 = vmatprep.subr.mxu0 %v63
    %1000 = vmatpush1.msra.mxu0 %v62
    %1001 = vmatprep.subr.mxu0 %v65
    %1002 = vmatpush1.msra.mxu0 %v64
    %1003 = vmatprep.subr.mxu0 %v67
    %1004 = vmatpush1.msra.mxu0 %v66
    %1005 = vmatprep.subr.mxu0 0.0
    %1006 = vmatpush1.msra.mxu0 0.0
    %1007 = vmatprep.subr.mxu0 0.0
    %1008 = vmatpush1.msra.mxu0 0.0
    %1009 = vmatprep.subr.mxu0 0.0
    %1010 = vmatpush1.msra.mxu0 0.0
    %1011 = vmatprep.subr.mxu0 0.0
    %1012 = vmatpush1.msra.mxu0 0.0
    %1013 = vmatprep.subr.mxu0 0.0
    %1014 = vmatpush1.msra.mxu0 0.0
    %1015 = vmatprep.subr.mxu0 0.0
    %1016 = vmatpush1.msra.mxu0 0.0
    %1017 = vmatprep.subr.mxu0 0.0
    %1018 = vmatpush1.msra.mxu0 0.0
    %1019 = vmatprep.subr.mxu0 0.0
    %1020 = vmatpush1.msra.mxu0 0.0
    %1021 = vmatprep.subr.mxu0 0.0
    %1022 = vmatpush1.msra.mxu0 0.0
    %1023 = vmatprep.subr.mxu0 0.0
    %1024 = vmatpush1.msra.mxu0 0.0
    %1025 = vmatprep.subr.mxu0 0.0
    %1026 = vmatpush1.msra.mxu0 0.0
    %1027 = vmatprep.subr.mxu0 0.0
    %1028 = vmatpush1.msra.mxu0 0.0
    %1029 = vmatprep.subr.mxu0 0.0
    %1030 = vmatpush1.msra.mxu0 0.0
    %1031 = vmatprep.subr.mxu0 0.0
    %1032 = vmatpush1.msra.mxu0 0.0
    %1033 = vmatprep.subr.mxu0 0.0
    %1034 = vmatpush1.msra.mxu0 0.0
    %1035 = vmatprep.subr.mxu0 0.0
    %1036 = vmatpush1.msra.mxu0 0.0
    %1037 = vmatprep.subr.mxu0 0.0
    %1038 = vmatpush1.msra.mxu0 0.0
    %1039 = vmatprep.subr.mxu0 0.0
    %1040 = vmatpush1.msra.mxu0 0.0
    %1041 = vmatprep.subr.mxu0 0.0
    %1042 = vmatpush1.msra.mxu0 0.0
    %1043 = vmatprep.subr.mxu0 0.0
    %1044 = vmatpush1.msra.mxu0 0.0
    %1045 = vmatprep.subr.mxu0 0.0
    %1046 = vmatpush1.msra.mxu0 0.0
    %1047 = vmatprep.subr.mxu0 0.0
    %1048 = vmatpush1.msra.mxu0 0.0
    %1049 = vmatprep.subr.mxu0 0.0
    %1050 = vmatpush1.msra.mxu0 0.0
    %1051 = vmatprep.subr.mxu0 0.0
    %1052 = vmatpush1.msra.mxu0 0.0
    %1053 = vmatprep.subr.mxu0 0.0
    %1054 = vmatpush1.msra.mxu0 0.0
    %1055 = vmatprep.subr.mxu0 0.0
    %1056 = vmatpush1.msra.mxu0 0.0
    %1057 = vmatprep.mubr.f32.mxu0 0.0
    %1058 = vmatmul.mubr.f32.gmra.mrb[0].mxu0 %v991
    %v1059 = vpop.f32.mrb[0].mxu0
    %v1060 = vadd.f32 0.0, %v1059
    %v1061 = vpop.f32.mrb[0].mxu0
    %v1062 = vadd.f32 0.0, %v1061
    %1063 = vdwg.mxu0
    %1066 = vrot.lane.b32.xlu0 %v657, 32
    %v1067 = vpop.permute.xlu0 %1066
    %1068 = vrot.lane.b32.xlu0 %v658, 32
    %v1069 = vpop.permute.xlu0 %1068
    %v1070 = vsel %vm480, %v1067, %v1069
    %v1071 = vsel %vm366, %v1070, 0
    %1073 = vmatprep.subr.mxu0 %v45
    %1074 = vmatpush1.msra.mxu0 %v44
    %1075 = vmatprep.subr.mxu0 %v47
    %1076 = vmatpush1.msra.mxu0 %v46
    %1077 = vmatprep.subr.mxu0 %v49
    %1078 = vmatpush1.msra.mxu0 %v48
    %1079 = vmatprep.subr.mxu0 %v51
    %1080 = vmatpush1.msra.mxu0 %v50
    %1081 = vmatprep.subr.mxu0 %v53
    %1082 = vmatpush1.msra.mxu0 %v52
    %1083 = vmatprep.subr.mxu0 %v55
    %1084 = vmatpush1.msra.mxu0 %v54
    %1085 = vmatprep.subr.mxu0 0.0
    %1086 = vmatpush1.msra.mxu0 0.0
    %1087 = vmatprep.subr.mxu0 0.0
    %1088 = vmatpush1.msra.mxu0 0.0
    %1089 = vmatprep.subr.mxu0 0.0
    %1090 = vmatpush1.msra.mxu0 0.0
    %1091 = vmatprep.subr.mxu0 0.0
    %1092 = vmatpush1.msra.mxu0 0.0
    %1093 = vmatprep.subr.mxu0 0.0
    %1094 = vmatpush1.msra.mxu0 0.0
    %1095 = vmatprep.subr.mxu0 0.0
    %1096 = vmatpush1.msra.mxu0 0.0
    %1097 = vmatprep.subr.mxu0 0.0
    %1098 = vmatpush1.msra.mxu0 0.0
    %1099 = vmatprep.subr.mxu0 0.0
    %1100 = vmatpush1.msra.mxu0 0.0
    %1101 = vmatprep.subr.mxu0 0.0
    %1102 = vmatpush1.msra.mxu0 0.0
    %1103 = vmatprep.subr.mxu0 0.0
    %1104 = vmatpush1.msra.mxu0 0.0
    %1105 = vmatprep.subr.mxu0 0.0
    %1106 = vmatpush1.msra.mxu0 0.0
    %1107 = vmatprep.subr.mxu0 0.0
    %1108 = vmatpush1.msra.mxu0 0.0
    %1109 = vmatprep.subr.mxu0 0.0
    %1110 = vmatpush1.msra.mxu0 0.0
    %1111 = vmatprep.subr.mxu0 0.0
    %1112 = vmatpush1.msra.mxu0 0.0
    %1113 = vmatprep.subr.mxu0 0.0
    %1114 = vmatpush1.msra.mxu0 0.0
    %1115 = vmatprep.subr.mxu0 0.0
    %1116 = vmatpush1.msra.mxu0 0.0
    %1117 = vmatprep.subr.mxu0 0.0
    %1118 = vmatpush1.msra.mxu0 0.0
    %1119 = vmatprep.subr.mxu0 0.0
    %1120 = vmatpush1.msra.mxu0 0.0
    %1121 = vmatprep.subr.mxu0 0.0
    %1122 = vmatpush1.msra.mxu0 0.0
    %1123 = vmatprep.subr.mxu0 0.0
    %1124 = vmatpush1.msra.mxu0 0.0
    %1125 = vmatprep.subr.mxu0 0.0
    %1126 = vmatpush1.msra.mxu0 0.0
    %1127 = vmatprep.subr.mxu0 0.0
    %1128 = vmatpush1.msra.mxu0 0.0
    %1129 = vmatprep.subr.mxu0 0.0
    %1130 = vmatpush1.msra.mxu0 0.0
    %1131 = vmatprep.subr.mxu0 0.0
    %1132 = vmatpush1.msra.mxu0 0.0
    %1133 = vmatprep.subr.mxu0 0.0
    %1134 = vmatpush1.msra.mxu0 0.0
    %1135 = vmatprep.subr.mxu0 0.0
    %1136 = vmatpush1.msra.mxu0 0.0
    %1137 = vmatprep.mubr.f32.mxu0 0.0
    %1138 = vmatmul.mubr.f32.gmra.mrb[0].mxu0 %v1071
    %v1139 = vpop.f32.mrb[0].mxu0
    %v1140 = vadd.f32 %v1060, %v1139
    %v1141 = vpop.f32.mrb[0].mxu0
    %v1142 = vadd.f32 %v1062, %v1141
    %1143 = vdwg.mxu0
    %v1144 = vadd.f32 %v1140, %v355
    %v1145 = vadd.f32 %v1142, %v359
    %v1146 = vxor.u32 %v1144, 2147483648
    %v1147 = vxor.u32 %v1145, 2147483648
    %v1148 = vmul.f32 %v1146, 1.442695
    %v1149 = vpow.pop %v1148
    %v1150 = vmul.f32 %v1147, 1.442695
    %v1151 = vpow.pop %v1150
    %v1152 = vadd.f32 %v1149, 1.0
    %v1153 = vadd.f32 %v1151, 1.0
    %v1154 = vrcp.pop %v1152
    %v1155 = vmul.f32 1.0, %v1154
    %v1156 = vrcp.pop %v1153
    %v1157 = vmul.f32 1.0, %v1156
    %v1158 = vtanh.pop %v1145
    %v1159 = vmul.f32 %v1155, %v651
    %1161 = vrot.lane.b32.xlu0 %v1158, 112
    %v1162 = vpop.permute.xlu0 %1161
    %v1164 = vmul.f32 %v1155, %v1162
    %1166 = vrot.lane.b32.xlu0 %v1164, 48
    %v1167 = vpop.permute.xlu0 %1166
    %v1169 = vadd.f32 %v1159, %v1167
    %v1170 = vtanh.pop %v1169
    %1172 = vrot.lane.b32.xlu0 %v1170, 48
    %v1173 = vpop.permute.xlu0 %1172
    %v1175 = vmul.f32 %v1155, %v1173
    %v1176 = vmul.f32 %v1157, %v1173
    %1177 = vmatprep.subr.mxu0 %v33
    %1178 = vmatpush1.msra.mxu0 %v32
    %1179 = vmatprep.subr.mxu0 %v35
    %1180 = vmatpush1.msra.mxu0 %v34
    %1181 = vmatprep.subr.mxu0 %v37
    %1182 = vmatpush1.msra.mxu0 %v36
    %1183 = vmatprep.subr.mxu0 %v39
    %1184 = vmatpush1.msra.mxu0 %v38
    %1185 = vmatprep.subr.mxu0 %v41
    %1186 = vmatpush1.msra.mxu0 %v40
    %1187 = vmatprep.subr.mxu0 %v43
    %1188 = vmatpush1.msra.mxu0 %v42
    %1189 = vmatprep.subr.mxu0 0.0
    %1190 = vmatpush1.msra.mxu0 0.0
    %1191 = vmatprep.subr.mxu0 0.0
    %1192 = vmatpush1.msra.mxu0 0.0
    %1193 = vmatprep.subr.mxu0 0.0
    %1194 = vmatpush1.msra.mxu0 0.0
    %1195 = vmatprep.subr.mxu0 0.0
    %1196 = vmatpush1.msra.mxu0 0.0
    %1197 = vmatprep.subr.mxu0 0.0
    %1198 = vmatpush1.msra.mxu0 0.0
    %1199 = vmatprep.subr.mxu0 0.0
    %1200 = vmatpush1.msra.mxu0 0.0
    %1201 = vmatprep.subr.mxu0 0.0
    %1202 = vmatpush1.msra.mxu0 0.0
    %1203 = vmatprep.subr.mxu0 0.0
    %1204 = vmatpush1.msra.mxu0 0.0
    %1205 = vmatprep.subr.mxu0 0.0
    %1206 = vmatpush1.msra.mxu0 0.0
    %1207 = vmatprep.subr.mxu0 0.0
    %1208 = vmatpush1.msra.mxu0 0.0
    %1209 = vmatprep.subr.mxu0 0.0
    %1210 = vmatpush1.msra.mxu0 0.0
    %1211 = vmatprep.subr.mxu0 0.0
    %1212 = vmatpush1.msra.mxu0 0.0
    %1213 = vmatprep.subr.mxu0 0.0
    %1214 = vmatpush1.msra.mxu0 0.0
    %1215 = vmatprep.subr.mxu0 0.0
    %1216 = vmatpush1.msra.mxu0 0.0
    %1217 = vmatprep.subr.mxu0 0.0
    %1218 = vmatpush1.msra.mxu0 0.0
    %1219 = vmatprep.subr.mxu0 0.0
    %1220 = vmatpush1.msra.mxu0 0.0
    %1221 = vmatprep.subr.mxu0 0.0
    %1222 = vmatpush1.msra.mxu0 0.0
    %1223 = vmatprep.subr.mxu0 0.0
    %1224 = vmatpush1.msra.mxu0 0.0
    %1225 = vmatprep.subr.mxu0 0.0
    %1226 = vmatpush1.msra.mxu0 0.0
    %1227 = vmatprep.subr.mxu0 0.0
    %1228 = vmatpush1.msra.mxu0 0.0
    %1229 = vmatprep.subr.mxu0 0.0
    %1230 = vmatpush1.msra.mxu0 0.0
    %1231 = vmatprep.subr.mxu0 0.0
    %1232 = vmatpush1.msra.mxu0 0.0
    %1233 = vmatprep.subr.mxu0 0.0
    %1234 = vmatpush1.msra.mxu0 0.0
    %1235 = vmatprep.subr.mxu0 0.0
    %1236 = vmatpush1.msra.mxu0 0.0
    %1237 = vmatprep.subr.mxu0 0.0
    %1238 = vmatpush1.msra.mxu0 0.0
    %1239 = vmatprep.subr.mxu0 0.0
    %1240 = vmatpush1.msra.mxu0 0.0
    %1241 = vmatprep.mubr.f32.mxu0 0.0
    %1242 = vmatmul.mubr.f32.gmra.mrb[0].mxu0 %v699
    %v1243 = vpop.f32.mrb[0].mxu0
    %v1244 = vadd.f32 0.0, %v1243
    %v1245 = vpop.f32.mrb[0].mxu0
    %v1246 = vadd.f32 0.0, %v1245
    %1247 = vdwg.mxu0
    %v1248 = vadd.f32 %v878, %v1244
    %v1249 = vadd.f32 %v879, %v1246
    %v1250 = vxor.u32 %v1248, 2147483648
    %v1251 = vxor.u32 %v1249, 2147483648
    %v1252 = vmul.f32 %v1250, 1.442695
    %v1253 = vpow.pop %v1252
    %v1254 = vmul.f32 %v1251, 1.442695
    %v1255 = vpow.pop %v1254
    %v1256 = vadd.f32 %v1253, 1.0
    %v1257 = vadd.f32 %v1255, 1.0
    %v1258 = vrcp.pop %v1256
    %v1259 = vmul.f32 1.0, %v1258
    %v1260 = vrcp.pop %v1257
    %v1261 = vmul.f32 1.0, %v1260
    %v1262 = vtanh.pop %v1249
    %v1263 = vmul.f32 %v1259, %v684
    %1265 = vrot.lane.b32.xlu0 %v1262, 112
    %v1266 = vpop.permute.xlu0 %1265
    %v1268 = vmul.f32 %v1259, %v1266
    %1270 = vrot.lane.b32.xlu0 %v1268, 48
    %v1271 = vpop.permute.xlu0 %1270
    %v1273 = vadd.f32 %v1263, %v1271
    %v1274 = vtanh.pop %v1273
    %1276 = vrot.lane.b32.xlu0 %v1274, 48
    %v1277 = vpop.permute.xlu0 %1276
    %v1279 = vmul.f32 %v1259, %v1277
    %v1280 = vmul.f32 %v1261, %v1277
    %1283 = vrot.lane.b32.xlu0 %v1279, 32
    %v1284 = vpop.permute.xlu0 %1283
    %1285 = vrot.lane.b32.xlu0 %v1280, 32
    %v1286 = vpop.permute.xlu0 %1285
    %v1287 = vsel %vm480, %v1284, %v1286
    %v1288 = vsel %vm366, %v1287, 0
    %1290 = vmatprep.subr.mxu0 %v57
    %1291 = vmatpush1.msra.mxu0 %v56
    %1292 = vmatprep.subr.mxu0 %v59
    %1293 = vmatpush1.msra.mxu0 %v58
    %1294 = vmatprep.subr.mxu0 %v61
    %1295 = vmatpush1.msra.mxu0 %v60
    %1296 = vmatprep.subr.mxu0 %v63
    %1297 = vmatpush1.msra.mxu0 %v62
    %1298 = vmatprep.subr.mxu0 %v65
    %1299 = vmatpush1.msra.mxu0 %v64
    %1300 = vmatprep.subr.mxu0 %v67
    %1301 = vmatpush1.msra.mxu0 %v66
    %1302 = vmatprep.subr.mxu0 0.0
    %1303 = vmatpush1.msra.mxu0 0.0
    %1304 = vmatprep.subr.mxu0 0.0
    %1305 = vmatpush1.msra.mxu0 0.0
    %1306 = vmatprep.subr.mxu0 0.0
    %1307 = vmatpush1.msra.mxu0 0.0
    %1308 = vmatprep.subr.mxu0 0.0
    %1309 = vmatpush1.msra.mxu0 0.0
    %1310 = vmatprep.subr.mxu0 0.0
    %1311 = vmatpush1.msra.mxu0 0.0
    %1312 = vmatprep.subr.mxu0 0.0
    %1313 = vmatpush1.msra.mxu0 0.0
    %1314 = vmatprep.subr.mxu0 0.0
    %1315 = vmatpush1.msra.mxu0 0.0
    %1316 = vmatprep.subr.mxu0 0.0
    %1317 = vmatpush1.msra.mxu0 0.0
    %1318 = vmatprep.subr.mxu0 0.0
    %1319 = vmatpush1.msra.mxu0 0.0
    %1320 = vmatprep.subr.mxu0 0.0
    %1321 = vmatpush1.msra.mxu0 0.0
    %1322 = vmatprep.subr.mxu0 0.0
    %1323 = vmatpush1.msra.mxu0 0.0
    %1324 = vmatprep.subr.mxu0 0.0
    %1325 = vmatpush1.msra.mxu0 0.0
    %1326 = vmatprep.subr.mxu0 0.0
    %1327 = vmatpush1.msra.mxu0 0.0
    %1328 = vmatprep.subr.mxu0 0.0
    %1329 = vmatpush1.msra.mxu0 0.0
    %1330 = vmatprep.subr.mxu0 0.0
    %1331 = vmatpush1.msra.mxu0 0.0
    %1332 = vmatprep.subr.mxu0 0.0
    %1333 = vmatpush1.msra.mxu0 0.0
    %1334 = vmatprep.subr.mxu0 0.0
    %1335 = vmatpush1.msra.mxu0 0.0
    %1336 = vmatprep.subr.mxu0 0.0
    %1337 = vmatpush1.msra.mxu0 0.0
    %1338 = vmatprep.subr.mxu0 0.0
    %1339 = vmatpush1.msra.mxu0 0.0
    %1340 = vmatprep.subr.mxu0 0.0
    %1341 = vmatpush1.msra.mxu0 0.0
    %1342 = vmatprep.subr.mxu0 0.0
    %1343 = vmatpush1.msra.mxu0 0.0
    %1344 = vmatprep.subr.mxu0 0.0
    %1345 = vmatpush1.msra.mxu0 0.0
    %1346 = vmatprep.subr.mxu0 0.0
    %1347 = vmatpush1.msra.mxu0 0.0
    %1348 = vmatprep.subr.mxu0 0.0
    %1349 = vmatpush1.msra.mxu0 0.0
    %1350 = vmatprep.subr.mxu0 0.0
    %1351 = vmatpush1.msra.mxu0 0.0
    %1352 = vmatprep.subr.mxu0 0.0
    %1353 = vmatpush1.msra.mxu0 0.0
    %1354 = vmatprep.mubr.f32.mxu0 0.0
    %1355 = vmatmul.mubr.f32.gmra.mrb[0].mxu0 %v1288
    %v1356 = vpop.f32.mrb[0].mxu0
    %v1357 = vadd.f32 0.0, %v1356
    %v1358 = vpop.f32.mrb[0].mxu0
    %v1359 = vadd.f32 0.0, %v1358
    %1360 = vdwg.mxu0
    %1363 = vrot.lane.b32.xlu0 %v874, 32
    %v1364 = vpop.permute.xlu0 %1363
    %1365 = vrot.lane.b32.xlu0 %v875, 32
    %v1366 = vpop.permute.xlu0 %1365
    %v1367 = vsel %vm480, %v1364, %v1366
    %v1368 = vsel %vm366, %v1367, 0
    %1370 = vmatprep.subr.mxu0 %v45
    %1371 = vmatpush1.msra.mxu0 %v44
    %1372 = vmatprep.subr.mxu0 %v47
    %1373 = vmatpush1.msra.mxu0 %v46
    %1374 = vmatprep.subr.mxu0 %v49
    %1375 = vmatpush1.msra.mxu0 %v48
    %1376 = vmatprep.subr.mxu0 %v51
    %1377 = vmatpush1.msra.mxu0 %v50
    %1378 = vmatprep.subr.mxu0 %v53
    %1379 = vmatpush1.msra.mxu0 %v52
    %1380 = vmatprep.subr.mxu0 %v55
    %1381 = vmatpush1.msra.mxu0 %v54
    %1382 = vmatprep.subr.mxu0 0.0
    %1383 = vmatpush1.msra.mxu0 0.0
    %1384 = vmatprep.subr.mxu0 0.0
    %1385 = vmatpush1.msra.mxu0 0.0
    %1386 = vmatprep.subr.mxu0 0.0
    %1387 = vmatpush1.msra.mxu0 0.0
    %1388 = vmatprep.subr.mxu0 0.0
    %1389 = vmatpush1.msra.mxu0 0.0
    %1390 = vmatprep.subr.mxu0 0.0
    %1391 = vmatpush1.msra.mxu0 0.0
    %1392 = vmatprep.subr.mxu0 0.0
    %1393 = vmatpush1.msra.mxu0 0.0
    %1394 = vmatprep.subr.mxu0 0.0
    %1395 = vmatpush1.msra.mxu0 0.0
    %1396 = vmatprep.subr.mxu0 0.0
    %1397 = vmatpush1.msra.mxu0 0.0
    %1398 = vmatprep.subr.mxu0 0.0
    %1399 = vmatpush1.msra.mxu0 0.0
    %1400 = vmatprep.subr.mxu0 0.0
    %1401 = vmatpush1.msra.mxu0 0.0
    %1402 = vmatprep.subr.mxu0 0.0
    %1403 = vmatpush1.msra.mxu0 0.0
    %1404 = vmatprep.subr.mxu0 0.0
    %1405 = vmatpush1.msra.mxu0 0.0
    %1406 = vmatprep.subr.mxu0 0.0
    %1407 = vmatpush1.msra.mxu0 0.0
    %1408 = vmatprep.subr.mxu0 0.0
    %1409 = vmatpush1.msra.mxu0 0.0
    %1410 = vmatprep.subr.mxu0 0.0
    %1411 = vmatpush1.msra.mxu0 0.0
    %1412 = vmatprep.subr.mxu0 0.0
    %1413 = vmatpush1.msra.mxu0 0.0
    %1414 = vmatprep.subr.mxu0 0.0
    %1415 = vmatpush1.msra.mxu0 0.0
    %1416 = vmatprep.subr.mxu0 0.0
    %1417 = vmatpush1.msra.mxu0 0.0
    %1418 = vmatprep.subr.mxu0 0.0
    %1419 = vmatpush1.msra.mxu0 0.0
    %1420 = vmatprep.subr.mxu0 0.0
    %1421 = vmatpush1.msra.mxu0 0.0
    %1422 = vmatprep.subr.mxu0 0.0
    %1423 = vmatpush1.msra.mxu0 0.0
    %1424 = vmatprep.subr.mxu0 0.0
    %1425 = vmatpush1.msra.mxu0 0.0
    %1426 = vmatprep.subr.mxu0 0.0
    %1427 = vmatpush1.msra.mxu0 0.0
    %1428 = vmatprep.subr.mxu0 0.0
    %1429 = vmatpush1.msra.mxu0 0.0
    %1430 = vmatprep.subr.mxu0 0.0
    %1431 = vmatpush1.msra.mxu0 0.0
    %1432 = vmatprep.subr.mxu0 0.0
    %1433 = vmatpush1.msra.mxu0 0.0
    %1434 = vmatprep.mubr.f32.mxu0 0.0
    %1435 = vmatmul.mubr.f32.gmra.mrb[0].mxu0 %v1368
    %v1436 = vpop.f32.mrb[0].mxu0
    %v1437 = vadd.f32 %v1357, %v1436
    %v1438 = vpop.f32.mrb[0].mxu0
    %v1439 = vadd.f32 %v1359, %v1438
    %1440 = vdwg.mxu0
    %v1441 = vadd.f32 %v1437, %v355
    %v1442 = vadd.f32 %v1439, %v359
    %v1443 = vxor.u32 %v1441, 2147483648
    %v1444 = vxor.u32 %v1442, 2147483648
    %v1445 = vmul.f32 %v1443, 1.442695
    %v1446 = vpow.pop %v1445
    %v1447 = vmul.f32 %v1444, 1.442695
    %v1448 = vpow.pop %v1447
    %v1449 = vadd.f32 %v1446, 1.0
    %v1450 = vadd.f32 %v1448, 1.0
    %v1451 = vrcp.pop %v1449
    %v1452 = vmul.f32 1.0, %v1451
    %v1453 = vrcp.pop %v1450
    %v1454 = vmul.f32 1.0, %v1453
    %v1455 = vtanh.pop %v1442
    %v1456 = vmul.f32 %v1452, %v868
    %1458 = vrot.lane.b32.xlu0 %v1455, 112
    %v1459 = vpop.permute.xlu0 %1458
    %v1461 = vmul.f32 %v1452, %v1459
    %1463 = vrot.lane.b32.xlu0 %v1461, 48
    %v1464 = vpop.permute.xlu0 %1463
    %v1466 = vadd.f32 %v1456, %v1464
    %v1467 = vtanh.pop %v1466
    %1469 = vrot.lane.b32.xlu0 %v1467, 48
    %v1470 = vpop.permute.xlu0 %1469
    %v1472 = vmul.f32 %v1452, %v1470
    %v1473 = vmul.f32 %v1454, %v1470
    %v1474 = vld [vmem:[%s157] sm:$0xff]
    %v1475 = vld [vmem:[%s157 + $0x8] sm:$0xff]
    %v1476 = vld [vmem:[%s157 + $0x10] sm:$0xff]
    %v1477 = vld [vmem:[%s157 + $0x18] sm:$0xff]
    %1478 = vmatprep.subr.mxu0 %v33
    %1479 = vmatpush1.msra.mxu0 %v32
    %1480 = vmatprep.subr.mxu0 %v35
    %1481 = vmatpush1.msra.mxu0 %v34
    %1482 = vmatprep.subr.mxu0 %v37
    %1483 = vmatpush1.msra.mxu0 %v36
    %1484 = vmatprep.subr.mxu0 %v39
    %1485 = vmatpush1.msra.mxu0 %v38
    %1486 = vmatprep.subr.mxu0 %v41
    %1487 = vmatpush1.msra.mxu0 %v40
    %1488 = vmatprep.subr.mxu0 %v43
    %1489 = vmatpush1.msra.mxu0 %v42
    %1490 = vmatprep.subr.mxu0 0.0
    %1491 = vmatpush1.msra.mxu0 0.0
    %1492 = vmatprep.subr.mxu0 0.0
    %1493 = vmatpush1.msra.mxu0 0.0
    %1494 = vmatprep.subr.mxu0 0.0
    %1495 = vmatpush1.msra.mxu0 0.0
    %1496 = vmatprep.subr.mxu0 0.0
    %1497 = vmatpush1.msra.mxu0 0.0
    %1498 = vmatprep.subr.mxu0 0.0
    %1499 = vmatpush1.msra.mxu0 0.0
    %1500 = vmatprep.subr.mxu0 0.0
    %1501 = vmatpush1.msra.mxu0 0.0
    %1502 = vmatprep.subr.mxu0 0.0
    %1503 = vmatpush1.msra.mxu0 0.0
    %1504 = vmatprep.subr.mxu0 0.0
    %1505 = vmatpush1.msra.mxu0 0.0
    %1506 = vmatprep.subr.mxu0 0.0
    %1507 = vmatpush1.msra.mxu0 0.0
    %1508 = vmatprep.subr.mxu0 0.0
    %1509 = vmatpush1.msra.mxu0 0.0
    %1510 = vmatprep.subr.mxu0 0.0
    %1511 = vmatpush1.msra.mxu0 0.0
    %1512 = vmatprep.subr.mxu0 0.0
    %1513 = vmatpush1.msra.mxu0 0.0
    %1514 = vmatprep.subr.mxu0 0.0
    %1515 = vmatpush1.msra.mxu0 0.0
    %1516 = vmatprep.subr.mxu0 0.0
    %1517 = vmatpush1.msra.mxu0 0.0
    %1518 = vmatprep.subr.mxu0 0.0
    %1519 = vmatpush1.msra.mxu0 0.0
    %1520 = vmatprep.subr.mxu0 0.0
    %1521 = vmatpush1.msra.mxu0 0.0
    %1522 = vmatprep.subr.mxu0 0.0
    %1523 = vmatpush1.msra.mxu0 0.0
    %1524 = vmatprep.subr.mxu0 0.0
    %1525 = vmatpush1.msra.mxu0 0.0
    %1526 = vmatprep.subr.mxu0 0.0
    %1527 = vmatpush1.msra.mxu0 0.0
    %1528 = vmatprep.subr.mxu0 0.0
    %1529 = vmatpush1.msra.mxu0 0.0
    %1530 = vmatprep.subr.mxu0 0.0
    %1531 = vmatpush1.msra.mxu0 0.0
    %1532 = vmatprep.subr.mxu0 0.0
    %1533 = vmatpush1.msra.mxu0 0.0
    %1534 = vmatprep.subr.mxu0 0.0
    %1535 = vmatpush1.msra.mxu0 0.0
    %1536 = vmatprep.subr.mxu0 0.0
    %1537 = vmatpush1.msra.mxu0 0.0
    %1538 = vmatprep.subr.mxu0 0.0
    %1539 = vmatpush1.msra.mxu0 0.0
    %1540 = vmatprep.subr.mxu0 0.0
    %1541 = vmatpush1.msra.mxu0 0.0
    %1542 = vmatprep.mubr.f32.mxu0 0.0
    %1543 = vmatmul.mubr.f32.gmra.mrb[0].mxu0 %v991
    %v1544 = vpop.f32.mrb[0].mxu0
    %v1545 = vadd.f32 0.0, %v1544
    %v1546 = vpop.f32.mrb[0].mxu0
    %v1547 = vadd.f32 0.0, %v1546
    %1548 = vdwg.mxu0
    %v1549 = vadd.f32 %v1474, %v1545
    %v1550 = vadd.f32 %v1475, %v1547
    %v1551 = vxor.u32 %v1549, 2147483648
    %v1552 = vxor.u32 %v1550, 2147483648
    %v1553 = vmul.f32 %v1551, 1.442695
    %v1554 = vpow.pop %v1553
    %v1555 = vmul.f32 %v1552, 1.442695
    %v1556 = vpow.pop %v1555
    %v1557 = vadd.f32 %v1554, 1.0
    %v1558 = vadd.f32 %v1556, 1.0
    %v1559 = vrcp.pop %v1557
    %v1560 = vmul.f32 1.0, %v1559
    %v1561 = vrcp.pop %v1558
    %v1562 = vmul.f32 1.0, %v1561
    %v1563 = vtanh.pop %v1550
    %v1564 = vmul.f32 %v1560, %v976
    %1566 = vrot.lane.b32.xlu0 %v1563, 112
    %v1567 = vpop.permute.xlu0 %1566
    %v1569 = vmul.f32 %v1560, %v1567
    %1571 = vrot.lane.b32.xlu0 %v1569, 48
    %v1572 = vpop.permute.xlu0 %1571
    %v1574 = vadd.f32 %v1564, %v1572
    %v1575 = vtanh.pop %v1574
    %1577 = vrot.lane.b32.xlu0 %v1575, 48
    %v1578 = vpop.permute.xlu0 %1577
    %v1580 = vmul.f32 %v1560, %v1578
    %v1581 = vmul.f32 %v1562, %v1578
    %1584 = vrot.lane.b32.xlu0 %v1580, 32
    %v1585 = vpop.permute.xlu0 %1584
    %1586 = vrot.lane.b32.xlu0 %v1581, 32
    %v1587 = vpop.permute.xlu0 %1586
    %v1588 = vsel %vm480, %v1585, %v1587
    %v1589 = vsel %vm366, %v1588, 0
    %1591 = vmatprep.subr.mxu0 %v57
    %1592 = vmatpush1.msra.mxu0 %v56
    %1593 = vmatprep.subr.mxu0 %v59
    %1594 = vmatpush1.msra.mxu0 %v58
    %1595 = vmatprep.subr.mxu0 %v61
    %1596 = vmatpush1.msra.mxu0 %v60
    %1597 = vmatprep.subr.mxu0 %v63
    %1598 = vmatpush1.msra.mxu0 %v62
    %1599 = vmatprep.subr.mxu0 %v65
    %1600 = vmatpush1.msra.mxu0 %v64
    %1601 = vmatprep.subr.mxu0 %v67
    %1602 = vmatpush1.msra.mxu0 %v66
    %1603 = vmatprep.subr.mxu0 0.0
    %1604 = vmatpush1.msra.mxu0 0.0
    %1605 = vmatprep.subr.mxu0 0.0
    %1606 = vmatpush1.msra.mxu0 0.0
    %1607 = vmatprep.subr.mxu0 0.0
    %1608 = vmatpush1.msra.mxu0 0.0
    %1609 = vmatprep.subr.mxu0 0.0
    %1610 = vmatpush1.msra.mxu0 0.0
    %1611 = vmatprep.subr.mxu0 0.0
    %1612 = vmatpush1.msra.mxu0 0.0
    %1613 = vmatprep.subr.mxu0 0.0
    %1614 = vmatpush1.msra.mxu0 0.0
    %1615 = vmatprep.subr.mxu0 0.0
    %1616 = vmatpush1.msra.mxu0 0.0
    %1617 = vmatprep.subr.mxu0 0.0
    %1618 = vmatpush1.msra.mxu0 0.0
    %1619 = vmatprep.subr.mxu0 0.0
    %1620 = vmatpush1.msra.mxu0 0.0
    %1621 = vmatprep.subr.mxu0 0.0
    %1622 = vmatpush1.msra.mxu0 0.0
    %1623 = vmatprep.subr.mxu0 0.0
    %1624 = vmatpush1.msra.mxu0 0.0
    %1625 = vmatprep.subr.mxu0 0.0
    %1626 = vmatpush1.msra.mxu0 0.0
    %1627 = vmatprep.subr.mxu0 0.0
    %1628 = vmatpush1.msra.mxu0 0.0
    %1629 = vmatprep.subr.mxu0 0.0
    %1630 = vmatpush1.msra.mxu0 0.0
    %1631 = vmatprep.subr.mxu0 0.0
    %1632 = vmatpush1.msra.mxu0 0.0
    %1633 = vmatprep.subr.mxu0 0.0
    %1634 = vmatpush1.msra.mxu0 0.0
    %1635 = vmatprep.subr.mxu0 0.0
    %1636 = vmatpush1.msra.mxu0 0.0
    %1637 = vmatprep.subr.mxu0 0.0
    %1638 = vmatpush1.msra.mxu0 0.0
    %1639 = vmatprep.subr.mxu0 0.0
    %1640 = vmatpush1.msra.mxu0 0.0
    %1641 = vmatprep.subr.mxu0 0.0
    %1642 = vmatpush1.msra.mxu0 0.0
    %1643 = vmatprep.subr.mxu0 0.0
    %1644 = vmatpush1.msra.mxu0 0.0
    %1645 = vmatprep.subr.mxu0 0.0
    %1646 = vmatpush1.msra.mxu0 0.0
    %1647 = vmatprep.subr.mxu0 0.0
    %1648 = vmatpush1.msra.mxu0 0.0
    %1649 = vmatprep.subr.mxu0 0.0
    %1650 = vmatpush1.msra.mxu0 0.0
    %1651 = vmatprep.subr.mxu0 0.0
    %1652 = vmatpush1.msra.mxu0 0.0
    %1653 = vmatprep.subr.mxu0 0.0
    %1654 = vmatpush1.msra.mxu0 0.0
    %1655 = vmatprep.mubr.f32.mxu0 0.0
    %1656 = vmatmul.mubr.f32.gmra.mrb[0].mxu0 %v1589
    %v1657 = vpop.f32.mrb[0].mxu0
    %v1658 = vadd.f32 0.0, %v1657
    %v1659 = vpop.f32.mrb[0].mxu0
    %v1660 = vadd.f32 0.0, %v1659
    %1661 = vdwg.mxu0
    %1664 = vrot.lane.b32.xlu0 %v1175, 32
    %v1665 = vpop.permute.xlu0 %1664
    %1666 = vrot.lane.b32.xlu0 %v1176, 32
    %v1667 = vpop.permute.xlu0 %1666
    %v1668 = vsel %vm480, %v1665, %v1667
    %v1669 = vsel %vm366, %v1668, 0
    %1671 = vmatprep.subr.mxu0 %v45
    %1672 = vmatpush1.msra.mxu0 %v44
    %1673 = vmatprep.subr.mxu0 %v47
    %1674 = vmatpush1.msra.mxu0 %v46
    %1675 = vmatprep.subr.mxu0 %v49
    %1676 = vmatpush1.msra.mxu0 %v48
    %1677 = vmatprep.subr.mxu0 %v51
    %1678 = vmatpush1.msra.mxu0 %v50
    %1679 = vmatprep.subr.mxu0 %v53
    %1680 = vmatpush1.msra.mxu0 %v52
    %1681 = vmatprep.subr.mxu0 %v55
    %1682 = vmatpush1.msra.mxu0 %v54
    %1683 = vmatprep.subr.mxu0 0.0
    %1684 = vmatpush1.msra.mxu0 0.0
    %1685 = vmatprep.subr.mxu0 0.0
    %1686 = vmatpush1.msra.mxu0 0.0
    %1687 = vmatprep.subr.mxu0 0.0
    %1688 = vmatpush1.msra.mxu0 0.0
    %1689 = vmatprep.subr.mxu0 0.0
    %1690 = vmatpush1.msra.mxu0 0.0
    %1691 = vmatprep.subr.mxu0 0.0
    %1692 = vmatpush1.msra.mxu0 0.0
    %1693 = vmatprep.subr.mxu0 0.0
    %1694 = vmatpush1.msra.mxu0 0.0
    %1695 = vmatprep.subr.mxu0 0.0
    %1696 = vmatpush1.msra.mxu0 0.0
    %1697 = vmatprep.subr.mxu0 0.0
    %1698 = vmatpush1.msra.mxu0 0.0
    %1699 = vmatprep.subr.mxu0 0.0
    %1700 = vmatpush1.msra.mxu0 0.0
    %1701 = vmatprep.subr.mxu0 0.0
    %1702 = vmatpush1.msra.mxu0 0.0
    %1703 = vmatprep.subr.mxu0 0.0
    %1704 = vmatpush1.msra.mxu0 0.0
    %1705 = vmatprep.subr.mxu0 0.0
    %1706 = vmatpush1.msra.mxu0 0.0
    %1707 = vmatprep.subr.mxu0 0.0
    %1708 = vmatpush1.msra.mxu0 0.0
    %1709 = vmatprep.subr.mxu0 0.0
    %1710 = vmatpush1.msra.mxu0 0.0
    %1711 = vmatprep.subr.mxu0 0.0
    %1712 = vmatpush1.msra.mxu0 0.0
    %1713 = vmatprep.subr.mxu0 0.0
    %1714 = vmatpush1.msra.mxu0 0.0
    %1715 = vmatprep.subr.mxu0 0.0
    %1716 = vmatpush1.msra.mxu0 0.0
    %1717 = vmatprep.subr.mxu0 0.0
    %1718 = vmatpush1.msra.mxu0 0.0
    %1719 = vmatprep.subr.mxu0 0.0
    %1720 = vmatpush1.msra.mxu0 0.0
    %1721 = vmatprep.subr.mxu0 0.0
    %1722 = vmatpush1.msra.mxu0 0.0
    %1723 = vmatprep.subr.mxu0 0.0
    %1724 = vmatpush1.msra.mxu0 0.0
    %1725 = vmatprep.subr.mxu0 0.0
    %1726 = vmatpush1.msra.mxu0 0.0
    %1727 = vmatprep.subr.mxu0 0.0
    %1728 = vmatpush1.msra.mxu0 0.0
    %1729 = vmatprep.subr.mxu0 0.0
    %1730 = vmatpush1.msra.mxu0 0.0
    %1731 = vmatprep.subr.mxu0 0.0
    %1732 = vmatpush1.msra.mxu0 0.0
    %1733 = vmatprep.subr.mxu0 0.0
    %1734 = vmatpush1.msra.mxu0 0.0
    %1735 = vmatprep.mubr.f32.mxu0 0.0
    %1736 = vmatmul.mubr.f32.gmra.mrb[0].mxu0 %v1669
    %v1737 = vpop.f32.mrb[0].mxu0
    %v1738 = vadd.f32 %v1658, %v1737
    %v1739 = vpop.f32.mrb[0].mxu0
    %v1740 = vadd.f32 %v1660, %v1739
    %1741 = vdwg.mxu0
    %v1742 = vadd.f32 %v1738, %v355
    %v1743 = vadd.f32 %v1740, %v359
    %v1744 = vxor.u32 %v1742, 2147483648
    %v1745 = vxor.u32 %v1743, 2147483648
    %v1746 = vmul.f32 %v1744, 1.442695
    %v1747 = vpow.pop %v1746
    %v1748 = vmul.f32 %v1745, 1.442695
    %v1749 = vpow.pop %v1748
    %v1750 = vadd.f32 %v1747, 1.0
    %v1751 = vadd.f32 %v1749, 1.0
    %v1752 = vrcp.pop %v1750
    %v1753 = vmul.f32 1.0, %v1752
    %v1754 = vrcp.pop %v1751
    %v1755 = vmul.f32 1.0, %v1754
    %v1756 = vtanh.pop %v1743
    %v1757 = vmul.f32 %v1753, %v1169
    %1759 = vrot.lane.b32.xlu0 %v1756, 112
    %v1760 = vpop.permute.xlu0 %1759
    %v1762 = vmul.f32 %v1753, %v1760
    %1764 = vrot.lane.b32.xlu0 %v1762, 48
    %v1765 = vpop.permute.xlu0 %1764
    %v1767 = vadd.f32 %v1757, %v1765
    %v1768 = vtanh.pop %v1767
    %1770 = vrot.lane.b32.xlu0 %v1768, 48
    %v1771 = vpop.permute.xlu0 %1770
    %v1773 = vmul.f32 %v1753, %v1771
    %v1774 = vmul.f32 %v1755, %v1771
    %1775 = vmatprep.subr.mxu0 %v33
    %1776 = vmatpush1.msra.mxu0 %v32
    %1777 = vmatprep.subr.mxu0 %v35
    %1778 = vmatpush1.msra.mxu0 %v34
    %1779 = vmatprep.subr.mxu0 %v37
    %1780 = vmatpush1.msra.mxu0 %v36
    %1781 = vmatprep.subr.mxu0 %v39
    %1782 = vmatpush1.msra.mxu0 %v38
    %1783 = vmatprep.subr.mxu0 %v41
    %1784 = vmatpush1.msra.mxu0 %v40
    %1785 = vmatprep.subr.mxu0 %v43
    %1786 = vmatpush1.msra.mxu0 %v42
    %1787 = vmatprep.subr.mxu0 0.0
    %1788 = vmatpush1.msra.mxu0 0.0
    %1789 = vmatprep.subr.mxu0 0.0
    %1790 = vmatpush1.msra.mxu0 0.0
    %1791 = vmatprep.subr.mxu0 0.0
    %1792 = vmatpush1.msra.mxu0 0.0
    %1793 = vmatprep.subr.mxu0 0.0
    %1794 = vmatpush1.msra.mxu0 0.0
    %1795 = vmatprep.subr.mxu0 0.0
    %1796 = vmatpush1.msra.mxu0 0.0
    %1797 = vmatprep.subr.mxu0 0.0
    %1798 = vmatpush1.msra.mxu0 0.0
    %1799 = vmatprep.subr.mxu0 0.0
    %1800 = vmatpush1.msra.mxu0 0.0
    %1801 = vmatprep.subr.mxu0 0.0
    %1802 = vmatpush1.msra.mxu0 0.0
    %1803 = vmatprep.subr.mxu0 0.0
    %1804 = vmatpush1.msra.mxu0 0.0
    %1805 = vmatprep.subr.mxu0 0.0
    %1806 = vmatpush1.msra.mxu0 0.0
    %1807 = vmatprep.subr.mxu0 0.0
    %1808 = vmatpush1.msra.mxu0 0.0
    %1809 = vmatprep.subr.mxu0 0.0
    %1810 = vmatpush1.msra.mxu0 0.0
    %1811 = vmatprep.subr.mxu0 0.0
    %1812 = vmatpush1.msra.mxu0 0.0
    %1813 = vmatprep.subr.mxu0 0.0
    %1814 = vmatpush1.msra.mxu0 0.0
    %1815 = vmatprep.subr.mxu0 0.0
    %1816 = vmatpush1.msra.mxu0 0.0
    %1817 = vmatprep.subr.mxu0 0.0
    %1818 = vmatpush1.msra.mxu0 0.0
    %1819 = vmatprep.subr.mxu0 0.0
    %1820 = vmatpush1.msra.mxu0 0.0
    %1821 = vmatprep.subr.mxu0 0.0
    %1822 = vmatpush1.msra.mxu0 0.0
    %1823 = vmatprep.subr.mxu0 0.0
    %1824 = vmatpush1.msra.mxu0 0.0
    %1825 = vmatprep.subr.mxu0 0.0
    %1826 = vmatpush1.msra.mxu0 0.0
    %1827 = vmatprep.subr.mxu0 0.0
    %1828 = vmatpush1.msra.mxu0 0.0
    %1829 = vmatprep.subr.mxu0 0.0
    %1830 = vmatpush1.msra.mxu0 0.0
    %1831 = vmatprep.subr.mxu0 0.0
    %1832 = vmatpush1.msra.mxu0 0.0
    %1833 = vmatprep.subr.mxu0 0.0
    %1834 = vmatpush1.msra.mxu0 0.0
    %1835 = vmatprep.subr.mxu0 0.0
    %1836 = vmatpush1.msra.mxu0 0.0
    %1837 = vmatprep.subr.mxu0 0.0
    %1838 = vmatpush1.msra.mxu0 0.0
    %1839 = vmatprep.mubr.f32.mxu0 0.0
    %1840 = vmatmul.mubr.f32.gmra.mrb[0].mxu0 %v1288
    %v1841 = vpop.f32.mrb[0].mxu0
    %v1842 = vadd.f32 0.0, %v1841
    %v1843 = vpop.f32.mrb[0].mxu0
    %v1844 = vadd.f32 0.0, %v1843
    %1845 = vdwg.mxu0
    %v1846 = vadd.f32 %v1476, %v1842
    %v1847 = vadd.f32 %v1477, %v1844
    %v1848 = vxor.u32 %v1846, 2147483648
    %v1849 = vxor.u32 %v1847, 2147483648
    %v1850 = vmul.f32 %v1848, 1.442695
    %v1851 = vpow.pop %v1850
    %v1852 = vmul.f32 %v1849, 1.442695
    %v1853 = vpow.pop %v1852
    %v1854 = vadd.f32 %v1851, 1.0
    %v1855 = vadd.f32 %v1853, 1.0
    %v1856 = vrcp.pop %v1854
    %v1857 = vmul.f32 1.0, %v1856
    %v1858 = vrcp.pop %v1855
    %v1859 = vmul.f32 1.0, %v1858
    %v1860 = vtanh.pop %v1847
    %v1861 = vmul.f32 %v1857, %v1273
    %1863 = vrot.lane.b32.xlu0 %v1860, 112
    %v1864 = vpop.permute.xlu0 %1863
    %v1866 = vmul.f32 %v1857, %v1864
    %1868 = vrot.lane.b32.xlu0 %v1866, 48
    %v1869 = vpop.permute.xlu0 %1868
    %v1871 = vadd.f32 %v1861, %v1869
    %v1872 = vtanh.pop %v1871
    %1874 = vrot.lane.b32.xlu0 %v1872, 48
    %v1875 = vpop.permute.xlu0 %1874
    %v1877 = vmul.f32 %v1857, %v1875
    %v1878 = vmul.f32 %v1859, %v1875
    %1881 = vrot.lane.b32.xlu0 %v1877, 32
    %v1882 = vpop.permute.xlu0 %1881
    %1883 = vrot.lane.b32.xlu0 %v1878, 32
    %v1884 = vpop.permute.xlu0 %1883
    %v1885 = vsel %vm480, %v1882, %v1884
    %v1886 = vsel %vm366, %v1885, 0
    %1888 = vmatprep.subr.mxu0 %v57
    %1889 = vmatpush1.msra.mxu0 %v56
    %1890 = vmatprep.subr.mxu0 %v59
    %1891 = vmatpush1.msra.mxu0 %v58
    %1892 = vmatprep.subr.mxu0 %v61
    %1893 = vmatpush1.msra.mxu0 %v60
    %1894 = vmatprep.subr.mxu0 %v63
    %1895 = vmatpush1.msra.mxu0 %v62
    %1896 = vmatprep.subr.mxu0 %v65
    %1897 = vmatpush1.msra.mxu0 %v64
    %1898 = vmatprep.subr.mxu0 %v67
    %1899 = vmatpush1.msra.mxu0 %v66
    %1900 = vmatprep.subr.mxu0 0.0
    %1901 = vmatpush1.msra.mxu0 0.0
    %1902 = vmatprep.subr.mxu0 0.0
    %1903 = vmatpush1.msra.mxu0 0.0
    %1904 = vmatprep.subr.mxu0 0.0
    %1905 = vmatpush1.msra.mxu0 0.0
    %1906 = vmatprep.subr.mxu0 0.0
    %1907 = vmatpush1.msra.mxu0 0.0
    %1908 = vmatprep.subr.mxu0 0.0
    %1909 = vmatpush1.msra.mxu0 0.0
    %1910 = vmatprep.subr.mxu0 0.0
    %1911 = vmatpush1.msra.mxu0 0.0
    %1912 = vmatprep.subr.mxu0 0.0
    %1913 = vmatpush1.msra.mxu0 0.0
    %1914 = vmatprep.subr.mxu0 0.0
    %1915 = vmatpush1.msra.mxu0 0.0
    %1916 = vmatprep.subr.mxu0 0.0
    %1917 = vmatpush1.msra.mxu0 0.0
    %1918 = vmatprep.subr.mxu0 0.0
    %1919 = vmatpush1.msra.mxu0 0.0
    %1920 = vmatprep.subr.mxu0 0.0
    %1921 = vmatpush1.msra.mxu0 0.0
    %1922 = vmatprep.subr.mxu0 0.0
    %1923 = vmatpush1.msra.mxu0 0.0
    %1924 = vmatprep.subr.mxu0 0.0
    %1925 = vmatpush1.msra.mxu0 0.0
    %1926 = vmatprep.subr.mxu0 0.0
    %1927 = vmatpush1.msra.mxu0 0.0
    %1928 = vmatprep.subr.mxu0 0.0
    %1929 = vmatpush1.msra.mxu0 0.0
    %1930 = vmatprep.subr.mxu0 0.0
    %1931 = vmatpush1.msra.mxu0 0.0
    %1932 = vmatprep.subr.mxu0 0.0
    %1933 = vmatpush1.msra.mxu0 0.0
    %1934 = vmatprep.subr.mxu0 0.0
    %1935 = vmatpush1.msra.mxu0 0.0
    %1936 = vmatprep.subr.mxu0 0.0
    %1937 = vmatpush1.msra.mxu0 0.0
    %1938 = vmatprep.subr.mxu0 0.0
    %1939 = vmatpush1.msra.mxu0 0.0
    %1940 = vmatprep.subr.mxu0 0.0
    %1941 = vmatpush1.msra.mxu0 0.0
    %1942 = vmatprep.subr.mxu0 0.0
    %1943 = vmatpush1.msra.mxu0 0.0
    %1944 = vmatprep.subr.mxu0 0.0
    %1945 = vmatpush1.msra.mxu0 0.0
    %1946 = vmatprep.subr.mxu0 0.0
    %1947 = vmatpush1.msra.mxu0 0.0
    %1948 = vmatprep.subr.mxu0 0.0
    %1949 = vmatpush1.msra.mxu0 0.0
    %1950 = vmatprep.subr.mxu0 0.0
    %1951 = vmatpush1.msra.mxu0 0.0
    %1952 = vmatprep.mubr.f32.mxu0 0.0
    %1953 = vmatmul.mubr.f32.gmra.mrb[0].mxu0 %v1886
    %v1954 = vpop.f32.mrb[0].mxu0
    %v1955 = vadd.f32 0.0, %v1954
    %v1956 = vpop.f32.mrb[0].mxu0
    %v1957 = vadd.f32 0.0, %v1956
    %1958 = vdwg.mxu0
    %1961 = vrot.lane.b32.xlu0 %v1472, 32
    %v1962 = vpop.permute.xlu0 %1961
    %1963 = vrot.lane.b32.xlu0 %v1473, 32
    %v1964 = vpop.permute.xlu0 %1963
    %v1965 = vsel %vm480, %v1962, %v1964
    %v1966 = vsel %vm366, %v1965, 0
    %1968 = vmatprep.subr.mxu0 %v45
    %1969 = vmatpush1.msra.mxu0 %v44
    %1970 = vmatprep.subr.mxu0 %v47
    %1971 = vmatpush1.msra.mxu0 %v46
    %1972 = vmatprep.subr.mxu0 %v49
    %1973 = vmatpush1.msra.mxu0 %v48
    %1974 = vmatprep.subr.mxu0 %v51
    %1975 = vmatpush1.msra.mxu0 %v50
    %1976 = vmatprep.subr.mxu0 %v53
    %1977 = vmatpush1.msra.mxu0 %v52
    %1978 = vmatprep.subr.mxu0 %v55
    %1979 = vmatpush1.msra.mxu0 %v54
    %1980 = vmatprep.subr.mxu0 0.0
    %1981 = vmatpush1.msra.mxu0 0.0
    %1982 = vmatprep.subr.mxu0 0.0
    %1983 = vmatpush1.msra.mxu0 0.0
    %1984 = vmatprep.subr.mxu0 0.0
    %1985 = vmatpush1.msra.mxu0 0.0
    %1986 = vmatprep.subr.mxu0 0.0
    %1987 = vmatpush1.msra.mxu0 0.0
    %1988 = vmatprep.subr.mxu0 0.0
    %1989 = vmatpush1.msra.mxu0 0.0
    %1990 = vmatprep.subr.mxu0 0.0
    %1991 = vmatpush1.msra.mxu0 0.0
    %1992 = vmatprep.subr.mxu0 0.0
    %1993 = vmatpush1.msra.mxu0 0.0
    %1994 = vmatprep.subr.mxu0 0.0
    %1995 = vmatpush1.msra.mxu0 0.0
    %1996 = vmatprep.subr.mxu0 0.0
    %1997 = vmatpush1.msra.mxu0 0.0
    %1998 = vmatprep.subr.mxu0 0.0
    %1999 = vmatpush1.msra.mxu0 0.0
    %2000 = vmatprep.subr.mxu0 0.0
    %2001 = vmatpush1.msra.mxu0 0.0
    %2002 = vmatprep.subr.mxu0 0.0
    %2003 = vmatpush1.msra.mxu0 0.0
    %2004 = vmatprep.subr.mxu0 0.0
    %2005 = vmatpush1.msra.mxu0 0.0
    %2006 = vmatprep.subr.mxu0 0.0
    %2007 = vmatpush1.msra.mxu0 0.0
    %2008 = vmatprep.subr.mxu0 0.0
    %2009 = vmatpush1.msra.mxu0 0.0
    %2010 = vmatprep.subr.mxu0 0.0
    %2011 = vmatpush1.msra.mxu0 0.0
    %2012 = vmatprep.subr.mxu0 0.0
    %2013 = vmatpush1.msra.mxu0 0.0
    %2014 = vmatprep.subr.mxu0 0.0
    %2015 = vmatpush1.msra.mxu0 0.0
    %2016 = vmatprep.subr.mxu0 0.0
    %2017 = vmatpush1.msra.mxu0 0.0
    %2018 = vmatprep.subr.mxu0 0.0
    %2019 = vmatpush1.msra.mxu0 0.0
    %2020 = vmatprep.subr.mxu0 0.0
    %2021 = vmatpush1.msra.mxu0 0.0
    %2022 = vmatprep.subr.mxu0 0.0
    %2023 = vmatpush1.msra.mxu0 0.0
    %2024 = vmatprep.subr.mxu0 0.0
    %2025 = vmatpush1.msra.mxu0 0.0
    %2026 = vmatprep.subr.mxu0 0.0
    %2027 = vmatpush1.msra.mxu0 0.0
    %2028 = vmatprep.subr.mxu0 0.0
    %2029 = vmatpush1.msra.mxu0 0.0
    %2030 = vmatprep.subr.mxu0 0.0
    %2031 = vmatpush1.msra.mxu0 0.0
    %2032 = vmatprep.mubr.f32.mxu0 0.0
    %2033 = vmatmul.mubr.f32.gmra.mrb[0].mxu0 %v1966
    %v2034 = vpop.f32.mrb[0].mxu0
    %v2035 = vadd.f32 %v1955, %v2034
    %v2036 = vpop.f32.mrb[0].mxu0
    %v2037 = vadd.f32 %v1957, %v2036
    %2038 = vdwg.mxu0
    %v2039 = vadd.f32 %v2035, %v355
    %v2040 = vadd.f32 %v2037, %v359
    %v2041 = vxor.u32 %v2039, 2147483648
    %v2042 = vxor.u32 %v2040, 2147483648
    %v2043 = vmul.f32 %v2041, 1.442695
    %v2044 = vpow.pop %v2043
    %v2045 = vmul.f32 %v2042, 1.442695
    %v2046 = vpow.pop %v2045
    %v2047 = vadd.f32 %v2044, 1.0
    %v2048 = vadd.f32 %v2046, 1.0
    %v2049 = vrcp.pop %v2047
    %v2050 = vmul.f32 1.0, %v2049
    %v2051 = vrcp.pop %v2048
    %v2052 = vmul.f32 1.0, %v2051
    %v2053 = vtanh.pop %v2040
    %v2054 = vmul.f32 %v2050, %v1466
    %2056 = vrot.lane.b32.xlu0 %v2053, 112
    %v2057 = vpop.permute.xlu0 %2056
    %v2059 = vmul.f32 %v2050, %v2057
    %2061 = vrot.lane.b32.xlu0 %v2059, 48
    %v2062 = vpop.permute.xlu0 %2061
    %v2064 = vadd.f32 %v2054, %v2062
    %v2065 = vtanh.pop %v2064
    %2067 = vrot.lane.b32.xlu0 %v2065, 48
    %v2068 = vpop.permute.xlu0 %2067
    %v2070 = vmul.f32 %v2050, %v2068
    %v2071 = vmul.f32 %v2052, %v2068
    %v2072 = vld [vmem:[%s178] sm:$0xff]
    %v2073 = vld [vmem:[%s178 + $0x8] sm:$0xff]
    %v2074 = vld [vmem:[%s178 + $0x10] sm:$0xff]
    %v2075 = vld [vmem:[%s178 + $0x18] sm:$0xff]
    %2076 = vmatprep.subr.mxu0 %v33
    %2077 = vmatpush1.msra.mxu0 %v32
    %2078 = vmatprep.subr.mxu0 %v35
    %2079 = vmatpush1.msra.mxu0 %v34
    %2080 = vmatprep.subr.mxu0 %v37
    %2081 = vmatpush1.msra.mxu0 %v36
    %2082 = vmatprep.subr.mxu0 %v39
    %2083 = vmatpush1.msra.mxu0 %v38
    %2084 = vmatprep.subr.mxu0 %v41
    %2085 = vmatpush1.msra.mxu0 %v40
    %2086 = vmatprep.subr.mxu0 %v43
    %2087 = vmatpush1.msra.mxu0 %v42
    %2088 = vmatprep.subr.mxu0 0.0
    %2089 = vmatpush1.msra.mxu0 0.0
    %2090 = vmatprep.subr.mxu0 0.0
    %2091 = vmatpush1.msra.mxu0 0.0
    %2092 = vmatprep.subr.mxu0 0.0
    %2093 = vmatpush1.msra.mxu0 0.0
    %2094 = vmatprep.subr.mxu0 0.0
    %2095 = vmatpush1.msra.mxu0 0.0
    %2096 = vmatprep.subr.mxu0 0.0
    %2097 = vmatpush1.msra.mxu0 0.0
    %2098 = vmatprep.subr.mxu0 0.0
    %2099 = vmatpush1.msra.mxu0 0.0
    %2100 = vmatprep.subr.mxu0 0.0
    %2101 = vmatpush1.msra.mxu0 0.0
    %2102 = vmatprep.subr.mxu0 0.0
    %2103 = vmatpush1.msra.mxu0 0.0
    %2104 = vmatprep.subr.mxu0 0.0
    %2105 = vmatpush1.msra.mxu0 0.0
    %2106 = vmatprep.subr.mxu0 0.0
    %2107 = vmatpush1.msra.mxu0 0.0
    %2108 = vmatprep.subr.mxu0 0.0
    %2109 = vmatpush1.msra.mxu0 0.0
    %2110 = vmatprep.subr.mxu0 0.0
    %2111 = vmatpush1.msra.mxu0 0.0
    %2112 = vmatprep.subr.mxu0 0.0
    %2113 = vmatpush1.msra.mxu0 0.0
    %2114 = vmatprep.subr.mxu0 0.0
    %2115 = vmatpush1.msra.mxu0 0.0
    %2116 = vmatprep.subr.mxu0 0.0
    %2117 = vmatpush1.msra.mxu0 0.0
    %2118 = vmatprep.subr.mxu0 0.0
    %2119 = vmatpush1.msra.mxu0 0.0
    %2120 = vmatprep.subr.mxu0 0.0
    %2121 = vmatpush1.msra.mxu0 0.0
    %2122 = vmatprep.subr.mxu0 0.0
    %2123 = vmatpush1.msra.mxu0 0.0
    %2124 = vmatprep.subr.mxu0 0.0
    %2125 = vmatpush1.msra.mxu0 0.0
    %2126 = vmatprep.subr.mxu0 0.0
    %2127 = vmatpush1.msra.mxu0 0.0
    %2128 = vmatprep.subr.mxu0 0.0
    %2129 = vmatpush1.msra.mxu0 0.0
    %2130 = vmatprep.subr.mxu0 0.0
    %2131 = vmatpush1.msra.mxu0 0.0
    %2132 = vmatprep.subr.mxu0 0.0
    %2133 = vmatpush1.msra.mxu0 0.0
    %2134 = vmatprep.subr.mxu0 0.0
    %2135 = vmatpush1.msra.mxu0 0.0
    %2136 = vmatprep.subr.mxu0 0.0
    %2137 = vmatpush1.msra.mxu0 0.0
    %2138 = vmatprep.subr.mxu0 0.0
    %2139 = vmatpush1.msra.mxu0 0.0
    %2140 = vmatprep.mubr.f32.mxu0 0.0
    %2141 = vmatmul.mubr.f32.gmra.mrb[0].mxu0 %v1589
    %v2142 = vpop.f32.mrb[0].mxu0
    %v2143 = vadd.f32 0.0, %v2142
    %v2144 = vpop.f32.mrb[0].mxu0
    %v2145 = vadd.f32 0.0, %v2144
    %2146 = vdwg.mxu0
    %v2147 = vadd.f32 %v2072, %v2143
    %v2148 = vadd.f32 %v2073, %v2145
    %v2149 = vxor.u32 %v2147, 2147483648
    %v2150 = vxor.u32 %v2148, 2147483648
    %v2151 = vmul.f32 %v2149, 1.442695
    %v2152 = vpow.pop %v2151
    %v2153 = vmul.f32 %v2150, 1.442695
    %v2154 = vpow.pop %v2153
    %v2155 = vadd.f32 %v2152, 1.0
    %v2156 = vadd.f32 %v2154, 1.0
    %v2157 = vrcp.pop %v2155
    %v2158 = vmul.f32 1.0, %v2157
    %v2159 = vrcp.pop %v2156
    %v2160 = vmul.f32 1.0, %v2159
    %v2161 = vtanh.pop %v2148
    %v2162 = vmul.f32 %v2158, %v1574
    %2164 = vrot.lane.b32.xlu0 %v2161, 112
    %v2165 = vpop.permute.xlu0 %2164
    %v2167 = vmul.f32 %v2158, %v2165
    %2169 = vrot.lane.b32.xlu0 %v2167, 48
    %v2170 = vpop.permute.xlu0 %2169
    %v2172 = vadd.f32 %v2162, %v2170
    %v2173 = vtanh.pop %v2172
    %2175 = vrot.lane.b32.xlu0 %v2173, 48
    %v2176 = vpop.permute.xlu0 %2175
    %v2178 = vmul.f32 %v2158, %v2176
    %v2179 = vmul.f32 %v2160, %v2176
    %2182 = vrot.lane.b32.xlu0 %v2178, 32
    %v2183 = vpop.permute.xlu0 %2182
    %2184 = vrot.lane.b32.xlu0 %v2179, 32
    %v2185 = vpop.permute.xlu0 %2184
    %v2186 = vsel %vm480, %v2183, %v2185
    %v2187 = vsel %vm366, %v2186, 0
    %2189 = vmatprep.subr.mxu0 %v57
    %2190 = vmatpush1.msra.mxu0 %v56
    %2191 = vmatprep.subr.mxu0 %v59
    %2192 = vmatpush1.msra.mxu0 %v58
    %2193 = vmatprep.subr.mxu0 %v61
    %2194 = vmatpush1.msra.mxu0 %v60
    %2195 = vmatprep.subr.mxu0 %v63
    %2196 = vmatpush1.msra.mxu0 %v62
    %2197 = vmatprep.subr.mxu0 %v65
    %2198 = vmatpush1.msra.mxu0 %v64
    %2199 = vmatprep.subr.mxu0 %v67
    %2200 = vmatpush1.msra.mxu0 %v66
    %2201 = vmatprep.subr.mxu0 0.0
    %2202 = vmatpush1.msra.mxu0 0.0
    %2203 = vmatprep.subr.mxu0 0.0
    %2204 = vmatpush1.msra.mxu0 0.0
    %2205 = vmatprep.subr.mxu0 0.0
    %2206 = vmatpush1.msra.mxu0 0.0
    %2207 = vmatprep.subr.mxu0 0.0
    %2208 = vmatpush1.msra.mxu0 0.0
    %2209 = vmatprep.subr.mxu0 0.0
    %2210 = vmatpush1.msra.mxu0 0.0
    %2211 = vmatprep.subr.mxu0 0.0
    %2212 = vmatpush1.msra.mxu0 0.0
    %2213 = vmatprep.subr.mxu0 0.0
    %2214 = vmatpush1.msra.mxu0 0.0
    %2215 = vmatprep.subr.mxu0 0.0
    %2216 = vmatpush1.msra.mxu0 0.0
    %2217 = vmatprep.subr.mxu0 0.0
    %2218 = vmatpush1.msra.mxu0 0.0
    %2219 = vmatprep.subr.mxu0 0.0
    %2220 = vmatpush1.msra.mxu0 0.0
    %2221 = vmatprep.subr.mxu0 0.0
    %2222 = vmatpush1.msra.mxu0 0.0
    %2223 = vmatprep.subr.mxu0 0.0
    %2224 = vmatpush1.msra.mxu0 0.0
    %2225 = vmatprep.subr.mxu0 0.0
    %2226 = vmatpush1.msra.mxu0 0.0
    %2227 = vmatprep.subr.mxu0 0.0
    %2228 = vmatpush1.msra.mxu0 0.0
    %2229 = vmatprep.subr.mxu0 0.0
    %2230 = vmatpush1.msra.mxu0 0.0
    %2231 = vmatprep.subr.mxu0 0.0
    %2232 = vmatpush1.msra.mxu0 0.0
    %2233 = vmatprep.subr.mxu0 0.0
    %2234 = vmatpush1.msra.mxu0 0.0
    %2235 = vmatprep.subr.mxu0 0.0
    %2236 = vmatpush1.msra.mxu0 0.0
    %2237 = vmatprep.subr.mxu0 0.0
    %2238 = vmatpush1.msra.mxu0 0.0
    %2239 = vmatprep.subr.mxu0 0.0
    %2240 = vmatpush1.msra.mxu0 0.0
    %2241 = vmatprep.subr.mxu0 0.0
    %2242 = vmatpush1.msra.mxu0 0.0
    %2243 = vmatprep.subr.mxu0 0.0
    %2244 = vmatpush1.msra.mxu0 0.0
    %2245 = vmatprep.subr.mxu0 0.0
    %2246 = vmatpush1.msra.mxu0 0.0
    %2247 = vmatprep.subr.mxu0 0.0
    %2248 = vmatpush1.msra.mxu0 0.0
    %2249 = vmatprep.subr.mxu0 0.0
    %2250 = vmatpush1.msra.mxu0 0.0
    %2251 = vmatprep.subr.mxu0 0.0
    %2252 = vmatpush1.msra.mxu0 0.0
    %2253 = vmatprep.mubr.f32.mxu0 0.0
    %2254 = vmatmul.mubr.f32.gmra.mrb[0].mxu0 %v2187
    %v2255 = vpop.f32.mrb[0].mxu0
    %v2256 = vadd.f32 0.0, %v2255
    %v2257 = vpop.f32.mrb[0].mxu0
    %v2258 = vadd.f32 0.0, %v2257
    %2259 = vdwg.mxu0
    %2262 = vrot.lane.b32.xlu0 %v1773, 32
    %v2263 = vpop.permute.xlu0 %2262
    %2264 = vrot.lane.b32.xlu0 %v1774, 32
    %v2265 = vpop.permute.xlu0 %2264
    %v2266 = vsel %vm480, %v2263, %v2265
    %v2267 = vsel %vm366, %v2266, 0
    %2269 = vmatprep.subr.mxu0 %v45
    %2270 = vmatpush1.msra.mxu0 %v44
    %2271 = vmatprep.subr.mxu0 %v47
    %2272 = vmatpush1.msra.mxu0 %v46
    %2273 = vmatprep.subr.mxu0 %v49
    %2274 = vmatpush1.msra.mxu0 %v48
    %2275 = vmatprep.subr.mxu0 %v51
    %2276 = vmatpush1.msra.mxu0 %v50
    %2277 = vmatprep.subr.mxu0 %v53
    %2278 = vmatpush1.msra.mxu0 %v52
    %2279 = vmatprep.subr.mxu0 %v55
    %2280 = vmatpush1.msra.mxu0 %v54
    %2281 = vmatprep.subr.mxu0 0.0
    %2282 = vmatpush1.msra.mxu0 0.0
    %2283 = vmatprep.subr.mxu0 0.0
    %2284 = vmatpush1.msra.mxu0 0.0
    %2285 = vmatprep.subr.mxu0 0.0
    %2286 = vmatpush1.msra.mxu0 0.0
    %2287 = vmatprep.subr.mxu0 0.0
    %2288 = vmatpush1.msra.mxu0 0.0
    %2289 = vmatprep.subr.mxu0 0.0
    %2290 = vmatpush1.msra.mxu0 0.0
    %2291 = vmatprep.subr.mxu0 0.0
    %2292 = vmatpush1.msra.mxu0 0.0
    %2293 = vmatprep.subr.mxu0 0.0
    %2294 = vmatpush1.msra.mxu0 0.0
    %2295 = vmatprep.subr.mxu0 0.0
    %2296 = vmatpush1.msra.mxu0 0.0
    %2297 = vmatprep.subr.mxu0 0.0
    %2298 = vmatpush1.msra.mxu0 0.0
    %2299 = vmatprep.subr.mxu0 0.0
    %2300 = vmatpush1.msra.mxu0 0.0
    %2301 = vmatprep.subr.mxu0 0.0
    %2302 = vmatpush1.msra.mxu0 0.0
    %2303 = vmatprep.subr.mxu0 0.0
    %2304 = vmatpush1.msra.mxu0 0.0
    %2305 = vmatprep.subr.mxu0 0.0
    %2306 = vmatpush1.msra.mxu0 0.0
    %2307 = vmatprep.subr.mxu0 0.0
    %2308 = vmatpush1.msra.mxu0 0.0
    %2309 = vmatprep.subr.mxu0 0.0
    %2310 = vmatpush1.msra.mxu0 0.0
    %2311 = vmatprep.subr.mxu0 0.0
    %2312 = vmatpush1.msra.mxu0 0.0
    %2313 = vmatprep.subr.mxu0 0.0
    %2314 = vmatpush1.msra.mxu0 0.0
    %2315 = vmatprep.subr.mxu0 0.0
    %2316 = vmatpush1.msra.mxu0 0.0
    %2317 = vmatprep.subr.mxu0 0.0
    %2318 = vmatpush1.msra.mxu0 0.0
    %2319 = vmatprep.subr.mxu0 0.0
    %2320 = vmatpush1.msra.mxu0 0.0
    %2321 = vmatprep.subr.mxu0 0.0
    %2322 = vmatpush1.msra.mxu0 0.0
    %2323 = vmatprep.subr.mxu0 0.0
    %2324 = vmatpush1.msra.mxu0 0.0
    %2325 = vmatprep.subr.mxu0 0.0
    %2326 = vmatpush1.msra.mxu0 0.0
    %2327 = vmatprep.subr.mxu0 0.0
    %2328 = vmatpush1.msra.mxu0 0.0
    %2329 = vmatprep.subr.mxu0 0.0
    %2330 = vmatpush1.msra.mxu0 0.0
    %2331 = vmatprep.subr.mxu0 0.0
    %2332 = vmatpush1.msra.mxu0 0.0
    %2333 = vmatprep.mubr.f32.mxu0 0.0
    %2334 = vmatmul.mubr.f32.gmra.mrb[0].mxu0 %v2267
    %v2335 = vpop.f32.mrb[0].mxu0
    %v2336 = vadd.f32 %v2256, %v2335
    %v2337 = vpop.f32.mrb[0].mxu0
    %v2338 = vadd.f32 %v2258, %v2337
    %2339 = vdwg.mxu0
    %v2340 = vadd.f32 %v2336, %v355
    %v2341 = vadd.f32 %v2338, %v359
    %v2342 = vxor.u32 %v2340, 2147483648
    %v2343 = vxor.u32 %v2341, 2147483648
    %v2344 = vmul.f32 %v2342, 1.442695
    %v2345 = vpow.pop %v2344
    %v2346 = vmul.f32 %v2343, 1.442695
    %v2347 = vpow.pop %v2346
    %v2348 = vadd.f32 %v2345, 1.0
    %v2349 = vadd.f32 %v2347, 1.0
    %v2350 = vrcp.pop %v2348
    %v2351 = vmul.f32 1.0, %v2350
    %v2352 = vrcp.pop %v2349
    %v2353 = vmul.f32 1.0, %v2352
    %v2354 = vtanh.pop %v2341
    %v2355 = vmul.f32 %v2351, %v1767
    %2357 = vrot.lane.b32.xlu0 %v2354, 112
    %v2358 = vpop.permute.xlu0 %2357
    %v2360 = vmul.f32 %v2351, %v2358
    %2362 = vrot.lane.b32.xlu0 %v2360, 48
    %v2363 = vpop.permute.xlu0 %2362
    %v2365 = vadd.f32 %v2355, %v2363
    %v2366 = vtanh.pop %v2365
    %2368 = vrot.lane.b32.xlu0 %v2366, 48
    %v2369 = vpop.permute.xlu0 %2368
    %v2371 = vmul.f32 %v2351, %v2369
    %v2372 = vmul.f32 %v2353, %v2369
    %2373 = vmatprep.subr.mxu0 %v33
    %2374 = vmatpush1.msra.mxu0 %v32
    %2375 = vmatprep.subr.mxu0 %v35
    %2376 = vmatpush1.msra.mxu0 %v34
    %2377 = vmatprep.subr.mxu0 %v37
    %2378 = vmatpush1.msra.mxu0 %v36
    %2379 = vmatprep.subr.mxu0 %v39
    %2380 = vmatpush1.msra.mxu0 %v38
    %2381 = vmatprep.subr.mxu0 %v41
    %2382 = vmatpush1.msra.mxu0 %v40
    %2383 = vmatprep.subr.mxu0 %v43
    %2384 = vmatpush1.msra.mxu0 %v42
    %2385 = vmatprep.subr.mxu0 0.0
    %2386 = vmatpush1.msra.mxu0 0.0
    %2387 = vmatprep.subr.mxu0 0.0
    %2388 = vmatpush1.msra.mxu0 0.0
    %2389 = vmatprep.subr.mxu0 0.0
    %2390 = vmatpush1.msra.mxu0 0.0
    %2391 = vmatprep.subr.mxu0 0.0
    %2392 = vmatpush1.msra.mxu0 0.0
    %2393 = vmatprep.subr.mxu0 0.0
    %2394 = vmatpush1.msra.mxu0 0.0
    %2395 = vmatprep.subr.mxu0 0.0
    %2396 = vmatpush1.msra.mxu0 0.0
    %2397 = vmatprep.subr.mxu0 0.0
    %2398 = vmatpush1.msra.mxu0 0.0
    %2399 = vmatprep.subr.mxu0 0.0
    %2400 = vmatpush1.msra.mxu0 0.0
    %2401 = vmatprep.subr.mxu0 0.0
    %2402 = vmatpush1.msra.mxu0 0.0
    %2403 = vmatprep.subr.mxu0 0.0
    %2404 = vmatpush1.msra.mxu0 0.0
    %2405 = vmatprep.subr.mxu0 0.0
    %2406 = vmatpush1.msra.mxu0 0.0
    %2407 = vmatprep.subr.mxu0 0.0
    %2408 = vmatpush1.msra.mxu0 0.0
    %2409 = vmatprep.subr.mxu0 0.0
    %2410 = vmatpush1.msra.mxu0 0.0
    %2411 = vmatprep.subr.mxu0 0.0
    %2412 = vmatpush1.msra.mxu0 0.0
    %2413 = vmatprep.subr.mxu0 0.0
    %2414 = vmatpush1.msra.mxu0 0.0
    %2415 = vmatprep.subr.mxu0 0.0
    %2416 = vmatpush1.msra.mxu0 0.0
    %2417 = vmatprep.subr.mxu0 0.0
    %2418 = vmatpush1.msra.mxu0 0.0
    %2419 = vmatprep.subr.mxu0 0.0
    %2420 = vmatpush1.msra.mxu0 0.0
    %2421 = vmatprep.subr.mxu0 0.0
    %2422 = vmatpush1.msra.mxu0 0.0
    %2423 = vmatprep.subr.mxu0 0.0
    %2424 = vmatpush1.msra.mxu0 0.0
    %2425 = vmatprep.subr.mxu0 0.0
    %2426 = vmatpush1.msra.mxu0 0.0
    %2427 = vmatprep.subr.mxu0 0.0
    %2428 = vmatpush1.msra.mxu0 0.0
    %2429 = vmatprep.subr.mxu0 0.0
    %2430 = vmatpush1.msra.mxu0 0.0
    %2431 = vmatprep.subr.mxu0 0.0
    %2432 = vmatpush1.msra.mxu0 0.0
    %2433 = vmatprep.subr.mxu0 0.0
    %2434 = vmatpush1.msra.mxu0 0.0
    %2435 = vmatprep.subr.mxu0 0.0
    %2436 = vmatpush1.msra.mxu0 0.0
    %2437 = vmatprep.mubr.f32.mxu0 0.0
    %2438 = vmatmul.mubr.f32.gmra.mrb[0].mxu0 %v1886
    %v2439 = vpop.f32.mrb[0].mxu0
    %v2440 = vadd.f32 0.0, %v2439
    %v2441 = vpop.f32.mrb[0].mxu0
    %v2442 = vadd.f32 0.0, %v2441
    %2443 = vdwg.mxu0
    %v2444 = vadd.f32 %v2074, %v2440
    %v2445 = vadd.f32 %v2075, %v2442
    %v2446 = vxor.u32 %v2444, 2147483648
    %v2447 = vxor.u32 %v2445, 2147483648
    %v2448 = vmul.f32 %v2446, 1.442695
    %v2449 = vpow.pop %v2448
    %v2450 = vmul.f32 %v2447, 1.442695
    %v2451 = vpow.pop %v2450
    %v2452 = vadd.f32 %v2449, 1.0
    %v2453 = vadd.f32 %v2451, 1.0
    %v2454 = vrcp.pop %v2452
    %v2455 = vmul.f32 1.0, %v2454
    %v2456 = vrcp.pop %v2453
    %v2457 = vmul.f32 1.0, %v2456
    %v2458 = vtanh.pop %v2445
    %v2459 = vmul.f32 %v2455, %v1871
    %2461 = vrot.lane.b32.xlu0 %v2458, 112
    %v2462 = vpop.permute.xlu0 %2461
    %v2464 = vmul.f32 %v2455, %v2462
    %2466 = vrot.lane.b32.xlu0 %v2464, 48
    %v2467 = vpop.permute.xlu0 %2466
    %v2469 = vadd.f32 %v2459, %v2467
    %v2470 = vtanh.pop %v2469
    %2472 = vrot.lane.b32.xlu0 %v2470, 48
    %v2473 = vpop.permute.xlu0 %2472
    %v2475 = vmul.f32 %v2455, %v2473
    %v2476 = vmul.f32 %v2457, %v2473
    %2479 = vrot.lane.b32.xlu0 %v2475, 32
    %v2480 = vpop.permute.xlu0 %2479
    %2481 = vrot.lane.b32.xlu0 %v2476, 32
    %v2482 = vpop.permute.xlu0 %2481
    %v2483 = vsel %vm480, %v2480, %v2482
    %v2484 = vsel %vm366, %v2483, 0
    %2486 = vmatprep.subr.mxu0 %v57
    %2487 = vmatpush1.msra.mxu0 %v56
    %2488 = vmatprep.subr.mxu0 %v59
    %2489 = vmatpush1.msra.mxu0 %v58
    %2490 = vmatprep.subr.mxu0 %v61
    %2491 = vmatpush1.msra.mxu0 %v60
    %2492 = vmatprep.subr.mxu0 %v63
    %2493 = vmatpush1.msra.mxu0 %v62
    %2494 = vmatprep.subr.mxu0 %v65
    %2495 = vmatpush1.msra.mxu0 %v64
    %2496 = vmatprep.subr.mxu0 %v67
    %2497 = vmatpush1.msra.mxu0 %v66
    %2498 = vmatprep.subr.mxu0 0.0
    %2499 = vmatpush1.msra.mxu0 0.0
    %2500 = vmatprep.subr.mxu0 0.0
    %2501 = vmatpush1.msra.mxu0 0.0
    %2502 = vmatprep.subr.mxu0 0.0
    %2503 = vmatpush1.msra.mxu0 0.0
    %2504 = vmatprep.subr.mxu0 0.0
    %2505 = vmatpush1.msra.mxu0 0.0
    %2506 = vmatprep.subr.mxu0 0.0
    %2507 = vmatpush1.msra.mxu0 0.0
    %2508 = vmatprep.subr.mxu0 0.0
    %2509 = vmatpush1.msra.mxu0 0.0
    %2510 = vmatprep.subr.mxu0 0.0
    %2511 = vmatpush1.msra.mxu0 0.0
    %2512 = vmatprep.subr.mxu0 0.0
    %2513 = vmatpush1.msra.mxu0 0.0
    %2514 = vmatprep.subr.mxu0 0.0
    %2515 = vmatpush1.msra.mxu0 0.0
    %2516 = vmatprep.subr.mxu0 0.0
    %2517 = vmatpush1.msra.mxu0 0.0
    %2518 = vmatprep.subr.mxu0 0.0
    %2519 = vmatpush1.msra.mxu0 0.0
    %2520 = vmatprep.subr.mxu0 0.0
    %2521 = vmatpush1.msra.mxu0 0.0
    %2522 = vmatprep.subr.mxu0 0.0
    %2523 = vmatpush1.msra.mxu0 0.0
    %2524 = vmatprep.subr.mxu0 0.0
    %2525 = vmatpush1.msra.mxu0 0.0
    %2526 = vmatprep.subr.mxu0 0.0
    %2527 = vmatpush1.msra.mxu0 0.0
    %2528 = vmatprep.subr.mxu0 0.0
    %2529 = vmatpush1.msra.mxu0 0.0
    %2530 = vmatprep.subr.mxu0 0.0
    %2531 = vmatpush1.msra.mxu0 0.0
    %2532 = vmatprep.subr.mxu0 0.0
    %2533 = vmatpush1.msra.mxu0 0.0
    %2534 = vmatprep.subr.mxu0 0.0
    %2535 = vmatpush1.msra.mxu0 0.0
    %2536 = vmatprep.subr.mxu0 0.0
    %2537 = vmatpush1.msra.mxu0 0.0
    %2538 = vmatprep.subr.mxu0 0.0
    %2539 = vmatpush1.msra.mxu0 0.0
    %2540 = vmatprep.subr.mxu0 0.0
    %2541 = vmatpush1.msra.mxu0 0.0
    %2542 = vmatprep.subr.mxu0 0.0
    %2543 = vmatpush1.msra.mxu0 0.0
    %2544 = vmatprep.subr.mxu0 0.0
    %2545 = vmatpush1.msra.mxu0 0.0
    %2546 = vmatprep.subr.mxu0 0.0
    %2547 = vmatpush1.msra.mxu0 0.0
    %2548 = vmatprep.subr.mxu0 0.0
    %2549 = vmatpush1.msra.mxu0 0.0
    %2550 = vmatprep.mubr.f32.mxu0 0.0
    %2551 = vmatmul.mubr.f32.gmra.mrb[0].mxu0 %v2484
    %v2552 = vpop.f32.mrb[0].mxu0
    %v2553 = vadd.f32 0.0, %v2552
    %v2554 = vpop.f32.mrb[0].mxu0
    %v2555 = vadd.f32 0.0, %v2554
    %2556 = vdwg.mxu0
    %2559 = vrot.lane.b32.xlu0 %v2070, 32
    %v2560 = vpop.permute.xlu0 %2559
    %2561 = vrot.lane.b32.xlu0 %v2071, 32
    %v2562 = vpop.permute.xlu0 %2561
    %v2563 = vsel %vm480, %v2560, %v2562
    %v2564 = vsel %vm366, %v2563, 0
    %2566 = vmatprep.subr.mxu0 %v45
    %2567 = vmatpush1.msra.mxu0 %v44
    %2568 = vmatprep.subr.mxu0 %v47
    %2569 = vmatpush1.msra.mxu0 %v46
    %2570 = vmatprep.subr.mxu0 %v49
    %2571 = vmatpush1.msra.mxu0 %v48
    %2572 = vmatprep.subr.mxu0 %v51
    %2573 = vmatpush1.msra.mxu0 %v50
    %2574 = vmatprep.subr.mxu0 %v53
    %2575 = vmatpush1.msra.mxu0 %v52
    %2576 = vmatprep.subr.mxu0 %v55
    %2577 = vmatpush1.msra.mxu0 %v54
    %2578 = vmatprep.subr.mxu0 0.0
    %2579 = vmatpush1.msra.mxu0 0.0
    %2580 = vmatprep.subr.mxu0 0.0
    %2581 = vmatpush1.msra.mxu0 0.0
    %2582 = vmatprep.subr.mxu0 0.0
    %2583 = vmatpush1.msra.mxu0 0.0
    %2584 = vmatprep.subr.mxu0 0.0
    %2585 = vmatpush1.msra.mxu0 0.0
    %2586 = vmatprep.subr.mxu0 0.0
    %2587 = vmatpush1.msra.mxu0 0.0
    %2588 = vmatprep.subr.mxu0 0.0
    %2589 = vmatpush1.msra.mxu0 0.0
    %2590 = vmatprep.subr.mxu0 0.0
    %2591 = vmatpush1.msra.mxu0 0.0
    %2592 = vmatprep.subr.mxu0 0.0
    %2593 = vmatpush1.msra.mxu0 0.0
    %2594 = vmatprep.subr.mxu0 0.0
    %2595 = vmatpush1.msra.mxu0 0.0
    %2596 = vmatprep.subr.mxu0 0.0
    %2597 = vmatpush1.msra.mxu0 0.0
    %2598 = vmatprep.subr.mxu0 0.0
    %2599 = vmatpush1.msra.mxu0 0.0
    %2600 = vmatprep.subr.mxu0 0.0
    %2601 = vmatpush1.msra.mxu0 0.0
    %2602 = vmatprep.subr.mxu0 0.0
    %2603 = vmatpush1.msra.mxu0 0.0
    %2604 = vmatprep.subr.mxu0 0.0
    %2605 = vmatpush1.msra.mxu0 0.0
    %2606 = vmatprep.subr.mxu0 0.0
    %2607 = vmatpush1.msra.mxu0 0.0
    %2608 = vmatprep.subr.mxu0 0.0
    %2609 = vmatpush1.msra.mxu0 0.0
    %2610 = vmatprep.subr.mxu0 0.0
    %2611 = vmatpush1.msra.mxu0 0.0
    %2612 = vmatprep.subr.mxu0 0.0
    %2613 = vmatpush1.msra.mxu0 0.0
    %2614 = vmatprep.subr.mxu0 0.0
    %2615 = vmatpush1.msra.mxu0 0.0
    %2616 = vmatprep.subr.mxu0 0.0
    %2617 = vmatpush1.msra.mxu0 0.0
    %2618 = vmatprep.subr.mxu0 0.0
    %2619 = vmatpush1.msra.mxu0 0.0
    %2620 = vmatprep.subr.mxu0 0.0
    %2621 = vmatpush1.msra.mxu0 0.0
    %2622 = vmatprep.subr.mxu0 0.0
    %2623 = vmatpush1.msra.mxu0 0.0
    %2624 = vmatprep.subr.mxu0 0.0
    %2625 = vmatpush1.msra.mxu0 0.0
    %2626 = vmatprep.subr.mxu0 0.0
    %2627 = vmatpush1.msra.mxu0 0.0
    %2628 = vmatprep.subr.mxu0 0.0
    %2629 = vmatpush1.msra.mxu0 0.0
    %2630 = vmatprep.mubr.f32.mxu0 0.0
    %2631 = vmatmul.mubr.f32.gmra.mrb[0].mxu0 %v2564
    %v2632 = vpop.f32.mrb[0].mxu0
    %v2633 = vadd.f32 %v2553, %v2632
    %v2634 = vpop.f32.mrb[0].mxu0
    %v2635 = vadd.f32 %v2555, %v2634
    %2636 = vdwg.mxu0
    %v2637 = vadd.f32 %v2633, %v355
    %v2638 = vadd.f32 %v2635, %v359
    %v2639 = vxor.u32 %v2637, 2147483648
    %v2640 = vxor.u32 %v2638, 2147483648
    %v2641 = vmul.f32 %v2639, 1.442695
    %v2642 = vpow.pop %v2641
    %v2643 = vmul.f32 %v2640, 1.442695
    %v2644 = vpow.pop %v2643
    %v2645 = vadd.f32 %v2642, 1.0
    %v2646 = vadd.f32 %v2644, 1.0
    %v2647 = vrcp.pop %v2645
    %v2648 = vmul.f32 1.0, %v2647
    %v2649 = vrcp.pop %v2646
    %v2650 = vmul.f32 1.0, %v2649
    %v2651 = vtanh.pop %v2638
    %v2652 = vmul.f32 %v2648, %v2064
    %2654 = vrot.lane.b32.xlu0 %v2651, 112
    %v2655 = vpop.permute.xlu0 %2654
    %v2657 = vmul.f32 %v2648, %v2655
    %2659 = vrot.lane.b32.xlu0 %v2657, 48
    %v2660 = vpop.permute.xlu0 %2659
    %v2662 = vadd.f32 %v2652, %v2660
    %v2663 = vtanh.pop %v2662
    %2665 = vrot.lane.b32.xlu0 %v2663, 48
    %v2666 = vpop.permute.xlu0 %2665
    %v2668 = vmul.f32 %v2648, %v2666
    %v2669 = vmul.f32 %v2650, %v2666
    %v2670 = vld [vmem:[%s199] sm:$0xff]
    %v2671 = vld [vmem:[%s199 + $0x8] sm:$0xff]
    %v2672 = vld [vmem:[%s199 + $0x10] sm:$0xff]
    %v2673 = vld [vmem:[%s199 + $0x18] sm:$0xff]
    %2674 = vmatprep.subr.mxu0 %v33
    %2675 = vmatpush1.msra.mxu0 %v32
    %2676 = vmatprep.subr.mxu0 %v35
    %2677 = vmatpush1.msra.mxu0 %v34
    %2678 = vmatprep.subr.mxu0 %v37
    %2679 = vmatpush1.msra.mxu0 %v36
    %2680 = vmatprep.subr.mxu0 %v39
    %2681 = vmatpush1.msra.mxu0 %v38
    %2682 = vmatprep.subr.mxu0 %v41
    %2683 = vmatpush1.msra.mxu0 %v40
    %2684 = vmatprep.subr.mxu0 %v43
    %2685 = vmatpush1.msra.mxu0 %v42
    %2686 = vmatprep.subr.mxu0 0.0
    %2687 = vmatpush1.msra.mxu0 0.0
    %2688 = vmatprep.subr.mxu0 0.0
    %2689 = vmatpush1.msra.mxu0 0.0
    %2690 = vmatprep.subr.mxu0 0.0
    %2691 = vmatpush1.msra.mxu0 0.0
    %2692 = vmatprep.subr.mxu0 0.0
    %2693 = vmatpush1.msra.mxu0 0.0
    %2694 = vmatprep.subr.mxu0 0.0
    %2695 = vmatpush1.msra.mxu0 0.0
    %2696 = vmatprep.subr.mxu0 0.0
    %2697 = vmatpush1.msra.mxu0 0.0
    %2698 = vmatprep.subr.mxu0 0.0
    %2699 = vmatpush1.msra.mxu0 0.0
    %2700 = vmatprep.subr.mxu0 0.0
    %2701 = vmatpush1.msra.mxu0 0.0
    %2702 = vmatprep.subr.mxu0 0.0
    %2703 = vmatpush1.msra.mxu0 0.0
    %2704 = vmatprep.subr.mxu0 0.0
    %2705 = vmatpush1.msra.mxu0 0.0
    %2706 = vmatprep.subr.mxu0 0.0
    %2707 = vmatpush1.msra.mxu0 0.0
    %2708 = vmatprep.subr.mxu0 0.0
    %2709 = vmatpush1.msra.mxu0 0.0
    %2710 = vmatprep.subr.mxu0 0.0
    %2711 = vmatpush1.msra.mxu0 0.0
    %2712 = vmatprep.subr.mxu0 0.0
    %2713 = vmatpush1.msra.mxu0 0.0
    %2714 = vmatprep.subr.mxu0 0.0
    %2715 = vmatpush1.msra.mxu0 0.0
    %2716 = vmatprep.subr.mxu0 0.0
    %2717 = vmatpush1.msra.mxu0 0.0
    %2718 = vmatprep.subr.mxu0 0.0
    %2719 = vmatpush1.msra.mxu0 0.0
    %2720 = vmatprep.subr.mxu0 0.0
    %2721 = vmatpush1.msra.mxu0 0.0
    %2722 = vmatprep.subr.mxu0 0.0
    %2723 = vmatpush1.msra.mxu0 0.0
    %2724 = vmatprep.subr.mxu0 0.0
    %2725 = vmatpush1.msra.mxu0 0.0
    %2726 = vmatprep.subr.mxu0 0.0
    %2727 = vmatpush1.msra.mxu0 0.0
    %2728 = vmatprep.subr.mxu0 0.0
    %2729 = vmatpush1.msra.mxu0 0.0
    %2730 = vmatprep.subr.mxu0 0.0
    %2731 = vmatpush1.msra.mxu0 0.0
    %2732 = vmatprep.subr.mxu0 0.0
    %2733 = vmatpush1.msra.mxu0 0.0
    %2734 = vmatprep.subr.mxu0 0.0
    %2735 = vmatpush1.msra.mxu0 0.0
    %2736 = vmatprep.subr.mxu0 0.0
    %2737 = vmatpush1.msra.mxu0 0.0
    %2738 = vmatprep.mubr.f32.mxu0 0.0
    %2739 = vmatmul.mubr.f32.gmra.mrb[0].mxu0 %v2187
    %v2740 = vpop.f32.mrb[0].mxu0
    %v2741 = vadd.f32 0.0, %v2740
    %v2742 = vpop.f32.mrb[0].mxu0
    %v2743 = vadd.f32 0.0, %v2742
    %2744 = vdwg.mxu0
    %v2745 = vadd.f32 %v2670, %v2741
    %v2746 = vadd.f32 %v2671, %v2743
    %v2747 = vxor.u32 %v2745, 2147483648
    %v2748 = vxor.u32 %v2746, 2147483648
    %v2749 = vmul.f32 %v2747, 1.442695
    %v2750 = vpow.pop %v2749
    %v2751 = vmul.f32 %v2748, 1.442695
    %v2752 = vpow.pop %v2751
    %v2753 = vadd.f32 %v2750, 1.0
    %v2754 = vadd.f32 %v2752, 1.0
    %v2755 = vrcp.pop %v2753
    %v2756 = vmul.f32 1.0, %v2755
    %v2757 = vrcp.pop %v2754
    %v2758 = vmul.f32 1.0, %v2757
    %v2759 = vtanh.pop %v2746
    %v2760 = vmul.f32 %v2756, %v2172
    %2762 = vrot.lane.b32.xlu0 %v2759, 112
    %v2763 = vpop.permute.xlu0 %2762
    %v2765 = vmul.f32 %v2756, %v2763
    %2767 = vrot.lane.b32.xlu0 %v2765, 48
    %v2768 = vpop.permute.xlu0 %2767
    %v2770 = vadd.f32 %v2760, %v2768
    %v2771 = vtanh.pop %v2770
    %2773 = vrot.lane.b32.xlu0 %v2771, 48
    %v2774 = vpop.permute.xlu0 %2773
    %v2776 = vmul.f32 %v2756, %v2774
    %v2777 = vmul.f32 %v2758, %v2774
    %2780 = vrot.lane.b32.xlu0 %v2776, 32
    %v2781 = vpop.permute.xlu0 %2780
    %2782 = vrot.lane.b32.xlu0 %v2777, 32
    %v2783 = vpop.permute.xlu0 %2782
    %v2784 = vsel %vm480, %v2781, %v2783
    %v2785 = vsel %vm366, %v2784, 0
    %2787 = vmatprep.subr.mxu0 %v57
    %2788 = vmatpush1.msra.mxu0 %v56
    %2789 = vmatprep.subr.mxu0 %v59
    %2790 = vmatpush1.msra.mxu0 %v58
    %2791 = vmatprep.subr.mxu0 %v61
    %2792 = vmatpush1.msra.mxu0 %v60
    %2793 = vmatprep.subr.mxu0 %v63
    %2794 = vmatpush1.msra.mxu0 %v62
    %2795 = vmatprep.subr.mxu0 %v65
    %2796 = vmatpush1.msra.mxu0 %v64
    %2797 = vmatprep.subr.mxu0 %v67
    %2798 = vmatpush1.msra.mxu0 %v66
    %2799 = vmatprep.subr.mxu0 0.0
    %2800 = vmatpush1.msra.mxu0 0.0
    %2801 = vmatprep.subr.mxu0 0.0
    %2802 = vmatpush1.msra.mxu0 0.0
    %2803 = vmatprep.subr.mxu0 0.0
    %2804 = vmatpush1.msra.mxu0 0.0
    %2805 = vmatprep.subr.mxu0 0.0
    %2806 = vmatpush1.msra.mxu0 0.0
    %2807 = vmatprep.subr.mxu0 0.0
    %2808 = vmatpush1.msra.mxu0 0.0
    %2809 = vmatprep.subr.mxu0 0.0
    %2810 = vmatpush1.msra.mxu0 0.0
    %2811 = vmatprep.subr.mxu0 0.0
    %2812 = vmatpush1.msra.mxu0 0.0
    %2813 = vmatprep.subr.mxu0 0.0
    %2814 = vmatpush1.msra.mxu0 0.0
    %2815 = vmatprep.subr.mxu0 0.0
    %2816 = vmatpush1.msra.mxu0 0.0
    %2817 = vmatprep.subr.mxu0 0.0
    %2818 = vmatpush1.msra.mxu0 0.0
    %2819 = vmatprep.subr.mxu0 0.0
    %2820 = vmatpush1.msra.mxu0 0.0
    %2821 = vmatprep.subr.mxu0 0.0
    %2822 = vmatpush1.msra.mxu0 0.0
    %2823 = vmatprep.subr.mxu0 0.0
    %2824 = vmatpush1.msra.mxu0 0.0
    %2825 = vmatprep.subr.mxu0 0.0
    %2826 = vmatpush1.msra.mxu0 0.0
    %2827 = vmatprep.subr.mxu0 0.0
    %2828 = vmatpush1.msra.mxu0 0.0
    %2829 = vmatprep.subr.mxu0 0.0
    %2830 = vmatpush1.msra.mxu0 0.0
    %2831 = vmatprep.subr.mxu0 0.0
    %2832 = vmatpush1.msra.mxu0 0.0
    %2833 = vmatprep.subr.mxu0 0.0
    %2834 = vmatpush1.msra.mxu0 0.0
    %2835 = vmatprep.subr.mxu0 0.0
    %2836 = vmatpush1.msra.mxu0 0.0
    %2837 = vmatprep.subr.mxu0 0.0
    %2838 = vmatpush1.msra.mxu0 0.0
    %2839 = vmatprep.subr.mxu0 0.0
    %2840 = vmatpush1.msra.mxu0 0.0
    %2841 = vmatprep.subr.mxu0 0.0
    %2842 = vmatpush1.msra.mxu0 0.0
    %2843 = vmatprep.subr.mxu0 0.0
    %2844 = vmatpush1.msra.mxu0 0.0
    %2845 = vmatprep.subr.mxu0 0.0
    %2846 = vmatpush1.msra.mxu0 0.0
    %2847 = vmatprep.subr.mxu0 0.0
    %2848 = vmatpush1.msra.mxu0 0.0
    %2849 = vmatprep.subr.mxu0 0.0
    %2850 = vmatpush1.msra.mxu0 0.0
    %2851 = vmatprep.mubr.f32.mxu0 0.0
    %2852 = vmatmul.mubr.f32.gmra.mrb[0].mxu0 %v2785
    %v2853 = vpop.f32.mrb[0].mxu0
    %v2854 = vadd.f32 0.0, %v2853
    %v2855 = vpop.f32.mrb[0].mxu0
    %v2856 = vadd.f32 0.0, %v2855
    %2857 = vdwg.mxu0
    %2860 = vrot.lane.b32.xlu0 %v2371, 32
    %v2861 = vpop.permute.xlu0 %2860
    %2862 = vrot.lane.b32.xlu0 %v2372, 32
    %v2863 = vpop.permute.xlu0 %2862
    %v2864 = vsel %vm480, %v2861, %v2863
    %v2865 = vsel %vm366, %v2864, 0
    %2867 = vmatprep.subr.mxu0 %v45
    %2868 = vmatpush1.msra.mxu0 %v44
    %2869 = vmatprep.subr.mxu0 %v47
    %2870 = vmatpush1.msra.mxu0 %v46
    %2871 = vmatprep.subr.mxu0 %v49
    %2872 = vmatpush1.msra.mxu0 %v48
    %2873 = vmatprep.subr.mxu0 %v51
    %2874 = vmatpush1.msra.mxu0 %v50
    %2875 = vmatprep.subr.mxu0 %v53
    %2876 = vmatpush1.msra.mxu0 %v52
    %2877 = vmatprep.subr.mxu0 %v55
    %2878 = vmatpush1.msra.mxu0 %v54
    %2879 = vmatprep.subr.mxu0 0.0
    %2880 = vmatpush1.msra.mxu0 0.0
    %2881 = vmatprep.subr.mxu0 0.0
    %2882 = vmatpush1.msra.mxu0 0.0
    %2883 = vmatprep.subr.mxu0 0.0
    %2884 = vmatpush1.msra.mxu0 0.0
    %2885 = vmatprep.subr.mxu0 0.0
    %2886 = vmatpush1.msra.mxu0 0.0
    %2887 = vmatprep.subr.mxu0 0.0
    %2888 = vmatpush1.msra.mxu0 0.0
    %2889 = vmatprep.subr.mxu0 0.0
    %2890 = vmatpush1.msra.mxu0 0.0
    %2891 = vmatprep.subr.mxu0 0.0
    %2892 = vmatpush1.msra.mxu0 0.0
    %2893 = vmatprep.subr.mxu0 0.0
    %2894 = vmatpush1.msra.mxu0 0.0
    %2895 = vmatprep.subr.mxu0 0.0
    %2896 = vmatpush1.msra.mxu0 0.0
    %2897 = vmatprep.subr.mxu0 0.0
    %2898 = vmatpush1.msra.mxu0 0.0
    %2899 = vmatprep.subr.mxu0 0.0
    %2900 = vmatpush1.msra.mxu0 0.0
    %2901 = vmatprep.subr.mxu0 0.0
    %2902 = vmatpush1.msra.mxu0 0.0
    %2903 = vmatprep.subr.mxu0 0.0
    %2904 = vmatpush1.msra.mxu0 0.0
    %2905 = vmatprep.subr.mxu0 0.0
    %2906 = vmatpush1.msra.mxu0 0.0
    %2907 = vmatprep.subr.mxu0 0.0
    %2908 = vmatpush1.msra.mxu0 0.0
    %2909 = vmatprep.subr.mxu0 0.0
    %2910 = vmatpush1.msra.mxu0 0.0
    %2911 = vmatprep.subr.mxu0 0.0
    %2912 = vmatpush1.msra.mxu0 0.0
    %2913 = vmatprep.subr.mxu0 0.0
    %2914 = vmatpush1.msra.mxu0 0.0
    %2915 = vmatprep.subr.mxu0 0.0
    %2916 = vmatpush1.msra.mxu0 0.0
    %2917 = vmatprep.subr.mxu0 0.0
    %2918 = vmatpush1.msra.mxu0 0.0
    %2919 = vmatprep.subr.mxu0 0.0
    %2920 = vmatpush1.msra.mxu0 0.0
    %2921 = vmatprep.subr.mxu0 0.0
    %2922 = vmatpush1.msra.mxu0 0.0
    %2923 = vmatprep.subr.mxu0 0.0
    %2924 = vmatpush1.msra.mxu0 0.0
    %2925 = vmatprep.subr.mxu0 0.0
    %2926 = vmatpush1.msra.mxu0 0.0
    %2927 = vmatprep.subr.mxu0 0.0
    %2928 = vmatpush1.msra.mxu0 0.0
    %2929 = vmatprep.subr.mxu0 0.0
    %2930 = vmatpush1.msra.mxu0 0.0
    %2931 = vmatprep.mubr.f32.mxu0 0.0
    %2932 = vmatmul.mubr.f32.gmra.mrb[0].mxu0 %v2865
    %v2933 = vpop.f32.mrb[0].mxu0
    %v2934 = vadd.f32 %v2854, %v2933
    %v2935 = vpop.f32.mrb[0].mxu0
    %v2936 = vadd.f32 %v2856, %v2935
    %2937 = vdwg.mxu0
    %v2938 = vadd.f32 %v2934, %v355
    %v2939 = vadd.f32 %v2936, %v359
    %v2940 = vxor.u32 %v2938, 2147483648
    %v2941 = vxor.u32 %v2939, 2147483648
    %v2942 = vmul.f32 %v2940, 1.442695
    %v2943 = vpow.pop %v2942
    %v2944 = vmul.f32 %v2941, 1.442695
    %v2945 = vpow.pop %v2944
    %v2946 = vadd.f32 %v2943, 1.0
    %v2947 = vadd.f32 %v2945, 1.0
    %v2948 = vrcp.pop %v2946
    %v2949 = vmul.f32 1.0, %v2948
    %v2950 = vrcp.pop %v2947
    %v2951 = vmul.f32 1.0, %v2950
    %v2952 = vtanh.pop %v2939
    %v2953 = vmul.f32 %v2949, %v2365
    %2955 = vrot.lane.b32.xlu0 %v2952, 112
    %v2956 = vpop.permute.xlu0 %2955
    %v2958 = vmul.f32 %v2949, %v2956
    %2960 = vrot.lane.b32.xlu0 %v2958, 48
    %v2961 = vpop.permute.xlu0 %2960
    %v2963 = vadd.f32 %v2953, %v2961
    %v2964 = vtanh.pop %v2963
    %2966 = vrot.lane.b32.xlu0 %v2964, 48
    %v2967 = vpop.permute.xlu0 %2966
    %v2969 = vmul.f32 %v2949, %v2967
    %v2970 = vmul.f32 %v2951, %v2967
    %2971 = vmatprep.subr.mxu0 %v33
    %2972 = vmatpush1.msra.mxu0 %v32
    %2973 = vmatprep.subr.mxu0 %v35
    %2974 = vmatpush1.msra.mxu0 %v34
    %2975 = vmatprep.subr.mxu0 %v37
    %2976 = vmatpush1.msra.mxu0 %v36
    %2977 = vmatprep.subr.mxu0 %v39
    %2978 = vmatpush1.msra.mxu0 %v38
    %2979 = vmatprep.subr.mxu0 %v41
    %2980 = vmatpush1.msra.mxu0 %v40
    %2981 = vmatprep.subr.mxu0 %v43
    %2982 = vmatpush1.msra.mxu0 %v42
    %2983 = vmatprep.subr.mxu0 0.0
    %2984 = vmatpush1.msra.mxu0 0.0
    %2985 = vmatprep.subr.mxu0 0.0
    %2986 = vmatpush1.msra.mxu0 0.0
    %2987 = vmatprep.subr.mxu0 0.0
    %2988 = vmatpush1.msra.mxu0 0.0
    %2989 = vmatprep.subr.mxu0 0.0
    %2990 = vmatpush1.msra.mxu0 0.0
    %2991 = vmatprep.subr.mxu0 0.0
    %2992 = vmatpush1.msra.mxu0 0.0
    %2993 = vmatprep.subr.mxu0 0.0
    %2994 = vmatpush1.msra.mxu0 0.0
    %2995 = vmatprep.subr.mxu0 0.0
    %2996 = vmatpush1.msra.mxu0 0.0
    %2997 = vmatprep.subr.mxu0 0.0
    %2998 = vmatpush1.msra.mxu0 0.0
    %2999 = vmatprep.subr.mxu0 0.0
    %3000 = vmatpush1.msra.mxu0 0.0
    %3001 = vmatprep.subr.mxu0 0.0
    %3002 = vmatpush1.msra.mxu0 0.0
    %3003 = vmatprep.subr.mxu0 0.0
    %3004 = vmatpush1.msra.mxu0 0.0
    %3005 = vmatprep.subr.mxu0 0.0
    %3006 = vmatpush1.msra.mxu0 0.0
    %3007 = vmatprep.subr.mxu0 0.0
    %3008 = vmatpush1.msra.mxu0 0.0
    %3009 = vmatprep.subr.mxu0 0.0
    %3010 = vmatpush1.msra.mxu0 0.0
    %3011 = vmatprep.subr.mxu0 0.0
    %3012 = vmatpush1.msra.mxu0 0.0
    %3013 = vmatprep.subr.mxu0 0.0
    %3014 = vmatpush1.msra.mxu0 0.0
    %3015 = vmatprep.subr.mxu0 0.0
    %3016 = vmatpush1.msra.mxu0 0.0
    %3017 = vmatprep.subr.mxu0 0.0
    %3018 = vmatpush1.msra.mxu0 0.0
    %3019 = vmatprep.subr.mxu0 0.0
    %3020 = vmatpush1.msra.mxu0 0.0
    %3021 = vmatprep.subr.mxu0 0.0
    %3022 = vmatpush1.msra.mxu0 0.0
    %3023 = vmatprep.subr.mxu0 0.0
    %3024 = vmatpush1.msra.mxu0 0.0
    %3025 = vmatprep.subr.mxu0 0.0
    %3026 = vmatpush1.msra.mxu0 0.0
    %3027 = vmatprep.subr.mxu0 0.0
    %3028 = vmatpush1.msra.mxu0 0.0
    %3029 = vmatprep.subr.mxu0 0.0
    %3030 = vmatpush1.msra.mxu0 0.0
    %3031 = vmatprep.subr.mxu0 0.0
    %3032 = vmatpush1.msra.mxu0 0.0
    %3033 = vmatprep.subr.mxu0 0.0
    %3034 = vmatpush1.msra.mxu0 0.0
    %3035 = vmatprep.mubr.f32.mxu0 0.0
    %3036 = vmatmul.mubr.f32.gmra.mrb[0].mxu0 %v2484
    %v3037 = vpop.f32.mrb[0].mxu0
    %v3038 = vadd.f32 0.0, %v3037
    %v3039 = vpop.f32.mrb[0].mxu0
    %v3040 = vadd.f32 0.0, %v3039
    %3041 = vdwg.mxu0
    %v3042 = vadd.f32 %v2672, %v3038
    %v3043 = vadd.f32 %v2673, %v3040
    %v3044 = vxor.u32 %v3042, 2147483648
    %v3045 = vxor.u32 %v3043, 2147483648
    %v3046 = vmul.f32 %v3044, 1.442695
    %v3047 = vpow.pop %v3046
    %v3048 = vmul.f32 %v3045, 1.442695
    %v3049 = vpow.pop %v3048
    %v3050 = vadd.f32 %v3047, 1.0
    %v3051 = vadd.f32 %v3049, 1.0
    %v3052 = vrcp.pop %v3050
    %v3053 = vmul.f32 1.0, %v3052
    %v3054 = vrcp.pop %v3051
    %v3055 = vmul.f32 1.0, %v3054
    %v3056 = vtanh.pop %v3043
    %v3057 = vmul.f32 %v3053, %v2469
    %3059 = vrot.lane.b32.xlu0 %v3056, 112
    %v3060 = vpop.permute.xlu0 %3059
    %v3062 = vmul.f32 %v3053, %v3060
    %3064 = vrot.lane.b32.xlu0 %v3062, 48
    %v3065 = vpop.permute.xlu0 %3064
    %v3067 = vadd.f32 %v3057, %v3065
    %v3068 = vtanh.pop %v3067
    %3070 = vrot.lane.b32.xlu0 %v3068, 48
    %v3071 = vpop.permute.xlu0 %3070
    %v3073 = vmul.f32 %v3053, %v3071
    %v3074 = vmul.f32 %v3055, %v3071
    %3077 = vrot.lane.b32.xlu0 %v3073, 32
    %v3078 = vpop.permute.xlu0 %3077
    %3079 = vrot.lane.b32.xlu0 %v3074, 32
    %v3080 = vpop.permute.xlu0 %3079
    %v3081 = vsel %vm480, %v3078, %v3080
    %v3082 = vsel %vm366, %v3081, 0
    %3084 = vmatprep.subr.mxu0 %v57
    %3085 = vmatpush1.msra.mxu0 %v56
    %3086 = vmatprep.subr.mxu0 %v59
    %3087 = vmatpush1.msra.mxu0 %v58
    %3088 = vmatprep.subr.mxu0 %v61
    %3089 = vmatpush1.msra.mxu0 %v60
    %3090 = vmatprep.subr.mxu0 %v63
    %3091 = vmatpush1.msra.mxu0 %v62
    %3092 = vmatprep.subr.mxu0 %v65
    %3093 = vmatpush1.msra.mxu0 %v64
    %3094 = vmatprep.subr.mxu0 %v67
    %3095 = vmatpush1.msra.mxu0 %v66
    %3096 = vmatprep.subr.mxu0 0.0
    %3097 = vmatpush1.msra.mxu0 0.0
    %3098 = vmatprep.subr.mxu0 0.0
    %3099 = vmatpush1.msra.mxu0 0.0
    %3100 = vmatprep.subr.mxu0 0.0
    %3101 = vmatpush1.msra.mxu0 0.0
    %3102 = vmatprep.subr.mxu0 0.0
    %3103 = vmatpush1.msra.mxu0 0.0
    %3104 = vmatprep.subr.mxu0 0.0
    %3105 = vmatpush1.msra.mxu0 0.0
    %3106 = vmatprep.subr.mxu0 0.0
    %3107 = vmatpush1.msra.mxu0 0.0
    %3108 = vmatprep.subr.mxu0 0.0
    %3109 = vmatpush1.msra.mxu0 0.0
    %3110 = vmatprep.subr.mxu0 0.0
    %3111 = vmatpush1.msra.mxu0 0.0
    %3112 = vmatprep.subr.mxu0 0.0
    %3113 = vmatpush1.msra.mxu0 0.0
    %3114 = vmatprep.subr.mxu0 0.0
    %3115 = vmatpush1.msra.mxu0 0.0
    %3116 = vmatprep.subr.mxu0 0.0
    %3117 = vmatpush1.msra.mxu0 0.0
    %3118 = vmatprep.subr.mxu0 0.0
    %3119 = vmatpush1.msra.mxu0 0.0
    %3120 = vmatprep.subr.mxu0 0.0
    %3121 = vmatpush1.msra.mxu0 0.0
    %3122 = vmatprep.subr.mxu0 0.0
    %3123 = vmatpush1.msra.mxu0 0.0
    %3124 = vmatprep.subr.mxu0 0.0
    %3125 = vmatpush1.msra.mxu0 0.0
    %3126 = vmatprep.subr.mxu0 0.0
    %3127 = vmatpush1.msra.mxu0 0.0
    %3128 = vmatprep.subr.mxu0 0.0
    %3129 = vmatpush1.msra.mxu0 0.0
    %3130 = vmatprep.subr.mxu0 0.0
    %3131 = vmatpush1.msra.mxu0 0.0
    %3132 = vmatprep.subr.mxu0 0.0
    %3133 = vmatpush1.msra.mxu0 0.0
    %3134 = vmatprep.subr.mxu0 0.0
    %3135 = vmatpush1.msra.mxu0 0.0
    %3136 = vmatprep.subr.mxu0 0.0
    %3137 = vmatpush1.msra.mxu0 0.0
    %3138 = vmatprep.subr.mxu0 0.0
    %3139 = vmatpush1.msra.mxu0 0.0
    %3140 = vmatprep.subr.mxu0 0.0
    %3141 = vmatpush1.msra.mxu0 0.0
    %3142 = vmatprep.subr.mxu0 0.0
    %3143 = vmatpush1.msra.mxu0 0.0
    %3144 = vmatprep.subr.mxu0 0.0
    %3145 = vmatpush1.msra.mxu0 0.0
    %3146 = vmatprep.subr.mxu0 0.0
    %3147 = vmatpush1.msra.mxu0 0.0
    %3148 = vmatprep.mubr.f32.mxu0 0.0
    %3149 = vmatmul.mubr.f32.gmra.mrb[0].mxu0 %v3082
    %v3150 = vpop.f32.mrb[0].mxu0
    %v3151 = vadd.f32 0.0, %v3150
    %v3152 = vpop.f32.mrb[0].mxu0
    %v3153 = vadd.f32 0.0, %v3152
    %3154 = vdwg.mxu0
    %3157 = vrot.lane.b32.xlu0 %v2668, 32
    %v3158 = vpop.permute.xlu0 %3157
    %3159 = vrot.lane.b32.xlu0 %v2669, 32
    %v3160 = vpop.permute.xlu0 %3159
    %v3161 = vsel %vm480, %v3158, %v3160
    %v3162 = vsel %vm366, %v3161, 0
    %3164 = vmatprep.subr.mxu0 %v45
    %3165 = vmatpush1.msra.mxu0 %v44
    %3166 = vmatprep.subr.mxu0 %v47
    %3167 = vmatpush1.msra.mxu0 %v46
    %3168 = vmatprep.subr.mxu0 %v49
    %3169 = vmatpush1.msra.mxu0 %v48
    %3170 = vmatprep.subr.mxu0 %v51
    %3171 = vmatpush1.msra.mxu0 %v50
    %3172 = vmatprep.subr.mxu0 %v53
    %3173 = vmatpush1.msra.mxu0 %v52
    %3174 = vmatprep.subr.mxu0 %v55
    %3175 = vmatpush1.msra.mxu0 %v54
    %3176 = vmatprep.subr.mxu0 0.0
    %3177 = vmatpush1.msra.mxu0 0.0
    %3178 = vmatprep.subr.mxu0 0.0
    %3179 = vmatpush1.msra.mxu0 0.0
    %3180 = vmatprep.subr.mxu0 0.0
    %3181 = vmatpush1.msra.mxu0 0.0
    %3182 = vmatprep.subr.mxu0 0.0
    %3183 = vmatpush1.msra.mxu0 0.0
    %3184 = vmatprep.subr.mxu0 0.0
    %3185 = vmatpush1.msra.mxu0 0.0
    %3186 = vmatprep.subr.mxu0 0.0
    %3187 = vmatpush1.msra.mxu0 0.0
    %3188 = vmatprep.subr.mxu0 0.0
    %3189 = vmatpush1.msra.mxu0 0.0
    %3190 = vmatprep.subr.mxu0 0.0
    %3191 = vmatpush1.msra.mxu0 0.0
    %3192 = vmatprep.subr.mxu0 0.0
    %3193 = vmatpush1.msra.mxu0 0.0
    %3194 = vmatprep.subr.mxu0 0.0
    %3195 = vmatpush1.msra.mxu0 0.0
    %3196 = vmatprep.subr.mxu0 0.0
    %3197 = vmatpush1.msra.mxu0 0.0
    %3198 = vmatprep.subr.mxu0 0.0
    %3199 = vmatpush1.msra.mxu0 0.0
    %3200 = vmatprep.subr.mxu0 0.0
    %3201 = vmatpush1.msra.mxu0 0.0
    %3202 = vmatprep.subr.mxu0 0.0
    %3203 = vmatpush1.msra.mxu0 0.0
    %3204 = vmatprep.subr.mxu0 0.0
    %3205 = vmatpush1.msra.mxu0 0.0
    %3206 = vmatprep.subr.mxu0 0.0
    %3207 = vmatpush1.msra.mxu0 0.0
    %3208 = vmatprep.subr.mxu0 0.0
    %3209 = vmatpush1.msra.mxu0 0.0
    %3210 = vmatprep.subr.mxu0 0.0
    %3211 = vmatpush1.msra.mxu0 0.0
    %3212 = vmatprep.subr.mxu0 0.0
    %3213 = vmatpush1.msra.mxu0 0.0
    %3214 = vmatprep.subr.mxu0 0.0
    %3215 = vmatpush1.msra.mxu0 0.0
    %3216 = vmatprep.subr.mxu0 0.0
    %3217 = vmatpush1.msra.mxu0 0.0
    %3218 = vmatprep.subr.mxu0 0.0
    %3219 = vmatpush1.msra.mxu0 0.0
    %3220 = vmatprep.subr.mxu0 0.0
    %3221 = vmatpush1.msra.mxu0 0.0
    %3222 = vmatprep.subr.mxu0 0.0
    %3223 = vmatpush1.msra.mxu0 0.0
    %3224 = vmatprep.subr.mxu0 0.0
    %3225 = vmatpush1.msra.mxu0 0.0
    %3226 = vmatprep.subr.mxu0 0.0
    %3227 = vmatpush1.msra.mxu0 0.0
    %3228 = vmatprep.mubr.f32.mxu0 0.0
    %3229 = vmatmul.mubr.f32.gmra.mrb[0].mxu0 %v3162
    %v3230 = vpop.f32.mrb[0].mxu0
    %v3231 = vadd.f32 %v3151, %v3230
    %v3232 = vpop.f32.mrb[0].mxu0
    %v3233 = vadd.f32 %v3153, %v3232
    %3234 = vdwg.mxu0
    %v3235 = vadd.f32 %v3231, %v355
    %v3236 = vadd.f32 %v3233, %v359
    %v3237 = vxor.u32 %v3235, 2147483648
    %v3238 = vxor.u32 %v3236, 2147483648
    %v3239 = vmul.f32 %v3237, 1.442695
    %v3240 = vpow.pop %v3239
    %v3241 = vmul.f32 %v3238, 1.442695
    %v3242 = vpow.pop %v3241
    %v3243 = vadd.f32 %v3240, 1.0
    %v3244 = vadd.f32 %v3242, 1.0
    %v3245 = vrcp.pop %v3243
    %v3246 = vmul.f32 1.0, %v3245
    %v3247 = vrcp.pop %v3244
    %v3248 = vmul.f32 1.0, %v3247
    %v3249 = vtanh.pop %v3236
    %v3250 = vmul.f32 %v3246, %v2662
    %3252 = vrot.lane.b32.xlu0 %v3249, 112
    %v3253 = vpop.permute.xlu0 %3252
    %v3255 = vmul.f32 %v3246, %v3253
    %3257 = vrot.lane.b32.xlu0 %v3255, 48
    %v3258 = vpop.permute.xlu0 %3257
    %v3260 = vadd.f32 %v3250, %v3258
    %v3261 = vtanh.pop %v3260
    %3263 = vrot.lane.b32.xlu0 %v3261, 48
    %v3264 = vpop.permute.xlu0 %3263
    %v3266 = vmul.f32 %v3246, %v3264
    %v3267 = vmul.f32 %v3248, %v3264
    %v3268 = vld [vmem:[%s220] sm:$0xff]
    %v3269 = vld [vmem:[%s220 + $0x8] sm:$0xff]
    %v3270 = vld [vmem:[%s220 + $0x10] sm:$0xff]
    %v3271 = vld [vmem:[%s220 + $0x18] sm:$0xff]
    %3272 = vmatprep.subr.mxu0 %v33
    %3273 = vmatpush1.msra.mxu0 %v32
    %3274 = vmatprep.subr.mxu0 %v35
    %3275 = vmatpush1.msra.mxu0 %v34
    %3276 = vmatprep.subr.mxu0 %v37
    %3277 = vmatpush1.msra.mxu0 %v36
    %3278 = vmatprep.subr.mxu0 %v39
    %3279 = vmatpush1.msra.mxu0 %v38
    %3280 = vmatprep.subr.mxu0 %v41
    %3281 = vmatpush1.msra.mxu0 %v40
    %3282 = vmatprep.subr.mxu0 %v43
    %3283 = vmatpush1.msra.mxu0 %v42
    %3284 = vmatprep.subr.mxu0 0.0
    %3285 = vmatpush1.msra.mxu0 0.0
    %3286 = vmatprep.subr.mxu0 0.0
    %3287 = vmatpush1.msra.mxu0 0.0
    %3288 = vmatprep.subr.mxu0 0.0
    %3289 = vmatpush1.msra.mxu0 0.0
    %3290 = vmatprep.subr.mxu0 0.0
    %3291 = vmatpush1.msra.mxu0 0.0
    %3292 = vmatprep.subr.mxu0 0.0
    %3293 = vmatpush1.msra.mxu0 0.0
    %3294 = vmatprep.subr.mxu0 0.0
    %3295 = vmatpush1.msra.mxu0 0.0
    %3296 = vmatprep.subr.mxu0 0.0
    %3297 = vmatpush1.msra.mxu0 0.0
    %3298 = vmatprep.subr.mxu0 0.0
    %3299 = vmatpush1.msra.mxu0 0.0
    %3300 = vmatprep.subr.mxu0 0.0
    %3301 = vmatpush1.msra.mxu0 0.0
    %3302 = vmatprep.subr.mxu0 0.0
    %3303 = vmatpush1.msra.mxu0 0.0
    %3304 = vmatprep.subr.mxu0 0.0
    %3305 = vmatpush1.msra.mxu0 0.0
    %3306 = vmatprep.subr.mxu0 0.0
    %3307 = vmatpush1.msra.mxu0 0.0
    %3308 = vmatprep.subr.mxu0 0.0
    %3309 = vmatpush1.msra.mxu0 0.0
    %3310 = vmatprep.subr.mxu0 0.0
    %3311 = vmatpush1.msra.mxu0 0.0
    %3312 = vmatprep.subr.mxu0 0.0
    %3313 = vmatpush1.msra.mxu0 0.0
    %3314 = vmatprep.subr.mxu0 0.0
    %3315 = vmatpush1.msra.mxu0 0.0
    %3316 = vmatprep.subr.mxu0 0.0
    %3317 = vmatpush1.msra.mxu0 0.0
    %3318 = vmatprep.subr.mxu0 0.0
    %3319 = vmatpush1.msra.mxu0 0.0
    %3320 = vmatprep.subr.mxu0 0.0
    %3321 = vmatpush1.msra.mxu0 0.0
    %3322 = vmatprep.subr.mxu0 0.0
    %3323 = vmatpush1.msra.mxu0 0.0
    %3324 = vmatprep.subr.mxu0 0.0
    %3325 = vmatpush1.msra.mxu0 0.0
    %3326 = vmatprep.subr.mxu0 0.0
    %3327 = vmatpush1.msra.mxu0 0.0
    %3328 = vmatprep.subr.mxu0 0.0
    %3329 = vmatpush1.msra.mxu0 0.0
    %3330 = vmatprep.subr.mxu0 0.0
    %3331 = vmatpush1.msra.mxu0 0.0
    %3332 = vmatprep.subr.mxu0 0.0
    %3333 = vmatpush1.msra.mxu0 0.0
    %3334 = vmatprep.subr.mxu0 0.0
    %3335 = vmatpush1.msra.mxu0 0.0
    %3336 = vmatprep.mubr.f32.mxu0 0.0
    %3337 = vmatmul.mubr.f32.gmra.mrb[0].mxu0 %v2785
    %v3338 = vpop.f32.mrb[0].mxu0
    %v3339 = vadd.f32 0.0, %v3338
    %v3340 = vpop.f32.mrb[0].mxu0
    %v3341 = vadd.f32 0.0, %v3340
    %3342 = vdwg.mxu0
    %v3343 = vadd.f32 %v3268, %v3339
    %v3344 = vadd.f32 %v3269, %v3341
    %v3345 = vxor.u32 %v3343, 2147483648
    %v3346 = vxor.u32 %v3344, 2147483648
    %v3347 = vmul.f32 %v3345, 1.442695
    %v3348 = vpow.pop %v3347
    %v3349 = vmul.f32 %v3346, 1.442695
    %v3350 = vpow.pop %v3349
    %v3351 = vadd.f32 %v3348, 1.0
    %v3352 = vadd.f32 %v3350, 1.0
    %v3353 = vrcp.pop %v3351
    %v3354 = vmul.f32 1.0, %v3353
    %v3355 = vrcp.pop %v3352
    %v3356 = vmul.f32 1.0, %v3355
    %v3357 = vtanh.pop %v3344
    %v3358 = vmul.f32 %v3354, %v2770
    %3360 = vrot.lane.b32.xlu0 %v3357, 112
    %v3361 = vpop.permute.xlu0 %3360
    %v3363 = vmul.f32 %v3354, %v3361
    %3365 = vrot.lane.b32.xlu0 %v3363, 48
    %v3366 = vpop.permute.xlu0 %3365
    %v3368 = vadd.f32 %v3358, %v3366
    %v3369 = vtanh.pop %v3368
    %3371 = vrot.lane.b32.xlu0 %v3369, 48
    %v3372 = vpop.permute.xlu0 %3371
    %v3374 = vmul.f32 %v3354, %v3372
    %v3375 = vmul.f32 %v3356, %v3372
    %3378 = vrot.lane.b32.xlu0 %v3374, 32
    %v3379 = vpop.permute.xlu0 %3378
    %3380 = vrot.lane.b32.xlu0 %v3375, 32
    %v3381 = vpop.permute.xlu0 %3380
    %v3382 = vsel %vm480, %v3379, %v3381
    %v3383 = vsel %vm366, %v3382, 0
    %3385 = vmatprep.subr.mxu0 %v57
    %3386 = vmatpush1.msra.mxu0 %v56
    %3387 = vmatprep.subr.mxu0 %v59
    %3388 = vmatpush1.msra.mxu0 %v58
    %3389 = vmatprep.subr.mxu0 %v61
    %3390 = vmatpush1.msra.mxu0 %v60
    %3391 = vmatprep.subr.mxu0 %v63
    %3392 = vmatpush1.msra.mxu0 %v62
    %3393 = vmatprep.subr.mxu0 %v65
    %3394 = vmatpush1.msra.mxu0 %v64
    %3395 = vmatprep.subr.mxu0 %v67
    %3396 = vmatpush1.msra.mxu0 %v66
    %3397 = vmatprep.subr.mxu0 0.0
    %3398 = vmatpush1.msra.mxu0 0.0
    %3399 = vmatprep.subr.mxu0 0.0
    %3400 = vmatpush1.msra.mxu0 0.0
    %3401 = vmatprep.subr.mxu0 0.0
    %3402 = vmatpush1.msra.mxu0 0.0
    %3403 = vmatprep.subr.mxu0 0.0
    %3404 = vmatpush1.msra.mxu0 0.0
    %3405 = vmatprep.subr.mxu0 0.0
    %3406 = vmatpush1.msra.mxu0 0.0
    %3407 = vmatprep.subr.mxu0 0.0
    %3408 = vmatpush1.msra.mxu0 0.0
    %3409 = vmatprep.subr.mxu0 0.0
    %3410 = vmatpush1.msra.mxu0 0.0
    %3411 = vmatprep.subr.mxu0 0.0
    %3412 = vmatpush1.msra.mxu0 0.0
    %3413 = vmatprep.subr.mxu0 0.0
    %3414 = vmatpush1.msra.mxu0 0.0
    %3415 = vmatprep.subr.mxu0 0.0
    %3416 = vmatpush1.msra.mxu0 0.0
    %3417 = vmatprep.subr.mxu0 0.0
    %3418 = vmatpush1.msra.mxu0 0.0
    %3419 = vmatprep.subr.mxu0 0.0
    %3420 = vmatpush1.msra.mxu0 0.0
    %3421 = vmatprep.subr.mxu0 0.0
    %3422 = vmatpush1.msra.mxu0 0.0
    %3423 = vmatprep.subr.mxu0 0.0
    %3424 = vmatpush1.msra.mxu0 0.0
    %3425 = vmatprep.subr.mxu0 0.0
    %3426 = vmatpush1.msra.mxu0 0.0
    %3427 = vmatprep.subr.mxu0 0.0
    %3428 = vmatpush1.msra.mxu0 0.0
    %3429 = vmatprep.subr.mxu0 0.0
    %3430 = vmatpush1.msra.mxu0 0.0
    %3431 = vmatprep.subr.mxu0 0.0
    %3432 = vmatpush1.msra.mxu0 0.0
    %3433 = vmatprep.subr.mxu0 0.0
    %3434 = vmatpush1.msra.mxu0 0.0
    %3435 = vmatprep.subr.mxu0 0.0
    %3436 = vmatpush1.msra.mxu0 0.0
    %3437 = vmatprep.subr.mxu0 0.0
    %3438 = vmatpush1.msra.mxu0 0.0
    %3439 = vmatprep.subr.mxu0 0.0
    %3440 = vmatpush1.msra.mxu0 0.0
    %3441 = vmatprep.subr.mxu0 0.0
    %3442 = vmatpush1.msra.mxu0 0.0
    %3443 = vmatprep.subr.mxu0 0.0
    %3444 = vmatpush1.msra.mxu0 0.0
    %3445 = vmatprep.subr.mxu0 0.0
    %3446 = vmatpush1.msra.mxu0 0.0
    %3447 = vmatprep.subr.mxu0 0.0
    %3448 = vmatpush1.msra.mxu0 0.0
    %3449 = vmatprep.mubr.f32.mxu0 0.0
    %3450 = vmatmul.mubr.f32.gmra.mrb[0].mxu0 %v3383
    %v3451 = vpop.f32.mrb[0].mxu0
    %v3452 = vadd.f32 0.0, %v3451
    %v3453 = vpop.f32.mrb[0].mxu0
    %v3454 = vadd.f32 0.0, %v3453
    %3455 = vdwg.mxu0
    %3458 = vrot.lane.b32.xlu0 %v2969, 32
    %v3459 = vpop.permute.xlu0 %3458
    %3460 = vrot.lane.b32.xlu0 %v2970, 32
    %v3461 = vpop.permute.xlu0 %3460
    %v3462 = vsel %vm480, %v3459, %v3461
    %v3463 = vsel %vm366, %v3462, 0
    %3465 = vmatprep.subr.mxu0 %v45
    %3466 = vmatpush1.msra.mxu0 %v44
    %3467 = vmatprep.subr.mxu0 %v47
    %3468 = vmatpush1.msra.mxu0 %v46
    %3469 = vmatprep.subr.mxu0 %v49
    %3470 = vmatpush1.msra.mxu0 %v48
    %3471 = vmatprep.subr.mxu0 %v51
    %3472 = vmatpush1.msra.mxu0 %v50
    %3473 = vmatprep.subr.mxu0 %v53
    %3474 = vmatpush1.msra.mxu0 %v52
    %3475 = vmatprep.subr.mxu0 %v55
    %3476 = vmatpush1.msra.mxu0 %v54
    %3477 = vmatprep.subr.mxu0 0.0
    %3478 = vmatpush1.msra.mxu0 0.0
    %3479 = vmatprep.subr.mxu0 0.0
    %3480 = vmatpush1.msra.mxu0 0.0
    %3481 = vmatprep.subr.mxu0 0.0
    %3482 = vmatpush1.msra.mxu0 0.0
    %3483 = vmatprep.subr.mxu0 0.0
    %3484 = vmatpush1.msra.mxu0 0.0
    %3485 = vmatprep.subr.mxu0 0.0
    %3486 = vmatpush1.msra.mxu0 0.0
    %3487 = vmatprep.subr.mxu0 0.0
    %3488 = vmatpush1.msra.mxu0 0.0
    %3489 = vmatprep.subr.mxu0 0.0
    %3490 = vmatpush1.msra.mxu0 0.0
    %3491 = vmatprep.subr.mxu0 0.0
    %3492 = vmatpush1.msra.mxu0 0.0
    %3493 = vmatprep.subr.mxu0 0.0
    %3494 = vmatpush1.msra.mxu0 0.0
    %3495 = vmatprep.subr.mxu0 0.0
    %3496 = vmatpush1.msra.mxu0 0.0
    %3497 = vmatprep.subr.mxu0 0.0
    %3498 = vmatpush1.msra.mxu0 0.0
    %3499 = vmatprep.subr.mxu0 0.0
    %3500 = vmatpush1.msra.mxu0 0.0
    %3501 = vmatprep.subr.mxu0 0.0
    %3502 = vmatpush1.msra.mxu0 0.0
    %3503 = vmatprep.subr.mxu0 0.0
    %3504 = vmatpush1.msra.mxu0 0.0
    %3505 = vmatprep.subr.mxu0 0.0
    %3506 = vmatpush1.msra.mxu0 0.0
    %3507 = vmatprep.subr.mxu0 0.0
    %3508 = vmatpush1.msra.mxu0 0.0
    %3509 = vmatprep.subr.mxu0 0.0
    %3510 = vmatpush1.msra.mxu0 0.0
    %3511 = vmatprep.subr.mxu0 0.0
    %3512 = vmatpush1.msra.mxu0 0.0
    %3513 = vmatprep.subr.mxu0 0.0
    %3514 = vmatpush1.msra.mxu0 0.0
    %3515 = vmatprep.subr.mxu0 0.0
    %3516 = vmatpush1.msra.mxu0 0.0
    %3517 = vmatprep.subr.mxu0 0.0
    %3518 = vmatpush1.msra.mxu0 0.0
    %3519 = vmatprep.subr.mxu0 0.0
    %3520 = vmatpush1.msra.mxu0 0.0
    %3521 = vmatprep.subr.mxu0 0.0
    %3522 = vmatpush1.msra.mxu0 0.0
    %3523 = vmatprep.subr.mxu0 0.0
    %3524 = vmatpush1.msra.mxu0 0.0
    %3525 = vmatprep.subr.mxu0 0.0
    %3526 = vmatpush1.msra.mxu0 0.0
    %3527 = vmatprep.subr.mxu0 0.0
    %3528 = vmatpush1.msra.mxu0 0.0
    %3529 = vmatprep.mubr.f32.mxu0 0.0
    %3530 = vmatmul.mubr.f32.gmra.mrb[0].mxu0 %v3463
    %v3531 = vpop.f32.mrb[0].mxu0
    %v3532 = vadd.f32 %v3452, %v3531
    %v3533 = vpop.f32.mrb[0].mxu0
    %v3534 = vadd.f32 %v3454, %v3533
    %3535 = vdwg.mxu0
    %v3536 = vadd.f32 %v3532, %v355
    %v3537 = vadd.f32 %v3534, %v359
    %v3538 = vxor.u32 %v3536, 2147483648
    %v3539 = vxor.u32 %v3537, 2147483648
    %v3540 = vmul.f32 %v3538, 1.442695
    %v3541 = vpow.pop %v3540
    %v3542 = vmul.f32 %v3539, 1.442695
    %v3543 = vpow.pop %v3542
    %v3544 = vadd.f32 %v3541, 1.0
    %v3545 = vadd.f32 %v3543, 1.0
    %v3546 = vrcp.pop %v3544
    %v3547 = vmul.f32 1.0, %v3546
    %v3548 = vrcp.pop %v3545
    %v3549 = vmul.f32 1.0, %v3548
    %v3550 = vtanh.pop %v3537
    %v3551 = vmul.f32 %v3547, %v2963
    %3553 = vrot.lane.b32.xlu0 %v3550, 112
    %v3554 = vpop.permute.xlu0 %3553
    %v3556 = vmul.f32 %v3547, %v3554
    %3558 = vrot.lane.b32.xlu0 %v3556, 48
    %v3559 = vpop.permute.xlu0 %3558
    %v3561 = vadd.f32 %v3551, %v3559
    %v3562 = vtanh.pop %v3561
    %3564 = vrot.lane.b32.xlu0 %v3562, 48
    %v3565 = vpop.permute.xlu0 %3564
    %v3567 = vmul.f32 %v3547, %v3565
    %v3568 = vmul.f32 %v3549, %v3565
    %3569 = vmatprep.subr.mxu0 %v33
    %3570 = vmatpush1.msra.mxu0 %v32
    %3571 = vmatprep.subr.mxu0 %v35
    %3572 = vmatpush1.msra.mxu0 %v34
    %3573 = vmatprep.subr.mxu0 %v37
    %3574 = vmatpush1.msra.mxu0 %v36
    %3575 = vmatprep.subr.mxu0 %v39
    %3576 = vmatpush1.msra.mxu0 %v38
    %3577 = vmatprep.subr.mxu0 %v41
    %3578 = vmatpush1.msra.mxu0 %v40
    %3579 = vmatprep.subr.mxu0 %v43
    %3580 = vmatpush1.msra.mxu0 %v42
    %3581 = vmatprep.subr.mxu0 0.0
    %3582 = vmatpush1.msra.mxu0 0.0
    %3583 = vmatprep.subr.mxu0 0.0
    %3584 = vmatpush1.msra.mxu0 0.0
    %3585 = vmatprep.subr.mxu0 0.0
    %3586 = vmatpush1.msra.mxu0 0.0
    %3587 = vmatprep.subr.mxu0 0.0
    %3588 = vmatpush1.msra.mxu0 0.0
    %3589 = vmatprep.subr.mxu0 0.0
    %3590 = vmatpush1.msra.mxu0 0.0
    %3591 = vmatprep.subr.mxu0 0.0
    %3592 = vmatpush1.msra.mxu0 0.0
    %3593 = vmatprep.subr.mxu0 0.0
    %3594 = vmatpush1.msra.mxu0 0.0
    %3595 = vmatprep.subr.mxu0 0.0
    %3596 = vmatpush1.msra.mxu0 0.0
    %3597 = vmatprep.subr.mxu0 0.0
    %3598 = vmatpush1.msra.mxu0 0.0
    %3599 = vmatprep.subr.mxu0 0.0
    %3600 = vmatpush1.msra.mxu0 0.0
    %3601 = vmatprep.subr.mxu0 0.0
    %3602 = vmatpush1.msra.mxu0 0.0
    %3603 = vmatprep.subr.mxu0 0.0
    %3604 = vmatpush1.msra.mxu0 0.0
    %3605 = vmatprep.subr.mxu0 0.0
    %3606 = vmatpush1.msra.mxu0 0.0
    %3607 = vmatprep.subr.mxu0 0.0
    %3608 = vmatpush1.msra.mxu0 0.0
    %3609 = vmatprep.subr.mxu0 0.0
    %3610 = vmatpush1.msra.mxu0 0.0
    %3611 = vmatprep.subr.mxu0 0.0
    %3612 = vmatpush1.msra.mxu0 0.0
    %3613 = vmatprep.subr.mxu0 0.0
    %3614 = vmatpush1.msra.mxu0 0.0
    %3615 = vmatprep.subr.mxu0 0.0
    %3616 = vmatpush1.msra.mxu0 0.0
    %3617 = vmatprep.subr.mxu0 0.0
    %3618 = vmatpush1.msra.mxu0 0.0
    %3619 = vmatprep.subr.mxu0 0.0
    %3620 = vmatpush1.msra.mxu0 0.0
    %3621 = vmatprep.subr.mxu0 0.0
    %3622 = vmatpush1.msra.mxu0 0.0
    %3623 = vmatprep.subr.mxu0 0.0
    %3624 = vmatpush1.msra.mxu0 0.0
    %3625 = vmatprep.subr.mxu0 0.0
    %3626 = vmatpush1.msra.mxu0 0.0
    %3627 = vmatprep.subr.mxu0 0.0
    %3628 = vmatpush1.msra.mxu0 0.0
    %3629 = vmatprep.subr.mxu0 0.0
    %3630 = vmatpush1.msra.mxu0 0.0
    %3631 = vmatprep.subr.mxu0 0.0
    %3632 = vmatpush1.msra.mxu0 0.0
    %3633 = vmatprep.mubr.f32.mxu0 0.0
    %3634 = vmatmul.mubr.f32.gmra.mrb[0].mxu0 %v3082
    %v3635 = vpop.f32.mrb[0].mxu0
    %v3636 = vadd.f32 0.0, %v3635
    %v3637 = vpop.f32.mrb[0].mxu0
    %v3638 = vadd.f32 0.0, %v3637
    %3639 = vdwg.mxu0
    %v3640 = vadd.f32 %v3270, %v3636
    %v3641 = vadd.f32 %v3271, %v3638
    %v3642 = vxor.u32 %v3640, 2147483648
    %v3643 = vxor.u32 %v3641, 2147483648
    %v3644 = vmul.f32 %v3642, 1.442695
    %v3645 = vpow.pop %v3644
    %v3646 = vmul.f32 %v3643, 1.442695
    %v3647 = vpow.pop %v3646
    %v3648 = vadd.f32 %v3645, 1.0
    %v3649 = vadd.f32 %v3647, 1.0
    %v3650 = vrcp.pop %v3648
    %v3651 = vmul.f32 1.0, %v3650
    %v3652 = vrcp.pop %v3649
    %v3653 = vmul.f32 1.0, %v3652
    %v3654 = vtanh.pop %v3641
    %v3655 = vmul.f32 %v3651, %v3067
    %3657 = vrot.lane.b32.xlu0 %v3654, 112
    %v3658 = vpop.permute.xlu0 %3657
    %v3660 = vmul.f32 %v3651, %v3658
    %3662 = vrot.lane.b32.xlu0 %v3660, 48
    %v3663 = vpop.permute.xlu0 %3662
    %v3665 = vadd.f32 %v3655, %v3663
    %v3666 = vtanh.pop %v3665
    %3668 = vrot.lane.b32.xlu0 %v3666, 48
    %v3669 = vpop.permute.xlu0 %3668
    %v3671 = vmul.f32 %v3651, %v3669
    %v3672 = vmul.f32 %v3653, %v3669
    %3675 = vrot.lane.b32.xlu0 %v3671, 32
    %v3676 = vpop.permute.xlu0 %3675
    %3677 = vrot.lane.b32.xlu0 %v3672, 32
    %v3678 = vpop.permute.xlu0 %3677
    %v3679 = vsel %vm480, %v3676, %v3678
    %v3680 = vsel %vm366, %v3679, 0
    %3682 = vmatprep.subr.mxu0 %v57
    %3683 = vmatpush1.msra.mxu0 %v56
    %3684 = vmatprep.subr.mxu0 %v59
    %3685 = vmatpush1.msra.mxu0 %v58
    %3686 = vmatprep.subr.mxu0 %v61
    %3687 = vmatpush1.msra.mxu0 %v60
    %3688 = vmatprep.subr.mxu0 %v63
    %3689 = vmatpush1.msra.mxu0 %v62
    %3690 = vmatprep.subr.mxu0 %v65
    %3691 = vmatpush1.msra.mxu0 %v64
    %3692 = vmatprep.subr.mxu0 %v67
    %3693 = vmatpush1.msra.mxu0 %v66
    %3694 = vmatprep.subr.mxu0 0.0
    %3695 = vmatpush1.msra.mxu0 0.0
    %3696 = vmatprep.subr.mxu0 0.0
    %3697 = vmatpush1.msra.mxu0 0.0
    %3698 = vmatprep.subr.mxu0 0.0
    %3699 = vmatpush1.msra.mxu0 0.0
    %3700 = vmatprep.subr.mxu0 0.0
    %3701 = vmatpush1.msra.mxu0 0.0
    %3702 = vmatprep.subr.mxu0 0.0
    %3703 = vmatpush1.msra.mxu0 0.0
    %3704 = vmatprep.subr.mxu0 0.0
    %3705 = vmatpush1.msra.mxu0 0.0
    %3706 = vmatprep.subr.mxu0 0.0
    %3707 = vmatpush1.msra.mxu0 0.0
    %3708 = vmatprep.subr.mxu0 0.0
    %3709 = vmatpush1.msra.mxu0 0.0
    %3710 = vmatprep.subr.mxu0 0.0
    %3711 = vmatpush1.msra.mxu0 0.0
    %3712 = vmatprep.subr.mxu0 0.0
    %3713 = vmatpush1.msra.mxu0 0.0
    %3714 = vmatprep.subr.mxu0 0.0
    %3715 = vmatpush1.msra.mxu0 0.0
    %3716 = vmatprep.subr.mxu0 0.0
    %3717 = vmatpush1.msra.mxu0 0.0
    %3718 = vmatprep.subr.mxu0 0.0
    %3719 = vmatpush1.msra.mxu0 0.0
    %3720 = vmatprep.subr.mxu0 0.0
    %3721 = vmatpush1.msra.mxu0 0.0
    %3722 = vmatprep.subr.mxu0 0.0
    %3723 = vmatpush1.msra.mxu0 0.0
    %3724 = vmatprep.subr.mxu0 0.0
    %3725 = vmatpush1.msra.mxu0 0.0
    %3726 = vmatprep.subr.mxu0 0.0
    %3727 = vmatpush1.msra.mxu0 0.0
    %3728 = vmatprep.subr.mxu0 0.0
    %3729 = vmatpush1.msra.mxu0 0.0
    %3730 = vmatprep.subr.mxu0 0.0
    %3731 = vmatpush1.msra.mxu0 0.0
    %3732 = vmatprep.subr.mxu0 0.0
    %3733 = vmatpush1.msra.mxu0 0.0
    %3734 = vmatprep.subr.mxu0 0.0
    %3735 = vmatpush1.msra.mxu0 0.0
    %3736 = vmatprep.subr.mxu0 0.0
    %3737 = vmatpush1.msra.mxu0 0.0
    %3738 = vmatprep.subr.mxu0 0.0
    %3739 = vmatpush1.msra.mxu0 0.0
    %3740 = vmatprep.subr.mxu0 0.0
    %3741 = vmatpush1.msra.mxu0 0.0
    %3742 = vmatprep.subr.mxu0 0.0
    %3743 = vmatpush1.msra.mxu0 0.0
    %3744 = vmatprep.subr.mxu0 0.0
    %3745 = vmatpush1.msra.mxu0 0.0
    %3746 = vmatprep.mubr.f32.mxu0 0.0
    %3747 = vmatmul.mubr.f32.gmra.mrb[0].mxu0 %v3680
    %v3748 = vpop.f32.mrb[0].mxu0
    %v3749 = vadd.f32 0.0, %v3748
    %v3750 = vpop.f32.mrb[0].mxu0
    %v3751 = vadd.f32 0.0, %v3750
    %3752 = vdwg.mxu0
    %3755 = vrot.lane.b32.xlu0 %v3266, 32
    %v3756 = vpop.permute.xlu0 %3755
    %3757 = vrot.lane.b32.xlu0 %v3267, 32
    %v3758 = vpop.permute.xlu0 %3757
    %v3759 = vsel %vm480, %v3756, %v3758
    %v3760 = vsel %vm366, %v3759, 0
    %3762 = vmatprep.subr.mxu0 %v45
    %3763 = vmatpush1.msra.mxu0 %v44
    %3764 = vmatprep.subr.mxu0 %v47
    %3765 = vmatpush1.msra.mxu0 %v46
    %3766 = vmatprep.subr.mxu0 %v49
    %3767 = vmatpush1.msra.mxu0 %v48
    %3768 = vmatprep.subr.mxu0 %v51
    %3769 = vmatpush1.msra.mxu0 %v50
    %3770 = vmatprep.subr.mxu0 %v53
    %3771 = vmatpush1.msra.mxu0 %v52
    %3772 = vmatprep.subr.mxu0 %v55
    %3773 = vmatpush1.msra.mxu0 %v54
    %3774 = vmatprep.subr.mxu0 0.0
    %3775 = vmatpush1.msra.mxu0 0.0
    %3776 = vmatprep.subr.mxu0 0.0
    %3777 = vmatpush1.msra.mxu0 0.0
    %3778 = vmatprep.subr.mxu0 0.0
    %3779 = vmatpush1.msra.mxu0 0.0
    %3780 = vmatprep.subr.mxu0 0.0
    %3781 = vmatpush1.msra.mxu0 0.0
    %3782 = vmatprep.subr.mxu0 0.0
    %3783 = vmatpush1.msra.mxu0 0.0
    %3784 = vmatprep.subr.mxu0 0.0
    %3785 = vmatpush1.msra.mxu0 0.0
    %3786 = vmatprep.subr.mxu0 0.0
    %3787 = vmatpush1.msra.mxu0 0.0
    %3788 = vmatprep.subr.mxu0 0.0
    %3789 = vmatpush1.msra.mxu0 0.0
    %3790 = vmatprep.subr.mxu0 0.0
    %3791 = vmatpush1.msra.mxu0 0.0
    %3792 = vmatprep.subr.mxu0 0.0
    %3793 = vmatpush1.msra.mxu0 0.0
    %3794 = vmatprep.subr.mxu0 0.0
    %3795 = vmatpush1.msra.mxu0 0.0
    %3796 = vmatprep.subr.mxu0 0.0
    %3797 = vmatpush1.msra.mxu0 0.0
    %3798 = vmatprep.subr.mxu0 0.0
    %3799 = vmatpush1.msra.mxu0 0.0
    %3800 = vmatprep.subr.mxu0 0.0
    %3801 = vmatpush1.msra.mxu0 0.0
    %3802 = vmatprep.subr.mxu0 0.0
    %3803 = vmatpush1.msra.mxu0 0.0
    %3804 = vmatprep.subr.mxu0 0.0
    %3805 = vmatpush1.msra.mxu0 0.0
    %3806 = vmatprep.subr.mxu0 0.0
    %3807 = vmatpush1.msra.mxu0 0.0
    %3808 = vmatprep.subr.mxu0 0.0
    %3809 = vmatpush1.msra.mxu0 0.0
    %3810 = vmatprep.subr.mxu0 0.0
    %3811 = vmatpush1.msra.mxu0 0.0
    %3812 = vmatprep.subr.mxu0 0.0
    %3813 = vmatpush1.msra.mxu0 0.0
    %3814 = vmatprep.subr.mxu0 0.0
    %3815 = vmatpush1.msra.mxu0 0.0
    %3816 = vmatprep.subr.mxu0 0.0
    %3817 = vmatpush1.msra.mxu0 0.0
    %3818 = vmatprep.subr.mxu0 0.0
    %3819 = vmatpush1.msra.mxu0 0.0
    %3820 = vmatprep.subr.mxu0 0.0
    %3821 = vmatpush1.msra.mxu0 0.0
    %3822 = vmatprep.subr.mxu0 0.0
    %3823 = vmatpush1.msra.mxu0 0.0
    %3824 = vmatprep.subr.mxu0 0.0
    %3825 = vmatpush1.msra.mxu0 0.0
    %3826 = vmatprep.mubr.f32.mxu0 0.0
    %3827 = vmatmul.mubr.f32.gmra.mrb[0].mxu0 %v3760
    %v3828 = vpop.f32.mrb[0].mxu0
    %v3829 = vadd.f32 %v3749, %v3828
    %v3830 = vpop.f32.mrb[0].mxu0
    %v3831 = vadd.f32 %v3751, %v3830
    %3832 = vdwg.mxu0
    %v3833 = vadd.f32 %v3829, %v355
    %v3834 = vadd.f32 %v3831, %v359
    %v3835 = vxor.u32 %v3833, 2147483648
    %v3836 = vxor.u32 %v3834, 2147483648
    %v3837 = vmul.f32 %v3835, 1.442695
    %v3838 = vpow.pop %v3837
    %v3839 = vmul.f32 %v3836, 1.442695
    %v3840 = vpow.pop %v3839
    %v3841 = vadd.f32 %v3838, 1.0
    %v3842 = vadd.f32 %v3840, 1.0
    %v3843 = vrcp.pop %v3841
    %v3844 = vmul.f32 1.0, %v3843
    %v3845 = vrcp.pop %v3842
    %v3846 = vmul.f32 1.0, %v3845
    %v3847 = vtanh.pop %v3834
    %v3848 = vmul.f32 %v3844, %v3260
    %3850 = vrot.lane.b32.xlu0 %v3847, 112
    %v3851 = vpop.permute.xlu0 %3850
    %v3853 = vmul.f32 %v3844, %v3851
    %3855 = vrot.lane.b32.xlu0 %v3853, 48
    %v3856 = vpop.permute.xlu0 %3855
    %v3858 = vadd.f32 %v3848, %v3856
    %v3859 = vtanh.pop %v3858
    %3861 = vrot.lane.b32.xlu0 %v3859, 48
    %v3862 = vpop.permute.xlu0 %3861
    %v3864 = vmul.f32 %v3844, %v3862
    %v3865 = vmul.f32 %v3846, %v3862
    %v3866 = vld [vmem:[%s241] sm:$0xff]
    %v3867 = vld [vmem:[%s241 + $0x8] sm:$0xff]
    %v3868 = vld [vmem:[%s241 + $0x10] sm:$0xff]
    %v3869 = vld [vmem:[%s241 + $0x18] sm:$0xff]
    %3870 = vmatprep.subr.mxu0 %v33
    %3871 = vmatpush1.msra.mxu0 %v32
    %3872 = vmatprep.subr.mxu0 %v35
    %3873 = vmatpush1.msra.mxu0 %v34
    %3874 = vmatprep.subr.mxu0 %v37
    %3875 = vmatpush1.msra.mxu0 %v36
    %3876 = vmatprep.subr.mxu0 %v39
    %3877 = vmatpush1.msra.mxu0 %v38
    %3878 = vmatprep.subr.mxu0 %v41
    %3879 = vmatpush1.msra.mxu0 %v40
    %3880 = vmatprep.subr.mxu0 %v43
    %3881 = vmatpush1.msra.mxu0 %v42
    %3882 = vmatprep.subr.mxu0 0.0
    %3883 = vmatpush1.msra.mxu0 0.0
    %3884 = vmatprep.subr.mxu0 0.0
    %3885 = vmatpush1.msra.mxu0 0.0
    %3886 = vmatprep.subr.mxu0 0.0
    %3887 = vmatpush1.msra.mxu0 0.0
    %3888 = vmatprep.subr.mxu0 0.0
    %3889 = vmatpush1.msra.mxu0 0.0
    %3890 = vmatprep.subr.mxu0 0.0
    %3891 = vmatpush1.msra.mxu0 0.0
    %3892 = vmatprep.subr.mxu0 0.0
    %3893 = vmatpush1.msra.mxu0 0.0
    %3894 = vmatprep.subr.mxu0 0.0
    %3895 = vmatpush1.msra.mxu0 0.0
    %3896 = vmatprep.subr.mxu0 0.0
    %3897 = vmatpush1.msra.mxu0 0.0
    %3898 = vmatprep.subr.mxu0 0.0
    %3899 = vmatpush1.msra.mxu0 0.0
    %3900 = vmatprep.subr.mxu0 0.0
    %3901 = vmatpush1.msra.mxu0 0.0
    %3902 = vmatprep.subr.mxu0 0.0
    %3903 = vmatpush1.msra.mxu0 0.0
    %3904 = vmatprep.subr.mxu0 0.0
    %3905 = vmatpush1.msra.mxu0 0.0
    %3906 = vmatprep.subr.mxu0 0.0
    %3907 = vmatpush1.msra.mxu0 0.0
    %3908 = vmatprep.subr.mxu0 0.0
    %3909 = vmatpush1.msra.mxu0 0.0
    %3910 = vmatprep.subr.mxu0 0.0
    %3911 = vmatpush1.msra.mxu0 0.0
    %3912 = vmatprep.subr.mxu0 0.0
    %3913 = vmatpush1.msra.mxu0 0.0
    %3914 = vmatprep.subr.mxu0 0.0
    %3915 = vmatpush1.msra.mxu0 0.0
    %3916 = vmatprep.subr.mxu0 0.0
    %3917 = vmatpush1.msra.mxu0 0.0
    %3918 = vmatprep.subr.mxu0 0.0
    %3919 = vmatpush1.msra.mxu0 0.0
    %3920 = vmatprep.subr.mxu0 0.0
    %3921 = vmatpush1.msra.mxu0 0.0
    %3922 = vmatprep.subr.mxu0 0.0
    %3923 = vmatpush1.msra.mxu0 0.0
    %3924 = vmatprep.subr.mxu0 0.0
    %3925 = vmatpush1.msra.mxu0 0.0
    %3926 = vmatprep.subr.mxu0 0.0
    %3927 = vmatpush1.msra.mxu0 0.0
    %3928 = vmatprep.subr.mxu0 0.0
    %3929 = vmatpush1.msra.mxu0 0.0
    %3930 = vmatprep.subr.mxu0 0.0
    %3931 = vmatpush1.msra.mxu0 0.0
    %3932 = vmatprep.subr.mxu0 0.0
    %3933 = vmatpush1.msra.mxu0 0.0
    %3934 = vmatprep.mubr.f32.mxu0 0.0
    %3935 = vmatmul.mubr.f32.gmra.mrb[0].mxu0 %v3383
    %v3936 = vpop.f32.mrb[0].mxu0
    %v3937 = vadd.f32 0.0, %v3936
    %v3938 = vpop.f32.mrb[0].mxu0
    %v3939 = vadd.f32 0.0, %v3938
    %3940 = vdwg.mxu0
    %v3941 = vadd.f32 %v3866, %v3937
    %v3942 = vadd.f32 %v3867, %v3939
    %v3943 = vxor.u32 %v3941, 2147483648
    %v3944 = vxor.u32 %v3942, 2147483648
    %v3945 = vmul.f32 %v3943, 1.442695
    %v3946 = vpow.pop %v3945
    %v3947 = vmul.f32 %v3944, 1.442695
    %v3948 = vpow.pop %v3947
    %v3949 = vadd.f32 %v3946, 1.0
    %v3950 = vadd.f32 %v3948, 1.0
    %v3951 = vrcp.pop %v3949
    %v3952 = vmul.f32 1.0, %v3951
    %v3953 = vrcp.pop %v3950
    %v3954 = vmul.f32 1.0, %v3953
    %v3955 = vtanh.pop %v3942
    %v3956 = vmul.f32 %v3952, %v3368
    %3958 = vrot.lane.b32.xlu0 %v3955, 112
    %v3959 = vpop.permute.xlu0 %3958
    %v3961 = vmul.f32 %v3952, %v3959
    %3963 = vrot.lane.b32.xlu0 %v3961, 48
    %v3964 = vpop.permute.xlu0 %3963
    %v3966 = vadd.f32 %v3956, %v3964
    %v3967 = vtanh.pop %v3966
    %3969 = vrot.lane.b32.xlu0 %v3967, 48
    %v3970 = vpop.permute.xlu0 %3969
    %v3972 = vmul.f32 %v3952, %v3970
    %v3973 = vmul.f32 %v3954, %v3970
    %3976 = vrot.lane.b32.xlu0 %v3972, 32
    %v3977 = vpop.permute.xlu0 %3976
    %3978 = vrot.lane.b32.xlu0 %v3973, 32
    %v3979 = vpop.permute.xlu0 %3978
    %v3980 = vsel %vm480, %v3977, %v3979
    %v3981 = vsel %vm366, %v3980, 0
    %3983 = vmatprep.subr.mxu0 %v57
    %3984 = vmatpush1.msra.mxu0 %v56
    %3985 = vmatprep.subr.mxu0 %v59
    %3986 = vmatpush1.msra.mxu0 %v58
    %3987 = vmatprep.subr.mxu0 %v61
    %3988 = vmatpush1.msra.mxu0 %v60
    %3989 = vmatprep.subr.mxu0 %v63
    %3990 = vmatpush1.msra.mxu0 %v62
    %3991 = vmatprep.subr.mxu0 %v65
    %3992 = vmatpush1.msra.mxu0 %v64
    %3993 = vmatprep.subr.mxu0 %v67
    %3994 = vmatpush1.msra.mxu0 %v66
    %3995 = vmatprep.subr.mxu0 0.0
    %3996 = vmatpush1.msra.mxu0 0.0
    %3997 = vmatprep.subr.mxu0 0.0
    %3998 = vmatpush1.msra.mxu0 0.0
    %3999 = vmatprep.subr.mxu0 0.0
    %4000 = vmatpush1.msra.mxu0 0.0
    %4001 = vmatprep.subr.mxu0 0.0
    %4002 = vmatpush1.msra.mxu0 0.0
    %4003 = vmatprep.subr.mxu0 0.0
    %4004 = vmatpush1.msra.mxu0 0.0
    %4005 = vmatprep.subr.mxu0 0.0
    %4006 = vmatpush1.msra.mxu0 0.0
    %4007 = vmatprep.subr.mxu0 0.0
    %4008 = vmatpush1.msra.mxu0 0.0
    %4009 = vmatprep.subr.mxu0 0.0
    %4010 = vmatpush1.msra.mxu0 0.0
    %4011 = vmatprep.subr.mxu0 0.0
    %4012 = vmatpush1.msra.mxu0 0.0
    %4013 = vmatprep.subr.mxu0 0.0
    %4014 = vmatpush1.msra.mxu0 0.0
    %4015 = vmatprep.subr.mxu0 0.0
    %4016 = vmatpush1.msra.mxu0 0.0
    %4017 = vmatprep.subr.mxu0 0.0
    %4018 = vmatpush1.msra.mxu0 0.0
    %4019 = vmatprep.subr.mxu0 0.0
    %4020 = vmatpush1.msra.mxu0 0.0
    %4021 = vmatprep.subr.mxu0 0.0
    %4022 = vmatpush1.msra.mxu0 0.0
    %4023 = vmatprep.subr.mxu0 0.0
    %4024 = vmatpush1.msra.mxu0 0.0
    %4025 = vmatprep.subr.mxu0 0.0
    %4026 = vmatpush1.msra.mxu0 0.0
    %4027 = vmatprep.subr.mxu0 0.0
    %4028 = vmatpush1.msra.mxu0 0.0
    %4029 = vmatprep.subr.mxu0 0.0
    %4030 = vmatpush1.msra.mxu0 0.0
    %4031 = vmatprep.subr.mxu0 0.0
    %4032 = vmatpush1.msra.mxu0 0.0
    %4033 = vmatprep.subr.mxu0 0.0
    %4034 = vmatpush1.msra.mxu0 0.0
    %4035 = vmatprep.subr.mxu0 0.0
    %4036 = vmatpush1.msra.mxu0 0.0
    %4037 = vmatprep.subr.mxu0 0.0
    %4038 = vmatpush1.msra.mxu0 0.0
    %4039 = vmatprep.subr.mxu0 0.0
    %4040 = vmatpush1.msra.mxu0 0.0
    %4041 = vmatprep.subr.mxu0 0.0
    %4042 = vmatpush1.msra.mxu0 0.0
    %4043 = vmatprep.subr.mxu0 0.0
    %4044 = vmatpush1.msra.mxu0 0.0
    %4045 = vmatprep.subr.mxu0 0.0
    %4046 = vmatpush1.msra.mxu0 0.0
    %4047 = vmatprep.mubr.f32.mxu0 0.0
    %4048 = vmatmul.mubr.f32.gmra.mrb[0].mxu0 %v3981
    %v4049 = vpop.f32.mrb[0].mxu0
    %v4050 = vadd.f32 0.0, %v4049
    %v4051 = vpop.f32.mrb[0].mxu0
    %v4052 = vadd.f32 0.0, %v4051
    %4053 = vdwg.mxu0
    %4056 = vrot.lane.b32.xlu0 %v3567, 32
    %v4057 = vpop.permute.xlu0 %4056
    %4058 = vrot.lane.b32.xlu0 %v3568, 32
    %v4059 = vpop.permute.xlu0 %4058
    %v4060 = vsel %vm480, %v4057, %v4059
    %v4061 = vsel %vm366, %v4060, 0
    %4063 = vmatprep.subr.mxu0 %v45
    %4064 = vmatpush1.msra.mxu0 %v44
    %4065 = vmatprep.subr.mxu0 %v47
    %4066 = vmatpush1.msra.mxu0 %v46
    %4067 = vmatprep.subr.mxu0 %v49
    %4068 = vmatpush1.msra.mxu0 %v48
    %4069 = vmatprep.subr.mxu0 %v51
    %4070 = vmatpush1.msra.mxu0 %v50
    %4071 = vmatprep.subr.mxu0 %v53
    %4072 = vmatpush1.msra.mxu0 %v52
    %4073 = vmatprep.subr.mxu0 %v55
    %4074 = vmatpush1.msra.mxu0 %v54
    %4075 = vmatprep.subr.mxu0 0.0
    %4076 = vmatpush1.msra.mxu0 0.0
    %4077 = vmatprep.subr.mxu0 0.0
    %4078 = vmatpush1.msra.mxu0 0.0
    %4079 = vmatprep.subr.mxu0 0.0
    %4080 = vmatpush1.msra.mxu0 0.0
    %4081 = vmatprep.subr.mxu0 0.0
    %4082 = vmatpush1.msra.mxu0 0.0
    %4083 = vmatprep.subr.mxu0 0.0
    %4084 = vmatpush1.msra.mxu0 0.0
    %4085 = vmatprep.subr.mxu0 0.0
    %4086 = vmatpush1.msra.mxu0 0.0
    %4087 = vmatprep.subr.mxu0 0.0
    %4088 = vmatpush1.msra.mxu0 0.0
    %4089 = vmatprep.subr.mxu0 0.0
    %4090 = vmatpush1.msra.mxu0 0.0
    %4091 = vmatprep.subr.mxu0 0.0
    %4092 = vmatpush1.msra.mxu0 0.0
    %4093 = vmatprep.subr.mxu0 0.0
    %4094 = vmatpush1.msra.mxu0 0.0
    %4095 = vmatprep.subr.mxu0 0.0
    %4096 = vmatpush1.msra.mxu0 0.0
    %4097 = vmatprep.subr.mxu0 0.0
    %4098 = vmatpush1.msra.mxu0 0.0
    %4099 = vmatprep.subr.mxu0 0.0
    %4100 = vmatpush1.msra.mxu0 0.0
    %4101 = vmatprep.subr.mxu0 0.0
    %4102 = vmatpush1.msra.mxu0 0.0
    %4103 = vmatprep.subr.mxu0 0.0
    %4104 = vmatpush1.msra.mxu0 0.0
    %4105 = vmatprep.subr.mxu0 0.0
    %4106 = vmatpush1.msra.mxu0 0.0
    %4107 = vmatprep.subr.mxu0 0.0
    %4108 = vmatpush1.msra.mxu0 0.0
    %4109 = vmatprep.subr.mxu0 0.0
    %4110 = vmatpush1.msra.mxu0 0.0
    %4111 = vmatprep.subr.mxu0 0.0
    %4112 = vmatpush1.msra.mxu0 0.0
    %4113 = vmatprep.subr.mxu0 0.0
    %4114 = vmatpush1.msra.mxu0 0.0
    %4115 = vmatprep.subr.mxu0 0.0
    %4116 = vmatpush1.msra.mxu0 0.0
    %4117 = vmatprep.subr.mxu0 0.0
    %4118 = vmatpush1.msra.mxu0 0.0
    %4119 = vmatprep.subr.mxu0 0.0
    %4120 = vmatpush1.msra.mxu0 0.0
    %4121 = vmatprep.subr.mxu0 0.0
    %4122 = vmatpush1.msra.mxu0 0.0
    %4123 = vmatprep.subr.mxu0 0.0
    %4124 = vmatpush1.msra.mxu0 0.0
    %4125 = vmatprep.subr.mxu0 0.0
    %4126 = vmatpush1.msra.mxu0 0.0
    %4127 = vmatprep.mubr.f32.mxu0 0.0
    %4128 = vmatmul.mubr.f32.gmra.mrb[0].mxu0 %v4061
    %v4129 = vpop.f32.mrb[0].mxu0
    %v4130 = vadd.f32 %v4050, %v4129
    %v4131 = vpop.f32.mrb[0].mxu0
    %v4132 = vadd.f32 %v4052, %v4131
    %4133 = vdwg.mxu0
    %v4134 = vadd.f32 %v4130, %v355
    %v4135 = vadd.f32 %v4132, %v359
    %v4136 = vxor.u32 %v4134, 2147483648
    %v4137 = vxor.u32 %v4135, 2147483648
    %v4138 = vmul.f32 %v4136, 1.442695
    %v4139 = vpow.pop %v4138
    %v4140 = vmul.f32 %v4137, 1.442695
    %v4141 = vpow.pop %v4140
    %v4142 = vadd.f32 %v4139, 1.0
    %v4143 = vadd.f32 %v4141, 1.0
    %v4144 = vrcp.pop %v4142
    %v4145 = vmul.f32 1.0, %v4144
    %v4146 = vrcp.pop %v4143
    %v4147 = vmul.f32 1.0, %v4146
    %v4148 = vtanh.pop %v4135
    %v4149 = vmul.f32 %v4145, %v3561
    %4151 = vrot.lane.b32.xlu0 %v4148, 112
    %v4152 = vpop.permute.xlu0 %4151
    %v4154 = vmul.f32 %v4145, %v4152
    %4156 = vrot.lane.b32.xlu0 %v4154, 48
    %v4157 = vpop.permute.xlu0 %4156
    %v4159 = vadd.f32 %v4149, %v4157
    %v4160 = vtanh.pop %v4159
    %4162 = vrot.lane.b32.xlu0 %v4160, 48
    %v4163 = vpop.permute.xlu0 %4162
    %v4165 = vmul.f32 %v4145, %v4163
    %v4166 = vmul.f32 %v4147, %v4163
    %4167 = vmatprep.subr.mxu0 %v33
    %4168 = vmatpush1.msra.mxu0 %v32
    %4169 = vmatprep.subr.mxu0 %v35
    %4170 = vmatpush1.msra.mxu0 %v34
    %4171 = vmatprep.subr.mxu0 %v37
    %4172 = vmatpush1.msra.mxu0 %v36
    %4173 = vmatprep.subr.mxu0 %v39
    %4174 = vmatpush1.msra.mxu0 %v38
    %4175 = vmatprep.subr.mxu0 %v41
    %4176 = vmatpush1.msra.mxu0 %v40
    %4177 = vmatprep.subr.mxu0 %v43
    %4178 = vmatpush1.msra.mxu0 %v42
    %4179 = vmatprep.subr.mxu0 0.0
    %4180 = vmatpush1.msra.mxu0 0.0
    %4181 = vmatprep.subr.mxu0 0.0
    %4182 = vmatpush1.msra.mxu0 0.0
    %4183 = vmatprep.subr.mxu0 0.0
    %4184 = vmatpush1.msra.mxu0 0.0
    %4185 = vmatprep.subr.mxu0 0.0
    %4186 = vmatpush1.msra.mxu0 0.0
    %4187 = vmatprep.subr.mxu0 0.0
    %4188 = vmatpush1.msra.mxu0 0.0
    %4189 = vmatprep.subr.mxu0 0.0
    %4190 = vmatpush1.msra.mxu0 0.0
    %4191 = vmatprep.subr.mxu0 0.0
    %4192 = vmatpush1.msra.mxu0 0.0
    %4193 = vmatprep.subr.mxu0 0.0
    %4194 = vmatpush1.msra.mxu0 0.0
    %4195 = vmatprep.subr.mxu0 0.0
    %4196 = vmatpush1.msra.mxu0 0.0
    %4197 = vmatprep.subr.mxu0 0.0
    %4198 = vmatpush1.msra.mxu0 0.0
    %4199 = vmatprep.subr.mxu0 0.0
    %4200 = vmatpush1.msra.mxu0 0.0
    %4201 = vmatprep.subr.mxu0 0.0
    %4202 = vmatpush1.msra.mxu0 0.0
    %4203 = vmatprep.subr.mxu0 0.0
    %4204 = vmatpush1.msra.mxu0 0.0
    %4205 = vmatprep.subr.mxu0 0.0
    %4206 = vmatpush1.msra.mxu0 0.0
    %4207 = vmatprep.subr.mxu0 0.0
    %4208 = vmatpush1.msra.mxu0 0.0
    %4209 = vmatprep.subr.mxu0 0.0
    %4210 = vmatpush1.msra.mxu0 0.0
    %4211 = vmatprep.subr.mxu0 0.0
    %4212 = vmatpush1.msra.mxu0 0.0
    %4213 = vmatprep.subr.mxu0 0.0
    %4214 = vmatpush1.msra.mxu0 0.0
    %4215 = vmatprep.subr.mxu0 0.0
    %4216 = vmatpush1.msra.mxu0 0.0
    %4217 = vmatprep.subr.mxu0 0.0
    %4218 = vmatpush1.msra.mxu0 0.0
    %4219 = vmatprep.subr.mxu0 0.0
    %4220 = vmatpush1.msra.mxu0 0.0
    %4221 = vmatprep.subr.mxu0 0.0
    %4222 = vmatpush1.msra.mxu0 0.0
    %4223 = vmatprep.subr.mxu0 0.0
    %4224 = vmatpush1.msra.mxu0 0.0
    %4225 = vmatprep.subr.mxu0 0.0
    %4226 = vmatpush1.msra.mxu0 0.0
    %4227 = vmatprep.subr.mxu0 0.0
    %4228 = vmatpush1.msra.mxu0 0.0
    %4229 = vmatprep.subr.mxu0 0.0
    %4230 = vmatpush1.msra.mxu0 0.0
    %4231 = vmatprep.mubr.f32.mxu0 0.0
    %4232 = vmatmul.mubr.f32.gmra.mrb[0].mxu0 %v3680
    %v4233 = vpop.f32.mrb[0].mxu0
    %v4234 = vadd.f32 0.0, %v4233
    %v4235 = vpop.f32.mrb[0].mxu0
    %v4236 = vadd.f32 0.0, %v4235
    %4237 = vdwg.mxu0
    %v4238 = vadd.f32 %v3868, %v4234
    %v4239 = vadd.f32 %v3869, %v4236
    %v4240 = vxor.u32 %v4238, 2147483648
    %v4241 = vxor.u32 %v4239, 2147483648
    %v4242 = vmul.f32 %v4240, 1.442695
    %v4243 = vpow.pop %v4242
    %v4244 = vmul.f32 %v4241, 1.442695
    %v4245 = vpow.pop %v4244
    %v4246 = vadd.f32 %v4243, 1.0
    %v4247 = vadd.f32 %v4245, 1.0
    %v4248 = vrcp.pop %v4246
    %v4249 = vmul.f32 1.0, %v4248
    %v4250 = vrcp.pop %v4247
    %v4251 = vmul.f32 1.0, %v4250
    %v4252 = vtanh.pop %v4239
    %v4253 = vmul.f32 %v4249, %v3665
    %4255 = vrot.lane.b32.xlu0 %v4252, 112
    %v4256 = vpop.permute.xlu0 %4255
    %v4258 = vmul.f32 %v4249, %v4256
    %4260 = vrot.lane.b32.xlu0 %v4258, 48
    %v4261 = vpop.permute.xlu0 %4260
    %v4263 = vadd.f32 %v4253, %v4261
    %v4264 = vtanh.pop %v4263
    %4266 = vrot.lane.b32.xlu0 %v4264, 48
    %v4267 = vpop.permute.xlu0 %4266
    %v4269 = vmul.f32 %v4249, %v4267
    %v4270 = vmul.f32 %v4251, %v4267
    %4273 = vrot.lane.b32.xlu0 %v4269, 32
    %v4274 = vpop.permute.xlu0 %4273
    %4275 = vrot.lane.b32.xlu0 %v4270, 32
    %v4276 = vpop.permute.xlu0 %4275
    %v4277 = vsel %vm480, %v4274, %v4276
    %v4278 = vsel %vm366, %v4277, 0
    %4280 = vmatprep.subr.mxu0 %v57
    %4281 = vmatpush1.msra.mxu0 %v56
    %4282 = vmatprep.subr.mxu0 %v59
    %4283 = vmatpush1.msra.mxu0 %v58
    %4284 = vmatprep.subr.mxu0 %v61
    %4285 = vmatpush1.msra.mxu0 %v60
    %4286 = vmatprep.subr.mxu0 %v63
    %4287 = vmatpush1.msra.mxu0 %v62
    %4288 = vmatprep.subr.mxu0 %v65
    %4289 = vmatpush1.msra.mxu0 %v64
    %4290 = vmatprep.subr.mxu0 %v67
    %4291 = vmatpush1.msra.mxu0 %v66
    %4292 = vmatprep.subr.mxu0 0.0
    %4293 = vmatpush1.msra.mxu0 0.0
    %4294 = vmatprep.subr.mxu0 0.0
    %4295 = vmatpush1.msra.mxu0 0.0
    %4296 = vmatprep.subr.mxu0 0.0
    %4297 = vmatpush1.msra.mxu0 0.0
    %4298 = vmatprep.subr.mxu0 0.0
    %4299 = vmatpush1.msra.mxu0 0.0
    %4300 = vmatprep.subr.mxu0 0.0
    %4301 = vmatpush1.msra.mxu0 0.0
    %4302 = vmatprep.subr.mxu0 0.0
    %4303 = vmatpush1.msra.mxu0 0.0
    %4304 = vmatprep.subr.mxu0 0.0
    %4305 = vmatpush1.msra.mxu0 0.0
    %4306 = vmatprep.subr.mxu0 0.0
    %4307 = vmatpush1.msra.mxu0 0.0
    %4308 = vmatprep.subr.mxu0 0.0
    %4309 = vmatpush1.msra.mxu0 0.0
    %4310 = vmatprep.subr.mxu0 0.0
    %4311 = vmatpush1.msra.mxu0 0.0
    %4312 = vmatprep.subr.mxu0 0.0
    %4313 = vmatpush1.msra.mxu0 0.0
    %4314 = vmatprep.subr.mxu0 0.0
    %4315 = vmatpush1.msra.mxu0 0.0
    %4316 = vmatprep.subr.mxu0 0.0
    %4317 = vmatpush1.msra.mxu0 0.0
    %4318 = vmatprep.subr.mxu0 0.0
    %4319 = vmatpush1.msra.mxu0 0.0
    %4320 = vmatprep.subr.mxu0 0.0
    %4321 = vmatpush1.msra.mxu0 0.0
    %4322 = vmatprep.subr.mxu0 0.0
    %4323 = vmatpush1.msra.mxu0 0.0
    %4324 = vmatprep.subr.mxu0 0.0
    %4325 = vmatpush1.msra.mxu0 0.0
    %4326 = vmatprep.subr.mxu0 0.0
    %4327 = vmatpush1.msra.mxu0 0.0
    %4328 = vmatprep.subr.mxu0 0.0
    %4329 = vmatpush1.msra.mxu0 0.0
    %4330 = vmatprep.subr.mxu0 0.0
    %4331 = vmatpush1.msra.mxu0 0.0
    %4332 = vmatprep.subr.mxu0 0.0
    %4333 = vmatpush1.msra.mxu0 0.0
    %4334 = vmatprep.subr.mxu0 0.0
    %4335 = vmatpush1.msra.mxu0 0.0
    %4336 = vmatprep.subr.mxu0 0.0
    %4337 = vmatpush1.msra.mxu0 0.0
    %4338 = vmatprep.subr.mxu0 0.0
    %4339 = vmatpush1.msra.mxu0 0.0
    %4340 = vmatprep.subr.mxu0 0.0
    %4341 = vmatpush1.msra.mxu0 0.0
    %4342 = vmatprep.subr.mxu0 0.0
    %4343 = vmatpush1.msra.mxu0 0.0
    %4344 = vmatprep.mubr.f32.mxu0 0.0
    %4345 = vmatmul.mubr.f32.gmra.mrb[0].mxu0 %v4278
    %v4346 = vpop.f32.mrb[0].mxu0
    %v4347 = vadd.f32 0.0, %v4346
    %v4348 = vpop.f32.mrb[0].mxu0
    %v4349 = vadd.f32 0.0, %v4348
    %4350 = vdwg.mxu0
    %4353 = vrot.lane.b32.xlu0 %v3864, 32
    %v4354 = vpop.permute.xlu0 %4353
    %4355 = vrot.lane.b32.xlu0 %v3865, 32
    %v4356 = vpop.permute.xlu0 %4355
    %v4357 = vsel %vm480, %v4354, %v4356
    %v4358 = vsel %vm366, %v4357, 0
    %4360 = vmatprep.subr.mxu0 %v45
    %4361 = vmatpush1.msra.mxu0 %v44
    %4362 = vmatprep.subr.mxu0 %v47
    %4363 = vmatpush1.msra.mxu0 %v46
    %4364 = vmatprep.subr.mxu0 %v49
    %4365 = vmatpush1.msra.mxu0 %v48
    %4366 = vmatprep.subr.mxu0 %v51
    %4367 = vmatpush1.msra.mxu0 %v50
    %4368 = vmatprep.subr.mxu0 %v53
    %4369 = vmatpush1.msra.mxu0 %v52
    %4370 = vmatprep.subr.mxu0 %v55
    %4371 = vmatpush1.msra.mxu0 %v54
    %4372 = vmatprep.subr.mxu0 0.0
    %4373 = vmatpush1.msra.mxu0 0.0
    %4374 = vmatprep.subr.mxu0 0.0
    %4375 = vmatpush1.msra.mxu0 0.0
    %4376 = vmatprep.subr.mxu0 0.0
    %4377 = vmatpush1.msra.mxu0 0.0
    %4378 = vmatprep.subr.mxu0 0.0
    %4379 = vmatpush1.msra.mxu0 0.0
    %4380 = vmatprep.subr.mxu0 0.0
    %4381 = vmatpush1.msra.mxu0 0.0
    %4382 = vmatprep.subr.mxu0 0.0
    %4383 = vmatpush1.msra.mxu0 0.0
    %4384 = vmatprep.subr.mxu0 0.0
    %4385 = vmatpush1.msra.mxu0 0.0
    %4386 = vmatprep.subr.mxu0 0.0
    %4387 = vmatpush1.msra.mxu0 0.0
    %4388 = vmatprep.subr.mxu0 0.0
    %4389 = vmatpush1.msra.mxu0 0.0
    %4390 = vmatprep.subr.mxu0 0.0
    %4391 = vmatpush1.msra.mxu0 0.0
    %4392 = vmatprep.subr.mxu0 0.0
    %4393 = vmatpush1.msra.mxu0 0.0
    %4394 = vmatprep.subr.mxu0 0.0
    %4395 = vmatpush1.msra.mxu0 0.0
    %4396 = vmatprep.subr.mxu0 0.0
    %4397 = vmatpush1.msra.mxu0 0.0
    %4398 = vmatprep.subr.mxu0 0.0
    %4399 = vmatpush1.msra.mxu0 0.0
    %4400 = vmatprep.subr.mxu0 0.0
    %4401 = vmatpush1.msra.mxu0 0.0
    %4402 = vmatprep.subr.mxu0 0.0
    %4403 = vmatpush1.msra.mxu0 0.0
    %4404 = vmatprep.subr.mxu0 0.0
    %4405 = vmatpush1.msra.mxu0 0.0
    %4406 = vmatprep.subr.mxu0 0.0
    %4407 = vmatpush1.msra.mxu0 0.0
    %4408 = vmatprep.subr.mxu0 0.0
    %4409 = vmatpush1.msra.mxu0 0.0
    %4410 = vmatprep.subr.mxu0 0.0
    %4411 = vmatpush1.msra.mxu0 0.0
    %4412 = vmatprep.subr.mxu0 0.0
    %4413 = vmatpush1.msra.mxu0 0.0
    %4414 = vmatprep.subr.mxu0 0.0
    %4415 = vmatpush1.msra.mxu0 0.0
    %4416 = vmatprep.subr.mxu0 0.0
    %4417 = vmatpush1.msra.mxu0 0.0
    %4418 = vmatprep.subr.mxu0 0.0
    %4419 = vmatpush1.msra.mxu0 0.0
    %4420 = vmatprep.subr.mxu0 0.0
    %4421 = vmatpush1.msra.mxu0 0.0
    %4422 = vmatprep.subr.mxu0 0.0
    %4423 = vmatpush1.msra.mxu0 0.0
    %4424 = vmatprep.mubr.f32.mxu0 0.0
    %4425 = vmatmul.mubr.f32.gmra.mrb[0].mxu0 %v4358
    %v4426 = vpop.f32.mrb[0].mxu0
    %v4427 = vadd.f32 %v4347, %v4426
    %v4428 = vpop.f32.mrb[0].mxu0
    %v4429 = vadd.f32 %v4349, %v4428
    %4430 = vdwg.mxu0
    %v4431 = vadd.f32 %v4427, %v355
    %v4432 = vadd.f32 %v4429, %v359
    %v4433 = vxor.u32 %v4431, 2147483648
    %v4434 = vxor.u32 %v4432, 2147483648
    %v4435 = vmul.f32 %v4433, 1.442695
    %v4436 = vpow.pop %v4435
    %v4437 = vmul.f32 %v4434, 1.442695
    %v4438 = vpow.pop %v4437
    %v4439 = vadd.f32 %v4436, 1.0
    %v4440 = vadd.f32 %v4438, 1.0
    %v4441 = vrcp.pop %v4439
    %v4442 = vmul.f32 1.0, %v4441
    %v4443 = vrcp.pop %v4440
    %v4444 = vmul.f32 1.0, %v4443
    %v4445 = vtanh.pop %v4432
    %v4446 = vmul.f32 %v4442, %v3858
    %4448 = vrot.lane.b32.xlu0 %v4445, 112
    %v4449 = vpop.permute.xlu0 %4448
    %v4451 = vmul.f32 %v4442, %v4449
    %4453 = vrot.lane.b32.xlu0 %v4451, 48
    %v4454 = vpop.permute.xlu0 %4453
    %v4456 = vadd.f32 %v4446, %v4454
    %v4457 = vtanh.pop %v4456
    %4459 = vrot.lane.b32.xlu0 %v4457, 48
    %v4460 = vpop.permute.xlu0 %4459
    %v4462 = vmul.f32 %v4442, %v4460
    %v4463 = vmul.f32 %v4444, %v4460
    %v4464 = vld [vmem:[%s262] sm:$0xff]
    %v4465 = vld [vmem:[%s262 + $0x8] sm:$0xff]
    %v4466 = vld [vmem:[%s262 + $0x10] sm:$0xff]
    %v4467 = vld [vmem:[%s262 + $0x18] sm:$0xff]
    %4468 = vmatprep.subr.mxu0 %v33
    %4469 = vmatpush1.msra.mxu0 %v32
    %4470 = vmatprep.subr.mxu0 %v35
    %4471 = vmatpush1.msra.mxu0 %v34
    %4472 = vmatprep.subr.mxu0 %v37
    %4473 = vmatpush1.msra.mxu0 %v36
    %4474 = vmatprep.subr.mxu0 %v39
    %4475 = vmatpush1.msra.mxu0 %v38
    %4476 = vmatprep.subr.mxu0 %v41
    %4477 = vmatpush1.msra.mxu0 %v40
    %4478 = vmatprep.subr.mxu0 %v43
    %4479 = vmatpush1.msra.mxu0 %v42
    %4480 = vmatprep.subr.mxu0 0.0
    %4481 = vmatpush1.msra.mxu0 0.0
    %4482 = vmatprep.subr.mxu0 0.0
    %4483 = vmatpush1.msra.mxu0 0.0
    %4484 = vmatprep.subr.mxu0 0.0
    %4485 = vmatpush1.msra.mxu0 0.0
    %4486 = vmatprep.subr.mxu0 0.0
    %4487 = vmatpush1.msra.mxu0 0.0
    %4488 = vmatprep.subr.mxu0 0.0
    %4489 = vmatpush1.msra.mxu0 0.0
    %4490 = vmatprep.subr.mxu0 0.0
    %4491 = vmatpush1.msra.mxu0 0.0
    %4492 = vmatprep.subr.mxu0 0.0
    %4493 = vmatpush1.msra.mxu0 0.0
    %4494 = vmatprep.subr.mxu0 0.0
    %4495 = vmatpush1.msra.mxu0 0.0
    %4496 = vmatprep.subr.mxu0 0.0
    %4497 = vmatpush1.msra.mxu0 0.0
    %4498 = vmatprep.subr.mxu0 0.0
    %4499 = vmatpush1.msra.mxu0 0.0
    %4500 = vmatprep.subr.mxu0 0.0
    %4501 = vmatpush1.msra.mxu0 0.0
    %4502 = vmatprep.subr.mxu0 0.0
    %4503 = vmatpush1.msra.mxu0 0.0
    %4504 = vmatprep.subr.mxu0 0.0
    %4505 = vmatpush1.msra.mxu0 0.0
    %4506 = vmatprep.subr.mxu0 0.0
    %4507 = vmatpush1.msra.mxu0 0.0
    %4508 = vmatprep.subr.mxu0 0.0
    %4509 = vmatpush1.msra.mxu0 0.0
    %4510 = vmatprep.subr.mxu0 0.0
    %4511 = vmatpush1.msra.mxu0 0.0
    %4512 = vmatprep.subr.mxu0 0.0
    %4513 = vmatpush1.msra.mxu0 0.0
    %4514 = vmatprep.subr.mxu0 0.0
    %4515 = vmatpush1.msra.mxu0 0.0
    %4516 = vmatprep.subr.mxu0 0.0
    %4517 = vmatpush1.msra.mxu0 0.0
    %4518 = vmatprep.subr.mxu0 0.0
    %4519 = vmatpush1.msra.mxu0 0.0
    %4520 = vmatprep.subr.mxu0 0.0
    %4521 = vmatpush1.msra.mxu0 0.0
    %4522 = vmatprep.subr.mxu0 0.0
    %4523 = vmatpush1.msra.mxu0 0.0
    %4524 = vmatprep.subr.mxu0 0.0
    %4525 = vmatpush1.msra.mxu0 0.0
    %4526 = vmatprep.subr.mxu0 0.0
    %4527 = vmatpush1.msra.mxu0 0.0
    %4528 = vmatprep.subr.mxu0 0.0
    %4529 = vmatpush1.msra.mxu0 0.0
    %4530 = vmatprep.subr.mxu0 0.0
    %4531 = vmatpush1.msra.mxu0 0.0
    %4532 = vmatprep.mubr.f32.mxu0 0.0
    %4533 = vmatmul.mubr.f32.gmra.mrb[0].mxu0 %v3981
    %v4534 = vpop.f32.mrb[0].mxu0
    %v4535 = vadd.f32 0.0, %v4534
    %v4536 = vpop.f32.mrb[0].mxu0
    %v4537 = vadd.f32 0.0, %v4536
    %4538 = vdwg.mxu0
    %v4539 = vadd.f32 %v4464, %v4535
    %v4540 = vadd.f32 %v4465, %v4537
    %v4541 = vxor.u32 %v4539, 2147483648
    %v4542 = vxor.u32 %v4540, 2147483648
    %v4543 = vmul.f32 %v4541, 1.442695
    %v4544 = vpow.pop %v4543
    %v4545 = vmul.f32 %v4542, 1.442695
    %v4546 = vpow.pop %v4545
    %v4547 = vadd.f32 %v4544, 1.0
    %v4548 = vadd.f32 %v4546, 1.0
    %v4549 = vrcp.pop %v4547
    %v4550 = vmul.f32 1.0, %v4549
    %v4551 = vrcp.pop %v4548
    %v4552 = vmul.f32 1.0, %v4551
    %v4553 = vtanh.pop %v4540
    %v4554 = vmul.f32 %v4550, %v3966
    %4556 = vrot.lane.b32.xlu0 %v4553, 112
    %v4557 = vpop.permute.xlu0 %4556
    %v4559 = vmul.f32 %v4550, %v4557
    %4561 = vrot.lane.b32.xlu0 %v4559, 48
    %v4562 = vpop.permute.xlu0 %4561
    %v4564 = vadd.f32 %v4554, %v4562
    %v4565 = vtanh.pop %v4564
    %4567 = vrot.lane.b32.xlu0 %v4565, 48
    %v4568 = vpop.permute.xlu0 %4567
    %v4570 = vmul.f32 %v4550, %v4568
    %v4571 = vmul.f32 %v4552, %v4568
    %4574 = vrot.lane.b32.xlu0 %v4570, 32
    %v4575 = vpop.permute.xlu0 %4574
    %4576 = vrot.lane.b32.xlu0 %v4571, 32
    %v4577 = vpop.permute.xlu0 %4576
    %v4578 = vsel %vm480, %v4575, %v4577
    %v4579 = vsel %vm366, %v4578, 0
    %4581 = vmatprep.subr.mxu0 %v57
    %4582 = vmatpush1.msra.mxu0 %v56
    %4583 = vmatprep.subr.mxu0 %v59
    %4584 = vmatpush1.msra.mxu0 %v58
    %4585 = vmatprep.subr.mxu0 %v61
    %4586 = vmatpush1.msra.mxu0 %v60
    %4587 = vmatprep.subr.mxu0 %v63
    %4588 = vmatpush1.msra.mxu0 %v62
    %4589 = vmatprep.subr.mxu0 %v65
    %4590 = vmatpush1.msra.mxu0 %v64
    %4591 = vmatprep.subr.mxu0 %v67
    %4592 = vmatpush1.msra.mxu0 %v66
    %4593 = vmatprep.subr.mxu0 0.0
    %4594 = vmatpush1.msra.mxu0 0.0
    %4595 = vmatprep.subr.mxu0 0.0
    %4596 = vmatpush1.msra.mxu0 0.0
    %4597 = vmatprep.subr.mxu0 0.0
    %4598 = vmatpush1.msra.mxu0 0.0
    %4599 = vmatprep.subr.mxu0 0.0
    %4600 = vmatpush1.msra.mxu0 0.0
    %4601 = vmatprep.subr.mxu0 0.0
    %4602 = vmatpush1.msra.mxu0 0.0
    %4603 = vmatprep.subr.mxu0 0.0
    %4604 = vmatpush1.msra.mxu0 0.0
    %4605 = vmatprep.subr.mxu0 0.0
    %4606 = vmatpush1.msra.mxu0 0.0
    %4607 = vmatprep.subr.mxu0 0.0
    %4608 = vmatpush1.msra.mxu0 0.0
    %4609 = vmatprep.subr.mxu0 0.0
    %4610 = vmatpush1.msra.mxu0 0.0
    %4611 = vmatprep.subr.mxu0 0.0
    %4612 = vmatpush1.msra.mxu0 0.0
    %4613 = vmatprep.subr.mxu0 0.0
    %4614 = vmatpush1.msra.mxu0 0.0
    %4615 = vmatprep.subr.mxu0 0.0
    %4616 = vmatpush1.msra.mxu0 0.0
    %4617 = vmatprep.subr.mxu0 0.0
    %4618 = vmatpush1.msra.mxu0 0.0
    %4619 = vmatprep.subr.mxu0 0.0
    %4620 = vmatpush1.msra.mxu0 0.0
    %4621 = vmatprep.subr.mxu0 0.0
    %4622 = vmatpush1.msra.mxu0 0.0
    %4623 = vmatprep.subr.mxu0 0.0
    %4624 = vmatpush1.msra.mxu0 0.0
    %4625 = vmatprep.subr.mxu0 0.0
    %4626 = vmatpush1.msra.mxu0 0.0
    %4627 = vmatprep.subr.mxu0 0.0
    %4628 = vmatpush1.msra.mxu0 0.0
    %4629 = vmatprep.subr.mxu0 0.0
    %4630 = vmatpush1.msra.mxu0 0.0
    %4631 = vmatprep.subr.mxu0 0.0
    %4632 = vmatpush1.msra.mxu0 0.0
    %4633 = vmatprep.subr.mxu0 0.0
    %4634 = vmatpush1.msra.mxu0 0.0
    %4635 = vmatprep.subr.mxu0 0.0
    %4636 = vmatpush1.msra.mxu0 0.0
    %4637 = vmatprep.subr.mxu0 0.0
    %4638 = vmatpush1.msra.mxu0 0.0
    %4639 = vmatprep.subr.mxu0 0.0
    %4640 = vmatpush1.msra.mxu0 0.0
    %4641 = vmatprep.subr.mxu0 0.0
    %4642 = vmatpush1.msra.mxu0 0.0
    %4643 = vmatprep.subr.mxu0 0.0
    %4644 = vmatpush1.msra.mxu0 0.0
    %4645 = vmatprep.mubr.f32.mxu0 0.0
    %4646 = vmatmul.mubr.f32.gmra.mrb[0].mxu0 %v4579
    %v4647 = vpop.f32.mrb[0].mxu0
    %v4648 = vadd.f32 0.0, %v4647
    %v4649 = vpop.f32.mrb[0].mxu0
    %v4650 = vadd.f32 0.0, %v4649
    %4651 = vdwg.mxu0
    %4654 = vrot.lane.b32.xlu0 %v4165, 32
    %v4655 = vpop.permute.xlu0 %4654
    %4656 = vrot.lane.b32.xlu0 %v4166, 32
    %v4657 = vpop.permute.xlu0 %4656
    %v4658 = vsel %vm480, %v4655, %v4657
    %v4659 = vsel %vm366, %v4658, 0
    %4661 = vmatprep.subr.mxu0 %v45
    %4662 = vmatpush1.msra.mxu0 %v44
    %4663 = vmatprep.subr.mxu0 %v47
    %4664 = vmatpush1.msra.mxu0 %v46
    %4665 = vmatprep.subr.mxu0 %v49
    %4666 = vmatpush1.msra.mxu0 %v48
    %4667 = vmatprep.subr.mxu0 %v51
    %4668 = vmatpush1.msra.mxu0 %v50
    %4669 = vmatprep.subr.mxu0 %v53
    %4670 = vmatpush1.msra.mxu0 %v52
    %4671 = vmatprep.subr.mxu0 %v55
    %4672 = vmatpush1.msra.mxu0 %v54
    %4673 = vmatprep.subr.mxu0 0.0
    %4674 = vmatpush1.msra.mxu0 0.0
    %4675 = vmatprep.subr.mxu0 0.0
    %4676 = vmatpush1.msra.mxu0 0.0
    %4677 = vmatprep.subr.mxu0 0.0
    %4678 = vmatpush1.msra.mxu0 0.0
    %4679 = vmatprep.subr.mxu0 0.0
    %4680 = vmatpush1.msra.mxu0 0.0
    %4681 = vmatprep.subr.mxu0 0.0
    %4682 = vmatpush1.msra.mxu0 0.0
    %4683 = vmatprep.subr.mxu0 0.0
    %4684 = vmatpush1.msra.mxu0 0.0
    %4685 = vmatprep.subr.mxu0 0.0
    %4686 = vmatpush1.msra.mxu0 0.0
    %4687 = vmatprep.subr.mxu0 0.0
    %4688 = vmatpush1.msra.mxu0 0.0
    %4689 = vmatprep.subr.mxu0 0.0
    %4690 = vmatpush1.msra.mxu0 0.0
    %4691 = vmatprep.subr.mxu0 0.0
    %4692 = vmatpush1.msra.mxu0 0.0
    %4693 = vmatprep.subr.mxu0 0.0
    %4694 = vmatpush1.msra.mxu0 0.0
    %4695 = vmatprep.subr.mxu0 0.0
    %4696 = vmatpush1.msra.mxu0 0.0
    %4697 = vmatprep.subr.mxu0 0.0
    %4698 = vmatpush1.msra.mxu0 0.0
    %4699 = vmatprep.subr.mxu0 0.0
    %4700 = vmatpush1.msra.mxu0 0.0
    %4701 = vmatprep.subr.mxu0 0.0
    %4702 = vmatpush1.msra.mxu0 0.0
    %4703 = vmatprep.subr.mxu0 0.0
    %4704 = vmatpush1.msra.mxu0 0.0
    %4705 = vmatprep.subr.mxu0 0.0
    %4706 = vmatpush1.msra.mxu0 0.0
    %4707 = vmatprep.subr.mxu0 0.0
    %4708 = vmatpush1.msra.mxu0 0.0
    %4709 = vmatprep.subr.mxu0 0.0
    %4710 = vmatpush1.msra.mxu0 0.0
    %4711 = vmatprep.subr.mxu0 0.0
    %4712 = vmatpush1.msra.mxu0 0.0
    %4713 = vmatprep.subr.mxu0 0.0
    %4714 = vmatpush1.msra.mxu0 0.0
    %4715 = vmatprep.subr.mxu0 0.0
    %4716 = vmatpush1.msra.mxu0 0.0
    %4717 = vmatprep.subr.mxu0 0.0
    %4718 = vmatpush1.msra.mxu0 0.0
    %4719 = vmatprep.subr.mxu0 0.0
    %4720 = vmatpush1.msra.mxu0 0.0
    %4721 = vmatprep.subr.mxu0 0.0
    %4722 = vmatpush1.msra.mxu0 0.0
    %4723 = vmatprep.subr.mxu0 0.0
    %4724 = vmatpush1.msra.mxu0 0.0
    %4725 = vmatprep.mubr.f32.mxu0 0.0
    %4726 = vmatmul.mubr.f32.gmra.mrb[0].mxu0 %v4659
    %v4727 = vpop.f32.mrb[0].mxu0
    %v4728 = vadd.f32 %v4648, %v4727
    %v4729 = vpop.f32.mrb[0].mxu0
    %v4730 = vadd.f32 %v4650, %v4729
    %4731 = vdwg.mxu0
    %v4732 = vadd.f32 %v4728, %v355
    %v4733 = vadd.f32 %v4730, %v359
    %v4734 = vxor.u32 %v4732, 2147483648
    %v4735 = vxor.u32 %v4733, 2147483648
    %v4736 = vmul.f32 %v4734, 1.442695
    %v4737 = vpow.pop %v4736
    %v4738 = vmul.f32 %v4735, 1.442695
    %v4739 = vpow.pop %v4738
    %v4740 = vadd.f32 %v4737, 1.0
    %v4741 = vadd.f32 %v4739, 1.0
    %v4742 = vrcp.pop %v4740
    %v4743 = vmul.f32 1.0, %v4742
    %v4744 = vrcp.pop %v4741
    %v4745 = vmul.f32 1.0, %v4744
    %v4746 = vtanh.pop %v4733
    %v4747 = vmul.f32 %v4743, %v4159
    %4749 = vrot.lane.b32.xlu0 %v4746, 112
    %v4750 = vpop.permute.xlu0 %4749
    %v4752 = vmul.f32 %v4743, %v4750
    %4754 = vrot.lane.b32.xlu0 %v4752, 48
    %v4755 = vpop.permute.xlu0 %4754
    %v4757 = vadd.f32 %v4747, %v4755
    %v4758 = vtanh.pop %v4757
    %4760 = vrot.lane.b32.xlu0 %v4758, 48
    %v4761 = vpop.permute.xlu0 %4760
    %v4763 = vmul.f32 %v4743, %v4761
    %v4764 = vmul.f32 %v4745, %v4761
    %4765 = vmatprep.subr.mxu0 %v33
    %4766 = vmatpush1.msra.mxu0 %v32
    %4767 = vmatprep.subr.mxu0 %v35
    %4768 = vmatpush1.msra.mxu0 %v34
    %4769 = vmatprep.subr.mxu0 %v37
    %4770 = vmatpush1.msra.mxu0 %v36
    %4771 = vmatprep.subr.mxu0 %v39
    %4772 = vmatpush1.msra.mxu0 %v38
    %4773 = vmatprep.subr.mxu0 %v41
    %4774 = vmatpush1.msra.mxu0 %v40
    %4775 = vmatprep.subr.mxu0 %v43
    %4776 = vmatpush1.msra.mxu0 %v42
    %4777 = vmatprep.subr.mxu0 0.0
    %4778 = vmatpush1.msra.mxu0 0.0
    %4779 = vmatprep.subr.mxu0 0.0
    %4780 = vmatpush1.msra.mxu0 0.0
    %4781 = vmatprep.subr.mxu0 0.0
    %4782 = vmatpush1.msra.mxu0 0.0
    %4783 = vmatprep.subr.mxu0 0.0
    %4784 = vmatpush1.msra.mxu0 0.0
    %4785 = vmatprep.subr.mxu0 0.0
    %4786 = vmatpush1.msra.mxu0 0.0
    %4787 = vmatprep.subr.mxu0 0.0
    %4788 = vmatpush1.msra.mxu0 0.0
    %4789 = vmatprep.subr.mxu0 0.0
    %4790 = vmatpush1.msra.mxu0 0.0
    %4791 = vmatprep.subr.mxu0 0.0
    %4792 = vmatpush1.msra.mxu0 0.0
    %4793 = vmatprep.subr.mxu0 0.0
    %4794 = vmatpush1.msra.mxu0 0.0
    %4795 = vmatprep.subr.mxu0 0.0
    %4796 = vmatpush1.msra.mxu0 0.0
    %4797 = vmatprep.subr.mxu0 0.0
    %4798 = vmatpush1.msra.mxu0 0.0
    %4799 = vmatprep.subr.mxu0 0.0
    %4800 = vmatpush1.msra.mxu0 0.0
    %4801 = vmatprep.subr.mxu0 0.0
    %4802 = vmatpush1.msra.mxu0 0.0
    %4803 = vmatprep.subr.mxu0 0.0
    %4804 = vmatpush1.msra.mxu0 0.0
    %4805 = vmatprep.subr.mxu0 0.0
    %4806 = vmatpush1.msra.mxu0 0.0
    %4807 = vmatprep.subr.mxu0 0.0
    %4808 = vmatpush1.msra.mxu0 0.0
    %4809 = vmatprep.subr.mxu0 0.0
    %4810 = vmatpush1.msra.mxu0 0.0
    %4811 = vmatprep.subr.mxu0 0.0
    %4812 = vmatpush1.msra.mxu0 0.0
    %4813 = vmatprep.subr.mxu0 0.0
    %4814 = vmatpush1.msra.mxu0 0.0
    %4815 = vmatprep.subr.mxu0 0.0
    %4816 = vmatpush1.msra.mxu0 0.0
    %4817 = vmatprep.subr.mxu0 0.0
    %4818 = vmatpush1.msra.mxu0 0.0
    %4819 = vmatprep.subr.mxu0 0.0
    %4820 = vmatpush1.msra.mxu0 0.0
    %4821 = vmatprep.subr.mxu0 0.0
    %4822 = vmatpush1.msra.mxu0 0.0
    %4823 = vmatprep.subr.mxu0 0.0
    %4824 = vmatpush1.msra.mxu0 0.0
    %4825 = vmatprep.subr.mxu0 0.0
    %4826 = vmatpush1.msra.mxu0 0.0
    %4827 = vmatprep.subr.mxu0 0.0
    %4828 = vmatpush1.msra.mxu0 0.0
    %4829 = vmatprep.mubr.f32.mxu0 0.0
    %4830 = vmatmul.mubr.f32.gmra.mrb[0].mxu0 %v4278
    %v4831 = vpop.f32.mrb[0].mxu0
    %v4832 = vadd.f32 0.0, %v4831
    %v4833 = vpop.f32.mrb[0].mxu0
    %v4834 = vadd.f32 0.0, %v4833
    %4835 = vdwg.mxu0
    %v4836 = vadd.f32 %v4466, %v4832
    %v4837 = vadd.f32 %v4467, %v4834
    %v4838 = vxor.u32 %v4836, 2147483648
    %v4839 = vxor.u32 %v4837, 2147483648
    %v4840 = vmul.f32 %v4838, 1.442695
    %v4841 = vpow.pop %v4840
    %v4842 = vmul.f32 %v4839, 1.442695
    %v4843 = vpow.pop %v4842
    %v4844 = vadd.f32 %v4841, 1.0
    %v4845 = vadd.f32 %v4843, 1.0
    %v4846 = vrcp.pop %v4844
    %v4847 = vmul.f32 1.0, %v4846
    %v4848 = vrcp.pop %v4845
    %v4849 = vmul.f32 1.0, %v4848
    %v4850 = vtanh.pop %v4837
    %v4851 = vmul.f32 %v4847, %v4263
    %4853 = vrot.lane.b32.xlu0 %v4850, 112
    %v4854 = vpop.permute.xlu0 %4853
    %v4856 = vmul.f32 %v4847, %v4854
    %4858 = vrot.lane.b32.xlu0 %v4856, 48
    %v4859 = vpop.permute.xlu0 %4858
    %v4861 = vadd.f32 %v4851, %v4859
    %v4862 = vtanh.pop %v4861
    %4864 = vrot.lane.b32.xlu0 %v4862, 48
    %v4865 = vpop.permute.xlu0 %4864
    %v4867 = vmul.f32 %v4847, %v4865
    %v4868 = vmul.f32 %v4849, %v4865
    %4871 = vrot.lane.b32.xlu0 %v4867, 32
    %v4872 = vpop.permute.xlu0 %4871
    %4873 = vrot.lane.b32.xlu0 %v4868, 32
    %v4874 = vpop.permute.xlu0 %4873
    %v4875 = vsel %vm480, %v4872, %v4874
    %v4876 = vsel %vm366, %v4875, 0
    %4878 = vmatprep.subr.mxu0 %v57
    %4879 = vmatpush1.msra.mxu0 %v56
    %4880 = vmatprep.subr.mxu0 %v59
    %4881 = vmatpush1.msra.mxu0 %v58
    %4882 = vmatprep.subr.mxu0 %v61
    %4883 = vmatpush1.msra.mxu0 %v60
    %4884 = vmatprep.subr.mxu0 %v63
    %4885 = vmatpush1.msra.mxu0 %v62
    %4886 = vmatprep.subr.mxu0 %v65
    %4887 = vmatpush1.msra.mxu0 %v64
    %4888 = vmatprep.subr.mxu0 %v67
    %4889 = vmatpush1.msra.mxu0 %v66
    %4890 = vmatprep.subr.mxu0 0.0
    %4891 = vmatpush1.msra.mxu0 0.0
    %4892 = vmatprep.subr.mxu0 0.0
    %4893 = vmatpush1.msra.mxu0 0.0
    %4894 = vmatprep.subr.mxu0 0.0
    %4895 = vmatpush1.msra.mxu0 0.0
    %4896 = vmatprep.subr.mxu0 0.0
    %4897 = vmatpush1.msra.mxu0 0.0
    %4898 = vmatprep.subr.mxu0 0.0
    %4899 = vmatpush1.msra.mxu0 0.0
    %4900 = vmatprep.subr.mxu0 0.0
    %4901 = vmatpush1.msra.mxu0 0.0
    %4902 = vmatprep.subr.mxu0 0.0
    %4903 = vmatpush1.msra.mxu0 0.0
    %4904 = vmatprep.subr.mxu0 0.0
    %4905 = vmatpush1.msra.mxu0 0.0
    %4906 = vmatprep.subr.mxu0 0.0
    %4907 = vmatpush1.msra.mxu0 0.0
    %4908 = vmatprep.subr.mxu0 0.0
    %4909 = vmatpush1.msra.mxu0 0.0
    %4910 = vmatprep.subr.mxu0 0.0
    %4911 = vmatpush1.msra.mxu0 0.0
    %4912 = vmatprep.subr.mxu0 0.0
    %4913 = vmatpush1.msra.mxu0 0.0
    %4914 = vmatprep.subr.mxu0 0.0
    %4915 = vmatpush1.msra.mxu0 0.0
    %4916 = vmatprep.subr.mxu0 0.0
    %4917 = vmatpush1.msra.mxu0 0.0
    %4918 = vmatprep.subr.mxu0 0.0
    %4919 = vmatpush1.msra.mxu0 0.0
    %4920 = vmatprep.subr.mxu0 0.0
    %4921 = vmatpush1.msra.mxu0 0.0
    %4922 = vmatprep.subr.mxu0 0.0
    %4923 = vmatpush1.msra.mxu0 0.0
    %4924 = vmatprep.subr.mxu0 0.0
    %4925 = vmatpush1.msra.mxu0 0.0
    %4926 = vmatprep.subr.mxu0 0.0
    %4927 = vmatpush1.msra.mxu0 0.0
    %4928 = vmatprep.subr.mxu0 0.0
    %4929 = vmatpush1.msra.mxu0 0.0
    %4930 = vmatprep.subr.mxu0 0.0
    %4931 = vmatpush1.msra.mxu0 0.0
    %4932 = vmatprep.subr.mxu0 0.0
    %4933 = vmatpush1.msra.mxu0 0.0
    %4934 = vmatprep.subr.mxu0 0.0
    %4935 = vmatpush1.msra.mxu0 0.0
    %4936 = vmatprep.subr.mxu0 0.0
    %4937 = vmatpush1.msra.mxu0 0.0
    %4938 = vmatprep.subr.mxu0 0.0
    %4939 = vmatpush1.msra.mxu0 0.0
    %4940 = vmatprep.subr.mxu0 0.0
    %4941 = vmatpush1.msra.mxu0 0.0
    %4942 = vmatprep.mubr.f32.mxu0 0.0
    %4943 = vmatmul.mubr.f32.gmra.mrb[0].mxu0 %v4876
    %v4944 = vpop.f32.mrb[0].mxu0
    %v4945 = vadd.f32 0.0, %v4944
    %v4946 = vpop.f32.mrb[0].mxu0
    %v4947 = vadd.f32 0.0, %v4946
    %4948 = vdwg.mxu0
    %4951 = vrot.lane.b32.xlu0 %v4462, 32
    %v4952 = vpop.permute.xlu0 %4951
    %4953 = vrot.lane.b32.xlu0 %v4463, 32
    %v4954 = vpop.permute.xlu0 %4953
    %v4955 = vsel %vm480, %v4952, %v4954
    %v4956 = vsel %vm366, %v4955, 0
    %4958 = vmatprep.subr.mxu0 %v45
    %4959 = vmatpush1.msra.mxu0 %v44
    %4960 = vmatprep.subr.mxu0 %v47
    %4961 = vmatpush1.msra.mxu0 %v46
    %4962 = vmatprep.subr.mxu0 %v49
    %4963 = vmatpush1.msra.mxu0 %v48
    %4964 = vmatprep.subr.mxu0 %v51
    %4965 = vmatpush1.msra.mxu0 %v50
    %4966 = vmatprep.subr.mxu0 %v53
    %4967 = vmatpush1.msra.mxu0 %v52
    %4968 = vmatprep.subr.mxu0 %v55
    %4969 = vmatpush1.msra.mxu0 %v54
    %4970 = vmatprep.subr.mxu0 0.0
    %4971 = vmatpush1.msra.mxu0 0.0
    %4972 = vmatprep.subr.mxu0 0.0
    %4973 = vmatpush1.msra.mxu0 0.0
    %4974 = vmatprep.subr.mxu0 0.0
    %4975 = vmatpush1.msra.mxu0 0.0
    %4976 = vmatprep.subr.mxu0 0.0
    %4977 = vmatpush1.msra.mxu0 0.0
    %4978 = vmatprep.subr.mxu0 0.0
    %4979 = vmatpush1.msra.mxu0 0.0
    %4980 = vmatprep.subr.mxu0 0.0
    %4981 = vmatpush1.msra.mxu0 0.0
    %4982 = vmatprep.subr.mxu0 0.0
    %4983 = vmatpush1.msra.mxu0 0.0
    %4984 = vmatprep.subr.mxu0 0.0
    %4985 = vmatpush1.msra.mxu0 0.0
    %4986 = vmatprep.subr.mxu0 0.0
    %4987 = vmatpush1.msra.mxu0 0.0
    %4988 = vmatprep.subr.mxu0 0.0
    %4989 = vmatpush1.msra.mxu0 0.0
    %4990 = vmatprep.subr.mxu0 0.0
    %4991 = vmatpush1.msra.mxu0 0.0
    %4992 = vmatprep.subr.mxu0 0.0
    %4993 = vmatpush1.msra.mxu0 0.0
    %4994 = vmatprep.subr.mxu0 0.0
    %4995 = vmatpush1.msra.mxu0 0.0
    %4996 = vmatprep.subr.mxu0 0.0
    %4997 = vmatpush1.msra.mxu0 0.0
    %4998 = vmatprep.subr.mxu0 0.0
    %4999 = vmatpush1.msra.mxu0 0.0
    %5000 = vmatprep.subr.mxu0 0.0
    %5001 = vmatpush1.msra.mxu0 0.0
    %5002 = vmatprep.subr.mxu0 0.0
    %5003 = vmatpush1.msra.mxu0 0.0
    %5004 = vmatprep.subr.mxu0 0.0
    %5005 = vmatpush1.msra.mxu0 0.0
    %5006 = vmatprep.subr.mxu0 0.0
    %5007 = vmatpush1.msra.mxu0 0.0
    %5008 = vmatprep.subr.mxu0 0.0
    %5009 = vmatpush1.msra.mxu0 0.0
    %5010 = vmatprep.subr.mxu0 0.0
    %5011 = vmatpush1.msra.mxu0 0.0
    %5012 = vmatprep.subr.mxu0 0.0
    %5013 = vmatpush1.msra.mxu0 0.0
    %5014 = vmatprep.subr.mxu0 0.0
    %5015 = vmatpush1.msra.mxu0 0.0
    %5016 = vmatprep.subr.mxu0 0.0
    %5017 = vmatpush1.msra.mxu0 0.0
    %5018 = vmatprep.subr.mxu0 0.0
    %5019 = vmatpush1.msra.mxu0 0.0
    %5020 = vmatprep.subr.mxu0 0.0
    %5021 = vmatpush1.msra.mxu0 0.0
    %5022 = vmatprep.mubr.f32.mxu0 0.0
    %5023 = vmatmul.mubr.f32.gmra.mrb[0].mxu0 %v4956
    %v5024 = vpop.f32.mrb[0].mxu0
    %v5025 = vadd.f32 %v4945, %v5024
    %v5026 = vpop.f32.mrb[0].mxu0
    %v5027 = vadd.f32 %v4947, %v5026
    %5028 = vdwg.mxu0
    %v5029 = vadd.f32 %v5025, %v355
    %v5030 = vadd.f32 %v5027, %v359
    %v5031 = vxor.u32 %v5029, 2147483648
    %v5032 = vxor.u32 %v5030, 2147483648
    %v5033 = vmul.f32 %v5031, 1.442695
    %v5034 = vpow.pop %v5033
    %v5035 = vmul.f32 %v5032, 1.442695
    %v5036 = vpow.pop %v5035
    %v5037 = vadd.f32 %v5034, 1.0
    %v5038 = vadd.f32 %v5036, 1.0
    %v5039 = vrcp.pop %v5037
    %v5040 = vmul.f32 1.0, %v5039
    %v5041 = vrcp.pop %v5038
    %v5042 = vmul.f32 1.0, %v5041
    %v5043 = vtanh.pop %v5030
    %v5044 = vmul.f32 %v5040, %v4456
    %5046 = vrot.lane.b32.xlu0 %v5043, 112
    %v5047 = vpop.permute.xlu0 %5046
    %v5049 = vmul.f32 %v5040, %v5047
    %5051 = vrot.lane.b32.xlu0 %v5049, 48
    %v5052 = vpop.permute.xlu0 %5051
    %v5054 = vadd.f32 %v5044, %v5052
    %v5055 = vtanh.pop %v5054
    %5057 = vrot.lane.b32.xlu0 %v5055, 48
    %v5058 = vpop.permute.xlu0 %5057
    %v5060 = vmul.f32 %v5040, %v5058
    %v5061 = vmul.f32 %v5042, %v5058
    %v5062 = vld [vmem:[%s283] sm:$0xff]
    %v5063 = vld [vmem:[%s283 + $0x8] sm:$0xff]
    %v5064 = vld [vmem:[%s283 + $0x10] sm:$0xff]
    %v5065 = vld [vmem:[%s283 + $0x18] sm:$0xff]
    %5066 = vmatprep.subr.mxu0 %v33
    %5067 = vmatpush1.msra.mxu0 %v32
    %5068 = vmatprep.subr.mxu0 %v35
    %5069 = vmatpush1.msra.mxu0 %v34
    %5070 = vmatprep.subr.mxu0 %v37
    %5071 = vmatpush1.msra.mxu0 %v36
    %5072 = vmatprep.subr.mxu0 %v39
    %5073 = vmatpush1.msra.mxu0 %v38
    %5074 = vmatprep.subr.mxu0 %v41
    %5075 = vmatpush1.msra.mxu0 %v40
    %5076 = vmatprep.subr.mxu0 %v43
    %5077 = vmatpush1.msra.mxu0 %v42
    %5078 = vmatprep.subr.mxu0 0.0
    %5079 = vmatpush1.msra.mxu0 0.0
    %5080 = vmatprep.subr.mxu0 0.0
    %5081 = vmatpush1.msra.mxu0 0.0
    %5082 = vmatprep.subr.mxu0 0.0
    %5083 = vmatpush1.msra.mxu0 0.0
    %5084 = vmatprep.subr.mxu0 0.0
    %5085 = vmatpush1.msra.mxu0 0.0
    %5086 = vmatprep.subr.mxu0 0.0
    %5087 = vmatpush1.msra.mxu0 0.0
    %5088 = vmatprep.subr.mxu0 0.0
    %5089 = vmatpush1.msra.mxu0 0.0
    %5090 = vmatprep.subr.mxu0 0.0
    %5091 = vmatpush1.msra.mxu0 0.0
    %5092 = vmatprep.subr.mxu0 0.0
    %5093 = vmatpush1.msra.mxu0 0.0
    %5094 = vmatprep.subr.mxu0 0.0
    %5095 = vmatpush1.msra.mxu0 0.0
    %5096 = vmatprep.subr.mxu0 0.0
    %5097 = vmatpush1.msra.mxu0 0.0
    %5098 = vmatprep.subr.mxu0 0.0
    %5099 = vmatpush1.msra.mxu0 0.0
    %5100 = vmatprep.subr.mxu0 0.0
    %5101 = vmatpush1.msra.mxu0 0.0
    %5102 = vmatprep.subr.mxu0 0.0
    %5103 = vmatpush1.msra.mxu0 0.0
    %5104 = vmatprep.subr.mxu0 0.0
    %5105 = vmatpush1.msra.mxu0 0.0
    %5106 = vmatprep.subr.mxu0 0.0
    %5107 = vmatpush1.msra.mxu0 0.0
    %5108 = vmatprep.subr.mxu0 0.0
    %5109 = vmatpush1.msra.mxu0 0.0
    %5110 = vmatprep.subr.mxu0 0.0
    %5111 = vmatpush1.msra.mxu0 0.0
    %5112 = vmatprep.subr.mxu0 0.0
    %5113 = vmatpush1.msra.mxu0 0.0
    %5114 = vmatprep.subr.mxu0 0.0
    %5115 = vmatpush1.msra.mxu0 0.0
    %5116 = vmatprep.subr.mxu0 0.0
    %5117 = vmatpush1.msra.mxu0 0.0
    %5118 = vmatprep.subr.mxu0 0.0
    %5119 = vmatpush1.msra.mxu0 0.0
    %5120 = vmatprep.subr.mxu0 0.0
    %5121 = vmatpush1.msra.mxu0 0.0
    %5122 = vmatprep.subr.mxu0 0.0
    %5123 = vmatpush1.msra.mxu0 0.0
    %5124 = vmatprep.subr.mxu0 0.0
    %5125 = vmatpush1.msra.mxu0 0.0
    %5126 = vmatprep.subr.mxu0 0.0
    %5127 = vmatpush1.msra.mxu0 0.0
    %5128 = vmatprep.subr.mxu0 0.0
    %5129 = vmatpush1.msra.mxu0 0.0
    %5130 = vmatprep.mubr.f32.mxu0 0.0
    %5131 = vmatmul.mubr.f32.gmra.mrb[0].mxu0 %v4579
    %v5132 = vpop.f32.mrb[0].mxu0
    %v5133 = vadd.f32 0.0, %v5132
    %v5134 = vpop.f32.mrb[0].mxu0
    %v5135 = vadd.f32 0.0, %v5134
    %5136 = vdwg.mxu0
    %v5137 = vadd.f32 %v5062, %v5133
    %v5138 = vadd.f32 %v5063, %v5135
    %v5139 = vxor.u32 %v5137, 2147483648
    %v5140 = vxor.u32 %v5138, 2147483648
    %v5141 = vmul.f32 %v5139, 1.442695
    %v5142 = vpow.pop %v5141
    %v5143 = vmul.f32 %v5140, 1.442695
    %v5144 = vpow.pop %v5143
    %v5145 = vadd.f32 %v5142, 1.0
    %v5146 = vadd.f32 %v5144, 1.0
    %v5147 = vrcp.pop %v5145
    %v5148 = vmul.f32 1.0, %v5147
    %v5149 = vrcp.pop %v5146
    %v5150 = vmul.f32 1.0, %v5149
    %v5151 = vtanh.pop %v5138
    %v5152 = vmul.f32 %v5148, %v4564
    %5154 = vrot.lane.b32.xlu0 %v5151, 112
    %v5155 = vpop.permute.xlu0 %5154
    %v5157 = vmul.f32 %v5148, %v5155
    %5159 = vrot.lane.b32.xlu0 %v5157, 48
    %v5160 = vpop.permute.xlu0 %5159
    %v5162 = vadd.f32 %v5152, %v5160
    %v5163 = vtanh.pop %v5162
    %5165 = vrot.lane.b32.xlu0 %v5163, 48
    %v5166 = vpop.permute.xlu0 %5165
    %v5168 = vmul.f32 %v5148, %v5166
    %v5169 = vmul.f32 %v5150, %v5166
    %5172 = vrot.lane.b32.xlu0 %v5168, 32
    %v5173 = vpop.permute.xlu0 %5172
    %5174 = vrot.lane.b32.xlu0 %v5169, 32
    %v5175 = vpop.permute.xlu0 %5174
    %v5176 = vsel %vm480, %v5173, %v5175
    %v5177 = vsel %vm366, %v5176, 0
    %5179 = vmatprep.subr.mxu0 %v57
    %5180 = vmatpush1.msra.mxu0 %v56
    %5181 = vmatprep.subr.mxu0 %v59
    %5182 = vmatpush1.msra.mxu0 %v58
    %5183 = vmatprep.subr.mxu0 %v61
    %5184 = vmatpush1.msra.mxu0 %v60
    %5185 = vmatprep.subr.mxu0 %v63
    %5186 = vmatpush1.msra.mxu0 %v62
    %5187 = vmatprep.subr.mxu0 %v65
    %5188 = vmatpush1.msra.mxu0 %v64
    %5189 = vmatprep.subr.mxu0 %v67
    %5190 = vmatpush1.msra.mxu0 %v66
    %5191 = vmatprep.subr.mxu0 0.0
    %5192 = vmatpush1.msra.mxu0 0.0
    %5193 = vmatprep.subr.mxu0 0.0
    %5194 = vmatpush1.msra.mxu0 0.0
    %5195 = vmatprep.subr.mxu0 0.0
    %5196 = vmatpush1.msra.mxu0 0.0
    %5197 = vmatprep.subr.mxu0 0.0
    %5198 = vmatpush1.msra.mxu0 0.0
    %5199 = vmatprep.subr.mxu0 0.0
    %5200 = vmatpush1.msra.mxu0 0.0
    %5201 = vmatprep.subr.mxu0 0.0
    %5202 = vmatpush1.msra.mxu0 0.0
    %5203 = vmatprep.subr.mxu0 0.0
    %5204 = vmatpush1.msra.mxu0 0.0
    %5205 = vmatprep.subr.mxu0 0.0
    %5206 = vmatpush1.msra.mxu0 0.0
    %5207 = vmatprep.subr.mxu0 0.0
    %5208 = vmatpush1.msra.mxu0 0.0
    %5209 = vmatprep.subr.mxu0 0.0
    %5210 = vmatpush1.msra.mxu0 0.0
    %5211 = vmatprep.subr.mxu0 0.0
    %5212 = vmatpush1.msra.mxu0 0.0
    %5213 = vmatprep.subr.mxu0 0.0
    %5214 = vmatpush1.msra.mxu0 0.0
    %5215 = vmatprep.subr.mxu0 0.0
    %5216 = vmatpush1.msra.mxu0 0.0
    %5217 = vmatprep.subr.mxu0 0.0
    %5218 = vmatpush1.msra.mxu0 0.0
    %5219 = vmatprep.subr.mxu0 0.0
    %5220 = vmatpush1.msra.mxu0 0.0
    %5221 = vmatprep.subr.mxu0 0.0
    %5222 = vmatpush1.msra.mxu0 0.0
    %5223 = vmatprep.subr.mxu0 0.0
    %5224 = vmatpush1.msra.mxu0 0.0
    %5225 = vmatprep.subr.mxu0 0.0
    %5226 = vmatpush1.msra.mxu0 0.0
    %5227 = vmatprep.subr.mxu0 0.0
    %5228 = vmatpush1.msra.mxu0 0.0
    %5229 = vmatprep.subr.mxu0 0.0
    %5230 = vmatpush1.msra.mxu0 0.0
    %5231 = vmatprep.subr.mxu0 0.0
    %5232 = vmatpush1.msra.mxu0 0.0
    %5233 = vmatprep.subr.mxu0 0.0
    %5234 = vmatpush1.msra.mxu0 0.0
    %5235 = vmatprep.subr.mxu0 0.0
    %5236 = vmatpush1.msra.mxu0 0.0
    %5237 = vmatprep.subr.mxu0 0.0
    %5238 = vmatpush1.msra.mxu0 0.0
    %5239 = vmatprep.subr.mxu0 0.0
    %5240 = vmatpush1.msra.mxu0 0.0
    %5241 = vmatprep.subr.mxu0 0.0
    %5242 = vmatpush1.msra.mxu0 0.0
    %5243 = vmatprep.mubr.f32.mxu0 0.0
    %5244 = vmatmul.mubr.f32.gmra.mrb[0].mxu0 %v5177
    %v5245 = vpop.f32.mrb[0].mxu0
    %v5246 = vadd.f32 0.0, %v5245
    %v5247 = vpop.f32.mrb[0].mxu0
    %v5248 = vadd.f32 0.0, %v5247
    %5249 = vdwg.mxu0
    %5252 = vrot.lane.b32.xlu0 %v4763, 32
    %v5253 = vpop.permute.xlu0 %5252
    %5254 = vrot.lane.b32.xlu0 %v4764, 32
    %v5255 = vpop.permute.xlu0 %5254
    %v5256 = vsel %vm480, %v5253, %v5255
    %v5257 = vsel %vm366, %v5256, 0
    %5259 = vmatprep.subr.mxu0 %v45
    %5260 = vmatpush1.msra.mxu0 %v44
    %5261 = vmatprep.subr.mxu0 %v47
    %5262 = vmatpush1.msra.mxu0 %v46
    %5263 = vmatprep.subr.mxu0 %v49
    %5264 = vmatpush1.msra.mxu0 %v48
    %5265 = vmatprep.subr.mxu0 %v51
    %5266 = vmatpush1.msra.mxu0 %v50
    %5267 = vmatprep.subr.mxu0 %v53
    %5268 = vmatpush1.msra.mxu0 %v52
    %5269 = vmatprep.subr.mxu0 %v55
    %5270 = vmatpush1.msra.mxu0 %v54
    %5271 = vmatprep.subr.mxu0 0.0
    %5272 = vmatpush1.msra.mxu0 0.0
    %5273 = vmatprep.subr.mxu0 0.0
    %5274 = vmatpush1.msra.mxu0 0.0
    %5275 = vmatprep.subr.mxu0 0.0
    %5276 = vmatpush1.msra.mxu0 0.0
    %5277 = vmatprep.subr.mxu0 0.0
    %5278 = vmatpush1.msra.mxu0 0.0
    %5279 = vmatprep.subr.mxu0 0.0
    %5280 = vmatpush1.msra.mxu0 0.0
    %5281 = vmatprep.subr.mxu0 0.0
    %5282 = vmatpush1.msra.mxu0 0.0
    %5283 = vmatprep.subr.mxu0 0.0
    %5284 = vmatpush1.msra.mxu0 0.0
    %5285 = vmatprep.subr.mxu0 0.0
    %5286 = vmatpush1.msra.mxu0 0.0
    %5287 = vmatprep.subr.mxu0 0.0
    %5288 = vmatpush1.msra.mxu0 0.0
    %5289 = vmatprep.subr.mxu0 0.0
    %5290 = vmatpush1.msra.mxu0 0.0
    %5291 = vmatprep.subr.mxu0 0.0
    %5292 = vmatpush1.msra.mxu0 0.0
    %5293 = vmatprep.subr.mxu0 0.0
    %5294 = vmatpush1.msra.mxu0 0.0
    %5295 = vmatprep.subr.mxu0 0.0
    %5296 = vmatpush1.msra.mxu0 0.0
    %5297 = vmatprep.subr.mxu0 0.0
    %5298 = vmatpush1.msra.mxu0 0.0
    %5299 = vmatprep.subr.mxu0 0.0
    %5300 = vmatpush1.msra.mxu0 0.0
    %5301 = vmatprep.subr.mxu0 0.0
    %5302 = vmatpush1.msra.mxu0 0.0
    %5303 = vmatprep.subr.mxu0 0.0
    %5304 = vmatpush1.msra.mxu0 0.0
    %5305 = vmatprep.subr.mxu0 0.0
    %5306 = vmatpush1.msra.mxu0 0.0
    %5307 = vmatprep.subr.mxu0 0.0
    %5308 = vmatpush1.msra.mxu0 0.0
    %5309 = vmatprep.subr.mxu0 0.0
    %5310 = vmatpush1.msra.mxu0 0.0
    %5311 = vmatprep.subr.mxu0 0.0
    %5312 = vmatpush1.msra.mxu0 0.0
    %5313 = vmatprep.subr.mxu0 0.0
    %5314 = vmatpush1.msra.mxu0 0.0
    %5315 = vmatprep.subr.mxu0 0.0
    %5316 = vmatpush1.msra.mxu0 0.0
    %5317 = vmatprep.subr.mxu0 0.0
    %5318 = vmatpush1.msra.mxu0 0.0
    %5319 = vmatprep.subr.mxu0 0.0
    %5320 = vmatpush1.msra.mxu0 0.0
    %5321 = vmatprep.subr.mxu0 0.0
    %5322 = vmatpush1.msra.mxu0 0.0
    %5323 = vmatprep.mubr.f32.mxu0 0.0
    %5324 = vmatmul.mubr.f32.gmra.mrb[0].mxu0 %v5257
    %v5325 = vpop.f32.mrb[0].mxu0
    %v5326 = vadd.f32 %v5246, %v5325
    %v5327 = vpop.f32.mrb[0].mxu0
    %v5328 = vadd.f32 %v5248, %v5327
    %5329 = vdwg.mxu0
    %v5330 = vadd.f32 %v5326, %v355
    %v5331 = vadd.f32 %v5328, %v359
    %v5332 = vxor.u32 %v5330, 2147483648
    %v5333 = vxor.u32 %v5331, 2147483648
    %v5334 = vmul.f32 %v5332, 1.442695
    %v5335 = vpow.pop %v5334
    %v5336 = vmul.f32 %v5333, 1.442695
    %v5337 = vpow.pop %v5336
    %v5338 = vadd.f32 %v5335, 1.0
    %v5339 = vadd.f32 %v5337, 1.0
    %v5340 = vrcp.pop %v5338
    %v5341 = vmul.f32 1.0, %v5340
    %v5342 = vrcp.pop %v5339
    %v5343 = vmul.f32 1.0, %v5342
    %v5344 = vtanh.pop %v5331
    %v5345 = vmul.f32 %v5341, %v4757
    %5347 = vrot.lane.b32.xlu0 %v5344, 112
    %v5348 = vpop.permute.xlu0 %5347
    %v5350 = vmul.f32 %v5341, %v5348
    %5352 = vrot.lane.b32.xlu0 %v5350, 48
    %v5353 = vpop.permute.xlu0 %5352
    %v5355 = vadd.f32 %v5345, %v5353
    %v5356 = vtanh.pop %v5355
    %5358 = vrot.lane.b32.xlu0 %v5356, 48
    %v5359 = vpop.permute.xlu0 %5358
    %v5361 = vmul.f32 %v5341, %v5359
    %v5362 = vmul.f32 %v5343, %v5359
    %5363 = vmatprep.subr.mxu0 %v33
    %5364 = vmatpush1.msra.mxu0 %v32
    %5365 = vmatprep.subr.mxu0 %v35
    %5366 = vmatpush1.msra.mxu0 %v34
    %5367 = vmatprep.subr.mxu0 %v37
    %5368 = vmatpush1.msra.mxu0 %v36
    %5369 = vmatprep.subr.mxu0 %v39
    %5370 = vmatpush1.msra.mxu0 %v38
    %5371 = vmatprep.subr.mxu0 %v41
    %5372 = vmatpush1.msra.mxu0 %v40
    %5373 = vmatprep.subr.mxu0 %v43
    %5374 = vmatpush1.msra.mxu0 %v42
    %5375 = vmatprep.subr.mxu0 0.0
    %5376 = vmatpush1.msra.mxu0 0.0
    %5377 = vmatprep.subr.mxu0 0.0
    %5378 = vmatpush1.msra.mxu0 0.0
    %5379 = vmatprep.subr.mxu0 0.0
    %5380 = vmatpush1.msra.mxu0 0.0
    %5381 = vmatprep.subr.mxu0 0.0
    %5382 = vmatpush1.msra.mxu0 0.0
    %5383 = vmatprep.subr.mxu0 0.0
    %5384 = vmatpush1.msra.mxu0 0.0
    %5385 = vmatprep.subr.mxu0 0.0
    %5386 = vmatpush1.msra.mxu0 0.0
    %5387 = vmatprep.subr.mxu0 0.0
    %5388 = vmatpush1.msra.mxu0 0.0
    %5389 = vmatprep.subr.mxu0 0.0
    %5390 = vmatpush1.msra.mxu0 0.0
    %5391 = vmatprep.subr.mxu0 0.0
    %5392 = vmatpush1.msra.mxu0 0.0
    %5393 = vmatprep.subr.mxu0 0.0
    %5394 = vmatpush1.msra.mxu0 0.0
    %5395 = vmatprep.subr.mxu0 0.0
    %5396 = vmatpush1.msra.mxu0 0.0
    %5397 = vmatprep.subr.mxu0 0.0
    %5398 = vmatpush1.msra.mxu0 0.0
    %5399 = vmatprep.subr.mxu0 0.0
    %5400 = vmatpush1.msra.mxu0 0.0
    %5401 = vmatprep.subr.mxu0 0.0
    %5402 = vmatpush1.msra.mxu0 0.0
    %5403 = vmatprep.subr.mxu0 0.0
    %5404 = vmatpush1.msra.mxu0 0.0
    %5405 = vmatprep.subr.mxu0 0.0
    %5406 = vmatpush1.msra.mxu0 0.0
    %5407 = vmatprep.subr.mxu0 0.0
    %5408 = vmatpush1.msra.mxu0 0.0
    %5409 = vmatprep.subr.mxu0 0.0
    %5410 = vmatpush1.msra.mxu0 0.0
    %5411 = vmatprep.subr.mxu0 0.0
    %5412 = vmatpush1.msra.mxu0 0.0
    %5413 = vmatprep.subr.mxu0 0.0
    %5414 = vmatpush1.msra.mxu0 0.0
    %5415 = vmatprep.subr.mxu0 0.0
    %5416 = vmatpush1.msra.mxu0 0.0
    %5417 = vmatprep.subr.mxu0 0.0
    %5418 = vmatpush1.msra.mxu0 0.0
    %5419 = vmatprep.subr.mxu0 0.0
    %5420 = vmatpush1.msra.mxu0 0.0
    %5421 = vmatprep.subr.mxu0 0.0
    %5422 = vmatpush1.msra.mxu0 0.0
    %5423 = vmatprep.subr.mxu0 0.0
    %5424 = vmatpush1.msra.mxu0 0.0
    %5425 = vmatprep.subr.mxu0 0.0
    %5426 = vmatpush1.msra.mxu0 0.0
    %5427 = vmatprep.mubr.f32.mxu0 0.0
    %5428 = vmatmul.mubr.f32.gmra.mrb[0].mxu0 %v4876
    %v5429 = vpop.f32.mrb[0].mxu0
    %v5430 = vadd.f32 0.0, %v5429
    %v5431 = vpop.f32.mrb[0].mxu0
    %v5432 = vadd.f32 0.0, %v5431
    %5433 = vdwg.mxu0
    %v5434 = vadd.f32 %v5064, %v5430
    %v5435 = vadd.f32 %v5065, %v5432
    %v5436 = vxor.u32 %v5434, 2147483648
    %v5437 = vxor.u32 %v5435, 2147483648
    %v5438 = vmul.f32 %v5436, 1.442695
    %v5439 = vpow.pop %v5438
    %v5440 = vmul.f32 %v5437, 1.442695
    %v5441 = vpow.pop %v5440
    %v5442 = vadd.f32 %v5439, 1.0
    %v5443 = vadd.f32 %v5441, 1.0
    %v5444 = vrcp.pop %v5442
    %v5445 = vmul.f32 1.0, %v5444
    %v5446 = vrcp.pop %v5443
    %v5447 = vmul.f32 1.0, %v5446
    %v5448 = vtanh.pop %v5435
    %v5449 = vmul.f32 %v5445, %v4861
    %5451 = vrot.lane.b32.xlu0 %v5448, 112
    %v5452 = vpop.permute.xlu0 %5451
    %v5454 = vmul.f32 %v5445, %v5452
    %5456 = vrot.lane.b32.xlu0 %v5454, 48
    %v5457 = vpop.permute.xlu0 %5456
    %v5459 = vadd.f32 %v5449, %v5457
    %v5460 = vtanh.pop %v5459
    %5462 = vrot.lane.b32.xlu0 %v5460, 48
    %v5463 = vpop.permute.xlu0 %5462
    %v5465 = vmul.f32 %v5445, %v5463
    %v5466 = vmul.f32 %v5447, %v5463
    %5469 = vrot.lane.b32.xlu0 %v5465, 32
    %v5470 = vpop.permute.xlu0 %5469
    %5471 = vrot.lane.b32.xlu0 %v5466, 32
    %v5472 = vpop.permute.xlu0 %5471
    %v5473 = vsel %vm480, %v5470, %v5472
    %v5474 = vsel %vm366, %v5473, 0
    %5476 = vmatprep.subr.mxu0 %v57
    %5477 = vmatpush1.msra.mxu0 %v56
    %5478 = vmatprep.subr.mxu0 %v59
    %5479 = vmatpush1.msra.mxu0 %v58
    %5480 = vmatprep.subr.mxu0 %v61
    %5481 = vmatpush1.msra.mxu0 %v60
    %5482 = vmatprep.subr.mxu0 %v63
    %5483 = vmatpush1.msra.mxu0 %v62
    %5484 = vmatprep.subr.mxu0 %v65
    %5485 = vmatpush1.msra.mxu0 %v64
    %5486 = vmatprep.subr.mxu0 %v67
    %5487 = vmatpush1.msra.mxu0 %v66
    %5488 = vmatprep.subr.mxu0 0.0
    %5489 = vmatpush1.msra.mxu0 0.0
    %5490 = vmatprep.subr.mxu0 0.0
    %5491 = vmatpush1.msra.mxu0 0.0
    %5492 = vmatprep.subr.mxu0 0.0
    %5493 = vmatpush1.msra.mxu0 0.0
    %5494 = vmatprep.subr.mxu0 0.0
    %5495 = vmatpush1.msra.mxu0 0.0
    %5496 = vmatprep.subr.mxu0 0.0
    %5497 = vmatpush1.msra.mxu0 0.0
    %5498 = vmatprep.subr.mxu0 0.0
    %5499 = vmatpush1.msra.mxu0 0.0
    %5500 = vmatprep.subr.mxu0 0.0
    %5501 = vmatpush1.msra.mxu0 0.0
    %5502 = vmatprep.subr.mxu0 0.0
    %5503 = vmatpush1.msra.mxu0 0.0
    %5504 = vmatprep.subr.mxu0 0.0
    %5505 = vmatpush1.msra.mxu0 0.0
    %5506 = vmatprep.subr.mxu0 0.0
    %5507 = vmatpush1.msra.mxu0 0.0
    %5508 = vmatprep.subr.mxu0 0.0
    %5509 = vmatpush1.msra.mxu0 0.0
    %5510 = vmatprep.subr.mxu0 0.0
    %5511 = vmatpush1.msra.mxu0 0.0
    %5512 = vmatprep.subr.mxu0 0.0
    %5513 = vmatpush1.msra.mxu0 0.0
    %5514 = vmatprep.subr.mxu0 0.0
    %5515 = vmatpush1.msra.mxu0 0.0
    %5516 = vmatprep.subr.mxu0 0.0
    %5517 = vmatpush1.msra.mxu0 0.0
    %5518 = vmatprep.subr.mxu0 0.0
    %5519 = vmatpush1.msra.mxu0 0.0
    %5520 = vmatprep.subr.mxu0 0.0
    %5521 = vmatpush1.msra.mxu0 0.0
    %5522 = vmatprep.subr.mxu0 0.0
    %5523 = vmatpush1.msra.mxu0 0.0
    %5524 = vmatprep.subr.mxu0 0.0
    %5525 = vmatpush1.msra.mxu0 0.0
    %5526 = vmatprep.subr.mxu0 0.0
    %5527 = vmatpush1.msra.mxu0 0.0
    %5528 = vmatprep.subr.mxu0 0.0
    %5529 = vmatpush1.msra.mxu0 0.0
    %5530 = vmatprep.subr.mxu0 0.0
    %5531 = vmatpush1.msra.mxu0 0.0
    %5532 = vmatprep.subr.mxu0 0.0
    %5533 = vmatpush1.msra.mxu0 0.0
    %5534 = vmatprep.subr.mxu0 0.0
    %5535 = vmatpush1.msra.mxu0 0.0
    %5536 = vmatprep.subr.mxu0 0.0
    %5537 = vmatpush1.msra.mxu0 0.0
    %5538 = vmatprep.subr.mxu0 0.0
    %5539 = vmatpush1.msra.mxu0 0.0
    %5540 = vmatprep.mubr.f32.mxu0 0.0
    %5541 = vmatmul.mubr.f32.gmra.mrb[0].mxu0 %v5474
    %v5542 = vpop.f32.mrb[0].mxu0
    %v5543 = vadd.f32 0.0, %v5542
    %v5544 = vpop.f32.mrb[0].mxu0
    %v5545 = vadd.f32 0.0, %v5544
    %5546 = vdwg.mxu0
    %5549 = vrot.lane.b32.xlu0 %v5060, 32
    %v5550 = vpop.permute.xlu0 %5549
    %5551 = vrot.lane.b32.xlu0 %v5061, 32
    %v5552 = vpop.permute.xlu0 %5551
    %v5553 = vsel %vm480, %v5550, %v5552
    %v5554 = vsel %vm366, %v5553, 0
    %5556 = vmatprep.subr.mxu0 %v45
    %5557 = vmatpush1.msra.mxu0 %v44
    %5558 = vmatprep.subr.mxu0 %v47
    %5559 = vmatpush1.msra.mxu0 %v46
    %5560 = vmatprep.subr.mxu0 %v49
    %5561 = vmatpush1.msra.mxu0 %v48
    %5562 = vmatprep.subr.mxu0 %v51
    %5563 = vmatpush1.msra.mxu0 %v50
    %5564 = vmatprep.subr.mxu0 %v53
    %5565 = vmatpush1.msra.mxu0 %v52
    %5566 = vmatprep.subr.mxu0 %v55
    %5567 = vmatpush1.msra.mxu0 %v54
    %5568 = vmatprep.subr.mxu0 0.0
    %5569 = vmatpush1.msra.mxu0 0.0
    %5570 = vmatprep.subr.mxu0 0.0
    %5571 = vmatpush1.msra.mxu0 0.0
    %5572 = vmatprep.subr.mxu0 0.0
    %5573 = vmatpush1.msra.mxu0 0.0
    %5574 = vmatprep.subr.mxu0 0.0
    %5575 = vmatpush1.msra.mxu0 0.0
    %5576 = vmatprep.subr.mxu0 0.0
    %5577 = vmatpush1.msra.mxu0 0.0
    %5578 = vmatprep.subr.mxu0 0.0
    %5579 = vmatpush1.msra.mxu0 0.0
    %5580 = vmatprep.subr.mxu0 0.0
    %5581 = vmatpush1.msra.mxu0 0.0
    %5582 = vmatprep.subr.mxu0 0.0
    %5583 = vmatpush1.msra.mxu0 0.0
    %5584 = vmatprep.subr.mxu0 0.0
    %5585 = vmatpush1.msra.mxu0 0.0
    %5586 = vmatprep.subr.mxu0 0.0
    %5587 = vmatpush1.msra.mxu0 0.0
    %5588 = vmatprep.subr.mxu0 0.0
    %5589 = vmatpush1.msra.mxu0 0.0
    %5590 = vmatprep.subr.mxu0 0.0
    %5591 = vmatpush1.msra.mxu0 0.0
    %5592 = vmatprep.subr.mxu0 0.0
    %5593 = vmatpush1.msra.mxu0 0.0
    %5594 = vmatprep.subr.mxu0 0.0
    %5595 = vmatpush1.msra.mxu0 0.0
    %5596 = vmatprep.subr.mxu0 0.0
    %5597 = vmatpush1.msra.mxu0 0.0
    %5598 = vmatprep.subr.mxu0 0.0
    %5599 = vmatpush1.msra.mxu0 0.0
    %5600 = vmatprep.subr.mxu0 0.0
    %5601 = vmatpush1.msra.mxu0 0.0
    %5602 = vmatprep.subr.mxu0 0.0
    %5603 = vmatpush1.msra.mxu0 0.0
    %5604 = vmatprep.subr.mxu0 0.0
    %5605 = vmatpush1.msra.mxu0 0.0
    %5606 = vmatprep.subr.mxu0 0.0
    %5607 = vmatpush1.msra.mxu0 0.0
    %5608 = vmatprep.subr.mxu0 0.0
    %5609 = vmatpush1.msra.mxu0 0.0
    %5610 = vmatprep.subr.mxu0 0.0
    %5611 = vmatpush1.msra.mxu0 0.0
    %5612 = vmatprep.subr.mxu0 0.0
    %5613 = vmatpush1.msra.mxu0 0.0
    %5614 = vmatprep.subr.mxu0 0.0
    %5615 = vmatpush1.msra.mxu0 0.0
    %5616 = vmatprep.subr.mxu0 0.0
    %5617 = vmatpush1.msra.mxu0 0.0
    %5618 = vmatprep.subr.mxu0 0.0
    %5619 = vmatpush1.msra.mxu0 0.0
    %5620 = vmatprep.mubr.f32.mxu0 0.0
    %5621 = vmatmul.mubr.f32.gmra.mrb[0].mxu0 %v5554
    %v5622 = vpop.f32.mrb[0].mxu0
    %v5623 = vadd.f32 %v5543, %v5622
    %v5624 = vpop.f32.mrb[0].mxu0
    %v5625 = vadd.f32 %v5545, %v5624
    %5626 = vdwg.mxu0
    %v5627 = vadd.f32 %v5623, %v355
    %v5628 = vadd.f32 %v5625, %v359
    %v5629 = vxor.u32 %v5627, 2147483648
    %v5630 = vxor.u32 %v5628, 2147483648
    %v5631 = vmul.f32 %v5629, 1.442695
    %v5632 = vpow.pop %v5631
    %v5633 = vmul.f32 %v5630, 1.442695
    %v5634 = vpow.pop %v5633
    %v5635 = vadd.f32 %v5632, 1.0
    %v5636 = vadd.f32 %v5634, 1.0
    %v5637 = vrcp.pop %v5635
    %v5638 = vmul.f32 1.0, %v5637
    %v5639 = vrcp.pop %v5636
    %v5640 = vmul.f32 1.0, %v5639
    %v5641 = vtanh.pop %v5628
    %v5642 = vmul.f32 %v5638, %v5054
    %5644 = vrot.lane.b32.xlu0 %v5641, 112
    %v5645 = vpop.permute.xlu0 %5644
    %v5647 = vmul.f32 %v5638, %v5645
    %5649 = vrot.lane.b32.xlu0 %v5647, 48
    %v5650 = vpop.permute.xlu0 %5649
    %v5652 = vadd.f32 %v5642, %v5650
    %v5653 = vtanh.pop %v5652
    %5655 = vrot.lane.b32.xlu0 %v5653, 48
    %v5656 = vpop.permute.xlu0 %5655
    %v5658 = vmul.f32 %v5638, %v5656
    %v5659 = vmul.f32 %v5640, %v5656
    %v5660 = vld [vmem:[%s304] sm:$0xff]
    %v5661 = vld [vmem:[%s304 + $0x8] sm:$0xff]
    %v5662 = vld [vmem:[%s304 + $0x10] sm:$0xff]
    %v5663 = vld [vmem:[%s304 + $0x18] sm:$0xff]
    %5664 = vmatprep.subr.mxu0 %v33
    %5665 = vmatpush1.msra.mxu0 %v32
    %5666 = vmatprep.subr.mxu0 %v35
    %5667 = vmatpush1.msra.mxu0 %v34
    %5668 = vmatprep.subr.mxu0 %v37
    %5669 = vmatpush1.msra.mxu0 %v36
    %5670 = vmatprep.subr.mxu0 %v39
    %5671 = vmatpush1.msra.mxu0 %v38
    %5672 = vmatprep.subr.mxu0 %v41
    %5673 = vmatpush1.msra.mxu0 %v40
    %5674 = vmatprep.subr.mxu0 %v43
    %5675 = vmatpush1.msra.mxu0 %v42
    %5676 = vmatprep.subr.mxu0 0.0
    %5677 = vmatpush1.msra.mxu0 0.0
    %5678 = vmatprep.subr.mxu0 0.0
    %5679 = vmatpush1.msra.mxu0 0.0
    %5680 = vmatprep.subr.mxu0 0.0
    %5681 = vmatpush1.msra.mxu0 0.0
    %5682 = vmatprep.subr.mxu0 0.0
    %5683 = vmatpush1.msra.mxu0 0.0
    %5684 = vmatprep.subr.mxu0 0.0
    %5685 = vmatpush1.msra.mxu0 0.0
    %5686 = vmatprep.subr.mxu0 0.0
    %5687 = vmatpush1.msra.mxu0 0.0
    %5688 = vmatprep.subr.mxu0 0.0
    %5689 = vmatpush1.msra.mxu0 0.0
    %5690 = vmatprep.subr.mxu0 0.0
    %5691 = vmatpush1.msra.mxu0 0.0
    %5692 = vmatprep.subr.mxu0 0.0
    %5693 = vmatpush1.msra.mxu0 0.0
    %5694 = vmatprep.subr.mxu0 0.0
    %5695 = vmatpush1.msra.mxu0 0.0
    %5696 = vmatprep.subr.mxu0 0.0
    %5697 = vmatpush1.msra.mxu0 0.0
    %5698 = vmatprep.subr.mxu0 0.0
    %5699 = vmatpush1.msra.mxu0 0.0
    %5700 = vmatprep.subr.mxu0 0.0
    %5701 = vmatpush1.msra.mxu0 0.0
    %5702 = vmatprep.subr.mxu0 0.0
    %5703 = vmatpush1.msra.mxu0 0.0
    %5704 = vmatprep.subr.mxu0 0.0
    %5705 = vmatpush1.msra.mxu0 0.0
    %5706 = vmatprep.subr.mxu0 0.0
    %5707 = vmatpush1.msra.mxu0 0.0
    %5708 = vmatprep.subr.mxu0 0.0
    %5709 = vmatpush1.msra.mxu0 0.0
    %5710 = vmatprep.subr.mxu0 0.0
    %5711 = vmatpush1.msra.mxu0 0.0
    %5712 = vmatprep.subr.mxu0 0.0
    %5713 = vmatpush1.msra.mxu0 0.0
    %5714 = vmatprep.subr.mxu0 0.0
    %5715 = vmatpush1.msra.mxu0 0.0
    %5716 = vmatprep.subr.mxu0 0.0
    %5717 = vmatpush1.msra.mxu0 0.0
    %5718 = vmatprep.subr.mxu0 0.0
    %5719 = vmatpush1.msra.mxu0 0.0
    %5720 = vmatprep.subr.mxu0 0.0
    %5721 = vmatpush1.msra.mxu0 0.0
    %5722 = vmatprep.subr.mxu0 0.0
    %5723 = vmatpush1.msra.mxu0 0.0
    %5724 = vmatprep.subr.mxu0 0.0
    %5725 = vmatpush1.msra.mxu0 0.0
    %5726 = vmatprep.subr.mxu0 0.0
    %5727 = vmatpush1.msra.mxu0 0.0
    %5728 = vmatprep.mubr.f32.mxu0 0.0
    %5729 = vmatmul.mubr.f32.gmra.mrb[0].mxu0 %v5177
    %v5730 = vpop.f32.mrb[0].mxu0
    %v5731 = vadd.f32 0.0, %v5730
    %v5732 = vpop.f32.mrb[0].mxu0
    %v5733 = vadd.f32 0.0, %v5732
    %5734 = vdwg.mxu0
    %v5735 = vadd.f32 %v5660, %v5731
    %v5736 = vadd.f32 %v5661, %v5733
    %v5737 = vxor.u32 %v5735, 2147483648
    %v5738 = vxor.u32 %v5736, 2147483648
    %v5739 = vmul.f32 %v5737, 1.442695
    %v5740 = vpow.pop %v5739
    %v5741 = vmul.f32 %v5738, 1.442695
    %v5742 = vpow.pop %v5741
    %v5743 = vadd.f32 %v5740, 1.0
    %v5744 = vadd.f32 %v5742, 1.0
    %v5745 = vrcp.pop %v5743
    %v5746 = vmul.f32 1.0, %v5745
    %v5747 = vrcp.pop %v5744
    %v5748 = vmul.f32 1.0, %v5747
    %v5749 = vtanh.pop %v5736
    %v5750 = vmul.f32 %v5746, %v5162
    %5752 = vrot.lane.b32.xlu0 %v5749, 112
    %v5753 = vpop.permute.xlu0 %5752
    %v5755 = vmul.f32 %v5746, %v5753
    %5757 = vrot.lane.b32.xlu0 %v5755, 48
    %v5758 = vpop.permute.xlu0 %5757
    %v5760 = vadd.f32 %v5750, %v5758
    %v5761 = vtanh.pop %v5760
    %5763 = vrot.lane.b32.xlu0 %v5761, 48
    %v5764 = vpop.permute.xlu0 %5763
    %v5766 = vmul.f32 %v5746, %v5764
    %v5767 = vmul.f32 %v5748, %v5764
    %5770 = vrot.lane.b32.xlu0 %v5766, 32
    %v5771 = vpop.permute.xlu0 %5770
    %5772 = vrot.lane.b32.xlu0 %v5767, 32
    %v5773 = vpop.permute.xlu0 %5772
    %v5774 = vsel %vm480, %v5771, %v5773
    %v5775 = vsel %vm366, %v5774, 0
    %5777 = vmatprep.subr.mxu0 %v57
    %5778 = vmatpush1.msra.mxu0 %v56
    %5779 = vmatprep.subr.mxu0 %v59
    %5780 = vmatpush1.msra.mxu0 %v58
    %5781 = vmatprep.subr.mxu0 %v61
    %5782 = vmatpush1.msra.mxu0 %v60
    %5783 = vmatprep.subr.mxu0 %v63
    %5784 = vmatpush1.msra.mxu0 %v62
    %5785 = vmatprep.subr.mxu0 %v65
    %5786 = vmatpush1.msra.mxu0 %v64
    %5787 = vmatprep.subr.mxu0 %v67
    %5788 = vmatpush1.msra.mxu0 %v66
    %5789 = vmatprep.subr.mxu0 0.0
    %5790 = vmatpush1.msra.mxu0 0.0
    %5791 = vmatprep.subr.mxu0 0.0
    %5792 = vmatpush1.msra.mxu0 0.0
    %5793 = vmatprep.subr.mxu0 0.0
    %5794 = vmatpush1.msra.mxu0 0.0
    %5795 = vmatprep.subr.mxu0 0.0
    %5796 = vmatpush1.msra.mxu0 0.0
    %5797 = vmatprep.subr.mxu0 0.0
    %5798 = vmatpush1.msra.mxu0 0.0
    %5799 = vmatprep.subr.mxu0 0.0
    %5800 = vmatpush1.msra.mxu0 0.0
    %5801 = vmatprep.subr.mxu0 0.0
    %5802 = vmatpush1.msra.mxu0 0.0
    %5803 = vmatprep.subr.mxu0 0.0
    %5804 = vmatpush1.msra.mxu0 0.0
    %5805 = vmatprep.subr.mxu0 0.0
    %5806 = vmatpush1.msra.mxu0 0.0
    %5807 = vmatprep.subr.mxu0 0.0
    %5808 = vmatpush1.msra.mxu0 0.0
    %5809 = vmatprep.subr.mxu0 0.0
    %5810 = vmatpush1.msra.mxu0 0.0
    %5811 = vmatprep.subr.mxu0 0.0
    %5812 = vmatpush1.msra.mxu0 0.0
    %5813 = vmatprep.subr.mxu0 0.0
    %5814 = vmatpush1.msra.mxu0 0.0
    %5815 = vmatprep.subr.mxu0 0.0
    %5816 = vmatpush1.msra.mxu0 0.0
    %5817 = vmatprep.subr.mxu0 0.0
    %5818 = vmatpush1.msra.mxu0 0.0
    %5819 = vmatprep.subr.mxu0 0.0
    %5820 = vmatpush1.msra.mxu0 0.0
    %5821 = vmatprep.subr.mxu0 0.0
    %5822 = vmatpush1.msra.mxu0 0.0
    %5823 = vmatprep.subr.mxu0 0.0
    %5824 = vmatpush1.msra.mxu0 0.0
    %5825 = vmatprep.subr.mxu0 0.0
    %5826 = vmatpush1.msra.mxu0 0.0
    %5827 = vmatprep.subr.mxu0 0.0
    %5828 = vmatpush1.msra.mxu0 0.0
    %5829 = vmatprep.subr.mxu0 0.0
    %5830 = vmatpush1.msra.mxu0 0.0
    %5831 = vmatprep.subr.mxu0 0.0
    %5832 = vmatpush1.msra.mxu0 0.0
    %5833 = vmatprep.subr.mxu0 0.0
    %5834 = vmatpush1.msra.mxu0 0.0
    %5835 = vmatprep.subr.mxu0 0.0
    %5836 = vmatpush1.msra.mxu0 0.0
    %5837 = vmatprep.subr.mxu0 0.0
    %5838 = vmatpush1.msra.mxu0 0.0
    %5839 = vmatprep.subr.mxu0 0.0
    %5840 = vmatpush1.msra.mxu0 0.0
    %5841 = vmatprep.mubr.f32.mxu0 0.0
    %5842 = vmatmul.mubr.f32.gmra.mrb[0].mxu0 %v5775
    %v5843 = vpop.f32.mrb[0].mxu0
    %v5844 = vadd.f32 0.0, %v5843
    %v5845 = vpop.f32.mrb[0].mxu0
    %v5846 = vadd.f32 0.0, %v5845
    %5847 = vdwg.mxu0
    %5850 = vrot.lane.b32.xlu0 %v5361, 32
    %v5851 = vpop.permute.xlu0 %5850
    %5852 = vrot.lane.b32.xlu0 %v5362, 32
    %v5853 = vpop.permute.xlu0 %5852
    %v5854 = vsel %vm480, %v5851, %v5853
    %v5855 = vsel %vm366, %v5854, 0
    %5857 = vmatprep.subr.mxu0 %v45
    %5858 = vmatpush1.msra.mxu0 %v44
    %5859 = vmatprep.subr.mxu0 %v47
    %5860 = vmatpush1.msra.mxu0 %v46
    %5861 = vmatprep.subr.mxu0 %v49
    %5862 = vmatpush1.msra.mxu0 %v48
    %5863 = vmatprep.subr.mxu0 %v51
    %5864 = vmatpush1.msra.mxu0 %v50
    %5865 = vmatprep.subr.mxu0 %v53
    %5866 = vmatpush1.msra.mxu0 %v52
    %5867 = vmatprep.subr.mxu0 %v55
    %5868 = vmatpush1.msra.mxu0 %v54
    %5869 = vmatprep.subr.mxu0 0.0
    %5870 = vmatpush1.msra.mxu0 0.0
    %5871 = vmatprep.subr.mxu0 0.0
    %5872 = vmatpush1.msra.mxu0 0.0
    %5873 = vmatprep.subr.mxu0 0.0
    %5874 = vmatpush1.msra.mxu0 0.0
    %5875 = vmatprep.subr.mxu0 0.0
    %5876 = vmatpush1.msra.mxu0 0.0
    %5877 = vmatprep.subr.mxu0 0.0
    %5878 = vmatpush1.msra.mxu0 0.0
    %5879 = vmatprep.subr.mxu0 0.0
    %5880 = vmatpush1.msra.mxu0 0.0
    %5881 = vmatprep.subr.mxu0 0.0
    %5882 = vmatpush1.msra.mxu0 0.0
    %5883 = vmatprep.subr.mxu0 0.0
    %5884 = vmatpush1.msra.mxu0 0.0
    %5885 = vmatprep.subr.mxu0 0.0
    %5886 = vmatpush1.msra.mxu0 0.0
    %5887 = vmatprep.subr.mxu0 0.0
    %5888 = vmatpush1.msra.mxu0 0.0
    %5889 = vmatprep.subr.mxu0 0.0
    %5890 = vmatpush1.msra.mxu0 0.0
    %5891 = vmatprep.subr.mxu0 0.0
    %5892 = vmatpush1.msra.mxu0 0.0
    %5893 = vmatprep.subr.mxu0 0.0
    %5894 = vmatpush1.msra.mxu0 0.0
    %5895 = vmatprep.subr.mxu0 0.0
    %5896 = vmatpush1.msra.mxu0 0.0
    %5897 = vmatprep.subr.mxu0 0.0
    %5898 = vmatpush1.msra.mxu0 0.0
    %5899 = vmatprep.subr.mxu0 0.0
    %5900 = vmatpush1.msra.mxu0 0.0
    %5901 = vmatprep.subr.mxu0 0.0
    %5902 = vmatpush1.msra.mxu0 0.0
    %5903 = vmatprep.subr.mxu0 0.0
    %5904 = vmatpush1.msra.mxu0 0.0
    %5905 = vmatprep.subr.mxu0 0.0
    %5906 = vmatpush1.msra.mxu0 0.0
    %5907 = vmatprep.subr.mxu0 0.0
    %5908 = vmatpush1.msra.mxu0 0.0
    %5909 = vmatprep.subr.mxu0 0.0
    %5910 = vmatpush1.msra.mxu0 0.0
    %5911 = vmatprep.subr.mxu0 0.0
    %5912 = vmatpush1.msra.mxu0 0.0
    %5913 = vmatprep.subr.mxu0 0.0
    %5914 = vmatpush1.msra.mxu0 0.0
    %5915 = vmatprep.subr.mxu0 0.0
    %5916 = vmatpush1.msra.mxu0 0.0
    %5917 = vmatprep.subr.mxu0 0.0
    %5918 = vmatpush1.msra.mxu0 0.0
    %5919 = vmatprep.subr.mxu0 0.0
    %5920 = vmatpush1.msra.mxu0 0.0
    %5921 = vmatprep.mubr.f32.mxu0 0.0
    %5922 = vmatmul.mubr.f32.gmra.mrb[0].mxu0 %v5855
    %v5923 = vpop.f32.mrb[0].mxu0
    %v5924 = vadd.f32 %v5844, %v5923
    %v5925 = vpop.f32.mrb[0].mxu0
    %v5926 = vadd.f32 %v5846, %v5925
    %5927 = vdwg.mxu0
    %v5928 = vadd.f32 %v5924, %v355
    %v5929 = vadd.f32 %v5926, %v359
    %v5930 = vxor.u32 %v5928, 2147483648
    %v5931 = vxor.u32 %v5929, 2147483648
    %v5932 = vmul.f32 %v5930, 1.442695
    %v5933 = vpow.pop %v5932
    %v5934 = vmul.f32 %v5931, 1.442695
    %v5935 = vpow.pop %v5934
    %v5936 = vadd.f32 %v5933, 1.0
    %v5937 = vadd.f32 %v5935, 1.0
    %v5938 = vrcp.pop %v5936
    %v5939 = vmul.f32 1.0, %v5938
    %v5940 = vrcp.pop %v5937
    %v5941 = vmul.f32 1.0, %v5940
    %v5942 = vtanh.pop %v5929
    %v5943 = vmul.f32 %v5939, %v5355
    %5945 = vrot.lane.b32.xlu0 %v5942, 112
    %v5946 = vpop.permute.xlu0 %5945
    %v5948 = vmul.f32 %v5939, %v5946
    %5950 = vrot.lane.b32.xlu0 %v5948, 48
    %v5951 = vpop.permute.xlu0 %5950
    %v5953 = vadd.f32 %v5943, %v5951
    %v5954 = vtanh.pop %v5953
    %5956 = vrot.lane.b32.xlu0 %v5954, 48
    %v5957 = vpop.permute.xlu0 %5956
    %v5959 = vmul.f32 %v5939, %v5957
    %v5960 = vmul.f32 %v5941, %v5957
    %5961 = vmatprep.subr.mxu0 %v33
    %5962 = vmatpush1.msra.mxu0 %v32
    %5963 = vmatprep.subr.mxu0 %v35
    %5964 = vmatpush1.msra.mxu0 %v34
    %5965 = vmatprep.subr.mxu0 %v37
    %5966 = vmatpush1.msra.mxu0 %v36
    %5967 = vmatprep.subr.mxu0 %v39
    %5968 = vmatpush1.msra.mxu0 %v38
    %5969 = vmatprep.subr.mxu0 %v41
    %5970 = vmatpush1.msra.mxu0 %v40
    %5971 = vmatprep.subr.mxu0 %v43
    %5972 = vmatpush1.msra.mxu0 %v42
    %5973 = vmatprep.subr.mxu0 0.0
    %5974 = vmatpush1.msra.mxu0 0.0
    %5975 = vmatprep.subr.mxu0 0.0
    %5976 = vmatpush1.msra.mxu0 0.0
    %5977 = vmatprep.subr.mxu0 0.0
    %5978 = vmatpush1.msra.mxu0 0.0
    %5979 = vmatprep.subr.mxu0 0.0
    %5980 = vmatpush1.msra.mxu0 0.0
    %5981 = vmatprep.subr.mxu0 0.0
    %5982 = vmatpush1.msra.mxu0 0.0
    %5983 = vmatprep.subr.mxu0 0.0
    %5984 = vmatpush1.msra.mxu0 0.0
    %5985 = vmatprep.subr.mxu0 0.0
    %5986 = vmatpush1.msra.mxu0 0.0
    %5987 = vmatprep.subr.mxu0 0.0
    %5988 = vmatpush1.msra.mxu0 0.0
    %5989 = vmatprep.subr.mxu0 0.0
    %5990 = vmatpush1.msra.mxu0 0.0
    %5991 = vmatprep.subr.mxu0 0.0
    %5992 = vmatpush1.msra.mxu0 0.0
    %5993 = vmatprep.subr.mxu0 0.0
    %5994 = vmatpush1.msra.mxu0 0.0
    %5995 = vmatprep.subr.mxu0 0.0
    %5996 = vmatpush1.msra.mxu0 0.0
    %5997 = vmatprep.subr.mxu0 0.0
    %5998 = vmatpush1.msra.mxu0 0.0
    %5999 = vmatprep.subr.mxu0 0.0
    %6000 = vmatpush1.msra.mxu0 0.0
    %6001 = vmatprep.subr.mxu0 0.0
    %6002 = vmatpush1.msra.mxu0 0.0
    %6003 = vmatprep.subr.mxu0 0.0
    %6004 = vmatpush1.msra.mxu0 0.0
    %6005 = vmatprep.subr.mxu0 0.0
    %6006 = vmatpush1.msra.mxu0 0.0
    %6007 = vmatprep.subr.mxu0 0.0
    %6008 = vmatpush1.msra.mxu0 0.0
    %6009 = vmatprep.subr.mxu0 0.0
    %6010 = vmatpush1.msra.mxu0 0.0
    %6011 = vmatprep.subr.mxu0 0.0
    %6012 = vmatpush1.msra.mxu0 0.0
    %6013 = vmatprep.subr.mxu0 0.0
    %6014 = vmatpush1.msra.mxu0 0.0
    %6015 = vmatprep.subr.mxu0 0.0
    %6016 = vmatpush1.msra.mxu0 0.0
    %6017 = vmatprep.subr.mxu0 0.0
    %6018 = vmatpush1.msra.mxu0 0.0
    %6019 = vmatprep.subr.mxu0 0.0
    %6020 = vmatpush1.msra.mxu0 0.0
    %6021 = vmatprep.subr.mxu0 0.0
    %6022 = vmatpush1.msra.mxu0 0.0
    %6023 = vmatprep.subr.mxu0 0.0
    %6024 = vmatpush1.msra.mxu0 0.0
    %6025 = vmatprep.mubr.f32.mxu0 0.0
    %6026 = vmatmul.mubr.f32.gmra.mrb[0].mxu0 %v5474
    %v6027 = vpop.f32.mrb[0].mxu0
    %v6028 = vadd.f32 0.0, %v6027
    %v6029 = vpop.f32.mrb[0].mxu0
    %v6030 = vadd.f32 0.0, %v6029
    %6031 = vdwg.mxu0
    %v6032 = vadd.f32 %v5662, %v6028
    %v6033 = vadd.f32 %v5663, %v6030
    %v6034 = vxor.u32 %v6032, 2147483648
    %v6035 = vxor.u32 %v6033, 2147483648
    %v6036 = vmul.f32 %v6034, 1.442695
    %v6037 = vpow.pop %v6036
    %v6038 = vmul.f32 %v6035, 1.442695
    %v6039 = vpow.pop %v6038
    %v6040 = vadd.f32 %v6037, 1.0
    %v6041 = vadd.f32 %v6039, 1.0
    %v6042 = vrcp.pop %v6040
    %v6043 = vmul.f32 1.0, %v6042
    %v6044 = vrcp.pop %v6041
    %v6045 = vmul.f32 1.0, %v6044
    %v6046 = vtanh.pop %v6033
    %v6047 = vmul.f32 %v6043, %v5459
    %6049 = vrot.lane.b32.xlu0 %v6046, 112
    %v6050 = vpop.permute.xlu0 %6049
    %v6052 = vmul.f32 %v6043, %v6050
    %6054 = vrot.lane.b32.xlu0 %v6052, 48
    %v6055 = vpop.permute.xlu0 %6054
    %v6057 = vadd.f32 %v6047, %v6055
    %v6058 = vtanh.pop %v6057
    %6060 = vrot.lane.b32.xlu0 %v6058, 48
    %v6061 = vpop.permute.xlu0 %6060
    %v6063 = vmul.f32 %v6043, %v6061
    %v6064 = vmul.f32 %v6045, %v6061
    %6067 = vrot.lane.b32.xlu0 %v6063, 32
    %v6068 = vpop.permute.xlu0 %6067
    %6069 = vrot.lane.b32.xlu0 %v6064, 32
    %v6070 = vpop.permute.xlu0 %6069
    %v6071 = vsel %vm480, %v6068, %v6070
    %v6072 = vsel %vm366, %v6071, 0
    %6074 = vmatprep.subr.mxu0 %v57
    %6075 = vmatpush1.msra.mxu0 %v56
    %6076 = vmatprep.subr.mxu0 %v59
    %6077 = vmatpush1.msra.mxu0 %v58
    %6078 = vmatprep.subr.mxu0 %v61
    %6079 = vmatpush1.msra.mxu0 %v60
    %6080 = vmatprep.subr.mxu0 %v63
    %6081 = vmatpush1.msra.mxu0 %v62
    %6082 = vmatprep.subr.mxu0 %v65
    %6083 = vmatpush1.msra.mxu0 %v64
    %6084 = vmatprep.subr.mxu0 %v67
    %6085 = vmatpush1.msra.mxu0 %v66
    %6086 = vmatprep.subr.mxu0 0.0
    %6087 = vmatpush1.msra.mxu0 0.0
    %6088 = vmatprep.subr.mxu0 0.0
    %6089 = vmatpush1.msra.mxu0 0.0
    %6090 = vmatprep.subr.mxu0 0.0
    %6091 = vmatpush1.msra.mxu0 0.0
    %6092 = vmatprep.subr.mxu0 0.0
    %6093 = vmatpush1.msra.mxu0 0.0
    %6094 = vmatprep.subr.mxu0 0.0
    %6095 = vmatpush1.msra.mxu0 0.0
    %6096 = vmatprep.subr.mxu0 0.0
    %6097 = vmatpush1.msra.mxu0 0.0
    %6098 = vmatprep.subr.mxu0 0.0
    %6099 = vmatpush1.msra.mxu0 0.0
    %6100 = vmatprep.subr.mxu0 0.0
    %6101 = vmatpush1.msra.mxu0 0.0
    %6102 = vmatprep.subr.mxu0 0.0
    %6103 = vmatpush1.msra.mxu0 0.0
    %6104 = vmatprep.subr.mxu0 0.0
    %6105 = vmatpush1.msra.mxu0 0.0
    %6106 = vmatprep.subr.mxu0 0.0
    %6107 = vmatpush1.msra.mxu0 0.0
    %6108 = vmatprep.subr.mxu0 0.0
    %6109 = vmatpush1.msra.mxu0 0.0
    %6110 = vmatprep.subr.mxu0 0.0
    %6111 = vmatpush1.msra.mxu0 0.0
    %6112 = vmatprep.subr.mxu0 0.0
    %6113 = vmatpush1.msra.mxu0 0.0
    %6114 = vmatprep.subr.mxu0 0.0
    %6115 = vmatpush1.msra.mxu0 0.0
    %6116 = vmatprep.subr.mxu0 0.0
    %6117 = vmatpush1.msra.mxu0 0.0
    %6118 = vmatprep.subr.mxu0 0.0
    %6119 = vmatpush1.msra.mxu0 0.0
    %6120 = vmatprep.subr.mxu0 0.0
    %6121 = vmatpush1.msra.mxu0 0.0
    %6122 = vmatprep.subr.mxu0 0.0
    %6123 = vmatpush1.msra.mxu0 0.0
    %6124 = vmatprep.subr.mxu0 0.0
    %6125 = vmatpush1.msra.mxu0 0.0
    %6126 = vmatprep.subr.mxu0 0.0
    %6127 = vmatpush1.msra.mxu0 0.0
    %6128 = vmatprep.subr.mxu0 0.0
    %6129 = vmatpush1.msra.mxu0 0.0
    %6130 = vmatprep.subr.mxu0 0.0
    %6131 = vmatpush1.msra.mxu0 0.0
    %6132 = vmatprep.subr.mxu0 0.0
    %6133 = vmatpush1.msra.mxu0 0.0
    %6134 = vmatprep.subr.mxu0 0.0
    %6135 = vmatpush1.msra.mxu0 0.0
    %6136 = vmatprep.subr.mxu0 0.0
    %6137 = vmatpush1.msra.mxu0 0.0
    %6138 = vmatprep.mubr.f32.mxu0 0.0
    %6139 = vmatmul.mubr.f32.gmra.mrb[0].mxu0 %v6072
    %v6140 = vpop.f32.mrb[0].mxu0
    %v6141 = vadd.f32 0.0, %v6140
    %v6142 = vpop.f32.mrb[0].mxu0
    %v6143 = vadd.f32 0.0, %v6142
    %6144 = vdwg.mxu0
    %6147 = vrot.lane.b32.xlu0 %v5658, 32
    %v6148 = vpop.permute.xlu0 %6147
    %6149 = vrot.lane.b32.xlu0 %v5659, 32
    %v6150 = vpop.permute.xlu0 %6149
    %v6151 = vsel %vm480, %v6148, %v6150
    %v6152 = vsel %vm366, %v6151, 0
    %6154 = vmatprep.subr.mxu0 %v45
    %6155 = vmatpush1.msra.mxu0 %v44
    %6156 = vmatprep.subr.mxu0 %v47
    %6157 = vmatpush1.msra.mxu0 %v46
    %6158 = vmatprep.subr.mxu0 %v49
    %6159 = vmatpush1.msra.mxu0 %v48
    %6160 = vmatprep.subr.mxu0 %v51
    %6161 = vmatpush1.msra.mxu0 %v50
    %6162 = vmatprep.subr.mxu0 %v53
    %6163 = vmatpush1.msra.mxu0 %v52
    %6164 = vmatprep.subr.mxu0 %v55
    %6165 = vmatpush1.msra.mxu0 %v54
    %6166 = vmatprep.subr.mxu0 0.0
    %6167 = vmatpush1.msra.mxu0 0.0
    %6168 = vmatprep.subr.mxu0 0.0
    %6169 = vmatpush1.msra.mxu0 0.0
    %6170 = vmatprep.subr.mxu0 0.0
    %6171 = vmatpush1.msra.mxu0 0.0
    %6172 = vmatprep.subr.mxu0 0.0
    %6173 = vmatpush1.msra.mxu0 0.0
    %6174 = vmatprep.subr.mxu0 0.0
    %6175 = vmatpush1.msra.mxu0 0.0
    %6176 = vmatprep.subr.mxu0 0.0
    %6177 = vmatpush1.msra.mxu0 0.0
    %6178 = vmatprep.subr.mxu0 0.0
    %6179 = vmatpush1.msra.mxu0 0.0
    %6180 = vmatprep.subr.mxu0 0.0
    %6181 = vmatpush1.msra.mxu0 0.0
    %6182 = vmatprep.subr.mxu0 0.0
    %6183 = vmatpush1.msra.mxu0 0.0
    %6184 = vmatprep.subr.mxu0 0.0
    %6185 = vmatpush1.msra.mxu0 0.0
    %6186 = vmatprep.subr.mxu0 0.0
    %6187 = vmatpush1.msra.mxu0 0.0
    %6188 = vmatprep.subr.mxu0 0.0
    %6189 = vmatpush1.msra.mxu0 0.0
    %6190 = vmatprep.subr.mxu0 0.0
    %6191 = vmatpush1.msra.mxu0 0.0
    %6192 = vmatprep.subr.mxu0 0.0
    %6193 = vmatpush1.msra.mxu0 0.0
    %6194 = vmatprep.subr.mxu0 0.0
    %6195 = vmatpush1.msra.mxu0 0.0
    %6196 = vmatprep.subr.mxu0 0.0
    %6197 = vmatpush1.msra.mxu0 0.0
    %6198 = vmatprep.subr.mxu0 0.0
    %6199 = vmatpush1.msra.mxu0 0.0
    %6200 = vmatprep.subr.mxu0 0.0
    %6201 = vmatpush1.msra.mxu0 0.0
    %6202 = vmatprep.subr.mxu0 0.0
    %6203 = vmatpush1.msra.mxu0 0.0
    %6204 = vmatprep.subr.mxu0 0.0
    %6205 = vmatpush1.msra.mxu0 0.0
    %6206 = vmatprep.subr.mxu0 0.0
    %6207 = vmatpush1.msra.mxu0 0.0
    %6208 = vmatprep.subr.mxu0 0.0
    %6209 = vmatpush1.msra.mxu0 0.0
    %6210 = vmatprep.subr.mxu0 0.0
    %6211 = vmatpush1.msra.mxu0 0.0
    %6212 = vmatprep.subr.mxu0 0.0
    %6213 = vmatpush1.msra.mxu0 0.0
    %6214 = vmatprep.subr.mxu0 0.0
    %6215 = vmatpush1.msra.mxu0 0.0
    %6216 = vmatprep.subr.mxu0 0.0
    %6217 = vmatpush1.msra.mxu0 0.0
    %6218 = vmatprep.mubr.f32.mxu0 0.0
    %6219 = vmatmul.mubr.f32.gmra.mrb[0].mxu0 %v6152
    %v6220 = vpop.f32.mrb[0].mxu0
    %v6221 = vadd.f32 %v6141, %v6220
    %v6222 = vpop.f32.mrb[0].mxu0
    %v6223 = vadd.f32 %v6143, %v6222
    %6224 = vdwg.mxu0
    %v6225 = vadd.f32 %v6221, %v355
    %v6226 = vadd.f32 %v6223, %v359
    %v6227 = vxor.u32 %v6225, 2147483648
    %v6228 = vxor.u32 %v6226, 2147483648
    %v6229 = vmul.f32 %v6227, 1.442695
    %v6230 = vpow.pop %v6229
    %v6231 = vmul.f32 %v6228, 1.442695
    %v6232 = vpow.pop %v6231
    %v6233 = vadd.f32 %v6230, 1.0
    %v6234 = vadd.f32 %v6232, 1.0
    %v6235 = vrcp.pop %v6233
    %v6236 = vmul.f32 1.0, %v6235
    %v6237 = vrcp.pop %v6234
    %v6238 = vmul.f32 1.0, %v6237
    %v6239 = vtanh.pop %v6226
    %v6240 = vmul.f32 %v6236, %v5652
    %6242 = vrot.lane.b32.xlu0 %v6239, 112
    %v6243 = vpop.permute.xlu0 %6242
    %v6245 = vmul.f32 %v6236, %v6243
    %6247 = vrot.lane.b32.xlu0 %v6245, 48
    %v6248 = vpop.permute.xlu0 %6247
    %v6250 = vadd.f32 %v6240, %v6248
    %v6251 = vtanh.pop %v6250
    %6253 = vrot.lane.b32.xlu0 %v6251, 48
    %v6254 = vpop.permute.xlu0 %6253
    %v6256 = vmul.f32 %v6236, %v6254
    %v6257 = vmul.f32 %v6238, %v6254
    %v6258 = vld [vmem:[%s325] sm:$0xff]
    %v6259 = vld [vmem:[%s325 + $0x8] sm:$0xff]
    %v6260 = vld [vmem:[%s325 + $0x10] sm:$0xff]
    %v6261 = vld [vmem:[%s325 + $0x18] sm:$0xff]
    %6262 = vmatprep.subr.mxu0 %v33
    %6263 = vmatpush1.msra.mxu0 %v32
    %6264 = vmatprep.subr.mxu0 %v35
    %6265 = vmatpush1.msra.mxu0 %v34
    %6266 = vmatprep.subr.mxu0 %v37
    %6267 = vmatpush1.msra.mxu0 %v36
    %6268 = vmatprep.subr.mxu0 %v39
    %6269 = vmatpush1.msra.mxu0 %v38
    %6270 = vmatprep.subr.mxu0 %v41
    %6271 = vmatpush1.msra.mxu0 %v40
    %6272 = vmatprep.subr.mxu0 %v43
    %6273 = vmatpush1.msra.mxu0 %v42
    %6274 = vmatprep.subr.mxu0 0.0
    %6275 = vmatpush1.msra.mxu0 0.0
    %6276 = vmatprep.subr.mxu0 0.0
    %6277 = vmatpush1.msra.mxu0 0.0
    %6278 = vmatprep.subr.mxu0 0.0
    %6279 = vmatpush1.msra.mxu0 0.0
    %6280 = vmatprep.subr.mxu0 0.0
    %6281 = vmatpush1.msra.mxu0 0.0
    %6282 = vmatprep.subr.mxu0 0.0
    %6283 = vmatpush1.msra.mxu0 0.0
    %6284 = vmatprep.subr.mxu0 0.0
    %6285 = vmatpush1.msra.mxu0 0.0
    %6286 = vmatprep.subr.mxu0 0.0
    %6287 = vmatpush1.msra.mxu0 0.0
    %6288 = vmatprep.subr.mxu0 0.0
    %6289 = vmatpush1.msra.mxu0 0.0
    %6290 = vmatprep.subr.mxu0 0.0
    %6291 = vmatpush1.msra.mxu0 0.0
    %6292 = vmatprep.subr.mxu0 0.0
    %6293 = vmatpush1.msra.mxu0 0.0
    %6294 = vmatprep.subr.mxu0 0.0
    %6295 = vmatpush1.msra.mxu0 0.0
    %6296 = vmatprep.subr.mxu0 0.0
    %6297 = vmatpush1.msra.mxu0 0.0
    %6298 = vmatprep.subr.mxu0 0.0
    %6299 = vmatpush1.msra.mxu0 0.0
    %6300 = vmatprep.subr.mxu0 0.0
    %6301 = vmatpush1.msra.mxu0 0.0
    %6302 = vmatprep.subr.mxu0 0.0
    %6303 = vmatpush1.msra.mxu0 0.0
    %6304 = vmatprep.subr.mxu0 0.0
    %6305 = vmatpush1.msra.mxu0 0.0
    %6306 = vmatprep.subr.mxu0 0.0
    %6307 = vmatpush1.msra.mxu0 0.0
    %6308 = vmatprep.subr.mxu0 0.0
    %6309 = vmatpush1.msra.mxu0 0.0
    %6310 = vmatprep.subr.mxu0 0.0
    %6311 = vmatpush1.msra.mxu0 0.0
    %6312 = vmatprep.subr.mxu0 0.0
    %6313 = vmatpush1.msra.mxu0 0.0
    %6314 = vmatprep.subr.mxu0 0.0
    %6315 = vmatpush1.msra.mxu0 0.0
    %6316 = vmatprep.subr.mxu0 0.0
    %6317 = vmatpush1.msra.mxu0 0.0
    %6318 = vmatprep.subr.mxu0 0.0
    %6319 = vmatpush1.msra.mxu0 0.0
    %6320 = vmatprep.subr.mxu0 0.0
    %6321 = vmatpush1.msra.mxu0 0.0
    %6322 = vmatprep.subr.mxu0 0.0
    %6323 = vmatpush1.msra.mxu0 0.0
    %6324 = vmatprep.subr.mxu0 0.0
    %6325 = vmatpush1.msra.mxu0 0.0
    %6326 = vmatprep.mubr.f32.mxu0 0.0
    %6327 = vmatmul.mubr.f32.gmra.mrb[0].mxu0 %v5775
    %v6328 = vpop.f32.mrb[0].mxu0
    %v6329 = vadd.f32 0.0, %v6328
    %v6330 = vpop.f32.mrb[0].mxu0
    %v6331 = vadd.f32 0.0, %v6330
    %6332 = vdwg.mxu0
    %v6333 = vadd.f32 %v6258, %v6329
    %v6334 = vadd.f32 %v6259, %v6331
    %v6335 = vxor.u32 %v6333, 2147483648
    %v6336 = vxor.u32 %v6334, 2147483648
    %v6337 = vmul.f32 %v6335, 1.442695
    %v6338 = vpow.pop %v6337
    %v6339 = vmul.f32 %v6336, 1.442695
    %v6340 = vpow.pop %v6339
    %v6341 = vadd.f32 %v6338, 1.0
    %v6342 = vadd.f32 %v6340, 1.0
    %v6343 = vrcp.pop %v6341
    %v6344 = vmul.f32 1.0, %v6343
    %v6345 = vrcp.pop %v6342
    %v6346 = vmul.f32 1.0, %v6345
    %v6347 = vtanh.pop %v6334
    %v6348 = vmul.f32 %v6344, %v5760
    %6350 = vrot.lane.b32.xlu0 %v6347, 112
    %v6351 = vpop.permute.xlu0 %6350
    %v6353 = vmul.f32 %v6344, %v6351
    %6355 = vrot.lane.b32.xlu0 %v6353, 48
    %v6356 = vpop.permute.xlu0 %6355
    %v6358 = vadd.f32 %v6348, %v6356
    %v6359 = vtanh.pop %v6358
    %6361 = vrot.lane.b32.xlu0 %v6359, 48
    %v6362 = vpop.permute.xlu0 %6361
    %v6364 = vmul.f32 %v6344, %v6362
    %v6365 = vmul.f32 %v6346, %v6362
    %6368 = vrot.lane.b32.xlu0 %v6364, 32
    %v6369 = vpop.permute.xlu0 %6368
    %6370 = vrot.lane.b32.xlu0 %v6365, 32
    %v6371 = vpop.permute.xlu0 %6370
    %v6372 = vsel %vm480, %v6369, %v6371
    %v6373 = vsel %vm366, %v6372, 0
    %6375 = vmatprep.subr.mxu0 %v57
    %6376 = vmatpush1.msra.mxu0 %v56
    %6377 = vmatprep.subr.mxu0 %v59
    %6378 = vmatpush1.msra.mxu0 %v58
    %6379 = vmatprep.subr.mxu0 %v61
    %6380 = vmatpush1.msra.mxu0 %v60
    %6381 = vmatprep.subr.mxu0 %v63
    %6382 = vmatpush1.msra.mxu0 %v62
    %6383 = vmatprep.subr.mxu0 %v65
    %6384 = vmatpush1.msra.mxu0 %v64
    %6385 = vmatprep.subr.mxu0 %v67
    %6386 = vmatpush1.msra.mxu0 %v66
    %6387 = vmatprep.subr.mxu0 0.0
    %6388 = vmatpush1.msra.mxu0 0.0
    %6389 = vmatprep.subr.mxu0 0.0
    %6390 = vmatpush1.msra.mxu0 0.0
    %6391 = vmatprep.subr.mxu0 0.0
    %6392 = vmatpush1.msra.mxu0 0.0
    %6393 = vmatprep.subr.mxu0 0.0
    %6394 = vmatpush1.msra.mxu0 0.0
    %6395 = vmatprep.subr.mxu0 0.0
    %6396 = vmatpush1.msra.mxu0 0.0
    %6397 = vmatprep.subr.mxu0 0.0
    %6398 = vmatpush1.msra.mxu0 0.0
    %6399 = vmatprep.subr.mxu0 0.0
    %6400 = vmatpush1.msra.mxu0 0.0
    %6401 = vmatprep.subr.mxu0 0.0
    %6402 = vmatpush1.msra.mxu0 0.0
    %6403 = vmatprep.subr.mxu0 0.0
    %6404 = vmatpush1.msra.mxu0 0.0
    %6405 = vmatprep.subr.mxu0 0.0
    %6406 = vmatpush1.msra.mxu0 0.0
    %6407 = vmatprep.subr.mxu0 0.0
    %6408 = vmatpush1.msra.mxu0 0.0
    %6409 = vmatprep.subr.mxu0 0.0
    %6410 = vmatpush1.msra.mxu0 0.0
    %6411 = vmatprep.subr.mxu0 0.0
    %6412 = vmatpush1.msra.mxu0 0.0
    %6413 = vmatprep.subr.mxu0 0.0
    %6414 = vmatpush1.msra.mxu0 0.0
    %6415 = vmatprep.subr.mxu0 0.0
    %6416 = vmatpush1.msra.mxu0 0.0
    %6417 = vmatprep.subr.mxu0 0.0
    %6418 = vmatpush1.msra.mxu0 0.0
    %6419 = vmatprep.subr.mxu0 0.0
    %6420 = vmatpush1.msra.mxu0 0.0
    %6421 = vmatprep.subr.mxu0 0.0
    %6422 = vmatpush1.msra.mxu0 0.0
    %6423 = vmatprep.subr.mxu0 0.0
    %6424 = vmatpush1.msra.mxu0 0.0
    %6425 = vmatprep.subr.mxu0 0.0
    %6426 = vmatpush1.msra.mxu0 0.0
    %6427 = vmatprep.subr.mxu0 0.0
    %6428 = vmatpush1.msra.mxu0 0.0
    %6429 = vmatprep.subr.mxu0 0.0
    %6430 = vmatpush1.msra.mxu0 0.0
    %6431 = vmatprep.subr.mxu0 0.0
    %6432 = vmatpush1.msra.mxu0 0.0
    %6433 = vmatprep.subr.mxu0 0.0
    %6434 = vmatpush1.msra.mxu0 0.0
    %6435 = vmatprep.subr.mxu0 0.0
    %6436 = vmatpush1.msra.mxu0 0.0
    %6437 = vmatprep.subr.mxu0 0.0
    %6438 = vmatpush1.msra.mxu0 0.0
    %6439 = vmatprep.mubr.f32.mxu0 0.0
    %6440 = vmatmul.mubr.f32.gmra.mrb[0].mxu0 %v6373
    %v6441 = vpop.f32.mrb[0].mxu0
    %v6442 = vadd.f32 0.0, %v6441
    %v6443 = vpop.f32.mrb[0].mxu0
    %v6444 = vadd.f32 0.0, %v6443
    %6445 = vdwg.mxu0
    %6448 = vrot.lane.b32.xlu0 %v5959, 32
    %v6449 = vpop.permute.xlu0 %6448
    %6450 = vrot.lane.b32.xlu0 %v5960, 32
    %v6451 = vpop.permute.xlu0 %6450
    %v6452 = vsel %vm480, %v6449, %v6451
    %v6453 = vsel %vm366, %v6452, 0
    %6455 = vmatprep.subr.mxu0 %v45
    %6456 = vmatpush1.msra.mxu0 %v44
    %6457 = vmatprep.subr.mxu0 %v47
    %6458 = vmatpush1.msra.mxu0 %v46
    %6459 = vmatprep.subr.mxu0 %v49
    %6460 = vmatpush1.msra.mxu0 %v48
    %6461 = vmatprep.subr.mxu0 %v51
    %6462 = vmatpush1.msra.mxu0 %v50
    %6463 = vmatprep.subr.mxu0 %v53
    %6464 = vmatpush1.msra.mxu0 %v52
    %6465 = vmatprep.subr.mxu0 %v55
    %6466 = vmatpush1.msra.mxu0 %v54
    %6467 = vmatprep.subr.mxu0 0.0
    %6468 = vmatpush1.msra.mxu0 0.0
    %6469 = vmatprep.subr.mxu0 0.0
    %6470 = vmatpush1.msra.mxu0 0.0
    %6471 = vmatprep.subr.mxu0 0.0
    %6472 = vmatpush1.msra.mxu0 0.0
    %6473 = vmatprep.subr.mxu0 0.0
    %6474 = vmatpush1.msra.mxu0 0.0
    %6475 = vmatprep.subr.mxu0 0.0
    %6476 = vmatpush1.msra.mxu0 0.0
    %6477 = vmatprep.subr.mxu0 0.0
    %6478 = vmatpush1.msra.mxu0 0.0
    %6479 = vmatprep.subr.mxu0 0.0
    %6480 = vmatpush1.msra.mxu0 0.0
    %6481 = vmatprep.subr.mxu0 0.0
    %6482 = vmatpush1.msra.mxu0 0.0
    %6483 = vmatprep.subr.mxu0 0.0
    %6484 = vmatpush1.msra.mxu0 0.0
    %6485 = vmatprep.subr.mxu0 0.0
    %6486 = vmatpush1.msra.mxu0 0.0
    %6487 = vmatprep.subr.mxu0 0.0
    %6488 = vmatpush1.msra.mxu0 0.0
    %6489 = vmatprep.subr.mxu0 0.0
    %6490 = vmatpush1.msra.mxu0 0.0
    %6491 = vmatprep.subr.mxu0 0.0
    %6492 = vmatpush1.msra.mxu0 0.0
    %6493 = vmatprep.subr.mxu0 0.0
    %6494 = vmatpush1.msra.mxu0 0.0
    %6495 = vmatprep.subr.mxu0 0.0
    %6496 = vmatpush1.msra.mxu0 0.0
    %6497 = vmatprep.subr.mxu0 0.0
    %6498 = vmatpush1.msra.mxu0 0.0
    %6499 = vmatprep.subr.mxu0 0.0
    %6500 = vmatpush1.msra.mxu0 0.0
    %6501 = vmatprep.subr.mxu0 0.0
    %6502 = vmatpush1.msra.mxu0 0.0
    %6503 = vmatprep.subr.mxu0 0.0
    %6504 = vmatpush1.msra.mxu0 0.0
    %6505 = vmatprep.subr.mxu0 0.0
    %6506 = vmatpush1.msra.mxu0 0.0
    %6507 = vmatprep.subr.mxu0 0.0
    %6508 = vmatpush1.msra.mxu0 0.0
    %6509 = vmatprep.subr.mxu0 0.0
    %6510 = vmatpush1.msra.mxu0 0.0
    %6511 = vmatprep.subr.mxu0 0.0
    %6512 = vmatpush1.msra.mxu0 0.0
    %6513 = vmatprep.subr.mxu0 0.0
    %6514 = vmatpush1.msra.mxu0 0.0
    %6515 = vmatprep.subr.mxu0 0.0
    %6516 = vmatpush1.msra.mxu0 0.0
    %6517 = vmatprep.subr.mxu0 0.0
    %6518 = vmatpush1.msra.mxu0 0.0
    %6519 = vmatprep.mubr.f32.mxu0 0.0
    %6520 = vmatmul.mubr.f32.gmra.mrb[0].mxu0 %v6453
    %v6521 = vpop.f32.mrb[0].mxu0
    %v6522 = vadd.f32 %v6442, %v6521
    %v6523 = vpop.f32.mrb[0].mxu0
    %v6524 = vadd.f32 %v6444, %v6523
    %6525 = vdwg.mxu0
    %v6526 = vadd.f32 %v6522, %v355
    %v6527 = vadd.f32 %v6524, %v359
    %v6528 = vxor.u32 %v6526, 2147483648
    %v6529 = vxor.u32 %v6527, 2147483648
    %v6530 = vmul.f32 %v6528, 1.442695
    %v6531 = vpow.pop %v6530
    %v6532 = vmul.f32 %v6529, 1.442695
    %v6533 = vpow.pop %v6532
    %v6534 = vadd.f32 %v6531, 1.0
    %v6535 = vadd.f32 %v6533, 1.0
    %v6536 = vrcp.pop %v6534
    %v6537 = vmul.f32 1.0, %v6536
    %v6538 = vrcp.pop %v6535
    %v6539 = vmul.f32 1.0, %v6538
    %v6540 = vtanh.pop %v6527
    %v6541 = vmul.f32 %v6537, %v5953
    %6543 = vrot.lane.b32.xlu0 %v6540, 112
    %v6544 = vpop.permute.xlu0 %6543
    %v6546 = vmul.f32 %v6537, %v6544
    %6548 = vrot.lane.b32.xlu0 %v6546, 48
    %v6549 = vpop.permute.xlu0 %6548
    %v6551 = vadd.f32 %v6541, %v6549
    %v6552 = vtanh.pop %v6551
    %6554 = vrot.lane.b32.xlu0 %v6552, 48
    %v6555 = vpop.permute.xlu0 %6554
    %v6557 = vmul.f32 %v6537, %v6555
    %v6558 = vmul.f32 %v6539, %v6555
    %6559 = vmatprep.subr.mxu0 %v33
    %6560 = vmatpush1.msra.mxu0 %v32
    %6561 = vmatprep.subr.mxu0 %v35
    %6562 = vmatpush1.msra.mxu0 %v34
    %6563 = vmatprep.subr.mxu0 %v37
    %6564 = vmatpush1.msra.mxu0 %v36
    %6565 = vmatprep.subr.mxu0 %v39
    %6566 = vmatpush1.msra.mxu0 %v38
    %6567 = vmatprep.subr.mxu0 %v41
    %6568 = vmatpush1.msra.mxu0 %v40
    %6569 = vmatprep.subr.mxu0 %v43
    %6570 = vmatpush1.msra.mxu0 %v42
    %6571 = vmatprep.subr.mxu0 0.0
    %6572 = vmatpush1.msra.mxu0 0.0
    %6573 = vmatprep.subr.mxu0 0.0
    %6574 = vmatpush1.msra.mxu0 0.0
    %6575 = vmatprep.subr.mxu0 0.0
    %6576 = vmatpush1.msra.mxu0 0.0
    %6577 = vmatprep.subr.mxu0 0.0
    %6578 = vmatpush1.msra.mxu0 0.0
    %6579 = vmatprep.subr.mxu0 0.0
    %6580 = vmatpush1.msra.mxu0 0.0
    %6581 = vmatprep.subr.mxu0 0.0
    %6582 = vmatpush1.msra.mxu0 0.0
    %6583 = vmatprep.subr.mxu0 0.0
    %6584 = vmatpush1.msra.mxu0 0.0
    %6585 = vmatprep.subr.mxu0 0.0
    %6586 = vmatpush1.msra.mxu0 0.0
    %6587 = vmatprep.subr.mxu0 0.0
    %6588 = vmatpush1.msra.mxu0 0.0
    %6589 = vmatprep.subr.mxu0 0.0
    %6590 = vmatpush1.msra.mxu0 0.0
    %6591 = vmatprep.subr.mxu0 0.0
    %6592 = vmatpush1.msra.mxu0 0.0
    %6593 = vmatprep.subr.mxu0 0.0
    %6594 = vmatpush1.msra.mxu0 0.0
    %6595 = vmatprep.subr.mxu0 0.0
    %6596 = vmatpush1.msra.mxu0 0.0
    %6597 = vmatprep.subr.mxu0 0.0
    %6598 = vmatpush1.msra.mxu0 0.0
    %6599 = vmatprep.subr.mxu0 0.0
    %6600 = vmatpush1.msra.mxu0 0.0
    %6601 = vmatprep.subr.mxu0 0.0
    %6602 = vmatpush1.msra.mxu0 0.0
    %6603 = vmatprep.subr.mxu0 0.0
    %6604 = vmatpush1.msra.mxu0 0.0
    %6605 = vmatprep.subr.mxu0 0.0
    %6606 = vmatpush1.msra.mxu0 0.0
    %6607 = vmatprep.subr.mxu0 0.0
    %6608 = vmatpush1.msra.mxu0 0.0
    %6609 = vmatprep.subr.mxu0 0.0
    %6610 = vmatpush1.msra.mxu0 0.0
    %6611 = vmatprep.subr.mxu0 0.0
    %6612 = vmatpush1.msra.mxu0 0.0
    %6613 = vmatprep.subr.mxu0 0.0
    %6614 = vmatpush1.msra.mxu0 0.0
    %6615 = vmatprep.subr.mxu0 0.0
    %6616 = vmatpush1.msra.mxu0 0.0
    %6617 = vmatprep.subr.mxu0 0.0
    %6618 = vmatpush1.msra.mxu0 0.0
    %6619 = vmatprep.subr.mxu0 0.0
    %6620 = vmatpush1.msra.mxu0 0.0
    %6621 = vmatprep.subr.mxu0 0.0
    %6622 = vmatpush1.msra.mxu0 0.0
    %6623 = vmatprep.mubr.f32.mxu0 0.0
    %6624 = vmatmul.mubr.f32.gmra.mrb[0].mxu0 %v6072
    %v6625 = vpop.f32.mrb[0].mxu0
    %v6626 = vadd.f32 0.0, %v6625
    %v6627 = vpop.f32.mrb[0].mxu0
    %v6628 = vadd.f32 0.0, %v6627
    %6629 = vdwg.mxu0
    %v6630 = vadd.f32 %v6260, %v6626
    %v6631 = vadd.f32 %v6261, %v6628
    %v6632 = vxor.u32 %v6630, 2147483648
    %v6633 = vxor.u32 %v6631, 2147483648
    %v6634 = vmul.f32 %v6632, 1.442695
    %v6635 = vpow.pop %v6634
    %v6636 = vmul.f32 %v6633, 1.442695
    %v6637 = vpow.pop %v6636
    %v6638 = vadd.f32 %v6635, 1.0
    %v6639 = vadd.f32 %v6637, 1.0
    %v6640 = vrcp.pop %v6638
    %v6641 = vmul.f32 1.0, %v6640
    %v6642 = vrcp.pop %v6639
    %v6643 = vmul.f32 1.0, %v6642
    %v6644 = vtanh.pop %v6631
    %v6645 = vmul.f32 %v6641, %v6057
    %6647 = vrot.lane.b32.xlu0 %v6644, 112
    %v6648 = vpop.permute.xlu0 %6647
    %v6650 = vmul.f32 %v6641, %v6648
    %6652 = vrot.lane.b32.xlu0 %v6650, 48
    %v6653 = vpop.permute.xlu0 %6652
    %v6655 = vadd.f32 %v6645, %v6653
    %v6656 = vtanh.pop %v6655
    %6658 = vrot.lane.b32.xlu0 %v6656, 48
    %v6659 = vpop.permute.xlu0 %6658
    %v6661 = vmul.f32 %v6641, %v6659
    %v6662 = vmul.f32 %v6643, %v6659
    %6665 = vrot.lane.b32.xlu0 %v6661, 32
    %v6666 = vpop.permute.xlu0 %6665
    %6667 = vrot.lane.b32.xlu0 %v6662, 32
    %v6668 = vpop.permute.xlu0 %6667
    %v6669 = vsel %vm480, %v6666, %v6668
    %v6670 = vsel %vm366, %v6669, 0
    %6672 = vmatprep.subr.mxu0 %v57
    %6673 = vmatpush1.msra.mxu0 %v56
    %6674 = vmatprep.subr.mxu0 %v59
    %6675 = vmatpush1.msra.mxu0 %v58
    %6676 = vmatprep.subr.mxu0 %v61
    %6677 = vmatpush1.msra.mxu0 %v60
    %6678 = vmatprep.subr.mxu0 %v63
    %6679 = vmatpush1.msra.mxu0 %v62
    %6680 = vmatprep.subr.mxu0 %v65
    %6681 = vmatpush1.msra.mxu0 %v64
    %6682 = vmatprep.subr.mxu0 %v67
    %6683 = vmatpush1.msra.mxu0 %v66
    %6684 = vmatprep.subr.mxu0 0.0
    %6685 = vmatpush1.msra.mxu0 0.0
    %6686 = vmatprep.subr.mxu0 0.0
    %6687 = vmatpush1.msra.mxu0 0.0
    %6688 = vmatprep.subr.mxu0 0.0
    %6689 = vmatpush1.msra.mxu0 0.0
    %6690 = vmatprep.subr.mxu0 0.0
    %6691 = vmatpush1.msra.mxu0 0.0
    %6692 = vmatprep.subr.mxu0 0.0
    %6693 = vmatpush1.msra.mxu0 0.0
    %6694 = vmatprep.subr.mxu0 0.0
    %6695 = vmatpush1.msra.mxu0 0.0
    %6696 = vmatprep.subr.mxu0 0.0
    %6697 = vmatpush1.msra.mxu0 0.0
    %6698 = vmatprep.subr.mxu0 0.0
    %6699 = vmatpush1.msra.mxu0 0.0
    %6700 = vmatprep.subr.mxu0 0.0
    %6701 = vmatpush1.msra.mxu0 0.0
    %6702 = vmatprep.subr.mxu0 0.0
    %6703 = vmatpush1.msra.mxu0 0.0
    %6704 = vmatprep.subr.mxu0 0.0
    %6705 = vmatpush1.msra.mxu0 0.0
    %6706 = vmatprep.subr.mxu0 0.0
    %6707 = vmatpush1.msra.mxu0 0.0
    %6708 = vmatprep.subr.mxu0 0.0
    %6709 = vmatpush1.msra.mxu0 0.0
    %6710 = vmatprep.subr.mxu0 0.0
    %6711 = vmatpush1.msra.mxu0 0.0
    %6712 = vmatprep.subr.mxu0 0.0
    %6713 = vmatpush1.msra.mxu0 0.0
    %6714 = vmatprep.subr.mxu0 0.0
    %6715 = vmatpush1.msra.mxu0 0.0
    %6716 = vmatprep.subr.mxu0 0.0
    %6717 = vmatpush1.msra.mxu0 0.0
    %6718 = vmatprep.subr.mxu0 0.0
    %6719 = vmatpush1.msra.mxu0 0.0
    %6720 = vmatprep.subr.mxu0 0.0
    %6721 = vmatpush1.msra.mxu0 0.0
    %6722 = vmatprep.subr.mxu0 0.0
    %6723 = vmatpush1.msra.mxu0 0.0
    %6724 = vmatprep.subr.mxu0 0.0
    %6725 = vmatpush1.msra.mxu0 0.0
    %6726 = vmatprep.subr.mxu0 0.0
    %6727 = vmatpush1.msra.mxu0 0.0
    %6728 = vmatprep.subr.mxu0 0.0
    %6729 = vmatpush1.msra.mxu0 0.0
    %6730 = vmatprep.subr.mxu0 0.0
    %6731 = vmatpush1.msra.mxu0 0.0
    %6732 = vmatprep.subr.mxu0 0.0
    %6733 = vmatpush1.msra.mxu0 0.0
    %6734 = vmatprep.subr.mxu0 0.0
    %6735 = vmatpush1.msra.mxu0 0.0
    %6736 = vmatprep.mubr.f32.mxu0 0.0
    %6737 = vmatmul.mubr.f32.gmra.mrb[0].mxu0 %v6670
    %v6738 = vpop.f32.mrb[0].mxu0
    %v6739 = vadd.f32 0.0, %v6738
    %v6740 = vpop.f32.mrb[0].mxu0
    %v6741 = vadd.f32 0.0, %v6740
    %6742 = vdwg.mxu0
    %6745 = vrot.lane.b32.xlu0 %v6256, 32
    %v6746 = vpop.permute.xlu0 %6745
    %6747 = vrot.lane.b32.xlu0 %v6257, 32
    %v6748 = vpop.permute.xlu0 %6747
    %v6749 = vsel %vm480, %v6746, %v6748
    %v6750 = vsel %vm366, %v6749, 0
    %6752 = vmatprep.subr.mxu0 %v45
    %6753 = vmatpush1.msra.mxu0 %v44
    %6754 = vmatprep.subr.mxu0 %v47
    %6755 = vmatpush1.msra.mxu0 %v46
    %6756 = vmatprep.subr.mxu0 %v49
    %6757 = vmatpush1.msra.mxu0 %v48
    %6758 = vmatprep.subr.mxu0 %v51
    %6759 = vmatpush1.msra.mxu0 %v50
    %6760 = vmatprep.subr.mxu0 %v53
    %6761 = vmatpush1.msra.mxu0 %v52
    %6762 = vmatprep.subr.mxu0 %v55
    %6763 = vmatpush1.msra.mxu0 %v54
    %6764 = vmatprep.subr.mxu0 0.0
    %6765 = vmatpush1.msra.mxu0 0.0
    %6766 = vmatprep.subr.mxu0 0.0
    %6767 = vmatpush1.msra.mxu0 0.0
    %6768 = vmatprep.subr.mxu0 0.0
    %6769 = vmatpush1.msra.mxu0 0.0
    %6770 = vmatprep.subr.mxu0 0.0
    %6771 = vmatpush1.msra.mxu0 0.0
    %6772 = vmatprep.subr.mxu0 0.0
    %6773 = vmatpush1.msra.mxu0 0.0
    %6774 = vmatprep.subr.mxu0 0.0
    %6775 = vmatpush1.msra.mxu0 0.0
    %6776 = vmatprep.subr.mxu0 0.0
    %6777 = vmatpush1.msra.mxu0 0.0
    %6778 = vmatprep.subr.mxu0 0.0
    %6779 = vmatpush1.msra.mxu0 0.0
    %6780 = vmatprep.subr.mxu0 0.0
    %6781 = vmatpush1.msra.mxu0 0.0
    %6782 = vmatprep.subr.mxu0 0.0
    %6783 = vmatpush1.msra.mxu0 0.0
    %6784 = vmatprep.subr.mxu0 0.0
    %6785 = vmatpush1.msra.mxu0 0.0
    %6786 = vmatprep.subr.mxu0 0.0
    %6787 = vmatpush1.msra.mxu0 0.0
    %6788 = vmatprep.subr.mxu0 0.0
    %6789 = vmatpush1.msra.mxu0 0.0
    %6790 = vmatprep.subr.mxu0 0.0
    %6791 = vmatpush1.msra.mxu0 0.0
    %6792 = vmatprep.subr.mxu0 0.0
    %6793 = vmatpush1.msra.mxu0 0.0
    %6794 = vmatprep.subr.mxu0 0.0
    %6795 = vmatpush1.msra.mxu0 0.0
    %6796 = vmatprep.subr.mxu0 0.0
    %6797 = vmatpush1.msra.mxu0 0.0
    %6798 = vmatprep.subr.mxu0 0.0
    %6799 = vmatpush1.msra.mxu0 0.0
    %6800 = vmatprep.subr.mxu0 0.0
    %6801 = vmatpush1.msra.mxu0 0.0
    %6802 = vmatprep.subr.mxu0 0.0
    %6803 = vmatpush1.msra.mxu0 0.0
    %6804 = vmatprep.subr.mxu0 0.0
    %6805 = vmatpush1.msra.mxu0 0.0
    %6806 = vmatprep.subr.mxu0 0.0
    %6807 = vmatpush1.msra.mxu0 0.0
    %6808 = vmatprep.subr.mxu0 0.0
    %6809 = vmatpush1.msra.mxu0 0.0
    %6810 = vmatprep.subr.mxu0 0.0
    %6811 = vmatpush1.msra.mxu0 0.0
    %6812 = vmatprep.subr.mxu0 0.0
    %6813 = vmatpush1.msra.mxu0 0.0
    %6814 = vmatprep.subr.mxu0 0.0
    %6815 = vmatpush1.msra.mxu0 0.0
    %6816 = vmatprep.mubr.f32.mxu0 0.0
    %6817 = vmatmul.mubr.f32.gmra.mrb[0].mxu0 %v6750
    %v6818 = vpop.f32.mrb[0].mxu0
    %v6819 = vadd.f32 %v6739, %v6818
    %v6820 = vpop.f32.mrb[0].mxu0
    %v6821 = vadd.f32 %v6741, %v6820
    %6822 = vdwg.mxu0
    %v6823 = vadd.f32 %v6819, %v355
    %v6824 = vadd.f32 %v6821, %v359
    %v6825 = vxor.u32 %v6823, 2147483648
    %v6826 = vxor.u32 %v6824, 2147483648
    %v6827 = vmul.f32 %v6825, 1.442695
    %v6828 = vpow.pop %v6827
    %v6829 = vmul.f32 %v6826, 1.442695
    %v6830 = vpow.pop %v6829
    %v6831 = vadd.f32 %v6828, 1.0
    %v6832 = vadd.f32 %v6830, 1.0
    %v6833 = vrcp.pop %v6831
    %v6834 = vmul.f32 1.0, %v6833
    %v6835 = vrcp.pop %v6832
    %v6836 = vmul.f32 1.0, %v6835
    %v6837 = vtanh.pop %v6824
    %v6838 = vmul.f32 %v6834, %v6250
    %6840 = vrot.lane.b32.xlu0 %v6837, 112
    %v6841 = vpop.permute.xlu0 %6840
    %v6843 = vmul.f32 %v6834, %v6841
    %6845 = vrot.lane.b32.xlu0 %v6843, 48
    %v6846 = vpop.permute.xlu0 %6845
    %v6848 = vadd.f32 %v6838, %v6846
    %v6849 = vtanh.pop %v6848
    %6851 = vrot.lane.b32.xlu0 %v6849, 48
    %v6852 = vpop.permute.xlu0 %6851
    %v6854 = vmul.f32 %v6834, %v6852
    %v6855 = vmul.f32 %v6836, %v6852
    %v6856 = vld [vmem:[%s346] sm:$0xff]
    %v6857 = vld [vmem:[%s346 + $0x8] sm:$0xff]
    %v6858 = vld [vmem:[%s346 + $0x10] sm:$0xff]
    %v6859 = vld [vmem:[%s346 + $0x18] sm:$0xff]
    %6860 = vmatprep.subr.mxu0 %v33
    %6861 = vmatpush1.msra.mxu0 %v32
    %6862 = vmatprep.subr.mxu0 %v35
    %6863 = vmatpush1.msra.mxu0 %v34
    %6864 = vmatprep.subr.mxu0 %v37
    %6865 = vmatpush1.msra.mxu0 %v36
    %6866 = vmatprep.subr.mxu0 %v39
    %6867 = vmatpush1.msra.mxu0 %v38
    %6868 = vmatprep.subr.mxu0 %v41
    %6869 = vmatpush1.msra.mxu0 %v40
    %6870 = vmatprep.subr.mxu0 %v43
    %6871 = vmatpush1.msra.mxu0 %v42
    %6872 = vmatprep.subr.mxu0 0.0
    %6873 = vmatpush1.msra.mxu0 0.0
    %6874 = vmatprep.subr.mxu0 0.0
    %6875 = vmatpush1.msra.mxu0 0.0
    %6876 = vmatprep.subr.mxu0 0.0
    %6877 = vmatpush1.msra.mxu0 0.0
    %6878 = vmatprep.subr.mxu0 0.0
    %6879 = vmatpush1.msra.mxu0 0.0
    %6880 = vmatprep.subr.mxu0 0.0
    %6881 = vmatpush1.msra.mxu0 0.0
    %6882 = vmatprep.subr.mxu0 0.0
    %6883 = vmatpush1.msra.mxu0 0.0
    %6884 = vmatprep.subr.mxu0 0.0
    %6885 = vmatpush1.msra.mxu0 0.0
    %6886 = vmatprep.subr.mxu0 0.0
    %6887 = vmatpush1.msra.mxu0 0.0
    %6888 = vmatprep.subr.mxu0 0.0
    %6889 = vmatpush1.msra.mxu0 0.0
    %6890 = vmatprep.subr.mxu0 0.0
    %6891 = vmatpush1.msra.mxu0 0.0
    %6892 = vmatprep.subr.mxu0 0.0
    %6893 = vmatpush1.msra.mxu0 0.0
    %6894 = vmatprep.subr.mxu0 0.0
    %6895 = vmatpush1.msra.mxu0 0.0
    %6896 = vmatprep.subr.mxu0 0.0
    %6897 = vmatpush1.msra.mxu0 0.0
    %6898 = vmatprep.subr.mxu0 0.0
    %6899 = vmatpush1.msra.mxu0 0.0
    %6900 = vmatprep.subr.mxu0 0.0
    %6901 = vmatpush1.msra.mxu0 0.0
    %6902 = vmatprep.subr.mxu0 0.0
    %6903 = vmatpush1.msra.mxu0 0.0
    %6904 = vmatprep.subr.mxu0 0.0
    %6905 = vmatpush1.msra.mxu0 0.0
    %6906 = vmatprep.subr.mxu0 0.0
    %6907 = vmatpush1.msra.mxu0 0.0
    %6908 = vmatprep.subr.mxu0 0.0
    %6909 = vmatpush1.msra.mxu0 0.0
    %6910 = vmatprep.subr.mxu0 0.0
    %6911 = vmatpush1.msra.mxu0 0.0
    %6912 = vmatprep.subr.mxu0 0.0
    %6913 = vmatpush1.msra.mxu0 0.0
    %6914 = vmatprep.subr.mxu0 0.0
    %6915 = vmatpush1.msra.mxu0 0.0
    %6916 = vmatprep.subr.mxu0 0.0
    %6917 = vmatpush1.msra.mxu0 0.0
    %6918 = vmatprep.subr.mxu0 0.0
    %6919 = vmatpush1.msra.mxu0 0.0
    %6920 = vmatprep.subr.mxu0 0.0
    %6921 = vmatpush1.msra.mxu0 0.0
    %6922 = vmatprep.subr.mxu0 0.0
    %6923 = vmatpush1.msra.mxu0 0.0
    %6924 = vmatprep.mubr.f32.mxu0 0.0
    %6925 = vmatmul.mubr.f32.gmra.mrb[0].mxu0 %v6373
    %v6926 = vpop.f32.mrb[0].mxu0
    %v6927 = vadd.f32 0.0, %v6926
    %v6928 = vpop.f32.mrb[0].mxu0
    %v6929 = vadd.f32 0.0, %v6928
    %6930 = vdwg.mxu0
    %v6931 = vadd.f32 %v6856, %v6927
    %v6932 = vadd.f32 %v6857, %v6929
    %v6933 = vxor.u32 %v6931, 2147483648
    %v6934 = vxor.u32 %v6932, 2147483648
    %v6935 = vmul.f32 %v6933, 1.442695
    %v6936 = vpow.pop %v6935
    %v6937 = vmul.f32 %v6934, 1.442695
    %v6938 = vpow.pop %v6937
    %v6939 = vadd.f32 %v6936, 1.0
    %v6940 = vadd.f32 %v6938, 1.0
    %v6941 = vrcp.pop %v6939
    %v6942 = vmul.f32 1.0, %v6941
    %v6943 = vrcp.pop %v6940
    %v6944 = vmul.f32 1.0, %v6943
    %v6945 = vtanh.pop %v6932
    %v6946 = vmul.f32 %v6942, %v6358
    %6948 = vrot.lane.b32.xlu0 %v6945, 112
    %v6949 = vpop.permute.xlu0 %6948
    %v6951 = vmul.f32 %v6942, %v6949
    %6953 = vrot.lane.b32.xlu0 %v6951, 48
    %v6954 = vpop.permute.xlu0 %6953
    %v6956 = vadd.f32 %v6946, %v6954
    %v6957 = vtanh.pop %v6956
    %6959 = vrot.lane.b32.xlu0 %v6957, 48
    %v6960 = vpop.permute.xlu0 %6959
    %v6962 = vmul.f32 %v6942, %v6960
    %v6963 = vmul.f32 %v6944, %v6960
    %6966 = vrot.lane.b32.xlu0 %v6962, 32
    %v6967 = vpop.permute.xlu0 %6966
    %6968 = vrot.lane.b32.xlu0 %v6963, 32
    %v6969 = vpop.permute.xlu0 %6968
    %v6970 = vsel %vm480, %v6967, %v6969
    %v6971 = vsel %vm366, %v6970, 0
    %6973 = vmatprep.subr.mxu0 %v57
    %6974 = vmatpush1.msra.mxu0 %v56
    %6975 = vmatprep.subr.mxu0 %v59
    %6976 = vmatpush1.msra.mxu0 %v58
    %6977 = vmatprep.subr.mxu0 %v61
    %6978 = vmatpush1.msra.mxu0 %v60
    %6979 = vmatprep.subr.mxu0 %v63
    %6980 = vmatpush1.msra.mxu0 %v62
    %6981 = vmatprep.subr.mxu0 %v65
    %6982 = vmatpush1.msra.mxu0 %v64
    %6983 = vmatprep.subr.mxu0 %v67
    %6984 = vmatpush1.msra.mxu0 %v66
    %6985 = vmatprep.subr.mxu0 0.0
    %6986 = vmatpush1.msra.mxu0 0.0
    %6987 = vmatprep.subr.mxu0 0.0
    %6988 = vmatpush1.msra.mxu0 0.0
    %6989 = vmatprep.subr.mxu0 0.0
    %6990 = vmatpush1.msra.mxu0 0.0
    %6991 = vmatprep.subr.mxu0 0.0
    %6992 = vmatpush1.msra.mxu0 0.0
    %6993 = vmatprep.subr.mxu0 0.0
    %6994 = vmatpush1.msra.mxu0 0.0
    %6995 = vmatprep.subr.mxu0 0.0
    %6996 = vmatpush1.msra.mxu0 0.0
    %6997 = vmatprep.subr.mxu0 0.0
    %6998 = vmatpush1.msra.mxu0 0.0
    %6999 = vmatprep.subr.mxu0 0.0
    %7000 = vmatpush1.msra.mxu0 0.0
    %7001 = vmatprep.subr.mxu0 0.0
    %7002 = vmatpush1.msra.mxu0 0.0
    %7003 = vmatprep.subr.mxu0 0.0
    %7004 = vmatpush1.msra.mxu0 0.0
    %7005 = vmatprep.subr.mxu0 0.0
    %7006 = vmatpush1.msra.mxu0 0.0
    %7007 = vmatprep.subr.mxu0 0.0
    %7008 = vmatpush1.msra.mxu0 0.0
    %7009 = vmatprep.subr.mxu0 0.0
    %7010 = vmatpush1.msra.mxu0 0.0
    %7011 = vmatprep.subr.mxu0 0.0
    %7012 = vmatpush1.msra.mxu0 0.0
    %7013 = vmatprep.subr.mxu0 0.0
    %7014 = vmatpush1.msra.mxu0 0.0
    %7015 = vmatprep.subr.mxu0 0.0
    %7016 = vmatpush1.msra.mxu0 0.0
    %7017 = vmatprep.subr.mxu0 0.0
    %7018 = vmatpush1.msra.mxu0 0.0
    %7019 = vmatprep.subr.mxu0 0.0
    %7020 = vmatpush1.msra.mxu0 0.0
    %7021 = vmatprep.subr.mxu0 0.0
    %7022 = vmatpush1.msra.mxu0 0.0
    %7023 = vmatprep.subr.mxu0 0.0
    %7024 = vmatpush1.msra.mxu0 0.0
    %7025 = vmatprep.subr.mxu0 0.0
    %7026 = vmatpush1.msra.mxu0 0.0
    %7027 = vmatprep.subr.mxu0 0.0
    %7028 = vmatpush1.msra.mxu0 0.0
    %7029 = vmatprep.subr.mxu0 0.0
    %7030 = vmatpush1.msra.mxu0 0.0
    %7031 = vmatprep.subr.mxu0 0.0
    %7032 = vmatpush1.msra.mxu0 0.0
    %7033 = vmatprep.subr.mxu0 0.0
    %7034 = vmatpush1.msra.mxu0 0.0
    %7035 = vmatprep.subr.mxu0 0.0
    %7036 = vmatpush1.msra.mxu0 0.0
    %7037 = vmatprep.mubr.f32.mxu0 0.0
    %7038 = vmatmul.mubr.f32.gmra.mrb[0].mxu0 %v6971
    %v7039 = vpop.f32.mrb[0].mxu0
    %v7040 = vadd.f32 0.0, %v7039
    %v7041 = vpop.f32.mrb[0].mxu0
    %v7042 = vadd.f32 0.0, %v7041
    %7043 = vdwg.mxu0
    %7046 = vrot.lane.b32.xlu0 %v6557, 32
    %v7047 = vpop.permute.xlu0 %7046
    %7048 = vrot.lane.b32.xlu0 %v6558, 32
    %v7049 = vpop.permute.xlu0 %7048
    %v7050 = vsel %vm480, %v7047, %v7049
    %v7051 = vsel %vm366, %v7050, 0
    %7053 = vmatprep.subr.mxu0 %v45
    %7054 = vmatpush1.msra.mxu0 %v44
    %7055 = vmatprep.subr.mxu0 %v47
    %7056 = vmatpush1.msra.mxu0 %v46
    %7057 = vmatprep.subr.mxu0 %v49
    %7058 = vmatpush1.msra.mxu0 %v48
    %7059 = vmatprep.subr.mxu0 %v51
    %7060 = vmatpush1.msra.mxu0 %v50
    %7061 = vmatprep.subr.mxu0 %v53
    %7062 = vmatpush1.msra.mxu0 %v52
    %7063 = vmatprep.subr.mxu0 %v55
    %7064 = vmatpush1.msra.mxu0 %v54
    %7065 = vmatprep.subr.mxu0 0.0
    %7066 = vmatpush1.msra.mxu0 0.0
    %7067 = vmatprep.subr.mxu0 0.0
    %7068 = vmatpush1.msra.mxu0 0.0
    %7069 = vmatprep.subr.mxu0 0.0
    %7070 = vmatpush1.msra.mxu0 0.0
    %7071 = vmatprep.subr.mxu0 0.0
    %7072 = vmatpush1.msra.mxu0 0.0
    %7073 = vmatprep.subr.mxu0 0.0
    %7074 = vmatpush1.msra.mxu0 0.0
    %7075 = vmatprep.subr.mxu0 0.0
    %7076 = vmatpush1.msra.mxu0 0.0
    %7077 = vmatprep.subr.mxu0 0.0
    %7078 = vmatpush1.msra.mxu0 0.0
    %7079 = vmatprep.subr.mxu0 0.0
    %7080 = vmatpush1.msra.mxu0 0.0
    %7081 = vmatprep.subr.mxu0 0.0
    %7082 = vmatpush1.msra.mxu0 0.0
    %7083 = vmatprep.subr.mxu0 0.0
    %7084 = vmatpush1.msra.mxu0 0.0
    %7085 = vmatprep.subr.mxu0 0.0
    %7086 = vmatpush1.msra.mxu0 0.0
    %7087 = vmatprep.subr.mxu0 0.0
    %7088 = vmatpush1.msra.mxu0 0.0
    %7089 = vmatprep.subr.mxu0 0.0
    %7090 = vmatpush1.msra.mxu0 0.0
    %7091 = vmatprep.subr.mxu0 0.0
    %7092 = vmatpush1.msra.mxu0 0.0
    %7093 = vmatprep.subr.mxu0 0.0
    %7094 = vmatpush1.msra.mxu0 0.0
    %7095 = vmatprep.subr.mxu0 0.0
    %7096 = vmatpush1.msra.mxu0 0.0
    %7097 = vmatprep.subr.mxu0 0.0
    %7098 = vmatpush1.msra.mxu0 0.0
    %7099 = vmatprep.subr.mxu0 0.0
    %7100 = vmatpush1.msra.mxu0 0.0
    %7101 = vmatprep.subr.mxu0 0.0
    %7102 = vmatpush1.msra.mxu0 0.0
    %7103 = vmatprep.subr.mxu0 0.0
    %7104 = vmatpush1.msra.mxu0 0.0
    %7105 = vmatprep.subr.mxu0 0.0
    %7106 = vmatpush1.msra.mxu0 0.0
    %7107 = vmatprep.subr.mxu0 0.0
    %7108 = vmatpush1.msra.mxu0 0.0
    %7109 = vmatprep.subr.mxu0 0.0
    %7110 = vmatpush1.msra.mxu0 0.0
    %7111 = vmatprep.subr.mxu0 0.0
    %7112 = vmatpush1.msra.mxu0 0.0
    %7113 = vmatprep.subr.mxu0 0.0
    %7114 = vmatpush1.msra.mxu0 0.0
    %7115 = vmatprep.subr.mxu0 0.0
    %7116 = vmatpush1.msra.mxu0 0.0
    %7117 = vmatprep.mubr.f32.mxu0 0.0
    %7118 = vmatmul.mubr.f32.gmra.mrb[0].mxu0 %v7051
    %v7119 = vpop.f32.mrb[0].mxu0
    %v7120 = vadd.f32 %v7040, %v7119
    %v7121 = vpop.f32.mrb[0].mxu0
    %v7122 = vadd.f32 %v7042, %v7121
    %7123 = vdwg.mxu0
    %v7124 = vadd.f32 %v7120, %v355
    %v7125 = vadd.f32 %v7122, %v359
    %v7126 = vxor.u32 %v7124, 2147483648
    %v7127 = vxor.u32 %v7125, 2147483648
    %v7128 = vmul.f32 %v7126, 1.442695
    %v7129 = vpow.pop %v7128
    %v7130 = vmul.f32 %v7127, 1.442695
    %v7131 = vpow.pop %v7130
    %v7132 = vadd.f32 %v7129, 1.0
    %v7133 = vadd.f32 %v7131, 1.0
    %v7134 = vrcp.pop %v7132
    %v7135 = vmul.f32 1.0, %v7134
    %v7136 = vrcp.pop %v7133
    %v7137 = vmul.f32 1.0, %v7136
    %v7138 = vtanh.pop %v7125
    %v7139 = vmul.f32 %v7135, %v6551
    %7141 = vrot.lane.b32.xlu0 %v7138, 112
    %v7142 = vpop.permute.xlu0 %7141
    %v7144 = vmul.f32 %v7135, %v7142
    %7146 = vrot.lane.b32.xlu0 %v7144, 48
    %v7147 = vpop.permute.xlu0 %7146
    %v7149 = vadd.f32 %v7139, %v7147
    %v7150 = vtanh.pop %v7149
    %7152 = vrot.lane.b32.xlu0 %v7150, 48
    %v7153 = vpop.permute.xlu0 %7152
    %v7155 = vmul.f32 %v7135, %v7153
    %v7156 = vmul.f32 %v7137, %v7153
    %7157 = vmatprep.subr.mxu0 %v33
    %7158 = vmatpush1.msra.mxu0 %v32
    %7159 = vmatprep.subr.mxu0 %v35
    %7160 = vmatpush1.msra.mxu0 %v34
    %7161 = vmatprep.subr.mxu0 %v37
    %7162 = vmatpush1.msra.mxu0 %v36
    %7163 = vmatprep.subr.mxu0 %v39
    %7164 = vmatpush1.msra.mxu0 %v38
    %7165 = vmatprep.subr.mxu0 %v41
    %7166 = vmatpush1.msra.mxu0 %v40
    %7167 = vmatprep.subr.mxu0 %v43
    %7168 = vmatpush1.msra.mxu0 %v42
    %7169 = vmatprep.subr.mxu0 0.0
    %7170 = vmatpush1.msra.mxu0 0.0
    %7171 = vmatprep.subr.mxu0 0.0
    %7172 = vmatpush1.msra.mxu0 0.0
    %7173 = vmatprep.subr.mxu0 0.0
    %7174 = vmatpush1.msra.mxu0 0.0
    %7175 = vmatprep.subr.mxu0 0.0
    %7176 = vmatpush1.msra.mxu0 0.0
    %7177 = vmatprep.subr.mxu0 0.0
    %7178 = vmatpush1.msra.mxu0 0.0
    %7179 = vmatprep.subr.mxu0 0.0
    %7180 = vmatpush1.msra.mxu0 0.0
    %7181 = vmatprep.subr.mxu0 0.0
    %7182 = vmatpush1.msra.mxu0 0.0
    %7183 = vmatprep.subr.mxu0 0.0
    %7184 = vmatpush1.msra.mxu0 0.0
    %7185 = vmatprep.subr.mxu0 0.0
    %7186 = vmatpush1.msra.mxu0 0.0
    %7187 = vmatprep.subr.mxu0 0.0
    %7188 = vmatpush1.msra.mxu0 0.0
    %7189 = vmatprep.subr.mxu0 0.0
    %7190 = vmatpush1.msra.mxu0 0.0
    %7191 = vmatprep.subr.mxu0 0.0
    %7192 = vmatpush1.msra.mxu0 0.0
    %7193 = vmatprep.subr.mxu0 0.0
    %7194 = vmatpush1.msra.mxu0 0.0
    %7195 = vmatprep.subr.mxu0 0.0
    %7196 = vmatpush1.msra.mxu0 0.0
    %7197 = vmatprep.subr.mxu0 0.0
    %7198 = vmatpush1.msra.mxu0 0.0
    %7199 = vmatprep.subr.mxu0 0.0
    %7200 = vmatpush1.msra.mxu0 0.0
    %7201 = vmatprep.subr.mxu0 0.0
    %7202 = vmatpush1.msra.mxu0 0.0
    %7203 = vmatprep.subr.mxu0 0.0
    %7204 = vmatpush1.msra.mxu0 0.0
    %7205 = vmatprep.subr.mxu0 0.0
    %7206 = vmatpush1.msra.mxu0 0.0
    %7207 = vmatprep.subr.mxu0 0.0
    %7208 = vmatpush1.msra.mxu0 0.0
    %7209 = vmatprep.subr.mxu0 0.0
    %7210 = vmatpush1.msra.mxu0 0.0
    %7211 = vmatprep.subr.mxu0 0.0
    %7212 = vmatpush1.msra.mxu0 0.0
    %7213 = vmatprep.subr.mxu0 0.0
    %7214 = vmatpush1.msra.mxu0 0.0
    %7215 = vmatprep.subr.mxu0 0.0
    %7216 = vmatpush1.msra.mxu0 0.0
    %7217 = vmatprep.subr.mxu0 0.0
    %7218 = vmatpush1.msra.mxu0 0.0
    %7219 = vmatprep.subr.mxu0 0.0
    %7220 = vmatpush1.msra.mxu0 0.0
    %7221 = vmatprep.mubr.f32.mxu0 0.0
    %7222 = vmatmul.mubr.f32.gmra.mrb[0].mxu0 %v6670
    %v7223 = vpop.f32.mrb[0].mxu0
    %v7224 = vadd.f32 0.0, %v7223
    %v7225 = vpop.f32.mrb[0].mxu0
    %v7226 = vadd.f32 0.0, %v7225
    %7227 = vdwg.mxu0
    %v7228 = vadd.f32 %v6858, %v7224
    %v7229 = vadd.f32 %v6859, %v7226
    %v7230 = vxor.u32 %v7228, 2147483648
    %v7231 = vxor.u32 %v7229, 2147483648
    %v7232 = vmul.f32 %v7230, 1.442695
    %v7233 = vpow.pop %v7232
    %v7234 = vmul.f32 %v7231, 1.442695
    %v7235 = vpow.pop %v7234
    %v7236 = vadd.f32 %v7233, 1.0
    %v7237 = vadd.f32 %v7235, 1.0
    %v7238 = vrcp.pop %v7236
    %v7239 = vmul.f32 1.0, %v7238
    %v7240 = vrcp.pop %v7237
    %v7241 = vmul.f32 1.0, %v7240
    %v7242 = vtanh.pop %v7229
    %v7243 = vmul.f32 %v7239, %v6655
    %7245 = vrot.lane.b32.xlu0 %v7242, 112
    %v7246 = vpop.permute.xlu0 %7245
    %v7248 = vmul.f32 %v7239, %v7246
    %7250 = vrot.lane.b32.xlu0 %v7248, 48
    %v7251 = vpop.permute.xlu0 %7250
    %v7253 = vadd.f32 %v7243, %v7251
    %v7254 = vtanh.pop %v7253
    %7256 = vrot.lane.b32.xlu0 %v7254, 48
    %v7257 = vpop.permute.xlu0 %7256
    %v7259 = vmul.f32 %v7239, %v7257
    %v7260 = vmul.f32 %v7241, %v7257
    %7263 = vrot.lane.b32.xlu0 %v7259, 32
    %v7264 = vpop.permute.xlu0 %7263
    %7265 = vrot.lane.b32.xlu0 %v7260, 32
    %v7266 = vpop.permute.xlu0 %7265
    %v7267 = vsel %vm480, %v7264, %v7266
    %v7268 = vsel %vm366, %v7267, 0
    %7270 = vmatprep.subr.mxu0 %v57
    %7271 = vmatpush1.msra.mxu0 %v56
    %7272 = vmatprep.subr.mxu0 %v59
    %7273 = vmatpush1.msra.mxu0 %v58
    %7274 = vmatprep.subr.mxu0 %v61
    %7275 = vmatpush1.msra.mxu0 %v60
    %7276 = vmatprep.subr.mxu0 %v63
    %7277 = vmatpush1.msra.mxu0 %v62
    %7278 = vmatprep.subr.mxu0 %v65
    %7279 = vmatpush1.msra.mxu0 %v64
    %7280 = vmatprep.subr.mxu0 %v67
    %7281 = vmatpush1.msra.mxu0 %v66
    %7282 = vmatprep.subr.mxu0 0.0
    %7283 = vmatpush1.msra.mxu0 0.0
    %7284 = vmatprep.subr.mxu0 0.0
    %7285 = vmatpush1.msra.mxu0 0.0
    %7286 = vmatprep.subr.mxu0 0.0
    %7287 = vmatpush1.msra.mxu0 0.0
    %7288 = vmatprep.subr.mxu0 0.0
    %7289 = vmatpush1.msra.mxu0 0.0
    %7290 = vmatprep.subr.mxu0 0.0
    %7291 = vmatpush1.msra.mxu0 0.0
    %7292 = vmatprep.subr.mxu0 0.0
    %7293 = vmatpush1.msra.mxu0 0.0
    %7294 = vmatprep.subr.mxu0 0.0
    %7295 = vmatpush1.msra.mxu0 0.0
    %7296 = vmatprep.subr.mxu0 0.0
    %7297 = vmatpush1.msra.mxu0 0.0
    %7298 = vmatprep.subr.mxu0 0.0
    %7299 = vmatpush1.msra.mxu0 0.0
    %7300 = vmatprep.subr.mxu0 0.0
    %7301 = vmatpush1.msra.mxu0 0.0
    %7302 = vmatprep.subr.mxu0 0.0
    %7303 = vmatpush1.msra.mxu0 0.0
    %7304 = vmatprep.subr.mxu0 0.0
    %7305 = vmatpush1.msra.mxu0 0.0
    %7306 = vmatprep.subr.mxu0 0.0
    %7307 = vmatpush1.msra.mxu0 0.0
    %7308 = vmatprep.subr.mxu0 0.0
    %7309 = vmatpush1.msra.mxu0 0.0
    %7310 = vmatprep.subr.mxu0 0.0
    %7311 = vmatpush1.msra.mxu0 0.0
    %7312 = vmatprep.subr.mxu0 0.0
    %7313 = vmatpush1.msra.mxu0 0.0
    %7314 = vmatprep.subr.mxu0 0.0
    %7315 = vmatpush1.msra.mxu0 0.0
    %7316 = vmatprep.subr.mxu0 0.0
    %7317 = vmatpush1.msra.mxu0 0.0
    %7318 = vmatprep.subr.mxu0 0.0
    %7319 = vmatpush1.msra.mxu0 0.0
    %7320 = vmatprep.subr.mxu0 0.0
    %7321 = vmatpush1.msra.mxu0 0.0
    %7322 = vmatprep.subr.mxu0 0.0
    %7323 = vmatpush1.msra.mxu0 0.0
    %7324 = vmatprep.subr.mxu0 0.0
    %7325 = vmatpush1.msra.mxu0 0.0
    %7326 = vmatprep.subr.mxu0 0.0
    %7327 = vmatpush1.msra.mxu0 0.0
    %7328 = vmatprep.subr.mxu0 0.0
    %7329 = vmatpush1.msra.mxu0 0.0
    %7330 = vmatprep.subr.mxu0 0.0
    %7331 = vmatpush1.msra.mxu0 0.0
    %7332 = vmatprep.subr.mxu0 0.0
    %7333 = vmatpush1.msra.mxu0 0.0
    %7334 = vmatprep.mubr.f32.mxu0 0.0
    %7335 = vmatmul.mubr.f32.gmra.mrb[0].mxu0 %v7268
    %v7336 = vpop.f32.mrb[0].mxu0
    %v7337 = vadd.f32 0.0, %v7336
    %v7338 = vpop.f32.mrb[0].mxu0
    %v7339 = vadd.f32 0.0, %v7338
    %7340 = vdwg.mxu0
    %7343 = vrot.lane.b32.xlu0 %v6854, 32
    %v7344 = vpop.permute.xlu0 %7343
    %7345 = vrot.lane.b32.xlu0 %v6855, 32
    %v7346 = vpop.permute.xlu0 %7345
    %v7347 = vsel %vm480, %v7344, %v7346
    %v7348 = vsel %vm366, %v7347, 0
    %7350 = vmatprep.subr.mxu0 %v45
    %7351 = vmatpush1.msra.mxu0 %v44
    %7352 = vmatprep.subr.mxu0 %v47
    %7353 = vmatpush1.msra.mxu0 %v46
    %7354 = vmatprep.subr.mxu0 %v49
    %7355 = vmatpush1.msra.mxu0 %v48
    %7356 = vmatprep.subr.mxu0 %v51
    %7357 = vmatpush1.msra.mxu0 %v50
    %7358 = vmatprep.subr.mxu0 %v53
    %7359 = vmatpush1.msra.mxu0 %v52
    %7360 = vmatprep.subr.mxu0 %v55
    %7361 = vmatpush1.msra.mxu0 %v54
    %7362 = vmatprep.subr.mxu0 0.0
    %7363 = vmatpush1.msra.mxu0 0.0
    %7364 = vmatprep.subr.mxu0 0.0
    %7365 = vmatpush1.msra.mxu0 0.0
    %7366 = vmatprep.subr.mxu0 0.0
    %7367 = vmatpush1.msra.mxu0 0.0
    %7368 = vmatprep.subr.mxu0 0.0
    %7369 = vmatpush1.msra.mxu0 0.0
    %7370 = vmatprep.subr.mxu0 0.0
    %7371 = vmatpush1.msra.mxu0 0.0
    %7372 = vmatprep.subr.mxu0 0.0
    %7373 = vmatpush1.msra.mxu0 0.0
    %7374 = vmatprep.subr.mxu0 0.0
    %7375 = vmatpush1.msra.mxu0 0.0
    %7376 = vmatprep.subr.mxu0 0.0
    %7377 = vmatpush1.msra.mxu0 0.0
    %7378 = vmatprep.subr.mxu0 0.0
    %7379 = vmatpush1.msra.mxu0 0.0
    %7380 = vmatprep.subr.mxu0 0.0
    %7381 = vmatpush1.msra.mxu0 0.0
    %7382 = vmatprep.subr.mxu0 0.0
    %7383 = vmatpush1.msra.mxu0 0.0
    %7384 = vmatprep.subr.mxu0 0.0
    %7385 = vmatpush1.msra.mxu0 0.0
    %7386 = vmatprep.subr.mxu0 0.0
    %7387 = vmatpush1.msra.mxu0 0.0
    %7388 = vmatprep.subr.mxu0 0.0
    %7389 = vmatpush1.msra.mxu0 0.0
    %7390 = vmatprep.subr.mxu0 0.0
    %7391 = vmatpush1.msra.mxu0 0.0
    %7392 = vmatprep.subr.mxu0 0.0
    %7393 = vmatpush1.msra.mxu0 0.0
    %7394 = vmatprep.subr.mxu0 0.0
    %7395 = vmatpush1.msra.mxu0 0.0
    %7396 = vmatprep.subr.mxu0 0.0
    %7397 = vmatpush1.msra.mxu0 0.0
    %7398 = vmatprep.subr.mxu0 0.0
    %7399 = vmatpush1.msra.mxu0 0.0
    %7400 = vmatprep.subr.mxu0 0.0
    %7401 = vmatpush1.msra.mxu0 0.0
    %7402 = vmatprep.subr.mxu0 0.0
    %7403 = vmatpush1.msra.mxu0 0.0
    %7404 = vmatprep.subr.mxu0 0.0
    %7405 = vmatpush1.msra.mxu0 0.0
    %7406 = vmatprep.subr.mxu0 0.0
    %7407 = vmatpush1.msra.mxu0 0.0
    %7408 = vmatprep.subr.mxu0 0.0
    %7409 = vmatpush1.msra.mxu0 0.0
    %7410 = vmatprep.subr.mxu0 0.0
    %7411 = vmatpush1.msra.mxu0 0.0
    %7412 = vmatprep.subr.mxu0 0.0
    %7413 = vmatpush1.msra.mxu0 0.0
    %7414 = vmatprep.mubr.f32.mxu0 0.0
    %7415 = vmatmul.mubr.f32.gmra.mrb[0].mxu0 %v7348
    %v7416 = vpop.f32.mrb[0].mxu0
    %v7417 = vadd.f32 %v7337, %v7416
    %v7418 = vpop.f32.mrb[0].mxu0
    %v7419 = vadd.f32 %v7339, %v7418
    %7420 = vdwg.mxu0
    %v7421 = vadd.f32 %v7417, %v355
    %v7422 = vadd.f32 %v7419, %v359
    %v7423 = vxor.u32 %v7421, 2147483648
    %v7424 = vxor.u32 %v7422, 2147483648
    %v7425 = vmul.f32 %v7423, 1.442695
    %v7426 = vpow.pop %v7425
    %v7427 = vmul.f32 %v7424, 1.442695
    %v7428 = vpow.pop %v7427
    %v7429 = vadd.f32 %v7426, 1.0
    %v7430 = vadd.f32 %v7428, 1.0
    %v7431 = vrcp.pop %v7429
    %v7432 = vmul.f32 1.0, %v7431
    %v7433 = vrcp.pop %v7430
    %v7434 = vmul.f32 1.0, %v7433
    %v7435 = vtanh.pop %v7422
    %v7436 = vmul.f32 %v7432, %v6848
    %7438 = vrot.lane.b32.xlu0 %v7435, 112
    %v7439 = vpop.permute.xlu0 %7438
    %v7441 = vmul.f32 %v7432, %v7439
    %7443 = vrot.lane.b32.xlu0 %v7441, 48
    %v7444 = vpop.permute.xlu0 %7443
    %v7446 = vadd.f32 %v7436, %v7444
    %v7447 = vtanh.pop %v7446
    %7449 = vrot.lane.b32.xlu0 %v7447, 48
    %v7450 = vpop.permute.xlu0 %7449
    %v7452 = vmul.f32 %v7432, %v7450
    %v7453 = vmul.f32 %v7434, %v7450
    %v7454 = vld [vmem:[%s3] sm:$0xff]
    %v7455 = vld [vmem:[%s3 + $0x8] sm:$0xff]
    %v7456 = vld [vmem:[%s3 + $0x10] sm:$0xff]
    %v7457 = vld [vmem:[%s3 + $0x18] sm:$0xff]
    %v7458 = vld [vmem:[%s3 + $0x20] sm:$0xff]
    %v7459 = vld [vmem:[%s3 + $0x28] sm:$0xff]
    %v7460 = vld [vmem:[%s3 + $0x30] sm:$0x1]
    %v7461 = vld [vmem:[%s3 + $0x31] sm:$0xff]
    %v7462 = vld [vmem:[%s3 + $0x39] sm:$0xff]
    %v7463 = vld [vmem:[%s3 + $0x41] sm:$0xff]
    %v7464 = vld [vmem:[%s3 + $0x49] sm:$0x1]
    %v7465 = vlaneseq
    %v7466 = vshrl.u32 %v7465, 7
    %v7467 = vsub.s32 0, %v7466
    %v7468 = vrot.slane %v7460, %v7467
    %7471 = vrot.lane.b32.xlu0 %v7155, 32
    %v7472 = vpop.permute.xlu0 %7471
    %7473 = vrot.lane.b32.xlu0 %v7156, 32
    %v7474 = vpop.permute.xlu0 %7473
    %v7475 = vsel %vm480, %v7472, %v7474
    %v7476 = vsel %vm366, %v7475, 0
    %7478 = vmatprep.subr.mxu0 0.0
    %7479 = vmatpush1.msra.mxu0 %v7454
    %7480 = vmatprep.subr.mxu0 0.0
    %7481 = vmatpush1.msra.mxu0 %v7455
    %7482 = vmatprep.subr.mxu0 0.0
    %7483 = vmatpush1.msra.mxu0 %v7456
    %7484 = vmatprep.subr.mxu0 0.0
    %7485 = vmatpush1.msra.mxu0 %v7457
    %7486 = vmatprep.subr.mxu0 0.0
    %7487 = vmatpush1.msra.mxu0 %v7458
    %7488 = vmatprep.subr.mxu0 0.0
    %7489 = vmatpush1.msra.mxu0 %v7459
    %7490 = vmatprep.subr.mxu0 0.0
    %7491 = vmatpush1.msra.mxu0 0.0
    %7492 = vmatprep.subr.mxu0 0.0
    %7493 = vmatpush1.msra.mxu0 0.0
    %7494 = vmatprep.subr.mxu0 0.0
    %7495 = vmatpush1.msra.mxu0 0.0
    %7496 = vmatprep.subr.mxu0 0.0
    %7497 = vmatpush1.msra.mxu0 0.0
    %7498 = vmatprep.subr.mxu0 0.0
    %7499 = vmatpush1.msra.mxu0 0.0
    %7500 = vmatprep.subr.mxu0 0.0
    %7501 = vmatpush1.msra.mxu0 0.0
    %7502 = vmatprep.subr.mxu0 0.0
    %7503 = vmatpush1.msra.mxu0 0.0
    %7504 = vmatprep.subr.mxu0 0.0
    %7505 = vmatpush1.msra.mxu0 0.0
    %7506 = vmatprep.subr.mxu0 0.0
    %7507 = vmatpush1.msra.mxu0 0.0
    %7508 = vmatprep.subr.mxu0 0.0
    %7509 = vmatpush1.msra.mxu0 0.0
    %7510 = vmatprep.subr.mxu0 0.0
    %7511 = vmatpush1.msra.mxu0 0.0
    %7512 = vmatprep.subr.mxu0 0.0
    %7513 = vmatpush1.msra.mxu0 0.0
    %7514 = vmatprep.subr.mxu0 0.0
    %7515 = vmatpush1.msra.mxu0 0.0
    %7516 = vmatprep.subr.mxu0 0.0
    %7517 = vmatpush1.msra.mxu0 0.0
    %7518 = vmatprep.subr.mxu0 0.0
    %7519 = vmatpush1.msra.mxu0 0.0
    %7520 = vmatprep.subr.mxu0 0.0
    %7521 = vmatpush1.msra.mxu0 0.0
    %7522 = vmatprep.subr.mxu0 0.0
    %7523 = vmatpush1.msra.mxu0 0.0
    %7524 = vmatprep.subr.mxu0 0.0
    %7525 = vmatpush1.msra.mxu0 0.0
    %7526 = vmatprep.subr.mxu0 0.0
    %7527 = vmatpush1.msra.mxu0 0.0
    %7528 = vmatprep.subr.mxu0 0.0
    %7529 = vmatpush1.msra.mxu0 0.0
    %7530 = vmatprep.subr.mxu0 0.0
    %7531 = vmatpush1.msra.mxu0 0.0
    %7532 = vmatprep.subr.mxu0 0.0
    %7533 = vmatpush1.msra.mxu0 0.0
    %7534 = vmatprep.subr.mxu0 0.0
    %7535 = vmatpush1.msra.mxu0 0.0
    %7536 = vmatprep.subr.mxu0 0.0
    %7537 = vmatpush1.msra.mxu0 0.0
    %7538 = vmatprep.subr.mxu0 0.0
    %7539 = vmatpush1.msra.mxu0 0.0
    %7540 = vmatprep.subr.mxu0 0.0
    %7541 = vmatpush1.msra.mxu0 0.0
    %7542 = vmatprep.mubr.f32.mxu0 0.0
    %7543 = vmatmul.mubr.f32.gmra.mrb[0].mxu0 %v7476
    %v7544 = vpop.f32.mrb[0].mxu0
    %v7545 = vadd.f32 %v7468, %v7544
    %v7546 = vpop.f32.mrb[0].mxu0
    %7547 = vdwg.mxu0
    %v7548 = vmax.f32 %v7545, 0.0
    %v7549 = vlaneseq
    %v7550 = vshrl.u32 %v7549, 7
    %v7551 = vsub.s32 0, %v7550
    %v7552 = vrot.slane %v7464, %v7551
    %vm7553 = vcmask 195584
    %v7555 = vsel %vm7553, %v7548, 0
    %7557 = vmatprep.subr.mxu0 0.0
    %7558 = vmatpush1.msra.mxu0 %v7461
    %7559 = vmatprep.subr.mxu0 0.0
    %7560 = vmatpush1.msra.mxu0 %v7462
    %7561 = vmatprep.subr.mxu0 0.0
    %7562 = vmatpush1.msra.mxu0 %v7463
    %7563 = vmatprep.subr.mxu0 0.0
    %7564 = vmatpush1.msra.mxu0 0.0
    %7565 = vmatprep.subr.mxu0 0.0
    %7566 = vmatpush1.msra.mxu0 0.0
    %7567 = vmatprep.subr.mxu0 0.0
    %7568 = vmatpush1.msra.mxu0 0.0
    %7569 = vmatprep.subr.mxu0 0.0
    %7570 = vmatpush1.msra.mxu0 0.0
    %7571 = vmatprep.subr.mxu0 0.0
    %7572 = vmatpush1.msra.mxu0 0.0
    %7573 = vmatprep.subr.mxu0 0.0
    %7574 = vmatpush1.msra.mxu0 0.0
    %7575 = vmatprep.subr.mxu0 0.0
    %7576 = vmatpush1.msra.mxu0 0.0
    %7577 = vmatprep.subr.mxu0 0.0
    %7578 = vmatpush1.msra.mxu0 0.0
    %7579 = vmatprep.subr.mxu0 0.0
    %7580 = vmatpush1.msra.mxu0 0.0
    %7581 = vmatprep.subr.mxu0 0.0
    %7582 = vmatpush1.msra.mxu0 0.0
    %7583 = vmatprep.subr.mxu0 0.0
    %7584 = vmatpush1.msra.mxu0 0.0
    %7585 = vmatprep.subr.mxu0 0.0
    %7586 = vmatpush1.msra.mxu0 0.0
    %7587 = vmatprep.subr.mxu0 0.0
    %7588 = vmatpush1.msra.mxu0 0.0
    %7589 = vmatprep.subr.mxu0 0.0
    %7590 = vmatpush1.msra.mxu0 0.0
    %7591 = vmatprep.subr.mxu0 0.0
    %7592 = vmatpush1.msra.mxu0 0.0
    %7593 = vmatprep.subr.mxu0 0.0
    %7594 = vmatpush1.msra.mxu0 0.0
    %7595 = vmatprep.subr.mxu0 0.0
    %7596 = vmatpush1.msra.mxu0 0.0
    %7597 = vmatprep.subr.mxu0 0.0
    %7598 = vmatpush1.msra.mxu0 0.0
    %7599 = vmatprep.subr.mxu0 0.0
    %7600 = vmatpush1.msra.mxu0 0.0
    %7601 = vmatprep.subr.mxu0 0.0
    %7602 = vmatpush1.msra.mxu0 0.0
    %7603 = vmatprep.subr.mxu0 0.0
    %7604 = vmatpush1.msra.mxu0 0.0
    %7605 = vmatprep.subr.mxu0 0.0
    %7606 = vmatpush1.msra.mxu0 0.0
    %7607 = vmatprep.subr.mxu0 0.0
    %7608 = vmatpush1.msra.mxu0 0.0
    %7609 = vmatprep.subr.mxu0 0.0
    %7610 = vmatpush1.msra.mxu0 0.0
    %7611 = vmatprep.subr.mxu0 0.0
    %7612 = vmatpush1.msra.mxu0 0.0
    %7613 = vmatprep.subr.mxu0 0.0
    %7614 = vmatpush1.msra.mxu0 0.0
    %7615 = vmatprep.subr.mxu0 0.0
    %7616 = vmatpush1.msra.mxu0 0.0
    %7617 = vmatprep.subr.mxu0 0.0
    %7618 = vmatpush1.msra.mxu0 0.0
    %7619 = vmatprep.subr.mxu0 0.0
    %7620 = vmatpush1.msra.mxu0 0.0
    %7621 = vmatprep.mubr.f32.mxu0 0.0
    %7622 = vmatmul.mubr.f32.gmra.mrb[0].mxu0 %v7555
    %v7623 = vpop.f32.mrb[0].mxu0
    %v7624 = vadd.f32 %v7552, %v7623
    %v7625 = vpop.f32.mrb[0].mxu0
    %7626 = vdwg.mxu0
    %vm7627 = vcmask 97280
    %7628 = vst.msk [vmem:[#allocation6] sm:$0xff] %vm7627, %v7624
    %7631 = vrot.lane.b32.xlu0 %v7452, 32
    %v7632 = vpop.permute.xlu0 %7631
    %7633 = vrot.lane.b32.xlu0 %v7453, 32
    %v7634 = vpop.permute.xlu0 %7633
    %v7635 = vsel %vm480, %v7632, %v7634
    %v7636 = vsel %vm366, %v7635, 0
    %7638 = vmatprep.subr.mxu0 0.0
    %7639 = vmatpush1.msra.mxu0 %v7454
    %7640 = vmatprep.subr.mxu0 0.0
    %7641 = vmatpush1.msra.mxu0 %v7455
    %7642 = vmatprep.subr.mxu0 0.0
    %7643 = vmatpush1.msra.mxu0 %v7456
    %7644 = vmatprep.subr.mxu0 0.0
    %7645 = vmatpush1.msra.mxu0 %v7457
    %7646 = vmatprep.subr.mxu0 0.0
    %7647 = vmatpush1.msra.mxu0 %v7458
    %7648 = vmatprep.subr.mxu0 0.0
    %7649 = vmatpush1.msra.mxu0 %v7459
    %7650 = vmatprep.subr.mxu0 0.0
    %7651 = vmatpush1.msra.mxu0 0.0
    %7652 = vmatprep.subr.mxu0 0.0
    %7653 = vmatpush1.msra.mxu0 0.0
    %7654 = vmatprep.subr.mxu0 0.0
    %7655 = vmatpush1.msra.mxu0 0.0
    %7656 = vmatprep.subr.mxu0 0.0
    %7657 = vmatpush1.msra.mxu0 0.0
    %7658 = vmatprep.subr.mxu0 0.0
    %7659 = vmatpush1.msra.mxu0 0.0
    %7660 = vmatprep.subr.mxu0 0.0
    %7661 = vmatpush1.msra.mxu0 0.0
    %7662 = vmatprep.subr.mxu0 0.0
    %7663 = vmatpush1.msra.mxu0 0.0
    %7664 = vmatprep.subr.mxu0 0.0
    %7665 = vmatpush1.msra.mxu0 0.0
    %7666 = vmatprep.subr.mxu0 0.0
    %7667 = vmatpush1.msra.mxu0 0.0
    %7668 = vmatprep.subr.mxu0 0.0
    %7669 = vmatpush1.msra.mxu0 0.0
    %7670 = vmatprep.subr.mxu0 0.0
    %7671 = vmatpush1.msra.mxu0 0.0
    %7672 = vmatprep.subr.mxu0 0.0
    %7673 = vmatpush1.msra.mxu0 0.0
    %7674 = vmatprep.subr.mxu0 0.0
    %7675 = vmatpush1.msra.mxu0 0.0
    %7676 = vmatprep.subr.mxu0 0.0
    %7677 = vmatpush1.msra.mxu0 0.0
    %7678 = vmatprep.subr.mxu0 0.0
    %7679 = vmatpush1.msra.mxu0 0.0
    %7680 = vmatprep.subr.mxu0 0.0
    %7681 = vmatpush1.msra.mxu0 0.0
    %7682 = vmatprep.subr.mxu0 0.0
    %7683 = vmatpush1.msra.mxu0 0.0
    %7684 = vmatprep.subr.mxu0 0.0
    %7685 = vmatpush1.msra.mxu0 0.0
    %7686 = vmatprep.subr.mxu0 0.0
    %7687 = vmatpush1.msra.mxu0 0.0
    %7688 = vmatprep.subr.mxu0 0.0
    %7689 = vmatpush1.msra.mxu0 0.0
    %7690 = vmatprep.subr.mxu0 0.0
    %7691 = vmatpush1.msra.mxu0 0.0
    %7692 = vmatprep.subr.mxu0 0.0
    %7693 = vmatpush1.msra.mxu0 0.0
    %7694 = vmatprep.subr.mxu0 0.0
    %7695 = vmatpush1.msra.mxu0 0.0
    %7696 = vmatprep.subr.mxu0 0.0
    %7697 = vmatpush1.msra.mxu0 0.0
    %7698 = vmatprep.subr.mxu0 0.0
    %7699 = vmatpush1.msra.mxu0 0.0
    %7700 = vmatprep.subr.mxu0 0.0
    %7701 = vmatpush1.msra.mxu0 0.0
    %7702 = vmatprep.mubr.f32.mxu0 0.0
    %7703 = vmatmul.mubr.f32.gmra.mrb[0].mxu0 %v7636
    %v7704 = vpop.f32.mrb[0].mxu0
    %v7705 = vadd.f32 %v7468, %v7704
    %v7706 = vpop.f32.mrb[0].mxu0
    %7707 = vdwg.mxu0
    %v7708 = vmax.f32 %v7705, 0.0
    %v7710 = vsel %vm7553, %v7708, 0
    %7712 = vmatprep.subr.mxu0 0.0
    %7713 = vmatpush1.msra.mxu0 %v7461
    %7714 = vmatprep.subr.mxu0 0.0
    %7715 = vmatpush1.msra.mxu0 %v7462
    %7716 = vmatprep.subr.mxu0 0.0
    %7717 = vmatpush1.msra.mxu0 %v7463
    %7718 = vmatprep.subr.mxu0 0.0
    %7719 = vmatpush1.msra.mxu0 0.0
    %7720 = vmatprep.subr.mxu0 0.0
    %7721 = vmatpush1.msra.mxu0 0.0
    %7722 = vmatprep.subr.mxu0 0.0
    %7723 = vmatpush1.msra.mxu0 0.0
    %7724 = vmatprep.subr.mxu0 0.0
    %7725 = vmatpush1.msra.mxu0 0.0
    %7726 = vmatprep.subr.mxu0 0.0
    %7727 = vmatpush1.msra.mxu0 0.0
    %7728 = vmatprep.subr.mxu0 0.0
    %7729 = vmatpush1.msra.mxu0 0.0
    %7730 = vmatprep.subr.mxu0 0.0
    %7731 = vmatpush1.msra.mxu0 0.0
    %7732 = vmatprep.subr.mxu0 0.0
    %7733 = vmatpush1.msra.mxu0 0.0
    %7734 = vmatprep.subr.mxu0 0.0
    %7735 = vmatpush1.msra.mxu0 0.0
    %7736 = vmatprep.subr.mxu0 0.0
    %7737 = vmatpush1.msra.mxu0 0.0
    %7738 = vmatprep.subr.mxu0 0.0
    %7739 = vmatpush1.msra.mxu0 0.0
    %7740 = vmatprep.subr.mxu0 0.0
    %7741 = vmatpush1.msra.mxu0 0.0
    %7742 = vmatprep.subr.mxu0 0.0
    %7743 = vmatpush1.msra.mxu0 0.0
    %7744 = vmatprep.subr.mxu0 0.0
    %7745 = vmatpush1.msra.mxu0 0.0
    %7746 = vmatprep.subr.mxu0 0.0
    %7747 = vmatpush1.msra.mxu0 0.0
    %7748 = vmatprep.subr.mxu0 0.0
    %7749 = vmatpush1.msra.mxu0 0.0
    %7750 = vmatprep.subr.mxu0 0.0
    %7751 = vmatpush1.msra.mxu0 0.0
    %7752 = vmatprep.subr.mxu0 0.0
    %7753 = vmatpush1.msra.mxu0 0.0
    %7754 = vmatprep.subr.mxu0 0.0
    %7755 = vmatpush1.msra.mxu0 0.0
    %7756 = vmatprep.subr.mxu0 0.0
    %7757 = vmatpush1.msra.mxu0 0.0
    %7758 = vmatprep.subr.mxu0 0.0
    %7759 = vmatpush1.msra.mxu0 0.0
    %7760 = vmatprep.subr.mxu0 0.0
    %7761 = vmatpush1.msra.mxu0 0.0
    %7762 = vmatprep.subr.mxu0 0.0
    %7763 = vmatpush1.msra.mxu0 0.0
    %7764 = vmatprep.subr.mxu0 0.0
    %7765 = vmatpush1.msra.mxu0 0.0
    %7766 = vmatprep.subr.mxu0 0.0
    %7767 = vmatpush1.msra.mxu0 0.0
    %7768 = vmatprep.subr.mxu0 0.0
    %7769 = vmatpush1.msra.mxu0 0.0
    %7770 = vmatprep.subr.mxu0 0.0
    %7771 = vmatpush1.msra.mxu0 0.0
    %7772 = vmatprep.subr.mxu0 0.0
    %7773 = vmatpush1.msra.mxu0 0.0
    %7774 = vmatprep.subr.mxu0 0.0
    %7775 = vmatpush1.msra.mxu0 0.0
    %7776 = vmatprep.mubr.f32.mxu0 0.0
    %7777 = vmatmul.mubr.f32.gmra.mrb[0].mxu0 %v7710
    %v7778 = vpop.f32.mrb[0].mxu0
    %v7779 = vadd.f32 %v7552, %v7778
    %v7780 = vpop.f32.mrb[0].mxu0
    %7781 = vdwg.mxu0
    %7782 = vst.msk [vmem:[#allocation6 + $0x8] sm:$0xff] %vm7627, %v7779
    // Predicated region
    $region22: #{tpu_custom_call.1} parent=1 // pred_check
      _
    $region23: #{tpu_custom_call.1} parent=1 // pred_check_branch
      %7784 = sbr.rel (0) target = $region25
    $region24: #{tpu_custom_call.1} parent=1 // pred_region
      %s7786 = ssub.s32 256, 256
      %7787 = vsyncadd [#allocation5], %s7786
      %s7788 = sshll.u32 [#allocation6], 4
      %s7789 = int_to_ptr.vmem [resolvable:$true] %s7788
      %7794 = dma.vmem_to_hbm [thread:$0]  %s7789, 256, %s4, [#allocation5], 128, 128, 8
    $region25: #{tpu_custom_call.1} parent=1 // pred_fallthru
      _
    // Predicated region
    $region26: #{tpu_custom_call.1} parent=1 // pred_check
      _
    $region27: #{tpu_custom_call.1} parent=1 // pred_check_branch
      %7796 = sbr.rel (0) target = $region29
    $region28: #{tpu_custom_call.1} parent=1 // pred_region
      %7797 = dma.done [#allocation5], 256
    $region29: #{tpu_custom_call.1} parent=1 // pred_fallthru
      _
    %7798 = vsyncpa [#allocation4], 1
    %7799 = vsyncpa [#allocation5], 1

</llo_original>
